<compile_context>
chip_gen: v7x
topology: tpu7x:2x2x1
jax: 0.10.0
libtpu: 0.0.40
codegen_flags: <defaults>
</compile_context>

<pallas_src>
import functools

import jax
import jax.numpy as jnp
from jax.experimental import pallas as pl
from jax.experimental.pallas import tpu as pltpu


def _round_up(x, m):
    return ((x + m - 1) // m) * m


def _mha2d_flash_kernel(x_ref, y_ref, wq_ref, wkv_ref, bq_ref, bkv_ref,
                        o_ref, q_sc, acc_sc, m_sc, l_sc, *opt_scratch,
                        n_heads, ch, ch_p, n_valid, tk, need_kv_mask,
                        compute_dtype, use_kv_cache):
    """One (batch, q-tile, kv-tile) grid step.

    x_ref   : (1, Cin, tq)    channel-major x tokens (q side)
    y_ref   : (1, Cin, tk)    channel-major y tokens (kv side)
    wq_ref  : (Cin, Cout_p)   fused all-head query weight   (resident, 1-buf)
    wkv_ref : (Cin, 2*Cout_p) fused all-head key|value weight (resident, 1-buf)
    bq_ref  : (1, Cout_p) f32 ;  bkv_ref : (1, 2*Cout_p) f32
    o_ref   : (1, tq, Cout)   unpadded output (heads concatenated on lanes)
    q_sc    : (tq, Cout_p)    compute_dtype — Q projected once per q tile
    acc_sc  : (tq, Cout_p)    f32 — online-softmax accumulator
    m_sc/l_sc : (n_heads, tq, 1) f32 — running max / denominator
    opt_scratch[0] (if use_kv_cache): (nkv, tk, 2*Cout_p) projected-KV cache
    """
    qi = pl.program_id(1)
    ki = pl.program_id(2)
    nk = pl.num_programs(2)
    cout_p = n_heads * ch_p
    is_bf16 = jnp.dtype(compute_dtype) == jnp.dtype(jnp.bfloat16)

    # ---- Q projection + online-softmax state init, once per (b, q-tile). ----
    @pl.when(ki == 0)
    def _init_q():
        # All-head Q projection in one wide MXU matmul; the contraction is
        # over dim 0 of both operands (tokens stay channel-major), lowering to
        # a transposed-LHS matmul.
        # TODO(synk): confirm no per-tile vxpose in the bundle dump; if one
        # appears, pre-transpose tokens to (N, Cin) once in the wrapper.
        x = x_ref[0]                                             # (Cin, tq)
        q = jax.lax.dot_general(
            x, wq_ref[...], (((0,), (0,)), ((), ())),
            preferred_element_type=jnp.float32) + bq_ref[...]    # (tq, Cout_p)
        q_sc[...] = q.astype(compute_dtype)
        acc_sc[...] = jnp.zeros(acc_sc.shape, acc_sc.dtype)
        m_sc[...] = jnp.full(m_sc.shape, -jnp.inf, m_sc.dtype)
        l_sc[...] = jnp.zeros(l_sc.shape, l_sc.dtype)

    # ---- K|V projection: once per (b, kv-tile) via the persistent cache. ----
    def _project_kv():
        y = y_ref[0]                                             # (Cin, tk)
        kv = jax.lax.dot_general(
            y, wkv_ref[...], (((0,), (0,)), ((), ())),
            preferred_element_type=jnp.float32) + bkv_ref[...]   # (tk, 2*Cout_p)
        return kv.astype(compute_dtype)

    if use_kv_cache:
        kv_sc = opt_scratch[0]

        @pl.when(qi == 0)
        def _fill_cache():
            kv_sc[ki] = _project_kv()

        kv = kv_sc[ki]                                           # (tk, 2*Cout_p)
    else:
        # Fallback when the projected KV would not fit the VMEM budget.
        kv = _project_kv()

    k = kv[:, :cout_p]                                           # (tk, Cout_p)
    v = kv[:, cout_p:]                                           # (tk, Cout_p)

    if need_kv_mask:
        # Additive mask bias, computed once per kv step (hoisted out of the
        # head loop); padding only ever lives in the last kv tile.
        kv_pos = ki * tk + jax.lax.broadcasted_iota(jnp.int32, (1, tk), 1)
        mask_bias = jnp.where(kv_pos < n_valid, 0.0, -jnp.inf)   # (1, tk) f32

    # Static unroll over heads (n_heads is small).
    # TODO(synk): for n_heads >= 4-8 audit vreg pressure / spills and switch
    # to a fori_loop over a head-major layout if needed.
    for h in range(n_heads):
        sl = slice(h * ch_p, (h + 1) * ch_p)     # 128-lane aligned head slice
        # energy = Q_h K_h^T : contract the last dims (no explicit transpose).
        s = jax.lax.dot_general(
            q_sc[:, sl], k[:, sl], (((1,), (1,)), ((), ())),
            preferred_element_type=jnp.float32)                  # (tq, tk)
        if need_kv_mask:
            s = s + mask_bias

        m_prev = m_sc[h]                                         # (tq, 1)
        m_new = jnp.maximum(m_prev, jnp.max(s, axis=-1, keepdims=True))
        alpha = jnp.exp(m_prev - m_new)                          # (tq, 1) f32
        if is_bf16:
            # bf16 EUP exp (v6e/v7x); m/l/acc stay f32.
            p = jnp.exp((s - m_new).astype(jnp.bfloat16))
        else:
            p = jnp.exp(s - m_new)
        l_sc[h] = alpha * l_sc[h] + jnp.sum(p, axis=-1, keepdims=True,
                                            dtype=jnp.float32)
        acc_sc[:, sl] = alpha * acc_sc[:, sl] + jnp.dot(
            p.astype(compute_dtype), v[:, sl],
            preferred_element_type=jnp.float32)
        m_sc[h] = m_new

    @pl.when(ki == nk - 1)
    def _finalize():
        # Normalize with the EUP reciprocal and store each head slice directly
        # into its (unpadded) lane range of the output block — no concatenate.
        for h in range(n_heads):
            inv_l = pl.reciprocal(l_sc[h], approx=True)          # (tq, 1)
            o_ref[0, :, h * ch:(h + 1) * ch] = (
                acc_sc[:, h * ch_p:h * ch_p + ch] * inv_l).astype(o_ref.dtype)


def multi_head_attention_2d(x, y, params, n_heads, *,
                            compute_dtype=jnp.bfloat16, tq=256, tk=256,
                            kv_cache_budget_bytes=24 * 1024 * 1024):
    """x, y: (B, C, H, W) float32 (NCHW, like the PyTorch module).

    Returns (B, n_heads, C_head, H, W) float32, matching MultiHeadAttention2d(
        in_channels=C, n_heads=n_heads, residual=False, kernel_size=1,
        attention_type=0).forward on 4-D inputs (no mask).

    compute_dtype selects MXU-operand / KV-cache / output dtype (bf16 default;
    softmax stats and the accumulator are always f32).  Tile defaults (256)
    target the 256x256 MXUs of v6e/v7x; on v5e tq=128 maps slightly better;
    on v7x keep the total footprint under the 64 MiB VMEM.
    """
    B, Cin, Hs, Ws = x.shape
    N = Hs * Ws
    Cout = params["wq"].shape[0]             # n_heads * C_head
    assert Cout % n_heads == 0
    Ch = Cout // n_heads
    Ch_p = _round_up(Ch, 128)                # lane-aligned per-head compute block
    Cout_p = n_heads * Ch_p
    # TODO(synk): for Ch << 128 this padded compute layout inflates scratch and
    # weight bytes (not MXU cycles); a multi-head-per-lane-group packing with a
    # block-diagonal QK^T mask would recover it.

    # Clamp tiles to the (padded) token count so tiny inputs don't over-pad.
    tq = max(128, min(tq, _round_up(N, 128)))
    tk = max(128, min(tk, _round_up(N, 128)))

    # Tokens stay channel-major: (B, C, H, W) -> (B, C, N) is a pure reshape
    # (no HBM transpose round trip); the kernel contracts over channels.
    x_cn = x.reshape(B, Cin, N)
    y_cn = y.reshape(B, Cin, N)

    N_pq = _round_up(N, tq)
    N_pk = _round_up(N, tk)
    if N_pq != N:
        x_cn = jnp.pad(x_cn, ((0, 0), (0, 0), (0, N_pq - N)))
    if N_pk != N:
        y_cn = jnp.pad(y_cn, ((0, 0), (0, 0), (0, N_pk - N)))
    x_cn = x_cn.astype(compute_dtype)
    y_cn = y_cn.astype(compute_dtype)

    # Pack the 1x1-conv weights/biases into fused, lane-padded matrices.
    #   Wq  : (Cin, Cout_p)      head h owns lanes [h*Ch_p, h*Ch_p + Ch)
    #   Wkv : (Cin, 2*Cout_p)    [ key block | value block ]
    def pack_w(w):                            # (Cout, Cin) -> (Cin, Cout_p)
        wt = w.reshape(n_heads, Ch, Cin)
        out = jnp.zeros((n_heads, Ch_p, Cin), w.dtype).at[:, :Ch, :].set(wt)
        return jnp.transpose(out.reshape(Cout_p, Cin), (1, 0))

    def pack_b(b):                            # (Cout,) -> (1, Cout_p)
        bt = b.reshape(n_heads, Ch)
        out = jnp.zeros((n_heads, Ch_p), b.dtype).at[:, :Ch].set(bt)
        return out.reshape(1, Cout_p)

    wq = pack_w(params["wq"]).astype(compute_dtype)
    wkv = jnp.concatenate([pack_w(params["wk"]), pack_w(params["wv"])],
                          axis=-1).astype(compute_dtype)
    bq = pack_b(params["bq"]).astype(jnp.float32)
    bkv = jnp.concatenate([pack_b(params["bk"]), pack_b(params["bv"])],
                          axis=-1).astype(jnp.float32)

    nq = N_pq // tq
    nkv = N_pk // tk
    grid = (B, nq, nkv)

    itemsize = jnp.dtype(compute_dtype).itemsize
    kv_cache_bytes = nkv * tk * 2 * Cout_p * itemsize
    use_kv_cache = kv_cache_bytes <= kv_cache_budget_bytes

    kernel = functools.partial(
        _mha2d_flash_kernel,
        n_heads=n_heads, ch=Ch, ch_p=Ch_p, n_valid=N, tk=tk,
        need_kv_mask=(N_pk != N), compute_dtype=compute_dtype,
        use_kv_cache=use_kv_cache)

    # VMEM footprint: double-buffered x/y/out tiles, single-buffered resident
    # weights/biases, scratch, and the projected-KV cache.  (Cap at 112 MiB —
    # fine for v5e/v6e 128 MiB physical; re-derive tiles for v7x's 64 MiB.)
    vmem_bytes = (
        2 * Cin * tq * itemsize            # x tile (double-buffered)
        + 2 * Cin * tk * itemsize          # y tile (double-buffered)
        + 3 * Cin * Cout_p * itemsize      # wq + wkv (single-buffered)
        + 3 * Cout_p * 4                   # bq + bkv (f32, single-buffered)
        + 2 * tq * Cout * itemsize         # out tile (double-buffered)
        + tq * Cout_p * itemsize           # q_sc
        + tq * Cout_p * 4                  # acc_sc
        + 2 * n_heads * tq * 128 * 4       # m_sc + l_sc (lane-padded)
        + (kv_cache_bytes if use_kv_cache else 0)
    )
    vmem_limit = int(min(112 * 1024 * 1024,
                         max(32 * 1024 * 1024, 2 * vmem_bytes)))

    cost = pl.CostEstimate(
        flops=int(B * (2 * N_pq * Cin * Cout_p                  # Q projection
                       + 2 * N_pk * Cin * 2 * Cout_p            # K|V projection
                       + n_heads * 4 * N_pq * N_pk * Ch_p)),    # QK^T + PV
        transcendentals=int(B * n_heads * N_pq * N_pk),         # exp
        bytes_accessed=int(B * (N_pq + N_pk) * Cin * itemsize
                           + 3 * Cin * Cout_p * itemsize
                           + B * N_pq * Cout * itemsize),
    )

    # y tokens are only consumed on the qi == 0 sweep when the KV cache is
    # live; collapsing the block index to kv-tile 0 afterwards skips the
    # redundant re-DMA of y tokens on every later q tile.
    if use_kv_cache:
        y_index_map = lambda b, qi, ki: (b, 0, jnp.where(qi == 0, ki, 0))
    else:
        y_index_map = lambda b, qi, ki: (b, 0, ki)

    resident = dict(pipeline_mode=pl.Buffered(1))   # constant-index inputs

    in_specs = [
        pl.BlockSpec((1, Cin, tq), lambda b, qi, ki: (b, 0, qi)),          # x
        pl.BlockSpec((1, Cin, tk), y_index_map),                           # y
        pl.BlockSpec((Cin, Cout_p), lambda b, qi, ki: (0, 0), **resident),      # Wq
        pl.BlockSpec((Cin, 2 * Cout_p), lambda b, qi, ki: (0, 0), **resident),  # Wk|Wv
        pl.BlockSpec((1, Cout_p), lambda b, qi, ki: (0, 0), **resident),        # bq
        pl.BlockSpec((1, 2 * Cout_p), lambda b, qi, ki: (0, 0), **resident),    # bk|bv
    ]

    scratch_shapes = [
        pltpu.VMEM((tq, Cout_p), compute_dtype),     # q_sc
        pltpu.VMEM((tq, Cout_p), jnp.float32),       # acc_sc
        pltpu.VMEM((n_heads, tq, 1), jnp.float32),   # m_sc
        pltpu.VMEM((n_heads, tq, 1), jnp.float32),   # l_sc
    ]
    if use_kv_cache:
        scratch_shapes.append(
            pltpu.VMEM((nkv, tk, 2 * Cout_p), compute_dtype))   # kv cache

    # qi must stay "arbitrary" when the kv cache is live: steps with qi > 0
    # reuse state produced on the qi == 0 sweep of the same core.
    dim_sem = (("parallel", "arbitrary", "arbitrary") if use_kv_cache
               else ("parallel", "parallel", "arbitrary"))

    out = pl.pallas_call(
        kernel,
        out_shape=jax.ShapeDtypeStruct((B, N_pq, Cout), compute_dtype),
        grid=grid,
        in_specs=in_specs,
        out_specs=pl.BlockSpec((1, tq, Cout), lambda b, qi, ki: (b, qi, 0)),
        scratch_shapes=scratch_shapes,
        compiler_params=pltpu.CompilerParams(
            dimension_semantics=dim_sem,
            vmem_limit_bytes=vmem_limit),
        cost_estimate=cost,
    )(x_cn, y_cn, wq, wkv, bq, bkv)

    # (B, N_pq, Cout) kernel output -> module output (B, n_heads, Ch, H, W).
    out = out[:, :N, :].reshape(B, N, n_heads, Ch)
    out = jnp.transpose(out, (0, 2, 3, 1)).reshape(B, n_heads, Ch, Hs, Ws)
    return out.astype(jnp.float32)


def _reference(x, y, params, n_heads):
    """Pure-JAX replica of the PyTorch forward (same config) for verification."""
    B, Cin, Hs, Ws = x.shape
    N = Hs * Ws
    Cout = params["wq"].shape[0]
    Ch = Cout // n_heads
    xt = jnp.transpose(x.reshape(B, Cin, N), (0, 2, 1))
    yt = jnp.transpose(y.reshape(B, Cin, N), (0, 2, 1))
    q = xt @ params["wq"].T + params["bq"]
    k = yt @ params["wk"].T + params["bk"]
    v = yt @ params["wv"].T + params["bv"]
    qh = jnp.transpose(q.reshape(B, N, n_heads, Ch), (2, 0, 1, 3))
    kh = jnp.transpose(k.reshape(B, N, n_heads, Ch), (2, 0, 1, 3))
    vh = jnp.transpose(v.reshape(B, N, n_heads, Ch), (2, 0, 1, 3))
    energy = jnp.einsum("hbnc,hbmc->hbnm", qh, kh)
    att = jax.nn.softmax(energy, axis=-1)
    out = jnp.einsum("hbnm,hbmc->hbnc", att, vh)          # (H, B, N, Ch)
    return jnp.transpose(out, (1, 0, 3, 2)).reshape(B, n_heads, Ch, Hs, Ws)


if __name__ == "__main__":
    # batch=2, in_channels=8, spatial 16x16 -> N=256 tokens, 2 heads.
    B, Cin, Hs, Ws = 2, 8, 16, 16
    n_heads = 2
    Ch = Cin                      # out_channels defaults to in_channels (per head)
    Cout = Ch * n_heads           # module does out_channels *= n_heads

    key = jax.random.PRNGKey(0)
    kx, ky, k1, k2, k3, k4, k5, k6 = jax.random.split(key, 8)
    x = jax.random.normal(kx, (B, Cin, Hs, Ws), dtype=jnp.float32)
    y = jax.random.normal(ky, (B, Cin, Hs, Ws), dtype=jnp.float32)

    scale = 0.2
    params = {
        "wq": scale * jax.random.normal(k1, (Cout, Cin), dtype=jnp.float32),
        "wk": scale * jax.random.normal(k2, (Cout, Cin), dtype=jnp.float32),
        "wv": scale * jax.random.normal(k3, (Cout, Cin), dtype=jnp.float32),
        "bq": scale * jax.random.normal(k4, (Cout,), dtype=jnp.float32),
        "bk": scale * jax.random.normal(k5, (Cout,), dtype=jnp.float32),
        "bv": scale * jax.random.normal(k6, (Cout,), dtype=jnp.float32),
    }

    ref = _reference(x, y, params, n_heads)

    # f32 MXU-operand path, single 256x256 tile: tight check.
    out32 = jax.block_until_ready(
        multi_head_attention_2d(x, y, params, n_heads,
                                compute_dtype=jnp.float32))
    assert out32.shape == (B, n_heads, Ch, Hs, Ws), out32.shape
    assert jnp.allclose(out32, ref, atol=5e-3, rtol=5e-3), \
        f"f32 max err {jnp.max(jnp.abs(out32 - ref))}"

    # f32 path with 128x128 tiles: exercises the multi-tile online softmax and
    # KV-cache reuse across q tiles.
    out32t = jax.block_until_ready(
        multi_head_attention_2d(x, y, params, n_heads,
                                compute_dtype=jnp.float32, tq=128, tk=128))
    assert jnp.allclose(out32t, ref, atol=5e-3, rtol=5e-3), \
        f"f32 tiled max err {jnp.max(jnp.abs(out32t - ref))}"

    # Default bf16 MXU-operand path (softmax stats / accumulator stay f32):
    # loose sanity check against the exact f32 reference.
    out16 = jax.block_until_ready(
        multi_head_attention_2d(x, y, params, n_heads))
    assert jnp.allclose(out16, ref, atol=1e-1, rtol=1e-1), \
        f"bf16 max err {jnp.max(jnp.abs(out16 - ref))}"

    # Non-multiple-of-tile spatial size: exercises the masked KV tail path.
    x2, y2 = x[:, :, :10, :10], y[:, :, :10, :10]
    ref2 = _reference(x2, y2, params, n_heads)
    out2 = jax.block_until_ready(
        multi_head_attention_2d(x2, y2, params, n_heads,
                                compute_dtype=jnp.float32))
    assert jnp.allclose(out2, ref2, atol=5e-3, rtol=5e-3), \
        f"masked max err {jnp.max(jnp.abs(out2 - ref2))}"

    print("KERNEL_OK")
</pallas_src>

<mosaic_0001>
module attributes {stable_mosaic.version = 11 : i64} {
  func.func @_mha2d_flash_kernel(%arg0: i32, %arg1: i32, %arg2: i32, %arg3: memref<1x8x256xf32, #tpu.memory_space<vmem>>, %arg4: memref<1x8x256xf32, #tpu.memory_space<vmem>>, %arg5: memref<8x256xf32, #tpu.memory_space<vmem>>, %arg6: memref<8x512xf32, #tpu.memory_space<vmem>>, %arg7: memref<1x256xf32, #tpu.memory_space<vmem>>, %arg8: memref<1x512xf32, #tpu.memory_space<vmem>>, %arg9: memref<1x256x16xf32, #tpu.memory_space<vmem>>, %arg10: memref<256x256xf32, #tpu.memory_space<vmem>>, %arg11: memref<256x256xf32, #tpu.memory_space<vmem>>, %arg12: memref<2x256x1xf32, #tpu.memory_space<vmem>>, %arg13: memref<2x256x1xf32, #tpu.memory_space<vmem>>, %arg14: memref<1x256x512xf32, #tpu.memory_space<vmem>>) attributes {dimension_semantics = [#tpu.dimension_semantics<parallel>, #tpu.dimension_semantics<arbitrary>, #tpu.dimension_semantics<arbitrary>], iteration_bounds = array<i64: 2, 1, 1>, scalar_prefetch = 0 : i64, scratch_operands = 5 : i64, tpu.core_type = #tpu.core_type<tc>, window_params = [{transform_indices = @transform_0, window_bounds = array<i64: 1, 8, 256>}, {transform_indices = @transform_1, window_bounds = array<i64: 1, 8, 256>}, {pipeline_mode = #tpu.pipeline_mode<synchronous>, transform_indices = @transform_2, window_bounds = array<i64: 8, 256>}, {pipeline_mode = #tpu.pipeline_mode<synchronous>, transform_indices = @transform_3, window_bounds = array<i64: 8, 512>}, {pipeline_mode = #tpu.pipeline_mode<synchronous>, transform_indices = @transform_4, window_bounds = array<i64: 1, 256>}, {pipeline_mode = #tpu.pipeline_mode<synchronous>, transform_indices = @transform_5, window_bounds = array<i64: 1, 512>}, {transform_indices = @transform_6, window_bounds = array<i64: 1, 256, 16>}]} {
    %c0_i32 = arith.constant 0 : i32
    %0 = arith.cmpi eq, %arg2, %c0_i32 : i32
    %1 = arith.extui %0 : i1 to i32
    %c0_i32_0 = arith.constant 0 : i32
    %2 = arith.cmpi ne, %1, %c0_i32_0 : i32
    scf.if %2 {
      %c0_47 = arith.constant 0 : index
      %c0_48 = arith.constant 0 : index
      %c0_49 = arith.constant 0 : index
      %78 = vector.load %arg3[%c0_47, %c0_48, %c0_49] : memref<1x8x256xf32, #tpu.memory_space<vmem>>, vector<1x8x256xf32>
      %79 = vector.shape_cast %78 : vector<1x8x256xf32> to vector<8x256xf32>
      %c0_50 = arith.constant 0 : index
      %c0_51 = arith.constant 0 : index
      %80 = vector.load %arg5[%c0_50, %c0_51] : memref<8x256xf32, #tpu.memory_space<vmem>>, vector<8x256xf32>
      %cst_52 = arith.constant dense<0.000000e+00> : vector<256x256xf32>
      %81 = tpu.matmul %79, %80, %cst_52 {dimension_numbers = #tpu.dot_dimension_numbers<[0], [0], [1], [1], [0, 1, 1, 1], [], []>} : vector<8x256xf32>, vector<8x256xf32>, vector<256x256xf32> -> vector<256x256xf32>
      %c0_53 = arith.constant 0 : index
      %c0_54 = arith.constant 0 : index
      %82 = vector.load %arg7[%c0_53, %c0_54] : memref<1x256xf32, #tpu.memory_space<vmem>>, vector<1x256xf32>
      %83 = vector.broadcast %82 : vector<1x256xf32> to vector<256x256xf32>
      %84 = arith.addf %81, %83 : vector<256x256xf32>
      %c0_55 = arith.constant 0 : index
      %c0_56 = arith.constant 0 : index
      %85 = vector.load %arg10[%c0_55, %c0_56] : memref<256x256xf32, #tpu.memory_space<vmem>>, vector<256x256xf32>
      tpu.vector_store %arg10[%c0_55, %c0_56], %84 {strides = array<i32>} : memref<256x256xf32, #tpu.memory_space<vmem>>, vector<256x256xf32>,
      %cst_57 = arith.constant 0.000000e+00 : f32
      %86 = vector.broadcast %cst_57 : f32 to vector<256x256xf32>
      %c0_58 = arith.constant 0 : index
      %c0_59 = arith.constant 0 : index
      %87 = vector.load %arg11[%c0_58, %c0_59] : memref<256x256xf32, #tpu.memory_space<vmem>>, vector<256x256xf32>
      tpu.vector_store %arg11[%c0_58, %c0_59], %86 {strides = array<i32>} : memref<256x256xf32, #tpu.memory_space<vmem>>, vector<256x256xf32>,
      %cst_60 = arith.constant 0xFF800000 : f32
      %88 = vector.broadcast %cst_60 : f32 to vector<2x256x1xf32>
      %c0_61 = arith.constant 0 : index
      %c0_62 = arith.constant 0 : index
      %c0_63 = arith.constant 0 : index
      %89 = vector.load %arg12[%c0_61, %c0_62, %c0_63] : memref<2x256x1xf32, #tpu.memory_space<vmem>>, vector<2x256x1xf32>
      tpu.vector_store %arg12[%c0_61, %c0_62, %c0_63], %88 {strides = array<i32>} : memref<2x256x1xf32, #tpu.memory_space<vmem>>, vector<2x256x1xf32>,
      %cst_64 = arith.constant 0.000000e+00 : f32
      %90 = vector.broadcast %cst_64 : f32 to vector<2x256x1xf32>
      %c0_65 = arith.constant 0 : index
      %c0_66 = arith.constant 0 : index
      %c0_67 = arith.constant 0 : index
      %91 = vector.load %arg13[%c0_65, %c0_66, %c0_67] : memref<2x256x1xf32, #tpu.memory_space<vmem>>, vector<2x256x1xf32>
      tpu.vector_store %arg13[%c0_65, %c0_66, %c0_67], %90 {strides = array<i32>} : memref<2x256x1xf32, #tpu.memory_space<vmem>>, vector<2x256x1xf32>,
    } else {
    }
    %c0_i32_1 = arith.constant 0 : i32
    %3 = arith.cmpi eq, %arg1, %c0_i32_1 : i32
    %4 = arith.extui %3 : i1 to i32
    %c0_i32_2 = arith.constant 0 : i32
    %5 = arith.cmpi ne, %4, %c0_i32_2 : i32
    scf.if %5 {
      %c0_47 = arith.constant 0 : index
      %c0_48 = arith.constant 0 : index
      %c0_49 = arith.constant 0 : index
      %78 = vector.load %arg4[%c0_47, %c0_48, %c0_49] : memref<1x8x256xf32, #tpu.memory_space<vmem>>, vector<1x8x256xf32>
      %79 = vector.shape_cast %78 : vector<1x8x256xf32> to vector<8x256xf32>
      %c0_50 = arith.constant 0 : index
      %c0_51 = arith.constant 0 : index
      %80 = vector.load %arg6[%c0_50, %c0_51] : memref<8x512xf32, #tpu.memory_space<vmem>>, vector<8x512xf32>
      %cst_52 = arith.constant dense<0.000000e+00> : vector<256x512xf32>
      %81 = tpu.matmul %79, %80, %cst_52 {dimension_numbers = #tpu.dot_dimension_numbers<[0], [0], [1], [1], [0, 1, 1, 1], [], []>} : vector<8x256xf32>, vector<8x512xf32>, vector<256x512xf32> -> vector<256x512xf32>
      %c0_53 = arith.constant 0 : index
      %c0_54 = arith.constant 0 : index
      %82 = vector.load %arg8[%c0_53, %c0_54] : memref<1x512xf32, #tpu.memory_space<vmem>>, vector<1x512xf32>
      %83 = vector.broadcast %82 : vector<1x512xf32> to vector<256x512xf32>
      %84 = arith.addf %81, %83 : vector<256x512xf32>
      %85 = arith.index_cast %arg2 : i32 to index
      %c0_55 = arith.constant 0 : index
      %c0_56 = arith.constant 0 : index
      %86 = vector.load %arg14[%85, %c0_55, %c0_56] : memref<1x256x512xf32, #tpu.memory_space<vmem>>, vector<1x256x512xf32>
      %87 = vector.shape_cast %86 : vector<1x256x512xf32> to vector<256x512xf32>
      %88 = vector.shape_cast %84 : vector<256x512xf32> to vector<1x256x512xf32>
      tpu.vector_store %arg14[%85, %c0_55, %c0_56], %88 {strides = array<i32>} : memref<1x256x512xf32, #tpu.memory_space<vmem>>, vector<1x256x512xf32>,
    } else {
    }
    %6 = arith.index_cast %arg2 : i32 to index
    %c0 = arith.constant 0 : index
    %c0_3 = arith.constant 0 : index
    %7 = vector.load %arg14[%6, %c0, %c0_3] : memref<1x256x512xf32, #tpu.memory_space<vmem>>, vector<1x256x512xf32>
    %8 = vector.shape_cast %7 : vector<1x256x512xf32> to vector<256x512xf32>
    %9 = vector.extract_strided_slice %8 {offsets = [0, 0], sizes = [256, 256], strides = [1, 1]} : vector<256x512xf32> to vector<256x256xf32>
    %10 = vector.extract_strided_slice %8 {offsets = [0, 256], sizes = [256, 256], strides = [1, 1]} : vector<256x512xf32> to vector<256x256xf32>
    %c0_4 = arith.constant 0 : index
    %c0_5 = arith.constant 0 : index
    %11 = vector.load %arg10[%c0_4, %c0_5] : memref<256x256xf32, #tpu.memory_space<vmem>>, vector<256x128xf32>
    %12 = vector.extract_strided_slice %9 {offsets = [0, 0], sizes = [256, 128], strides = [1, 1]} : vector<256x256xf32> to vector<256x128xf32>
    %cst = arith.constant dense<0.000000e+00> : vector<256x256xf32>
    %13 = tpu.matmul %11, %12, %cst {dimension_numbers = #tpu.dot_dimension_numbers<[1], [1], [0], [0], [0, 0, 1, 0], [], []>} : vector<256x128xf32>, vector<256x128xf32>, vector<256x256xf32> -> vector<256x256xf32>
    %c0_6 = arith.constant 0 : index
    %c0_7 = arith.constant 0 : index
    %c0_8 = arith.constant 0 : index
    %14 = vector.load %arg12[%c0_6, %c0_7, %c0_8] : memref<2x256x1xf32, #tpu.memory_space<vmem>>, vector<1x256x1xf32>
    %15 = vector.shape_cast %14 : vector<1x256x1xf32> to vector<256x1xf32>
    %cst_9 = arith.constant dense<0xFF800000> : vector<256xf32>
    %16 = vector.multi_reduction <maximumf>, %13, %cst_9 [1] : vector<256x256xf32> to vector<256xf32>
    %17 = vector.shape_cast %16 : vector<256xf32> to vector<256x1xf32>
    %18 = arith.maximumf %15, %17 : vector<256x1xf32>
    %19 = arith.subf %15, %18 : vector<256x1xf32>
    %20 = math.exp %19 : vector<256x1xf32>
    %21 = vector.broadcast %18 : vector<256x1xf32> to vector<256x256xf32>
    %22 = arith.subf %13, %21 : vector<256x256xf32>
    %23 = math.exp %22 : vector<256x256xf32>
    %c0_10 = arith.constant 0 : index
    %c0_11 = arith.constant 0 : index
    %c0_12 = arith.constant 0 : index
    %24 = vector.load %arg13[%c0_10, %c0_11, %c0_12] : memref<2x256x1xf32, #tpu.memory_space<vmem>>, vector<1x256x1xf32>
    %25 = vector.shape_cast %24 : vector<1x256x1xf32> to vector<256x1xf32>
    %26 = arith.mulf %20, %25 : vector<256x1xf32>
    %cst_13 = arith.constant dense<0.000000e+00> : vector<256xf32>
    %27 = vector.multi_reduction <add>, %23, %cst_13 [1] : vector<256x256xf32> to vector<256xf32>
    %28 = vector.shape_cast %27 : vector<256xf32> to vector<256x1xf32>
    %29 = arith.addf %26, %28 : vector<256x1xf32>
    %c0_14 = arith.constant 0 : index
    %c0_15 = arith.constant 0 : index
    %c0_16 = arith.constant 0 : index
    %30 = vector.load %arg13[%c0_14, %c0_15, %c0_16] : memref<2x256x1xf32, #tpu.memory_space<vmem>>, vector<1x256x1xf32>
    %31 = vector.shape_cast %30 : vector<1x256x1xf32> to vector<256x1xf32>
    %32 = vector.shape_cast %29 : vector<256x1xf32> to vector<1x256x1xf32>
    tpu.vector_store %arg13[%c0_14, %c0_15, %c0_16], %32 {strides = array<i32>} : memref<2x256x1xf32, #tpu.memory_space<vmem>>, vector<1x256x1xf32>,
    %c0_17 = arith.constant 0 : index
    %c0_18 = arith.constant 0 : index
    %33 = vector.load %arg11[%c0_17, %c0_18] : memref<256x256xf32, #tpu.memory_space<vmem>>, vector<256x128xf32>
    %34 = vector.broadcast %20 : vector<256x1xf32> to vector<256x128xf32>
    %35 = arith.mulf %34, %33 : vector<256x128xf32>
    %36 = vector.extract_strided_slice %10 {offsets = [0, 0], sizes = [256, 128], strides = [1, 1]} : vector<256x256xf32> to vector<256x128xf32>
    %cst_19 = arith.constant dense<0.000000e+00> : vector<256x128xf32>
    %37 = tpu.matmul %23, %36, %cst_19 {dimension_numbers = #tpu.dot_dimension_numbers<[1], [0], [0], [1], [0, 0, 1, 1], [], []>} : vector<256x256xf32>, vector<256x128xf32>, vector<256x128xf32> -> vector<256x128xf32>
    %38 = arith.addf %35, %37 : vector<256x128xf32>
    %c0_20 = arith.constant 0 : index
    %c0_21 = arith.constant 0 : index
    %39 = vector.load %arg11[%c0_20, %c0_21] : memref<256x256xf32, #tpu.memory_space<vmem>>, vector<256x128xf32>
    tpu.vector_store %arg11[%c0_20, %c0_21], %38 {strides = array<i32>} : memref<256x256xf32, #tpu.memory_space<vmem>>, vector<256x128xf32>,
    %c0_22 = arith.constant 0 : index
    %c0_23 = arith.constant 0 : index
    %c0_24 = arith.constant 0 : index
    %40 = vector.load %arg12[%c0_22, %c0_23, %c0_24] : memref<2x256x1xf32, #tpu.memory_space<vmem>>, vector<1x256x1xf32>
    %41 = vector.shape_cast %40 : vector<1x256x1xf32> to vector<256x1xf32>
    %42 = vector.shape_cast %18 : vector<256x1xf32> to vector<1x256x1xf32>
    tpu.vector_store %arg12[%c0_22, %c0_23, %c0_24], %42 {strides = array<i32>} : memref<2x256x1xf32, #tpu.memory_space<vmem>>, vector<1x256x1xf32>,
    %c0_25 = arith.constant 0 : index
    %c128 = arith.constant 128 : index
    %43 = vector.load %arg10[%c0_25, %c128] : memref<256x256xf32, #tpu.memory_space<vmem>>, vector<256x128xf32>
    %44 = vector.extract_strided_slice %9 {offsets = [0, 128], sizes = [256, 128], strides = [1, 1]} : vector<256x256xf32> to vector<256x128xf32>
    %cst_26 = arith.constant dense<0.000000e+00> : vector<256x256xf32>
    %45 = tpu.matmul %43, %44, %cst_26 {dimension_numbers = #tpu.dot_dimension_numbers<[1], [1], [0], [0], [0, 0, 1, 0], [], []>} : vector<256x128xf32>, vector<256x128xf32>, vector<256x256xf32> -> vector<256x256xf32>
    %c1 = arith.constant 1 : index
    %c0_27 = arith.constant 0 : index
    %c0_28 = arith.constant 0 : index
    %46 = vector.load %arg12[%c1, %c0_27, %c0_28] : memref<2x256x1xf32, #tpu.memory_space<vmem>>, vector<1x256x1xf32>
    %47 = vector.shape_cast %46 : vector<1x256x1xf32> to vector<256x1xf32>
    %cst_29 = arith.constant dense<0xFF800000> : vector<256xf32>
    %48 = vector.multi_reduction <maximumf>, %45, %cst_29 [1] : vector<256x256xf32> to vector<256xf32>
    %49 = vector.shape_cast %48 : vector<256xf32> to vector<256x1xf32>
    %50 = arith.maximumf %47, %49 : vector<256x1xf32>
    %51 = arith.subf %47, %50 : vector<256x1xf32>
    %52 = math.exp %51 : vector<256x1xf32>
    %53 = vector.broadcast %50 : vector<256x1xf32> to vector<256x256xf32>
    %54 = arith.subf %45, %53 : vector<256x256xf32>
    %55 = math.exp %54 : vector<256x256xf32>
    %c1_30 = arith.constant 1 : index
    %c0_31 = arith.constant 0 : index
    %c0_32 = arith.constant 0 : index
    %56 = vector.load %arg13[%c1_30, %c0_31, %c0_32] : memref<2x256x1xf32, #tpu.memory_space<vmem>>, vector<1x256x1xf32>
    %57 = vector.shape_cast %56 : vector<1x256x1xf32> to vector<256x1xf32>
    %58 = arith.mulf %52, %57 : vector<256x1xf32>
    %cst_33 = arith.constant dense<0.000000e+00> : vector<256xf32>
    %59 = vector.multi_reduction <add>, %55, %cst_33 [1] : vector<256x256xf32> to vector<256xf32>
    %60 = vector.shape_cast %59 : vector<256xf32> to vector<256x1xf32>
    %61 = arith.addf %58, %60 : vector<256x1xf32>
    %c1_34 = arith.constant 1 : index
    %c0_35 = arith.constant 0 : index
    %c0_36 = arith.constant 0 : index
    %62 = vector.load %arg13[%c1_34, %c0_35, %c0_36] : memref<2x256x1xf32, #tpu.memory_space<vmem>>, vector<1x256x1xf32>
    %63 = vector.shape_cast %62 : vector<1x256x1xf32> to vector<256x1xf32>
    %64 = vector.shape_cast %61 : vector<256x1xf32> to vector<1x256x1xf32>
    tpu.vector_store %arg13[%c1_34, %c0_35, %c0_36], %64 {strides = array<i32>} : memref<2x256x1xf32, #tpu.memory_space<vmem>>, vector<1x256x1xf32>,
    %c0_37 = arith.constant 0 : index
    %c128_38 = arith.constant 128 : index
    %65 = vector.load %arg11[%c0_37, %c128_38] : memref<256x256xf32, #tpu.memory_space<vmem>>, vector<256x128xf32>
    %66 = vector.broadcast %52 : vector<256x1xf32> to vector<256x128xf32>
    %67 = arith.mulf %66, %65 : vector<256x128xf32>
    %68 = vector.extract_strided_slice %10 {offsets = [0, 128], sizes = [256, 128], strides = [1, 1]} : vector<256x256xf32> to vector<256x128xf32>
    %cst_39 = arith.constant dense<0.000000e+00> : vector<256x128xf32>
    %69 = tpu.matmul %55, %68, %cst_39 {dimension_numbers = #tpu.dot_dimension_numbers<[1], [0], [0], [1], [0, 0, 1, 1], [], []>} : vector<256x256xf32>, vector<256x128xf32>, vector<256x128xf32> -> vector<256x128xf32>
    %70 = arith.addf %67, %69 : vector<256x128xf32>
    %c0_40 = arith.constant 0 : index
    %c128_41 = arith.constant 128 : index
    %71 = vector.load %arg11[%c0_40, %c128_41] : memref<256x256xf32, #tpu.memory_space<vmem>>, vector<256x128xf32>
    tpu.vector_store %arg11[%c0_40, %c128_41], %70 {strides = array<i32>} : memref<256x256xf32, #tpu.memory_space<vmem>>, vector<256x128xf32>,
    %c1_42 = arith.constant 1 : index
    %c0_43 = arith.constant 0 : index
    %c0_44 = arith.constant 0 : index
    %72 = vector.load %arg12[%c1_42, %c0_43, %c0_44] : memref<2x256x1xf32, #tpu.memory_space<vmem>>, vector<1x256x1xf32>
    %73 = vector.shape_cast %72 : vector<1x256x1xf32> to vector<256x1xf32>
    %74 = vector.shape_cast %50 : vector<256x1xf32> to vector<1x256x1xf32>
    tpu.vector_store %arg12[%c1_42, %c0_43, %c0_44], %74 {strides = array<i32>} : memref<2x256x1xf32, #tpu.memory_space<vmem>>, vector<1x256x1xf32>,
    %c0_i32_45 = arith.constant 0 : i32
    %75 = arith.cmpi eq, %arg2, %c0_i32_45 : i32
    %76 = arith.extui %75 : i1 to i32
    %c0_i32_46 = arith.constant 0 : i32
    %77 = arith.cmpi ne, %76, %c0_i32_46 : i32
    scf.if %77 {
      %c0_47 = arith.constant 0 : index
      %c0_48 = arith.constant 0 : index
      %c0_49 = arith.constant 0 : index
      %78 = vector.load %arg13[%c0_47, %c0_48, %c0_49] : memref<2x256x1xf32, #tpu.memory_space<vmem>>, vector<1x256x1xf32>
      %79 = vector.shape_cast %78 : vector<1x256x1xf32> to vector<256x1xf32>
      %80 = tpu.reciprocal %79 {approx = true} : vector<256x1xf32> -> vector<256x1xf32>
      %c0_50 = arith.constant 0 : index
      %c0_51 = arith.constant 0 : index
      %81 = vector.load %arg11[%c0_50, %c0_51] : memref<256x256xf32, #tpu.memory_space<vmem>>, vector<256x8xf32>
      %82 = vector.broadcast %80 : vector<256x1xf32> to vector<256x8xf32>
      %83 = arith.mulf %81, %82 : vector<256x8xf32>
      %c0_52 = arith.constant 0 : index
      %c0_53 = arith.constant 0 : index
      %c0_54 = arith.constant 0 : index
      %84 = vector.load %arg9[%c0_52, %c0_53, %c0_54] : memref<1x256x16xf32, #tpu.memory_space<vmem>>, vector<1x256x8xf32>
      %85 = vector.shape_cast %84 : vector<1x256x8xf32> to vector<256x8xf32>
      %86 = vector.shape_cast %83 : vector<256x8xf32> to vector<1x256x8xf32>
      tpu.vector_store %arg9[%c0_52, %c0_53, %c0_54], %86 {strides = array<i32>} : memref<1x256x16xf32, #tpu.memory_space<vmem>>, vector<1x256x8xf32>,
      %c1_55 = arith.constant 1 : index
      %c0_56 = arith.constant 0 : index
      %c0_57 = arith.constant 0 : index
      %87 = vector.load %arg13[%c1_55, %c0_56, %c0_57] : memref<2x256x1xf32, #tpu.memory_space<vmem>>, vector<1x256x1xf32>
      %88 = vector.shape_cast %87 : vector<1x256x1xf32> to vector<256x1xf32>
      %89 = tpu.reciprocal %88 {approx = true} : vector<256x1xf32> -> vector<256x1xf32>
      %c0_58 = arith.constant 0 : index
      %c128_59 = arith.constant 128 : index
      %90 = vector.load %arg11[%c0_58, %c128_59] : memref<256x256xf32, #tpu.memory_space<vmem>>, vector<256x8xf32>
      %91 = vector.broadcast %89 : vector<256x1xf32> to vector<256x8xf32>
      %92 = arith.mulf %90, %91 : vector<256x8xf32>
      %c0_60 = arith.constant 0 : index
      %c0_61 = arith.constant 0 : index
      %c8 = arith.constant 8 : index
      %93 = vector.load %arg9[%c0_60, %c0_61, %c8] : memref<1x256x16xf32, #tpu.memory_space<vmem>>, vector<1x256x8xf32>
      %94 = vector.shape_cast %93 : vector<1x256x8xf32> to vector<256x8xf32>
      %95 = vector.shape_cast %92 : vector<256x8xf32> to vector<1x256x8xf32>
      tpu.vector_store %arg9[%c0_60, %c0_61, %c8], %95 {strides = array<i32>} : memref<1x256x16xf32, #tpu.memory_space<vmem>>, vector<1x256x8xf32>,
    } else {
    }
    return
  }
  func.func @transform_0(%arg0: i32, %arg1: i32, %arg2: i32) -> (i32, i32, i32) {
    %c0_i32 = arith.constant 0 : i32
    %c0_i32_0 = arith.constant 0 : i32
    return %arg0, %c0_i32, %arg1 : i32, i32, i32
  }
  func.func @transform_1(%arg0: i32, %arg1: i32, %arg2: i32) -> (i32, i32, i32) {
    %c0_i32 = arith.constant 0 : i32
    %0 = arith.cmpi eq, %arg1, %c0_i32 : i32
    %c0_i32_0 = arith.constant 0 : i32
    %1 = arith.select %0, %arg2, %c0_i32_0 : i32
    %c0_i32_1 = arith.constant 0 : i32
    %c0_i32_2 = arith.constant 0 : i32
    return %arg0, %c0_i32_1, %1 : i32, i32, i32
  }
  func.func @transform_2(%arg0: i32, %arg1: i32, %arg2: i32) -> (i32, i32) {
    %c0_i32 = arith.constant 0 : i32
    %c0_i32_0 = arith.constant 0 : i32
    %c0_i32_1 = arith.constant 0 : i32
    return %c0_i32, %c0_i32_0 : i32, i32
  }
  func.func @transform_3(%arg0: i32, %arg1: i32, %arg2: i32) -> (i32, i32) {
    %c0_i32 = arith.constant 0 : i32
    %c0_i32_0 = arith.constant 0 : i32
    %c0_i32_1 = arith.constant 0 : i32
    return %c0_i32, %c0_i32_0 : i32, i32
  }
  func.func @transform_4(%arg0: i32, %arg1: i32, %arg2: i32) -> (i32, i32) {
    %c0_i32 = arith.constant 0 : i32
    %c0_i32_0 = arith.constant 0 : i32
    %c0_i32_1 = arith.constant 0 : i32
    return %c0_i32, %c0_i32_0 : i32, i32
  }
  func.func @transform_5(%arg0: i32, %arg1: i32, %arg2: i32) -> (i32, i32) {
    %c0_i32 = arith.constant 0 : i32
    %c0_i32_0 = arith.constant 0 : i32
    %c0_i32_1 = arith.constant 0 : i32
    return %c0_i32, %c0_i32_0 : i32, i32
  }
  func.func @transform_6(%arg0: i32, %arg1: i32, %arg2: i32) -> (i32, i32, i32) {
    %c0_i32 = arith.constant 0 : i32
    %c0_i32_0 = arith.constant 0 : i32
    return %arg0, %arg1, %c0_i32 : i32, i32, i32
  }
}

</mosaic_0001>

<llo_original>
// kernel: tpu_custom_call.1
$region0: #{tpu_custom_call.1}
  #allocation0 [shape = 'u32[]', space=smem, size = 0x4, offset = 0x4, fixed_abs, tag = 'smem constant byte address 0x4 - core index']
  #allocation1 [shape = 'u32[144,128]{1,0:T(1,128)}', space=vmem, size = 0x12000, scoped, tag = 'internal scratch']
  #allocation2 [shape = 'f32[256,256]{1,0:T(8,128)}', space=vmem, size = 0x40000, scoped, tag = 'scratch operand']
  #allocation3 [shape = 'f32[256,256]{1,0:T(8,128)}', space=vmem, size = 0x40000, scoped, tag = 'scratch operand']
  #allocation4 [shape = 'f32[2,256,1]{2,1,0:T(8,128)}', space=vmem, size = 0x40000, scoped, tag = 'scratch operand']
  #allocation5 [shape = 'f32[2,256,1]{2,1,0:T(8,128)}', space=vmem, size = 0x40000, scoped, tag = 'scratch operand']
  #allocation6 [shape = 'f32[1,256,512]{2,1,0:T(8,128)}', space=vmem, size = 0x80000, scoped, tag = 'scratch operand']
  %s0 = inlined_call_operand.hbm [shape: f32[2,8,256], index: 0, kind: input, shape index: {}]
  %s1 = inlined_call_operand.hbm [shape: f32[2,8,256], index: 1, kind: input, shape index: {}]
  %s2 = inlined_call_operand.hbm [shape: f32[8,256], index: 2, kind: input, shape index: {}]
  %s3 = inlined_call_operand.hbm [shape: f32[8,512], index: 3, kind: input, shape index: {}]
  %s4 = inlined_call_operand.vmem [shape: f32[1,256], index: 4, kind: input, shape index: {}]
  %s5 = inlined_call_operand.vmem [shape: f32[1,512], index: 5, kind: input, shape index: {}]
  %s6 = inlined_call_operand.vmem [shape: f32[2,256,16], index: 6, kind: output, shape index: {}]
  %s7 = sld [smem:[#allocation0]]
  $region85: #{tpu_custom_call.1} parent=0
    _
  %s9 = ssub.s32 1, %s7
  %s10 = scalar_select 0, %s9, %s7
  $region1: #{tpu_custom_call.1} parent=0
    #allocation7 [shape = 'u8[16384]{0}', space=vmem, size = 0x4000, scoped, tag = 'input window, operand 0']
    #allocation8 [shape = 's32[2]{0}', space=sflag, size = 0x8, scoped, tag = 'scoped memory for tpu_custom_call.1']
    #allocation9 [shape = 'u8[16384]{0}', space=vmem, size = 0x4000, scoped, tag = 'input window, operand 1']
    #allocation10 [shape = 's32[2]{0}', space=sflag, size = 0x8, scoped, tag = 'scoped memory for tpu_custom_call.1']
    #allocation11 [shape = 'u8[8192]{0}', space=vmem, size = 0x2000, scoped, tag = 'input window, operand 2, single buffered']
    #allocation12 [shape = 'u8[16384]{0}', space=vmem, size = 0x4000, scoped, tag = 'input window, operand 3, single buffered']
    #allocation13 [shape = 's32[1]{0}', space=sflag, size = 0x4, scoped, tag = 'scoped memory for tpu_custom_call.1']
    %11 = vsyncpa [#allocation8], 0
    %s12 = scalar_lea.sflag [#allocation8], 1
    %13 = vsyncpa %s12, 0
    %14 = vsyncpa [#allocation10], 0
    %s15 = scalar_lea.sflag [#allocation10], 1
    %16 = vsyncpa %s15, 0
    %17 = vsyncpa [#allocation13], 0
    loop: start=0, step=1, limit=4
    $region2: #{tpu_custom_call.1} parent=1 // loop_pre_header
      _
    $region3: #{tpu_custom_call.1} parent=1 // loop_header
      %s19 = sphi 0, %s23
      %p20 = scmp.ge.s32.totalorder %s19, 4
      %s26 = sphi 0, %s45
      %s27 = sphi 0, %s41
      %s28 = sphi 0, %s37
      %s29 = sphi 0, %s26
      %s30 = sphi 0, %s27
      %s31 = sphi 0, %s28
      %s32 = sphi 0, %s29
      %s33 = sphi 0, %s30
      %s34 = sphi 0, %s31
      %s50 = sphi 0, %s52
      %s53 = sphi 0, %s50
      %s54 = sphi 0, %s53
      %s70 = sphi 0, %s54
      %s82 = sphi 0, %s84
      %s85 = sphi 0, %s82
      %s86 = sphi 0, %s85
      %s102 = sphi 0, %s86
      %s106 = sphi 0, %s106
      %s108 = sphi 0, %s106
      %s109 = sphi 0, %s108
      %s123 = sphi 0, %s109
      %s127 = sphi 0, %s127
      %s129 = sphi 0, %s127
      %s130 = sphi 0, %s129
      %s144 = sphi 0, %s130
      %s148 = sphi 0, %s148
      %s150 = sphi 0, %s148
      %s151 = sphi 0, %s150
      %s165 = sphi 0, %s151
      %s169 = sphi 0, %s169
      %s171 = sphi 0, %s169
      %s172 = sphi 0, %s171
      %s186 = sphi 0, %s172
      %s194 = sphi 0, %s196
      %s197 = sphi 0, %s194
      %s198 = sphi 0, %s197
      %s214 = sphi 0, %s198
    $region4: #{tpu_custom_call.1} parent=1 // loop_header_branch
      %22 = sbr.rel (%p20) target = $region8
    $region5: #{tpu_custom_call.1} parent=1 // loop_body
      %s24 = ssub.s32 %s19, 1
      %s25 = ssub.s32 %s19, 2
      %s35 = sadd.s32 1, %s28
      %p36 = scmp.ge.s32.totalorder %s35, 1
      %s37 = scalar_select %p36, 0, %s35
      %s38 = sadd.s32 1, %s27
      %s39 = scalar_select %p36, %s38, %s27
      %p40 = scmp.ge.s32.totalorder %s39, 1
      %s41 = scalar_select %p40, 0, %s39
      %s42 = sadd.s32 1, %s26
      %s43 = scalar_select %p40, %s42, %s26
      %p44 = scmp.ge.s32.totalorder %s43, 2
      %s45 = scalar_select %p44, 0, %s43
      %s46 = ssub.s32 %s26, %s45
      %s47 = ssub.s32 %s27, %s41
      %s48 = sor.u32 %s46, %s47
      %p49 = scmp.eq.s32.totalorder %s48, 0
      %s51 = sadd.s32 %s50, 1
      %s52 = scalar_select %p49, %s50, %s51
      %p55 = pneg %p49
      %p56 = scmp.eq.s32.totalorder %s19, 1
      %p57 = por %p55, %p56
      %p58 = scmp.ne.s32.totalorder %s50, %s53
      %p59 = scmp.eq.s32.totalorder %s19, 0
      %p60 = por %p58, %p59
      %p61 = scmp.ne.s32.totalorder %s50, %s53
      %p62 = scmp.eq.s32.totalorder %s24, 1
      %p63 = por %p61, %p62
      %p64 = scmp.ne.s32.totalorder %s53, %s54
      %p65 = scmp.eq.s32.totalorder %s24, 0
      %p66 = por %p64, %p65
      %p67 = scmp.ne.s32.totalorder %s53, %s54
      %p68 = scmp.eq.s32.totalorder %s25, 1
      %p69 = por %p67, %p68
      %p71 = scmp.ne.s32.totalorder %s54, %s70
      %p72 = scmp.eq.s32.totalorder %s25, 0
      %p73 = por %p71, %p72
      %p74 = scmp.eq.s32.totalorder %s27, 0
      %s75 = scalar_select %p74, %s28, 0
      %p76 = scmp.eq.s32.totalorder %s41, 0
      %s77 = scalar_select %p76, %s37, 0
      %s78 = ssub.s32 %s26, %s45
      %s79 = ssub.s32 %s75, %s77
      %s80 = sor.u32 %s78, %s79
      %p81 = scmp.eq.s32.totalorder %s80, 0
      %s83 = sadd.s32 %s82, 1
      %s84 = scalar_select %p81, %s82, %s83
      %p87 = pneg %p81
      %p88 = scmp.eq.s32.totalorder %s19, 1
      %p89 = por %p87, %p88
      %p90 = scmp.ne.s32.totalorder %s82, %s85
      %p91 = scmp.eq.s32.totalorder %s19, 0
      %p92 = por %p90, %p91
      %p93 = scmp.ne.s32.totalorder %s82, %s85
      %p94 = scmp.eq.s32.totalorder %s24, 1
      %p95 = por %p93, %p94
      %p96 = scmp.ne.s32.totalorder %s85, %s86
      %p97 = scmp.eq.s32.totalorder %s24, 0
      %p98 = por %p96, %p97
      %p99 = scmp.ne.s32.totalorder %s85, %s86
      %p100 = scmp.eq.s32.totalorder %s25, 1
      %p101 = por %p99, %p100
      %p103 = scmp.ne.s32.totalorder %s86, %s102
      %p104 = scmp.eq.s32.totalorder %s25, 0
      %p105 = por %p103, %p104
      %s107 = sadd.s32 %s106, 1
      %p110 = scmp.eq.s32.totalorder %s19, 1
      %p111 = scmp.ne.s32.totalorder %s106, %s108
      %p112 = scmp.eq.s32.totalorder %s19, 0
      %p113 = por %p111, %p112
      %p114 = scmp.ne.s32.totalorder %s106, %s108
      %p115 = scmp.eq.s32.totalorder %s24, 1
      %p116 = por %p114, %p115
      %p117 = scmp.ne.s32.totalorder %s108, %s109
      %p118 = scmp.eq.s32.totalorder %s24, 0
      %p119 = por %p117, %p118
      %p120 = scmp.ne.s32.totalorder %s108, %s109
      %p121 = scmp.eq.s32.totalorder %s25, 1
      %p122 = por %p120, %p121
      %p124 = scmp.ne.s32.totalorder %s109, %s123
      %p125 = scmp.eq.s32.totalorder %s25, 0
      %p126 = por %p124, %p125
      %s128 = sadd.s32 %s127, 1
      %p131 = scmp.eq.s32.totalorder %s19, 1
      %p132 = scmp.ne.s32.totalorder %s127, %s129
      %p133 = scmp.eq.s32.totalorder %s19, 0
      %p134 = por %p132, %p133
      %p135 = scmp.ne.s32.totalorder %s127, %s129
      %p136 = scmp.eq.s32.totalorder %s24, 1
      %p137 = por %p135, %p136
      %p138 = scmp.ne.s32.totalorder %s129, %s130
      %p139 = scmp.eq.s32.totalorder %s24, 0
      %p140 = por %p138, %p139
      %p141 = scmp.ne.s32.totalorder %s129, %s130
      %p142 = scmp.eq.s32.totalorder %s25, 1
      %p143 = por %p141, %p142
      %p145 = scmp.ne.s32.totalorder %s130, %s144
      %p146 = scmp.eq.s32.totalorder %s25, 0
      %p147 = por %p145, %p146
      %s149 = sadd.s32 %s148, 1
      %p152 = scmp.eq.s32.totalorder %s19, 1
      %p153 = scmp.ne.s32.totalorder %s148, %s150
      %p154 = scmp.eq.s32.totalorder %s19, 0
      %p155 = por %p153, %p154
      %p156 = scmp.ne.s32.totalorder %s148, %s150
      %p157 = scmp.eq.s32.totalorder %s24, 1
      %p158 = por %p156, %p157
      %p159 = scmp.ne.s32.totalorder %s150, %s151
      %p160 = scmp.eq.s32.totalorder %s24, 0
      %p161 = por %p159, %p160
      %p162 = scmp.ne.s32.totalorder %s150, %s151
      %p163 = scmp.eq.s32.totalorder %s25, 1
      %p164 = por %p162, %p163
      %p166 = scmp.ne.s32.totalorder %s151, %s165
      %p167 = scmp.eq.s32.totalorder %s25, 0
      %p168 = por %p166, %p167
      %s170 = sadd.s32 %s169, 1
      %p173 = scmp.eq.s32.totalorder %s19, 1
      %p174 = scmp.ne.s32.totalorder %s169, %s171
      %p175 = scmp.eq.s32.totalorder %s19, 0
      %p176 = por %p174, %p175
      %p177 = scmp.ne.s32.totalorder %s169, %s171
      %p178 = scmp.eq.s32.totalorder %s24, 1
      %p179 = por %p177, %p178
      %p180 = scmp.ne.s32.totalorder %s171, %s172
      %p181 = scmp.eq.s32.totalorder %s24, 0
      %p182 = por %p180, %p181
      %p183 = scmp.ne.s32.totalorder %s171, %s172
      %p184 = scmp.eq.s32.totalorder %s25, 1
      %p185 = por %p183, %p184
      %p187 = scmp.ne.s32.totalorder %s172, %s186
      %p188 = scmp.eq.s32.totalorder %s25, 0
      %p189 = por %p187, %p188
      %s190 = ssub.s32 %s26, %s45
      %s191 = ssub.s32 %s27, %s41
      %s192 = sor.u32 %s190, %s191
      %p193 = scmp.eq.s32.totalorder %s192, 0
      %s195 = sadd.s32 %s194, 1
      %s196 = scalar_select %p193, %s194, %s195
      %p199 = pneg %p193
      %p200 = scmp.eq.s32.totalorder %s19, 1
      %p201 = por %p199, %p200
      %p202 = scmp.ne.s32.totalorder %s194, %s197
      %p203 = scmp.eq.s32.totalorder %s19, 0
      %p204 = por %p202, %p203
      %p205 = scmp.ne.s32.totalorder %s194, %s197
      %p206 = scmp.eq.s32.totalorder %s24, 1
      %p207 = por %p205, %p206
      %p208 = scmp.ne.s32.totalorder %s197, %s198
      %p209 = scmp.eq.s32.totalorder %s24, 0
      %p210 = por %p208, %p209
      %p211 = scmp.ne.s32.totalorder %s197, %s198
      %p212 = scmp.eq.s32.totalorder %s25, 1
      %p213 = por %p211, %p212
      %p215 = scmp.ne.s32.totalorder %s198, %s214
      %p216 = scmp.eq.s32.totalorder %s25, 0
      %p217 = por %p215, %p216
      %p218 = scmp.le.s32.totalorder 1, %s19
      %p219 = scmp.lt.s32.totalorder %s19, 3
      %p220 = pnand %p218, %p219
      %p221 = pneg %p220
      // Predicated region
      $region9: #{tpu_custom_call.1} parent=5 // pred_check
        _
      $region10: #{tpu_custom_call.1} parent=5 // pred_check_branch
        %223 = sbr.rel (%p220) target = $region12
      $region11: #{tpu_custom_call.1} parent=5 // pred_region
        %s224 = ssub.s32 %s19, 1
        // Predicated region
        $region13: #{tpu_custom_call.1} parent=11 // pred_check
          %p225 = pneg %p119
        $region14: #{tpu_custom_call.1} parent=11 // pred_check_branch
          %227 = sbr.rel (%p225) target = $region16
        $region15: #{tpu_custom_call.1} parent=11 // pred_region
          %s229 = ssub.s32 256, 256
          %230 = vsyncadd [#allocation10], %s229
          %s232 = sshll.u32 [#allocation11], 4
          %s233 = int_to_ptr.vmem [resolvable:$true] %s232
          %235 = dma.hbm_to_vmem [thread:$0]  %s2, 256, %s233, [#allocation10]
        $region16: #{tpu_custom_call.1} parent=11 // pred_fallthru
          _
        // Predicated region
        $region17: #{tpu_custom_call.1} parent=11 // pred_check
          %p236 = pneg %p140
        $region18: #{tpu_custom_call.1} parent=11 // pred_check_branch
          %238 = sbr.rel (%p236) target = $region20
        $region19: #{tpu_custom_call.1} parent=11 // pred_region
          %s240 = ssub.s32 512, 512
          %241 = vsyncadd [#allocation13], %s240
          %s243 = sshll.u32 [#allocation12], 4
          %s244 = int_to_ptr.vmem [resolvable:$true] %s243
          %246 = dma.hbm_to_vmem [thread:$0]  %s3, 512, %s244, [#allocation13]
        $region20: #{tpu_custom_call.1} parent=11 // pred_fallthru
          _
        // Predicated region
        $region21: #{tpu_custom_call.1} parent=11 // pred_check
          %p247 = pneg %p161
        $region22: #{tpu_custom_call.1} parent=11 // pred_check_branch
          %249 = sbr.rel (%p247) target = $region24
        $region23: #{tpu_custom_call.1} parent=11 // pred_region
          _
        $region24: #{tpu_custom_call.1} parent=11 // pred_fallthru
          _
        // Predicated region
        $region25: #{tpu_custom_call.1} parent=11 // pred_check
          %p250 = pneg %p182
        $region26: #{tpu_custom_call.1} parent=11 // pred_check_branch
          %252 = sbr.rel (%p250) target = $region28
        $region27: #{tpu_custom_call.1} parent=11 // pred_region
          _
        $region28: #{tpu_custom_call.1} parent=11 // pred_fallthru
          _
      $region12: #{tpu_custom_call.1} parent=5 // pred_fallthru
        _
      %p253 = scmp.lt.s32.totalorder %s19, 2
      // Predicated region
      $region29: #{tpu_custom_call.1} parent=5 // pred_check
        %p254 = pneg %p253
      $region30: #{tpu_custom_call.1} parent=5 // pred_check_branch
        %256 = sbr.rel (%p254) target = $region32
      $region31: #{tpu_custom_call.1} parent=5 // pred_region
        // Predicated region
        $region33: #{tpu_custom_call.1} parent=31 // pred_check
          %p257 = pneg %p60
        $region34: #{tpu_custom_call.1} parent=31 // pred_check_branch
          %259 = sbr.rel (%p257) target = $region36
        $region35: #{tpu_custom_call.1} parent=31 // pred_region
          %s260 = sand.u32 %s50, 1
          %s261 = scalar_lea.sflag [#allocation8], %s260
          %s262 = sand.u32 %s50, 1
          %s263 = smul.addr %s262, 16
          %s264 = scalar_lea.vmem [#allocation7], %s263
          %s265 = smul.u32 2, %s27
          %s267 = ssub.s32 256, 256
          %268 = vsyncadd %s261, %s267
          %s269 = smul.addr %s26, 2
          %s270 = sadd.s32 %s265, %s269
          %s271 = smul.addr %s270, 128
          %s272 = scalar_lea.hbm %s0, %s271
          %s274 = sshll.u32 %s264, 4
          %s275 = int_to_ptr.vmem [resolvable:$true] %s274
          %277 = dma.hbm_to_vmem [thread:$0]  %s272, 256, %s275, %s261
        $region36: #{tpu_custom_call.1} parent=31 // pred_fallthru
          _
        // Predicated region
        $region37: #{tpu_custom_call.1} parent=31 // pred_check
          %p278 = pneg %p92
        $region38: #{tpu_custom_call.1} parent=31 // pred_check_branch
          %280 = sbr.rel (%p278) target = $region40
        $region39: #{tpu_custom_call.1} parent=31 // pred_region
          %s281 = sand.u32 %s19, 1
          %s282 = scalar_lea.sflag [#allocation10], %s281
          %s283 = sand.u32 %s82, 1
          %s284 = smul.addr %s283, 16
          %s285 = scalar_lea.vmem [#allocation9], %s284
          %p286 = scmp.eq.s32.totalorder %s27, 0
          %s287 = scalar_select %p286, %s28, 0
          %s288 = smul.u32 2, %s287
          %s290 = ssub.s32 256, 256
          %291 = vsyncadd %s282, %s290
          %s292 = smul.addr %s26, 2
          %s293 = sadd.s32 %s288, %s292
          %s294 = smul.addr %s293, 128
          %s295 = scalar_lea.hbm %s1, %s294
          %s297 = sshll.u32 %s285, 4
          %s298 = int_to_ptr.vmem [resolvable:$true] %s297
          %300 = dma.hbm_to_vmem [thread:$0]  %s295, 256, %s298, %s282
        $region40: #{tpu_custom_call.1} parent=31 // pred_fallthru
          _
      $region32: #{tpu_custom_call.1} parent=5 // pred_fallthru
        _
      %p301 = scmp.le.s32.totalorder 1, %s19
      %p302 = scmp.lt.s32.totalorder %s19, 3
      %p303 = pnand %p301, %p302
      %p304 = pneg %p303
      // Predicated region
      $region41: #{tpu_custom_call.1} parent=5 // pred_check
        _
      $region42: #{tpu_custom_call.1} parent=5 // pred_check_branch
        %306 = sbr.rel (%p303) target = $region44
      $region43: #{tpu_custom_call.1} parent=5 // pred_region
        %s307 = ssub.s32 %s19, 1
        %s308 = sand.u32 %s53, 1
        %s309 = scalar_lea.sflag [#allocation8], %s308
        %s310 = sand.u32 %s53, 1
        %s311 = smul.addr %s310, 16
        %s312 = scalar_lea.vmem [#allocation7], %s311
        // Predicated region
        $region45: #{tpu_custom_call.1} parent=43 // pred_check
          %p313 = pneg %p66
        $region46: #{tpu_custom_call.1} parent=43 // pred_check_branch
          %315 = sbr.rel (%p313) target = $region48
        $region47: #{tpu_custom_call.1} parent=43 // pred_region
          %316 = dma.done %s309, 256
        $region48: #{tpu_custom_call.1} parent=43 // pred_fallthru
          _
        %s317 = sand.u32 %s24, 1
        %s318 = scalar_lea.sflag [#allocation10], %s317
        %s319 = sand.u32 %s85, 1
        %s320 = smul.addr %s319, 16
        %s321 = scalar_lea.vmem [#allocation9], %s320
        // Predicated region
        $region49: #{tpu_custom_call.1} parent=43 // pred_check
          %p322 = pneg %p98
        $region50: #{tpu_custom_call.1} parent=43 // pred_check_branch
          %324 = sbr.rel (%p322) target = $region52
        $region51: #{tpu_custom_call.1} parent=43 // pred_region
          %325 = dma.done %s318, 256
        $region52: #{tpu_custom_call.1} parent=43 // pred_fallthru
          _
        // Predicated region
        $region53: #{tpu_custom_call.1} parent=43 // pred_check
          %p326 = pneg %p119
        $region54: #{tpu_custom_call.1} parent=43 // pred_check_branch
          %328 = sbr.rel (%p326) target = $region56
        $region55: #{tpu_custom_call.1} parent=43 // pred_region
          %329 = dma.done [#allocation10], 256
        $region56: #{tpu_custom_call.1} parent=43 // pred_fallthru
          _
        // Predicated region
        $region57: #{tpu_custom_call.1} parent=43 // pred_check
          %p330 = pneg %p140
        $region58: #{tpu_custom_call.1} parent=43 // pred_check_branch
          %332 = sbr.rel (%p330) target = $region60
        $region59: #{tpu_custom_call.1} parent=43 // pred_region
          %333 = dma.done [#allocation13], 512
        $region60: #{tpu_custom_call.1} parent=43 // pred_fallthru
          _
        %s334 = sand.u32 %s53, 1
        %s335 = scalar_lea.sflag [#allocation8], %s334
        %s336 = sand.u32 %s53, 1
        %s337 = smul.addr %s336, 16
        %s338 = scalar_lea.vmem [#allocation7], %s337
        %p339 = pneg %p66
        %p340 = pneg %p63
        %s341 = sand.u32 %s24, 1
        %s342 = scalar_lea.sflag [#allocation10], %s341
        %s343 = sand.u32 %s85, 1
        %s344 = smul.addr %s343, 16
        %s345 = scalar_lea.vmem [#allocation9], %s344
        %p346 = pneg %p98
        %p347 = pneg %p95
        %p348 = pneg %p119
        %p349 = pneg %p116
        %p350 = pneg %p140
        %p351 = pneg %p137
        %p352 = pneg %p161
        %p353 = pneg %p158
        %p354 = pneg %p182
        %p355 = pneg %p179
        %p356 = pneg %p210
        %p357 = pneg %p207
        %s358 = smul.u32 32, %s30
        %p359 = scmp.lt.s32.totalorder %s29, 1
        %s360 = scalar_select %p359, %s29, 1
        %p361 = scmp.lt.s32.totalorder %s358, 31
        %s362 = scalar_select %p361, %s358, 31
        %s363 = smul.addr %s360, 32
        %s364 = sadd.s32 %s362, %s363
        %s365 = smul.addr %s364, 8
        %s366 = scalar_lea.vmem %s6, %s365
        %s367 = smul.u32 2, %s30
        %p368 = scmp.eq.s32.totalorder %s30, 0
        %s369 = scalar_select %p368, %s31, 0
        %s370 = smul.u32 2, %s369
        %s371 = smul.u32 32, %s30
        %p372 = scmp.lt.s32.totalorder %s29, 1
        %s373 = scalar_select %p372, %s29, 1
        %p374 = scmp.lt.s32.totalorder %s371, 31
        %s375 = scalar_select %p374, %s371, 31
        %s376 = smul.addr %s373, 32
        %s377 = sadd.s32 %s375, %s376
        %s378 = smul.addr %s377, 8
        %s379 = scalar_lea.vmem %s6, %s378
        %s380 = smul.u32 32, %s30
        %p381 = scmp.eq.s32.totalorder %s31, 0
        // Predicated region
        $region61: #{tpu_custom_call.1} parent=43 // pred_check
          %p382 = pneg %p381
        $region62: #{tpu_custom_call.1} parent=43 // pred_check_branch
          %384 = sbr.rel (%p382) target = $region64
        $region63: #{tpu_custom_call.1} parent=43 // pred_region
          %v385 = vld [vmem:[%s312] sm:$0xff]
          %v386 = vld [vmem:[%s312 + $0x8] sm:$0xff]
          %v387 = vld [vmem:[#allocation11] sm:$0xff]
          %v388 = vld [vmem:[#allocation11 + $0x8] sm:$0xff]
          %v389 = vld [vmem:[%s4] sm:$0x3]
          %v391 = vlaneseq
          %v392 = vshrl.u32 %v391, 7
          %v393 = vsub.s32 0, %v392
          %v394 = vrot.slane %v389, %v393
          %v395 = vlaneseq
          %v396 = vshrl.u32 %v395, 7
          %v397 = vsub.s32 1, %v396
          %v398 = vrot.slane %v389, %v397
          %401 = vxpose.xlu0.b32.start [1/16] %v385, 128
          %402 = vxpose.xlu0.b32.cont [2/16] 0.0, 128
          %403 = vxpose.xlu0.b32.cont [3/16] 0.0, 128
          %404 = vxpose.xlu0.b32.cont [4/16] 0.0, 128
          %405 = vxpose.xlu0.b32.cont [5/16] 0.0, 128
          %406 = vxpose.xlu0.b32.cont [6/16] 0.0, 128
          %407 = vxpose.xlu0.b32.cont [7/16] 0.0, 128
          %408 = vxpose.xlu0.b32.cont [8/16] 0.0, 128
          %409 = vxpose.xlu0.b32.cont [9/16] 0.0, 128
          %410 = vxpose.xlu0.b32.cont [10/16] 0.0, 128
          %411 = vxpose.xlu0.b32.cont [11/16] 0.0, 128
          %412 = vxpose.xlu0.b32.cont [12/16] 0.0, 128
          %413 = vxpose.xlu0.b32.cont [13/16] 0.0, 128
          %414 = vxpose.xlu0.b32.cont [14/16] 0.0, 128
          %415 = vxpose.xlu0.b32.cont [15/16] 0.0, 128
          %416 = vxpose.xlu0.b32.end [16/16] 0.0, 128
          %v417 = vpop.trf.xlu0
          %v418 = vpop.trf.xlu0
          %v419 = vpop.trf.xlu0
          %v420 = vpop.trf.xlu0
          %v421 = vpop.trf.xlu0
          %v422 = vpop.trf.xlu0
          %v423 = vpop.trf.xlu0
          %v424 = vpop.trf.xlu0
          %v425 = vpop.trf.xlu0
          %v426 = vpop.trf.xlu0
          %v427 = vpop.trf.xlu0
          %v428 = vpop.trf.xlu0
          %v429 = vpop.trf.xlu0
          %v430 = vpop.trf.xlu0
          %v431 = vpop.trf.xlu0
          %v432 = vpop.trf.xlu0
          %433 = vxpose.xlu0.b32.start [1/16] %v386, 128
          %434 = vxpose.xlu0.b32.cont [2/16] 0.0, 128
          %435 = vxpose.xlu0.b32.cont [3/16] 0.0, 128
          %436 = vxpose.xlu0.b32.cont [4/16] 0.0, 128
          %437 = vxpose.xlu0.b32.cont [5/16] 0.0, 128
          %438 = vxpose.xlu0.b32.cont [6/16] 0.0, 128
          %439 = vxpose.xlu0.b32.cont [7/16] 0.0, 128
          %440 = vxpose.xlu0.b32.cont [8/16] 0.0, 128
          %441 = vxpose.xlu0.b32.cont [9/16] 0.0, 128
          %442 = vxpose.xlu0.b32.cont [10/16] 0.0, 128
          %443 = vxpose.xlu0.b32.cont [11/16] 0.0, 128
          %444 = vxpose.xlu0.b32.cont [12/16] 0.0, 128
          %445 = vxpose.xlu0.b32.cont [13/16] 0.0, 128
          %446 = vxpose.xlu0.b32.cont [14/16] 0.0, 128
          %447 = vxpose.xlu0.b32.cont [15/16] 0.0, 128
          %448 = vxpose.xlu0.b32.end [16/16] 0.0, 128
          %v449 = vpop.trf.xlu0
          %v450 = vpop.trf.xlu0
          %v451 = vpop.trf.xlu0
          %v452 = vpop.trf.xlu0
          %v453 = vpop.trf.xlu0
          %v454 = vpop.trf.xlu0
          %v455 = vpop.trf.xlu0
          %v456 = vpop.trf.xlu0
          %v457 = vpop.trf.xlu0
          %v458 = vpop.trf.xlu0
          %v459 = vpop.trf.xlu0
          %v460 = vpop.trf.xlu0
          %v461 = vpop.trf.xlu0
          %v462 = vpop.trf.xlu0
          %v463 = vpop.trf.xlu0
          %v464 = vpop.trf.xlu0
          %vm465 = vcmask 64512
          %v467 = vsel %vm465, %v417, 0
          %v470 = vsel %vm465, %v418, 0
          %v473 = vsel %vm465, %v419, 0
          %v476 = vsel %vm465, %v420, 0
          %v479 = vsel %vm465, %v421, 0
          %v482 = vsel %vm465, %v422, 0
          %v485 = vsel %vm465, %v423, 0
          %v488 = vsel %vm465, %v424, 0
          %v491 = vsel %vm465, %v425, 0
          %v494 = vsel %vm465, %v426, 0
          %v497 = vsel %vm465, %v427, 0
          %v500 = vsel %vm465, %v428, 0
          %v503 = vsel %vm465, %v429, 0
          %v506 = vsel %vm465, %v430, 0
          %v509 = vsel %vm465, %v431, 0
          %v512 = vsel %vm465, %v432, 0
          %v515 = vsel %vm465, %v449, 0
          %v518 = vsel %vm465, %v450, 0
          %v521 = vsel %vm465, %v451, 0
          %v524 = vsel %vm465, %v452, 0
          %v527 = vsel %vm465, %v453, 0
          %v530 = vsel %vm465, %v454, 0
          %v533 = vsel %vm465, %v455, 0
          %v536 = vsel %vm465, %v456, 0
          %v539 = vsel %vm465, %v457, 0
          %v542 = vsel %vm465, %v458, 0
          %v545 = vsel %vm465, %v459, 0
          %v548 = vsel %vm465, %v460, 0
          %v551 = vsel %vm465, %v461, 0
          %v554 = vsel %vm465, %v462, 0
          %v557 = vsel %vm465, %v463, 0
          %v560 = vsel %vm465, %v464, 0
          %562 = vmatprep.subr.mxu0 %v388
          %563 = vmatpush1.msra.mxu0 %v387
          %564 = vmatprep.subr.mxu0 0.0
          %565 = vmatpush1.msra.mxu0 0.0
          %566 = vmatprep.subr.mxu0 0.0
          %567 = vmatpush1.msra.mxu0 0.0
          %568 = vmatprep.subr.mxu0 0.0
          %569 = vmatpush1.msra.mxu0 0.0
          %570 = vmatprep.subr.mxu0 0.0
          %571 = vmatpush1.msra.mxu0 0.0
          %572 = vmatprep.subr.mxu0 0.0
          %573 = vmatpush1.msra.mxu0 0.0
          %574 = vmatprep.subr.mxu0 0.0
          %575 = vmatpush1.msra.mxu0 0.0
          %576 = vmatprep.subr.mxu0 0.0
          %577 = vmatpush1.msra.mxu0 0.0
          %578 = vmatprep.subr.mxu0 0.0
          %579 = vmatpush1.msra.mxu0 0.0
          %580 = vmatprep.subr.mxu0 0.0
          %581 = vmatpush1.msra.mxu0 0.0
          %582 = vmatprep.subr.mxu0 0.0
          %583 = vmatpush1.msra.mxu0 0.0
          %584 = vmatprep.subr.mxu0 0.0
          %585 = vmatpush1.msra.mxu0 0.0
          %586 = vmatprep.subr.mxu0 0.0
          %587 = vmatpush1.msra.mxu0 0.0
          %588 = vmatprep.subr.mxu0 0.0
          %589 = vmatpush1.msra.mxu0 0.0
          %590 = vmatprep.subr.mxu0 0.0
          %591 = vmatpush1.msra.mxu0 0.0
          %592 = vmatprep.subr.mxu0 0.0
          %593 = vmatpush1.msra.mxu0 0.0
          %594 = vmatprep.subr.mxu0 0.0
          %595 = vmatpush1.msra.mxu0 0.0
          %596 = vmatprep.subr.mxu0 0.0
          %597 = vmatpush1.msra.mxu0 0.0
          %598 = vmatprep.subr.mxu0 0.0
          %599 = vmatpush1.msra.mxu0 0.0
          %600 = vmatprep.subr.mxu0 0.0
          %601 = vmatpush1.msra.mxu0 0.0
          %602 = vmatprep.subr.mxu0 0.0
          %603 = vmatpush1.msra.mxu0 0.0
          %604 = vmatprep.subr.mxu0 0.0
          %605 = vmatpush1.msra.mxu0 0.0
          %606 = vmatprep.subr.mxu0 0.0
          %607 = vmatpush1.msra.mxu0 0.0
          %608 = vmatprep.subr.mxu0 0.0
          %609 = vmatpush1.msra.mxu0 0.0
          %610 = vmatprep.subr.mxu0 0.0
          %611 = vmatpush1.msra.mxu0 0.0
          %612 = vmatprep.subr.mxu0 0.0
          %613 = vmatpush1.msra.mxu0 0.0
          %614 = vmatprep.subr.mxu0 0.0
          %615 = vmatpush1.msra.mxu0 0.0
          %616 = vmatprep.subr.mxu0 0.0
          %617 = vmatpush1.msra.mxu0 0.0
          %618 = vmatprep.subr.mxu0 0.0
          %619 = vmatpush1.msra.mxu0 0.0
          %620 = vmatprep.subr.mxu0 0.0
          %621 = vmatpush1.msra.mxu0 0.0
          %622 = vmatprep.subr.mxu0 0.0
          %623 = vmatpush1.msra.mxu0 0.0
          %624 = vmatprep.subr.mxu0 0.0
          %625 = vmatpush1.msra.mxu0 0.0
          %626 = vmatprep.mubr.f32.mxu0 0.0
          %627 = vmatmul.mubr.f32.gmra.mrb[0].mxu0 %v467
          %v628 = vpop.f32.mrb[0].mxu0
          %v629 = vadd.f32 %v394, %v628
          %v630 = vpop.f32.mrb[0].mxu0
          %v631 = vadd.f32 %v398, %v630
          %632 = vmatprep.mubr.f32.mxu0 0.0
          %633 = vmatmul.mubr.f32.gmra.mrb[0].mxu0 %v470
          %v634 = vpop.f32.mrb[0].mxu0
          %v635 = vadd.f32 %v394, %v634
          %v636 = vpop.f32.mrb[0].mxu0
          %v637 = vadd.f32 %v398, %v636
          %638 = vmatprep.mubr.f32.mxu0 0.0
          %639 = vmatmul.mubr.f32.gmra.mrb[0].mxu0 %v473
          %v640 = vpop.f32.mrb[0].mxu0
          %v641 = vadd.f32 %v394, %v640
          %v642 = vpop.f32.mrb[0].mxu0
          %v643 = vadd.f32 %v398, %v642
          %644 = vmatprep.mubr.f32.mxu0 0.0
          %645 = vmatmul.mubr.f32.gmra.mrb[0].mxu0 %v476
          %v646 = vpop.f32.mrb[0].mxu0
          %v647 = vadd.f32 %v394, %v646
          %v648 = vpop.f32.mrb[0].mxu0
          %v649 = vadd.f32 %v398, %v648
          %650 = vmatprep.mubr.f32.mxu0 0.0
          %651 = vmatmul.mubr.f32.gmra.mrb[0].mxu0 %v479
          %v652 = vpop.f32.mrb[0].mxu0
          %v653 = vadd.f32 %v394, %v652
          %v654 = vpop.f32.mrb[0].mxu0
          %v655 = vadd.f32 %v398, %v654
          %656 = vmatprep.mubr.f32.mxu0 0.0
          %657 = vmatmul.mubr.f32.gmra.mrb[0].mxu0 %v482
          %v658 = vpop.f32.mrb[0].mxu0
          %v659 = vadd.f32 %v394, %v658
          %v660 = vpop.f32.mrb[0].mxu0
          %v661 = vadd.f32 %v398, %v660
          %662 = vmatprep.mubr.f32.mxu0 0.0
          %663 = vmatmul.mubr.f32.gmra.mrb[0].mxu0 %v485
          %v664 = vpop.f32.mrb[0].mxu0
          %v665 = vadd.f32 %v394, %v664
          %v666 = vpop.f32.mrb[0].mxu0
          %v667 = vadd.f32 %v398, %v666
          %668 = vmatprep.mubr.f32.mxu0 0.0
          %669 = vmatmul.mubr.f32.gmra.mrb[0].mxu0 %v488
          %v670 = vpop.f32.mrb[0].mxu0
          %v671 = vadd.f32 %v394, %v670
          %v672 = vpop.f32.mrb[0].mxu0
          %v673 = vadd.f32 %v398, %v672
          %674 = vmatprep.mubr.f32.mxu0 0.0
          %675 = vmatmul.mubr.f32.gmra.mrb[0].mxu0 %v491
          %v676 = vpop.f32.mrb[0].mxu0
          %v677 = vadd.f32 %v394, %v676
          %v678 = vpop.f32.mrb[0].mxu0
          %v679 = vadd.f32 %v398, %v678
          %680 = vmatprep.mubr.f32.mxu0 0.0
          %681 = vmatmul.mubr.f32.gmra.mrb[0].mxu0 %v494
          %v682 = vpop.f32.mrb[0].mxu0
          %v683 = vadd.f32 %v394, %v682
          %v684 = vpop.f32.mrb[0].mxu0
          %v685 = vadd.f32 %v398, %v684
          %686 = vmatprep.mubr.f32.mxu0 0.0
          %687 = vmatmul.mubr.f32.gmra.mrb[0].mxu0 %v497
          %v688 = vpop.f32.mrb[0].mxu0
          %v689 = vadd.f32 %v394, %v688
          %v690 = vpop.f32.mrb[0].mxu0
          %v691 = vadd.f32 %v398, %v690
          %692 = vmatprep.mubr.f32.mxu0 0.0
          %693 = vmatmul.mubr.f32.gmra.mrb[0].mxu0 %v500
          %v694 = vpop.f32.mrb[0].mxu0
          %v695 = vadd.f32 %v394, %v694
          %v696 = vpop.f32.mrb[0].mxu0
          %v697 = vadd.f32 %v398, %v696
          %698 = vmatprep.mubr.f32.mxu0 0.0
          %699 = vmatmul.mubr.f32.gmra.mrb[0].mxu0 %v503
          %v700 = vpop.f32.mrb[0].mxu0
          %v701 = vadd.f32 %v394, %v700
          %v702 = vpop.f32.mrb[0].mxu0
          %v703 = vadd.f32 %v398, %v702
          %704 = vmatprep.mubr.f32.mxu0 0.0
          %705 = vmatmul.mubr.f32.gmra.mrb[0].mxu0 %v506
          %v706 = vpop.f32.mrb[0].mxu0
          %v707 = vadd.f32 %v394, %v706
          %v708 = vpop.f32.mrb[0].mxu0
          %v709 = vadd.f32 %v398, %v708
          %710 = vmatprep.mubr.f32.mxu0 0.0
          %711 = vmatmul.mubr.f32.gmra.mrb[0].mxu0 %v509
          %v712 = vpop.f32.mrb[0].mxu0
          %v713 = vadd.f32 %v394, %v712
          %v714 = vpop.f32.mrb[0].mxu0
          %v715 = vadd.f32 %v398, %v714
          %716 = vmatprep.mubr.f32.mxu0 0.0
          %717 = vmatmul.mubr.f32.gmra.mrb[0].mxu0 %v512
          %v718 = vpop.f32.mrb[0].mxu0
          %v719 = vadd.f32 %v394, %v718
          %v720 = vpop.f32.mrb[0].mxu0
          %v721 = vadd.f32 %v398, %v720
          %722 = vmatprep.mubr.f32.mxu0 0.0
          %723 = vmatmul.mubr.f32.gmra.mrb[0].mxu0 %v515
          %v724 = vpop.f32.mrb[0].mxu0
          %v725 = vadd.f32 %v394, %v724
          %v726 = vpop.f32.mrb[0].mxu0
          %v727 = vadd.f32 %v398, %v726
          %728 = vmatprep.mubr.f32.mxu0 0.0
          %729 = vmatmul.mubr.f32.gmra.mrb[0].mxu0 %v518
          %v730 = vpop.f32.mrb[0].mxu0
          %v731 = vadd.f32 %v394, %v730
          %v732 = vpop.f32.mrb[0].mxu0
          %v733 = vadd.f32 %v398, %v732
          %734 = vmatprep.mubr.f32.mxu0 0.0
          %735 = vmatmul.mubr.f32.gmra.mrb[0].mxu0 %v521
          %v736 = vpop.f32.mrb[0].mxu0
          %v737 = vadd.f32 %v394, %v736
          %v738 = vpop.f32.mrb[0].mxu0
          %v739 = vadd.f32 %v398, %v738
          %740 = vmatprep.mubr.f32.mxu0 0.0
          %741 = vmatmul.mubr.f32.gmra.mrb[0].mxu0 %v524
          %v742 = vpop.f32.mrb[0].mxu0
          %v743 = vadd.f32 %v394, %v742
          %v744 = vpop.f32.mrb[0].mxu0
          %v745 = vadd.f32 %v398, %v744
          %746 = vmatprep.mubr.f32.mxu0 0.0
          %747 = vmatmul.mubr.f32.gmra.mrb[0].mxu0 %v527
          %v748 = vpop.f32.mrb[0].mxu0
          %v749 = vadd.f32 %v394, %v748
          %v750 = vpop.f32.mrb[0].mxu0
          %v751 = vadd.f32 %v398, %v750
          %752 = vmatprep.mubr.f32.mxu0 0.0
          %753 = vmatmul.mubr.f32.gmra.mrb[0].mxu0 %v530
          %v754 = vpop.f32.mrb[0].mxu0
          %v755 = vadd.f32 %v394, %v754
          %v756 = vpop.f32.mrb[0].mxu0
          %v757 = vadd.f32 %v398, %v756
          %758 = vmatprep.mubr.f32.mxu0 0.0
          %759 = vmatmul.mubr.f32.gmra.mrb[0].mxu0 %v533
          %v760 = vpop.f32.mrb[0].mxu0
          %v761 = vadd.f32 %v394, %v760
          %v762 = vpop.f32.mrb[0].mxu0
          %v763 = vadd.f32 %v398, %v762
          %764 = vmatprep.mubr.f32.mxu0 0.0
          %765 = vmatmul.mubr.f32.gmra.mrb[0].mxu0 %v536
          %v766 = vpop.f32.mrb[0].mxu0
          %v767 = vadd.f32 %v394, %v766
          %v768 = vpop.f32.mrb[0].mxu0
          %v769 = vadd.f32 %v398, %v768
          %770 = vmatprep.mubr.f32.mxu0 0.0
          %771 = vmatmul.mubr.f32.gmra.mrb[0].mxu0 %v539
          %v772 = vpop.f32.mrb[0].mxu0
          %v773 = vadd.f32 %v394, %v772
          %v774 = vpop.f32.mrb[0].mxu0
          %v775 = vadd.f32 %v398, %v774
          %776 = vmatprep.mubr.f32.mxu0 0.0
          %777 = vmatmul.mubr.f32.gmra.mrb[0].mxu0 %v542
          %v778 = vpop.f32.mrb[0].mxu0
          %v779 = vadd.f32 %v394, %v778
          %v780 = vpop.f32.mrb[0].mxu0
          %v781 = vadd.f32 %v398, %v780
          %782 = vmatprep.mubr.f32.mxu0 0.0
          %783 = vmatmul.mubr.f32.gmra.mrb[0].mxu0 %v545
          %v784 = vpop.f32.mrb[0].mxu0
          %v785 = vadd.f32 %v394, %v784
          %v786 = vpop.f32.mrb[0].mxu0
          %v787 = vadd.f32 %v398, %v786
          %788 = vmatprep.mubr.f32.mxu0 0.0
          %789 = vmatmul.mubr.f32.gmra.mrb[0].mxu0 %v548
          %v790 = vpop.f32.mrb[0].mxu0
          %v791 = vadd.f32 %v394, %v790
          %v792 = vpop.f32.mrb[0].mxu0
          %v793 = vadd.f32 %v398, %v792
          %794 = vmatprep.mubr.f32.mxu0 0.0
          %795 = vmatmul.mubr.f32.gmra.mrb[0].mxu0 %v551
          %v796 = vpop.f32.mrb[0].mxu0
          %v797 = vadd.f32 %v394, %v796
          %v798 = vpop.f32.mrb[0].mxu0
          %v799 = vadd.f32 %v398, %v798
          %800 = vmatprep.mubr.f32.mxu0 0.0
          %801 = vmatmul.mubr.f32.gmra.mrb[0].mxu0 %v554
          %v802 = vpop.f32.mrb[0].mxu0
          %v803 = vadd.f32 %v394, %v802
          %v804 = vpop.f32.mrb[0].mxu0
          %v805 = vadd.f32 %v398, %v804
          %806 = vmatprep.mubr.f32.mxu0 0.0
          %807 = vmatmul.mubr.f32.gmra.mrb[0].mxu0 %v557
          %v808 = vpop.f32.mrb[0].mxu0
          %v809 = vadd.f32 %v394, %v808
          %v810 = vpop.f32.mrb[0].mxu0
          %v811 = vadd.f32 %v398, %v810
          %812 = vmatprep.mubr.f32.mxu0 0.0
          %813 = vmatmul.mubr.f32.gmra.mrb[0].mxu0 %v560
          %v814 = vpop.f32.mrb[0].mxu0
          %v815 = vadd.f32 %v394, %v814
          %v816 = vpop.f32.mrb[0].mxu0
          %v817 = vadd.f32 %v398, %v816
          %818 = vdwg.mxu0
          %819 = vst [vmem:[#allocation2] sm:$0xff] %v629
          %820 = vst [vmem:[#allocation2 + $0x8] sm:$0xff] %v631
          %821 = vst [vmem:[#allocation2 + $0x10] sm:$0xff] %v635
          %822 = vst [vmem:[#allocation2 + $0x18] sm:$0xff] %v637
          %823 = vst [vmem:[#allocation2 + $0x20] sm:$0xff] %v641
          %824 = vst [vmem:[#allocation2 + $0x28] sm:$0xff] %v643
          %825 = vst [vmem:[#allocation2 + $0x30] sm:$0xff] %v647
          %826 = vst [vmem:[#allocation2 + $0x38] sm:$0xff] %v649
          %827 = vst [vmem:[#allocation2 + $0x40] sm:$0xff] %v653
          %828 = vst [vmem:[#allocation2 + $0x48] sm:$0xff] %v655
          %829 = vst [vmem:[#allocation2 + $0x50] sm:$0xff] %v659
          %830 = vst [vmem:[#allocation2 + $0x58] sm:$0xff] %v661
          %831 = vst [vmem:[#allocation2 + $0x60] sm:$0xff] %v665
          %832 = vst [vmem:[#allocation2 + $0x68] sm:$0xff] %v667
          %833 = vst [vmem:[#allocation2 + $0x70] sm:$0xff] %v671
          %834 = vst [vmem:[#allocation2 + $0x78] sm:$0xff] %v673
          %835 = vst [vmem:[#allocation2 + $0x80] sm:$0xff] %v677
          %836 = vst [vmem:[#allocation2 + $0x88] sm:$0xff] %v679
          %837 = vst [vmem:[#allocation2 + $0x90] sm:$0xff] %v683
          %838 = vst [vmem:[#allocation2 + $0x98] sm:$0xff] %v685
          %839 = vst [vmem:[#allocation2 + $0xa0] sm:$0xff] %v689
          %840 = vst [vmem:[#allocation2 + $0xa8] sm:$0xff] %v691
          %841 = vst [vmem:[#allocation2 + $0xb0] sm:$0xff] %v695
          %842 = vst [vmem:[#allocation2 + $0xb8] sm:$0xff] %v697
          %843 = vst [vmem:[#allocation2 + $0xc0] sm:$0xff] %v701
          %844 = vst [vmem:[#allocation2 + $0xc8] sm:$0xff] %v703
          %845 = vst [vmem:[#allocation2 + $0xd0] sm:$0xff] %v707
          %846 = vst [vmem:[#allocation2 + $0xd8] sm:$0xff] %v709
          %847 = vst [vmem:[#allocation2 + $0xe0] sm:$0xff] %v713
          %848 = vst [vmem:[#allocation2 + $0xe8] sm:$0xff] %v715
          %849 = vst [vmem:[#allocation2 + $0xf0] sm:$0xff] %v719
          %850 = vst [vmem:[#allocation2 + $0xf8] sm:$0xff] %v721
          %851 = vst [vmem:[#allocation2 + $0x100] sm:$0xff] %v725
          %852 = vst [vmem:[#allocation2 + $0x108] sm:$0xff] %v727
          %853 = vst [vmem:[#allocation2 + $0x110] sm:$0xff] %v731
          %854 = vst [vmem:[#allocation2 + $0x118] sm:$0xff] %v733
          %855 = vst [vmem:[#allocation2 + $0x120] sm:$0xff] %v737
          %856 = vst [vmem:[#allocation2 + $0x128] sm:$0xff] %v739
          %857 = vst [vmem:[#allocation2 + $0x130] sm:$0xff] %v743
          %858 = vst [vmem:[#allocation2 + $0x138] sm:$0xff] %v745
          %859 = vst [vmem:[#allocation2 + $0x140] sm:$0xff] %v749
          %860 = vst [vmem:[#allocation2 + $0x148] sm:$0xff] %v751
          %861 = vst [vmem:[#allocation2 + $0x150] sm:$0xff] %v755
          %862 = vst [vmem:[#allocation2 + $0x158] sm:$0xff] %v757
          %863 = vst [vmem:[#allocation2 + $0x160] sm:$0xff] %v761
          %864 = vst [vmem:[#allocation2 + $0x168] sm:$0xff] %v763
          %865 = vst [vmem:[#allocation2 + $0x170] sm:$0xff] %v767
          %866 = vst [vmem:[#allocation2 + $0x178] sm:$0xff] %v769
          %867 = vst [vmem:[#allocation2 + $0x180] sm:$0xff] %v773
          %868 = vst [vmem:[#allocation2 + $0x188] sm:$0xff] %v775
          %869 = vst [vmem:[#allocation2 + $0x190] sm:$0xff] %v779
          %870 = vst [vmem:[#allocation2 + $0x198] sm:$0xff] %v781
          %871 = vst [vmem:[#allocation2 + $0x1a0] sm:$0xff] %v785
          %872 = vst [vmem:[#allocation2 + $0x1a8] sm:$0xff] %v787
          %873 = vst [vmem:[#allocation2 + $0x1b0] sm:$0xff] %v791
          %874 = vst [vmem:[#allocation2 + $0x1b8] sm:$0xff] %v793
          %875 = vst [vmem:[#allocation2 + $0x1c0] sm:$0xff] %v797
          %876 = vst [vmem:[#allocation2 + $0x1c8] sm:$0xff] %v799
          %877 = vst [vmem:[#allocation2 + $0x1d0] sm:$0xff] %v803
          %878 = vst [vmem:[#allocation2 + $0x1d8] sm:$0xff] %v805
          %879 = vst [vmem:[#allocation2 + $0x1e0] sm:$0xff] %v809
          %880 = vst [vmem:[#allocation2 + $0x1e8] sm:$0xff] %v811
          %881 = vst [vmem:[#allocation2 + $0x1f0] sm:$0xff] %v815
          %882 = vst [vmem:[#allocation2 + $0x1f8] sm:$0xff] %v817
          %883 = vst [vmem:[#allocation3] sm:$0xff] 0.0
          %884 = vst [vmem:[#allocation3 + $0x8] sm:$0xff] 0.0
          %885 = vst [vmem:[#allocation3 + $0x10] sm:$0xff] 0.0
          %886 = vst [vmem:[#allocation3 + $0x18] sm:$0xff] 0.0
          %887 = vst [vmem:[#allocation3 + $0x20] sm:$0xff] 0.0
          %888 = vst [vmem:[#allocation3 + $0x28] sm:$0xff] 0.0
          %889 = vst [vmem:[#allocation3 + $0x30] sm:$0xff] 0.0
          %890 = vst [vmem:[#allocation3 + $0x38] sm:$0xff] 0.0
          %891 = vst [vmem:[#allocation3 + $0x40] sm:$0xff] 0.0
          %892 = vst [vmem:[#allocation3 + $0x48] sm:$0xff] 0.0
          %893 = vst [vmem:[#allocation3 + $0x50] sm:$0xff] 0.0
          %894 = vst [vmem:[#allocation3 + $0x58] sm:$0xff] 0.0
          %895 = vst [vmem:[#allocation3 + $0x60] sm:$0xff] 0.0
          %896 = vst [vmem:[#allocation3 + $0x68] sm:$0xff] 0.0
          %897 = vst [vmem:[#allocation3 + $0x70] sm:$0xff] 0.0
          %898 = vst [vmem:[#allocation3 + $0x78] sm:$0xff] 0.0
          %899 = vst [vmem:[#allocation3 + $0x80] sm:$0xff] 0.0
          %900 = vst [vmem:[#allocation3 + $0x88] sm:$0xff] 0.0
          %901 = vst [vmem:[#allocation3 + $0x90] sm:$0xff] 0.0
          %902 = vst [vmem:[#allocation3 + $0x98] sm:$0xff] 0.0
          %903 = vst [vmem:[#allocation3 + $0xa0] sm:$0xff] 0.0
          %904 = vst [vmem:[#allocation3 + $0xa8] sm:$0xff] 0.0
          %905 = vst [vmem:[#allocation3 + $0xb0] sm:$0xff] 0.0
          %906 = vst [vmem:[#allocation3 + $0xb8] sm:$0xff] 0.0
          %907 = vst [vmem:[#allocation3 + $0xc0] sm:$0xff] 0.0
          %908 = vst [vmem:[#allocation3 + $0xc8] sm:$0xff] 0.0
          %909 = vst [vmem:[#allocation3 + $0xd0] sm:$0xff] 0.0
          %910 = vst [vmem:[#allocation3 + $0xd8] sm:$0xff] 0.0
          %911 = vst [vmem:[#allocation3 + $0xe0] sm:$0xff] 0.0
          %912 = vst [vmem:[#allocation3 + $0xe8] sm:$0xff] 0.0
          %913 = vst [vmem:[#allocation3 + $0xf0] sm:$0xff] 0.0
          %914 = vst [vmem:[#allocation3 + $0xf8] sm:$0xff] 0.0
          %915 = vst [vmem:[#allocation3 + $0x100] sm:$0xff] 0.0
          %916 = vst [vmem:[#allocation3 + $0x108] sm:$0xff] 0.0
          %917 = vst [vmem:[#allocation3 + $0x110] sm:$0xff] 0.0
          %918 = vst [vmem:[#allocation3 + $0x118] sm:$0xff] 0.0
          %919 = vst [vmem:[#allocation3 + $0x120] sm:$0xff] 0.0
          %920 = vst [vmem:[#allocation3 + $0x128] sm:$0xff] 0.0
          %921 = vst [vmem:[#allocation3 + $0x130] sm:$0xff] 0.0
          %922 = vst [vmem:[#allocation3 + $0x138] sm:$0xff] 0.0
          %923 = vst [vmem:[#allocation3 + $0x140] sm:$0xff] 0.0
          %924 = vst [vmem:[#allocation3 + $0x148] sm:$0xff] 0.0
          %925 = vst [vmem:[#allocation3 + $0x150] sm:$0xff] 0.0
          %926 = vst [vmem:[#allocation3 + $0x158] sm:$0xff] 0.0
          %927 = vst [vmem:[#allocation3 + $0x160] sm:$0xff] 0.0
          %928 = vst [vmem:[#allocation3 + $0x168] sm:$0xff] 0.0
          %929 = vst [vmem:[#allocation3 + $0x170] sm:$0xff] 0.0
          %930 = vst [vmem:[#allocation3 + $0x178] sm:$0xff] 0.0
          %931 = vst [vmem:[#allocation3 + $0x180] sm:$0xff] 0.0
          %932 = vst [vmem:[#allocation3 + $0x188] sm:$0xff] 0.0
          %933 = vst [vmem:[#allocation3 + $0x190] sm:$0xff] 0.0
          %934 = vst [vmem:[#allocation3 + $0x198] sm:$0xff] 0.0
          %935 = vst [vmem:[#allocation3 + $0x1a0] sm:$0xff] 0.0
          %936 = vst [vmem:[#allocation3 + $0x1a8] sm:$0xff] 0.0
          %937 = vst [vmem:[#allocation3 + $0x1b0] sm:$0xff] 0.0
          %938 = vst [vmem:[#allocation3 + $0x1b8] sm:$0xff] 0.0
          %939 = vst [vmem:[#allocation3 + $0x1c0] sm:$0xff] 0.0
          %940 = vst [vmem:[#allocation3 + $0x1c8] sm:$0xff] 0.0
          %941 = vst [vmem:[#allocation3 + $0x1d0] sm:$0xff] 0.0
          %942 = vst [vmem:[#allocation3 + $0x1d8] sm:$0xff] 0.0
          %943 = vst [vmem:[#allocation3 + $0x1e0] sm:$0xff] 0.0
          %944 = vst [vmem:[#allocation3 + $0x1e8] sm:$0xff] 0.0
          %945 = vst [vmem:[#allocation3 + $0x1f0] sm:$0xff] 0.0
          %946 = vst [vmem:[#allocation3 + $0x1f8] sm:$0xff] 0.0
          %vm947 = vcmask 7168
          %948 = vst.msk [vmem:[#allocation4] sm:$0xff] %vm947, -inf
          %949 = vst.msk [vmem:[#allocation4 + $0x8] sm:$0xff] %vm947, -inf
          %950 = vst.msk [vmem:[#allocation4 + $0x10] sm:$0xff] %vm947, -inf
          %951 = vst.msk [vmem:[#allocation4 + $0x18] sm:$0xff] %vm947, -inf
          %952 = vst.msk [vmem:[#allocation4 + $0x20] sm:$0xff] %vm947, -inf
          %953 = vst.msk [vmem:[#allocation4 + $0x28] sm:$0xff] %vm947, -inf
          %954 = vst.msk [vmem:[#allocation4 + $0x30] sm:$0xff] %vm947, -inf
          %955 = vst.msk [vmem:[#allocation4 + $0x38] sm:$0xff] %vm947, -inf
          %956 = vst.msk [vmem:[#allocation4 + $0x40] sm:$0xff] %vm947, -inf
          %957 = vst.msk [vmem:[#allocation4 + $0x48] sm:$0xff] %vm947, -inf
          %958 = vst.msk [vmem:[#allocation4 + $0x50] sm:$0xff] %vm947, -inf
          %959 = vst.msk [vmem:[#allocation4 + $0x58] sm:$0xff] %vm947, -inf
          %960 = vst.msk [vmem:[#allocation4 + $0x60] sm:$0xff] %vm947, -inf
          %961 = vst.msk [vmem:[#allocation4 + $0x68] sm:$0xff] %vm947, -inf
          %962 = vst.msk [vmem:[#allocation4 + $0x70] sm:$0xff] %vm947, -inf
          %963 = vst.msk [vmem:[#allocation4 + $0x78] sm:$0xff] %vm947, -inf
          %964 = vst.msk [vmem:[#allocation4 + $0x80] sm:$0xff] %vm947, -inf
          %965 = vst.msk [vmem:[#allocation4 + $0x88] sm:$0xff] %vm947, -inf
          %966 = vst.msk [vmem:[#allocation4 + $0x90] sm:$0xff] %vm947, -inf
          %967 = vst.msk [vmem:[#allocation4 + $0x98] sm:$0xff] %vm947, -inf
          %968 = vst.msk [vmem:[#allocation4 + $0xa0] sm:$0xff] %vm947, -inf
          %969 = vst.msk [vmem:[#allocation4 + $0xa8] sm:$0xff] %vm947, -inf
          %970 = vst.msk [vmem:[#allocation4 + $0xb0] sm:$0xff] %vm947, -inf
          %971 = vst.msk [vmem:[#allocation4 + $0xb8] sm:$0xff] %vm947, -inf
          %972 = vst.msk [vmem:[#allocation4 + $0xc0] sm:$0xff] %vm947, -inf
          %973 = vst.msk [vmem:[#allocation4 + $0xc8] sm:$0xff] %vm947, -inf
          %974 = vst.msk [vmem:[#allocation4 + $0xd0] sm:$0xff] %vm947, -inf
          %975 = vst.msk [vmem:[#allocation4 + $0xd8] sm:$0xff] %vm947, -inf
          %976 = vst.msk [vmem:[#allocation4 + $0xe0] sm:$0xff] %vm947, -inf
          %977 = vst.msk [vmem:[#allocation4 + $0xe8] sm:$0xff] %vm947, -inf
          %978 = vst.msk [vmem:[#allocation4 + $0xf0] sm:$0xff] %vm947, -inf
          %979 = vst.msk [vmem:[#allocation4 + $0xf8] sm:$0xff] %vm947, -inf
          %980 = vst.msk [vmem:[#allocation4 + $0x100] sm:$0xff] %vm947, -inf
          %981 = vst.msk [vmem:[#allocation4 + $0x108] sm:$0xff] %vm947, -inf
          %982 = vst.msk [vmem:[#allocation4 + $0x110] sm:$0xff] %vm947, -inf
          %983 = vst.msk [vmem:[#allocation4 + $0x118] sm:$0xff] %vm947, -inf
          %984 = vst.msk [vmem:[#allocation4 + $0x120] sm:$0xff] %vm947, -inf
          %985 = vst.msk [vmem:[#allocation4 + $0x128] sm:$0xff] %vm947, -inf
          %986 = vst.msk [vmem:[#allocation4 + $0x130] sm:$0xff] %vm947, -inf
          %987 = vst.msk [vmem:[#allocation4 + $0x138] sm:$0xff] %vm947, -inf
          %988 = vst.msk [vmem:[#allocation4 + $0x140] sm:$0xff] %vm947, -inf
          %989 = vst.msk [vmem:[#allocation4 + $0x148] sm:$0xff] %vm947, -inf
          %990 = vst.msk [vmem:[#allocation4 + $0x150] sm:$0xff] %vm947, -inf
          %991 = vst.msk [vmem:[#allocation4 + $0x158] sm:$0xff] %vm947, -inf
          %992 = vst.msk [vmem:[#allocation4 + $0x160] sm:$0xff] %vm947, -inf
          %993 = vst.msk [vmem:[#allocation4 + $0x168] sm:$0xff] %vm947, -inf
          %994 = vst.msk [vmem:[#allocation4 + $0x170] sm:$0xff] %vm947, -inf
          %995 = vst.msk [vmem:[#allocation4 + $0x178] sm:$0xff] %vm947, -inf
          %996 = vst.msk [vmem:[#allocation4 + $0x180] sm:$0xff] %vm947, -inf
          %997 = vst.msk [vmem:[#allocation4 + $0x188] sm:$0xff] %vm947, -inf
          %998 = vst.msk [vmem:[#allocation4 + $0x190] sm:$0xff] %vm947, -inf
          %999 = vst.msk [vmem:[#allocation4 + $0x198] sm:$0xff] %vm947, -inf
          %1000 = vst.msk [vmem:[#allocation4 + $0x1a0] sm:$0xff] %vm947, -inf
          %1001 = vst.msk [vmem:[#allocation4 + $0x1a8] sm:$0xff] %vm947, -inf
          %1002 = vst.msk [vmem:[#allocation4 + $0x1b0] sm:$0xff] %vm947, -inf
          %1003 = vst.msk [vmem:[#allocation4 + $0x1b8] sm:$0xff] %vm947, -inf
          %1004 = vst.msk [vmem:[#allocation4 + $0x1c0] sm:$0xff] %vm947, -inf
          %1005 = vst.msk [vmem:[#allocation4 + $0x1c8] sm:$0xff] %vm947, -inf
          %1006 = vst.msk [vmem:[#allocation4 + $0x1d0] sm:$0xff] %vm947, -inf
          %1007 = vst.msk [vmem:[#allocation4 + $0x1d8] sm:$0xff] %vm947, -inf
          %1008 = vst.msk [vmem:[#allocation4 + $0x1e0] sm:$0xff] %vm947, -inf
          %1009 = vst.msk [vmem:[#allocation4 + $0x1e8] sm:$0xff] %vm947, -inf
          %1010 = vst.msk [vmem:[#allocation4 + $0x1f0] sm:$0xff] %vm947, -inf
          %1011 = vst.msk [vmem:[#allocation4 + $0x1f8] sm:$0xff] %vm947, -inf
          %1012 = vst.msk [vmem:[#allocation5] sm:$0xff] %vm947, 0.0
          %1013 = vst.msk [vmem:[#allocation5 + $0x8] sm:$0xff] %vm947, 0.0
          %1014 = vst.msk [vmem:[#allocation5 + $0x10] sm:$0xff] %vm947, 0.0
          %1015 = vst.msk [vmem:[#allocation5 + $0x18] sm:$0xff] %vm947, 0.0
          %1016 = vst.msk [vmem:[#allocation5 + $0x20] sm:$0xff] %vm947, 0.0
          %1017 = vst.msk [vmem:[#allocation5 + $0x28] sm:$0xff] %vm947, 0.0
          %1018 = vst.msk [vmem:[#allocation5 + $0x30] sm:$0xff] %vm947, 0.0
          %1019 = vst.msk [vmem:[#allocation5 + $0x38] sm:$0xff] %vm947, 0.0
          %1020 = vst.msk [vmem:[#allocation5 + $0x40] sm:$0xff] %vm947, 0.0
          %1021 = vst.msk [vmem:[#allocation5 + $0x48] sm:$0xff] %vm947, 0.0
          %1022 = vst.msk [vmem:[#allocation5 + $0x50] sm:$0xff] %vm947, 0.0
          %1023 = vst.msk [vmem:[#allocation5 + $0x58] sm:$0xff] %vm947, 0.0
          %1024 = vst.msk [vmem:[#allocation5 + $0x60] sm:$0xff] %vm947, 0.0
          %1025 = vst.msk [vmem:[#allocation5 + $0x68] sm:$0xff] %vm947, 0.0
          %1026 = vst.msk [vmem:[#allocation5 + $0x70] sm:$0xff] %vm947, 0.0
          %1027 = vst.msk [vmem:[#allocation5 + $0x78] sm:$0xff] %vm947, 0.0
          %1028 = vst.msk [vmem:[#allocation5 + $0x80] sm:$0xff] %vm947, 0.0
          %1029 = vst.msk [vmem:[#allocation5 + $0x88] sm:$0xff] %vm947, 0.0
          %1030 = vst.msk [vmem:[#allocation5 + $0x90] sm:$0xff] %vm947, 0.0
          %1031 = vst.msk [vmem:[#allocation5 + $0x98] sm:$0xff] %vm947, 0.0
          %1032 = vst.msk [vmem:[#allocation5 + $0xa0] sm:$0xff] %vm947, 0.0
          %1033 = vst.msk [vmem:[#allocation5 + $0xa8] sm:$0xff] %vm947, 0.0
          %1034 = vst.msk [vmem:[#allocation5 + $0xb0] sm:$0xff] %vm947, 0.0
          %1035 = vst.msk [vmem:[#allocation5 + $0xb8] sm:$0xff] %vm947, 0.0
          %1036 = vst.msk [vmem:[#allocation5 + $0xc0] sm:$0xff] %vm947, 0.0
          %1037 = vst.msk [vmem:[#allocation5 + $0xc8] sm:$0xff] %vm947, 0.0
          %1038 = vst.msk [vmem:[#allocation5 + $0xd0] sm:$0xff] %vm947, 0.0
          %1039 = vst.msk [vmem:[#allocation5 + $0xd8] sm:$0xff] %vm947, 0.0
          %1040 = vst.msk [vmem:[#allocation5 + $0xe0] sm:$0xff] %vm947, 0.0
          %1041 = vst.msk [vmem:[#allocation5 + $0xe8] sm:$0xff] %vm947, 0.0
          %1042 = vst.msk [vmem:[#allocation5 + $0xf0] sm:$0xff] %vm947, 0.0
          %1043 = vst.msk [vmem:[#allocation5 + $0xf8] sm:$0xff] %vm947, 0.0
          %1044 = vst.msk [vmem:[#allocation5 + $0x100] sm:$0xff] %vm947, 0.0
          %1045 = vst.msk [vmem:[#allocation5 + $0x108] sm:$0xff] %vm947, 0.0
          %1046 = vst.msk [vmem:[#allocation5 + $0x110] sm:$0xff] %vm947, 0.0
          %1047 = vst.msk [vmem:[#allocation5 + $0x118] sm:$0xff] %vm947, 0.0
          %1048 = vst.msk [vmem:[#allocation5 + $0x120] sm:$0xff] %vm947, 0.0
          %1049 = vst.msk [vmem:[#allocation5 + $0x128] sm:$0xff] %vm947, 0.0
          %1050 = vst.msk [vmem:[#allocation5 + $0x130] sm:$0xff] %vm947, 0.0
          %1051 = vst.msk [vmem:[#allocation5 + $0x138] sm:$0xff] %vm947, 0.0
          %1052 = vst.msk [vmem:[#allocation5 + $0x140] sm:$0xff] %vm947, 0.0
          %1053 = vst.msk [vmem:[#allocation5 + $0x148] sm:$0xff] %vm947, 0.0
          %1054 = vst.msk [vmem:[#allocation5 + $0x150] sm:$0xff] %vm947, 0.0
          %1055 = vst.msk [vmem:[#allocation5 + $0x158] sm:$0xff] %vm947, 0.0
          %1056 = vst.msk [vmem:[#allocation5 + $0x160] sm:$0xff] %vm947, 0.0
          %1057 = vst.msk [vmem:[#allocation5 + $0x168] sm:$0xff] %vm947, 0.0
          %1058 = vst.msk [vmem:[#allocation5 + $0x170] sm:$0xff] %vm947, 0.0
          %1059 = vst.msk [vmem:[#allocation5 + $0x178] sm:$0xff] %vm947, 0.0
          %1060 = vst.msk [vmem:[#allocation5 + $0x180] sm:$0xff] %vm947, 0.0
          %1061 = vst.msk [vmem:[#allocation5 + $0x188] sm:$0xff] %vm947, 0.0
          %1062 = vst.msk [vmem:[#allocation5 + $0x190] sm:$0xff] %vm947, 0.0
          %1063 = vst.msk [vmem:[#allocation5 + $0x198] sm:$0xff] %vm947, 0.0
          %1064 = vst.msk [vmem:[#allocation5 + $0x1a0] sm:$0xff] %vm947, 0.0
          %1065 = vst.msk [vmem:[#allocation5 + $0x1a8] sm:$0xff] %vm947, 0.0
          %1066 = vst.msk [vmem:[#allocation5 + $0x1b0] sm:$0xff] %vm947, 0.0
          %1067 = vst.msk [vmem:[#allocation5 + $0x1b8] sm:$0xff] %vm947, 0.0
          %1068 = vst.msk [vmem:[#allocation5 + $0x1c0] sm:$0xff] %vm947, 0.0
          %1069 = vst.msk [vmem:[#allocation5 + $0x1c8] sm:$0xff] %vm947, 0.0
          %1070 = vst.msk [vmem:[#allocation5 + $0x1d0] sm:$0xff] %vm947, 0.0
          %1071 = vst.msk [vmem:[#allocation5 + $0x1d8] sm:$0xff] %vm947, 0.0
          %1072 = vst.msk [vmem:[#allocation5 + $0x1e0] sm:$0xff] %vm947, 0.0
          %1073 = vst.msk [vmem:[#allocation5 + $0x1e8] sm:$0xff] %vm947, 0.0
          %1074 = vst.msk [vmem:[#allocation5 + $0x1f0] sm:$0xff] %vm947, 0.0
          %1075 = vst.msk [vmem:[#allocation5 + $0x1f8] sm:$0xff] %vm947, 0.0
        $region64: #{tpu_custom_call.1} parent=43 // pred_fallthru
          _
        %p1076 = scmp.eq.s32.totalorder %s30, 0
        // Predicated region
        $region65: #{tpu_custom_call.1} parent=43 // pred_check
          %p1077 = pneg %p1076
        $region66: #{tpu_custom_call.1} parent=43 // pred_check_branch
          %1079 = sbr.rel (%p1077) target = $region68
        $region67: #{tpu_custom_call.1} parent=43 // pred_region
          %v1080 = vld [vmem:[%s321] sm:$0xff]
          %v1081 = vld [vmem:[%s321 + $0x8] sm:$0xff]
          %v1082 = vld [vmem:[#allocation12] sm:$0xff]
          %v1083 = vld [vmem:[#allocation12 + $0x8] sm:$0xff]
          %v1084 = vld [vmem:[#allocation12 + $0x10] sm:$0xff]
          %v1085 = vld [vmem:[#allocation12 + $0x18] sm:$0xff]
          %v1086 = vld [vmem:[%s5] sm:$0xf]
          %v1088 = vlaneseq
          %v1089 = vshrl.u32 %v1088, 7
          %v1090 = vsub.s32 0, %v1089
          %v1091 = vrot.slane %v1086, %v1090
          %v1092 = vlaneseq
          %v1093 = vshrl.u32 %v1092, 7
          %v1094 = vsub.s32 1, %v1093
          %v1095 = vrot.slane %v1086, %v1094
          %v1096 = vlaneseq
          %v1097 = vshrl.u32 %v1096, 7
          %v1098 = vsub.s32 2, %v1097
          %v1099 = vrot.slane %v1086, %v1098
          %v1100 = vlaneseq
          %v1101 = vshrl.u32 %v1100, 7
          %v1102 = vsub.s32 3, %v1101
          %v1103 = vrot.slane %v1086, %v1102
          %1108 = vxpose.xlu0.b32.start [1/16] %v1080, 128
          %1109 = vxpose.xlu0.b32.cont [2/16] 0.0, 128
          %1110 = vxpose.xlu0.b32.cont [3/16] 0.0, 128
          %1111 = vxpose.xlu0.b32.cont [4/16] 0.0, 128
          %1112 = vxpose.xlu0.b32.cont [5/16] 0.0, 128
          %1113 = vxpose.xlu0.b32.cont [6/16] 0.0, 128
          %1114 = vxpose.xlu0.b32.cont [7/16] 0.0, 128
          %1115 = vxpose.xlu0.b32.cont [8/16] 0.0, 128
          %1116 = vxpose.xlu0.b32.cont [9/16] 0.0, 128
          %1117 = vxpose.xlu0.b32.cont [10/16] 0.0, 128
          %1118 = vxpose.xlu0.b32.cont [11/16] 0.0, 128
          %1119 = vxpose.xlu0.b32.cont [12/16] 0.0, 128
          %1120 = vxpose.xlu0.b32.cont [13/16] 0.0, 128
          %1121 = vxpose.xlu0.b32.cont [14/16] 0.0, 128
          %1122 = vxpose.xlu0.b32.cont [15/16] 0.0, 128
          %1123 = vxpose.xlu0.b32.end [16/16] 0.0, 128
          %v1124 = vpop.trf.xlu0
          %v1125 = vpop.trf.xlu0
          %v1126 = vpop.trf.xlu0
          %v1127 = vpop.trf.xlu0
          %v1128 = vpop.trf.xlu0
          %v1129 = vpop.trf.xlu0
          %v1130 = vpop.trf.xlu0
          %v1131 = vpop.trf.xlu0
          %v1132 = vpop.trf.xlu0
          %v1133 = vpop.trf.xlu0
          %v1134 = vpop.trf.xlu0
          %v1135 = vpop.trf.xlu0
          %v1136 = vpop.trf.xlu0
          %v1137 = vpop.trf.xlu0
          %v1138 = vpop.trf.xlu0
          %v1139 = vpop.trf.xlu0
          %1140 = vxpose.xlu0.b32.start [1/16] %v1081, 128
          %1141 = vxpose.xlu0.b32.cont [2/16] 0.0, 128
          %1142 = vxpose.xlu0.b32.cont [3/16] 0.0, 128
          %1143 = vxpose.xlu0.b32.cont [4/16] 0.0, 128
          %1144 = vxpose.xlu0.b32.cont [5/16] 0.0, 128
          %1145 = vxpose.xlu0.b32.cont [6/16] 0.0, 128
          %1146 = vxpose.xlu0.b32.cont [7/16] 0.0, 128
          %1147 = vxpose.xlu0.b32.cont [8/16] 0.0, 128
          %1148 = vxpose.xlu0.b32.cont [9/16] 0.0, 128
          %1149 = vxpose.xlu0.b32.cont [10/16] 0.0, 128
          %1150 = vxpose.xlu0.b32.cont [11/16] 0.0, 128
          %1151 = vxpose.xlu0.b32.cont [12/16] 0.0, 128
          %1152 = vxpose.xlu0.b32.cont [13/16] 0.0, 128
          %1153 = vxpose.xlu0.b32.cont [14/16] 0.0, 128
          %1154 = vxpose.xlu0.b32.cont [15/16] 0.0, 128
          %1155 = vxpose.xlu0.b32.end [16/16] 0.0, 128
          %v1156 = vpop.trf.xlu0
          %v1157 = vpop.trf.xlu0
          %v1158 = vpop.trf.xlu0
          %v1159 = vpop.trf.xlu0
          %v1160 = vpop.trf.xlu0
          %v1161 = vpop.trf.xlu0
          %v1162 = vpop.trf.xlu0
          %v1163 = vpop.trf.xlu0
          %v1164 = vpop.trf.xlu0
          %v1165 = vpop.trf.xlu0
          %v1166 = vpop.trf.xlu0
          %v1167 = vpop.trf.xlu0
          %v1168 = vpop.trf.xlu0
          %v1169 = vpop.trf.xlu0
          %v1170 = vpop.trf.xlu0
          %v1171 = vpop.trf.xlu0
          %vm1172 = vcmask 64512
          %v1174 = vsel %vm1172, %v1124, 0
          %v1177 = vsel %vm1172, %v1125, 0
          %v1180 = vsel %vm1172, %v1126, 0
          %v1183 = vsel %vm1172, %v1127, 0
          %v1186 = vsel %vm1172, %v1128, 0
          %v1189 = vsel %vm1172, %v1129, 0
          %v1192 = vsel %vm1172, %v1130, 0
          %v1195 = vsel %vm1172, %v1131, 0
          %v1198 = vsel %vm1172, %v1132, 0
          %v1201 = vsel %vm1172, %v1133, 0
          %v1204 = vsel %vm1172, %v1134, 0
          %v1207 = vsel %vm1172, %v1135, 0
          %v1210 = vsel %vm1172, %v1136, 0
          %v1213 = vsel %vm1172, %v1137, 0
          %v1216 = vsel %vm1172, %v1138, 0
          %v1219 = vsel %vm1172, %v1139, 0
          %v1222 = vsel %vm1172, %v1156, 0
          %v1225 = vsel %vm1172, %v1157, 0
          %v1228 = vsel %vm1172, %v1158, 0
          %v1231 = vsel %vm1172, %v1159, 0
          %v1234 = vsel %vm1172, %v1160, 0
          %v1237 = vsel %vm1172, %v1161, 0
          %v1240 = vsel %vm1172, %v1162, 0
          %v1243 = vsel %vm1172, %v1163, 0
          %v1246 = vsel %vm1172, %v1164, 0
          %v1249 = vsel %vm1172, %v1165, 0
          %v1252 = vsel %vm1172, %v1166, 0
          %v1255 = vsel %vm1172, %v1167, 0
          %v1258 = vsel %vm1172, %v1168, 0
          %v1261 = vsel %vm1172, %v1169, 0
          %v1264 = vsel %vm1172, %v1170, 0
          %v1267 = vsel %vm1172, %v1171, 0
          %1269 = vmatprep.subr.mxu0 %v1083
          %1270 = vmatpush1.msra.mxu0 %v1082
          %1271 = vmatprep.subr.mxu0 0.0
          %1272 = vmatpush1.msra.mxu0 0.0
          %1273 = vmatprep.subr.mxu0 0.0
          %1274 = vmatpush1.msra.mxu0 0.0
          %1275 = vmatprep.subr.mxu0 0.0
          %1276 = vmatpush1.msra.mxu0 0.0
          %1277 = vmatprep.subr.mxu0 0.0
          %1278 = vmatpush1.msra.mxu0 0.0
          %1279 = vmatprep.subr.mxu0 0.0
          %1280 = vmatpush1.msra.mxu0 0.0
          %1281 = vmatprep.subr.mxu0 0.0
          %1282 = vmatpush1.msra.mxu0 0.0
          %1283 = vmatprep.subr.mxu0 0.0
          %1284 = vmatpush1.msra.mxu0 0.0
          %1285 = vmatprep.subr.mxu0 0.0
          %1286 = vmatpush1.msra.mxu0 0.0
          %1287 = vmatprep.subr.mxu0 0.0
          %1288 = vmatpush1.msra.mxu0 0.0
          %1289 = vmatprep.subr.mxu0 0.0
          %1290 = vmatpush1.msra.mxu0 0.0
          %1291 = vmatprep.subr.mxu0 0.0
          %1292 = vmatpush1.msra.mxu0 0.0
          %1293 = vmatprep.subr.mxu0 0.0
          %1294 = vmatpush1.msra.mxu0 0.0
          %1295 = vmatprep.subr.mxu0 0.0
          %1296 = vmatpush1.msra.mxu0 0.0
          %1297 = vmatprep.subr.mxu0 0.0
          %1298 = vmatpush1.msra.mxu0 0.0
          %1299 = vmatprep.subr.mxu0 0.0
          %1300 = vmatpush1.msra.mxu0 0.0
          %1301 = vmatprep.subr.mxu0 0.0
          %1302 = vmatpush1.msra.mxu0 0.0
          %1303 = vmatprep.subr.mxu0 0.0
          %1304 = vmatpush1.msra.mxu0 0.0
          %1305 = vmatprep.subr.mxu0 0.0
          %1306 = vmatpush1.msra.mxu0 0.0
          %1307 = vmatprep.subr.mxu0 0.0
          %1308 = vmatpush1.msra.mxu0 0.0
          %1309 = vmatprep.subr.mxu0 0.0
          %1310 = vmatpush1.msra.mxu0 0.0
          %1311 = vmatprep.subr.mxu0 0.0
          %1312 = vmatpush1.msra.mxu0 0.0
          %1313 = vmatprep.subr.mxu0 0.0
          %1314 = vmatpush1.msra.mxu0 0.0
          %1315 = vmatprep.subr.mxu0 0.0
          %1316 = vmatpush1.msra.mxu0 0.0
          %1317 = vmatprep.subr.mxu0 0.0
          %1318 = vmatpush1.msra.mxu0 0.0
          %1319 = vmatprep.subr.mxu0 0.0
          %1320 = vmatpush1.msra.mxu0 0.0
          %1321 = vmatprep.subr.mxu0 0.0
          %1322 = vmatpush1.msra.mxu0 0.0
          %1323 = vmatprep.subr.mxu0 0.0
          %1324 = vmatpush1.msra.mxu0 0.0
          %1325 = vmatprep.subr.mxu0 0.0
          %1326 = vmatpush1.msra.mxu0 0.0
          %1327 = vmatprep.subr.mxu0 0.0
          %1328 = vmatpush1.msra.mxu0 0.0
          %1329 = vmatprep.subr.mxu0 0.0
          %1330 = vmatpush1.msra.mxu0 0.0
          %1331 = vmatprep.subr.mxu0 0.0
          %1332 = vmatpush1.msra.mxu0 0.0
          %1333 = vmatprep.mubr.f32.mxu0 0.0
          %1334 = vmatmul.mubr.f32.gmra.mrb[0].mxu0 %v1174
          %v1335 = vpop.f32.mrb[0].mxu0
          %v1336 = vadd.f32 %v1091, %v1335
          %v1337 = vpop.f32.mrb[0].mxu0
          %v1338 = vadd.f32 %v1095, %v1337
          %1339 = vmatprep.mubr.f32.mxu0 0.0
          %1340 = vmatmul.mubr.f32.gmra.mrb[0].mxu0 %v1177
          %v1341 = vpop.f32.mrb[0].mxu0
          %v1342 = vadd.f32 %v1091, %v1341
          %v1343 = vpop.f32.mrb[0].mxu0
          %v1344 = vadd.f32 %v1095, %v1343
          %1345 = vmatprep.mubr.f32.mxu0 0.0
          %1346 = vmatmul.mubr.f32.gmra.mrb[0].mxu0 %v1180
          %v1347 = vpop.f32.mrb[0].mxu0
          %v1348 = vadd.f32 %v1091, %v1347
          %v1349 = vpop.f32.mrb[0].mxu0
          %v1350 = vadd.f32 %v1095, %v1349
          %1351 = vmatprep.mubr.f32.mxu0 0.0
          %1352 = vmatmul.mubr.f32.gmra.mrb[0].mxu0 %v1183
          %v1353 = vpop.f32.mrb[0].mxu0
          %v1354 = vadd.f32 %v1091, %v1353
          %v1355 = vpop.f32.mrb[0].mxu0
          %v1356 = vadd.f32 %v1095, %v1355
          %1357 = vmatprep.mubr.f32.mxu0 0.0
          %1358 = vmatmul.mubr.f32.gmra.mrb[0].mxu0 %v1186
          %v1359 = vpop.f32.mrb[0].mxu0
          %v1360 = vadd.f32 %v1091, %v1359
          %v1361 = vpop.f32.mrb[0].mxu0
          %v1362 = vadd.f32 %v1095, %v1361
          %1363 = vmatprep.mubr.f32.mxu0 0.0
          %1364 = vmatmul.mubr.f32.gmra.mrb[0].mxu0 %v1189
          %v1365 = vpop.f32.mrb[0].mxu0
          %v1366 = vadd.f32 %v1091, %v1365
          %v1367 = vpop.f32.mrb[0].mxu0
          %v1368 = vadd.f32 %v1095, %v1367
          %1369 = vmatprep.mubr.f32.mxu0 0.0
          %1370 = vmatmul.mubr.f32.gmra.mrb[0].mxu0 %v1192
          %v1371 = vpop.f32.mrb[0].mxu0
          %v1372 = vadd.f32 %v1091, %v1371
          %v1373 = vpop.f32.mrb[0].mxu0
          %v1374 = vadd.f32 %v1095, %v1373
          %1375 = vmatprep.mubr.f32.mxu0 0.0
          %1376 = vmatmul.mubr.f32.gmra.mrb[0].mxu0 %v1195
          %v1377 = vpop.f32.mrb[0].mxu0
          %v1378 = vadd.f32 %v1091, %v1377
          %v1379 = vpop.f32.mrb[0].mxu0
          %v1380 = vadd.f32 %v1095, %v1379
          %1381 = vmatprep.mubr.f32.mxu0 0.0
          %1382 = vmatmul.mubr.f32.gmra.mrb[0].mxu0 %v1198
          %v1383 = vpop.f32.mrb[0].mxu0
          %v1384 = vadd.f32 %v1091, %v1383
          %v1385 = vpop.f32.mrb[0].mxu0
          %v1386 = vadd.f32 %v1095, %v1385
          %1387 = vmatprep.mubr.f32.mxu0 0.0
          %1388 = vmatmul.mubr.f32.gmra.mrb[0].mxu0 %v1201
          %v1389 = vpop.f32.mrb[0].mxu0
          %v1390 = vadd.f32 %v1091, %v1389
          %v1391 = vpop.f32.mrb[0].mxu0
          %v1392 = vadd.f32 %v1095, %v1391
          %1393 = vmatprep.mubr.f32.mxu0 0.0
          %1394 = vmatmul.mubr.f32.gmra.mrb[0].mxu0 %v1204
          %v1395 = vpop.f32.mrb[0].mxu0
          %v1396 = vadd.f32 %v1091, %v1395
          %v1397 = vpop.f32.mrb[0].mxu0
          %v1398 = vadd.f32 %v1095, %v1397
          %1399 = vmatprep.mubr.f32.mxu0 0.0
          %1400 = vmatmul.mubr.f32.gmra.mrb[0].mxu0 %v1207
          %v1401 = vpop.f32.mrb[0].mxu0
          %v1402 = vadd.f32 %v1091, %v1401
          %v1403 = vpop.f32.mrb[0].mxu0
          %v1404 = vadd.f32 %v1095, %v1403
          %1405 = vmatprep.mubr.f32.mxu0 0.0
          %1406 = vmatmul.mubr.f32.gmra.mrb[0].mxu0 %v1210
          %v1407 = vpop.f32.mrb[0].mxu0
          %v1408 = vadd.f32 %v1091, %v1407
          %v1409 = vpop.f32.mrb[0].mxu0
          %v1410 = vadd.f32 %v1095, %v1409
          %1411 = vmatprep.mubr.f32.mxu0 0.0
          %1412 = vmatmul.mubr.f32.gmra.mrb[0].mxu0 %v1213
          %v1413 = vpop.f32.mrb[0].mxu0
          %v1414 = vadd.f32 %v1091, %v1413
          %v1415 = vpop.f32.mrb[0].mxu0
          %v1416 = vadd.f32 %v1095, %v1415
          %1417 = vmatprep.mubr.f32.mxu0 0.0
          %1418 = vmatmul.mubr.f32.gmra.mrb[0].mxu0 %v1216
          %v1419 = vpop.f32.mrb[0].mxu0
          %v1420 = vadd.f32 %v1091, %v1419
          %v1421 = vpop.f32.mrb[0].mxu0
          %v1422 = vadd.f32 %v1095, %v1421
          %1423 = vmatprep.mubr.f32.mxu0 0.0
          %1424 = vmatmul.mubr.f32.gmra.mrb[0].mxu0 %v1219
          %v1425 = vpop.f32.mrb[0].mxu0
          %v1426 = vadd.f32 %v1091, %v1425
          %v1427 = vpop.f32.mrb[0].mxu0
          %v1428 = vadd.f32 %v1095, %v1427
          %1429 = vmatprep.mubr.f32.mxu0 0.0
          %1430 = vmatmul.mubr.f32.gmra.mrb[0].mxu0 %v1222
          %v1431 = vpop.f32.mrb[0].mxu0
          %v1432 = vadd.f32 %v1091, %v1431
          %v1433 = vpop.f32.mrb[0].mxu0
          %v1434 = vadd.f32 %v1095, %v1433
          %1435 = vmatprep.mubr.f32.mxu0 0.0
          %1436 = vmatmul.mubr.f32.gmra.mrb[0].mxu0 %v1225
          %v1437 = vpop.f32.mrb[0].mxu0
          %v1438 = vadd.f32 %v1091, %v1437
          %v1439 = vpop.f32.mrb[0].mxu0
          %v1440 = vadd.f32 %v1095, %v1439
          %1441 = vmatprep.mubr.f32.mxu0 0.0
          %1442 = vmatmul.mubr.f32.gmra.mrb[0].mxu0 %v1228
          %v1443 = vpop.f32.mrb[0].mxu0
          %v1444 = vadd.f32 %v1091, %v1443
          %v1445 = vpop.f32.mrb[0].mxu0
          %v1446 = vadd.f32 %v1095, %v1445
          %1447 = vmatprep.mubr.f32.mxu0 0.0
          %1448 = vmatmul.mubr.f32.gmra.mrb[0].mxu0 %v1231
          %v1449 = vpop.f32.mrb[0].mxu0
          %v1450 = vadd.f32 %v1091, %v1449
          %v1451 = vpop.f32.mrb[0].mxu0
          %v1452 = vadd.f32 %v1095, %v1451
          %1453 = vmatprep.mubr.f32.mxu0 0.0
          %1454 = vmatmul.mubr.f32.gmra.mrb[0].mxu0 %v1234
          %v1455 = vpop.f32.mrb[0].mxu0
          %v1456 = vadd.f32 %v1091, %v1455
          %v1457 = vpop.f32.mrb[0].mxu0
          %v1458 = vadd.f32 %v1095, %v1457
          %1459 = vmatprep.mubr.f32.mxu0 0.0
          %1460 = vmatmul.mubr.f32.gmra.mrb[0].mxu0 %v1237
          %v1461 = vpop.f32.mrb[0].mxu0
          %v1462 = vadd.f32 %v1091, %v1461
          %v1463 = vpop.f32.mrb[0].mxu0
          %v1464 = vadd.f32 %v1095, %v1463
          %1465 = vmatprep.mubr.f32.mxu0 0.0
          %1466 = vmatmul.mubr.f32.gmra.mrb[0].mxu0 %v1240
          %v1467 = vpop.f32.mrb[0].mxu0
          %v1468 = vadd.f32 %v1091, %v1467
          %v1469 = vpop.f32.mrb[0].mxu0
          %v1470 = vadd.f32 %v1095, %v1469
          %1471 = vmatprep.mubr.f32.mxu0 0.0
          %1472 = vmatmul.mubr.f32.gmra.mrb[0].mxu0 %v1243
          %v1473 = vpop.f32.mrb[0].mxu0
          %v1474 = vadd.f32 %v1091, %v1473
          %v1475 = vpop.f32.mrb[0].mxu0
          %v1476 = vadd.f32 %v1095, %v1475
          %1477 = vmatprep.mubr.f32.mxu0 0.0
          %1478 = vmatmul.mubr.f32.gmra.mrb[0].mxu0 %v1246
          %v1479 = vpop.f32.mrb[0].mxu0
          %v1480 = vadd.f32 %v1091, %v1479
          %v1481 = vpop.f32.mrb[0].mxu0
          %v1482 = vadd.f32 %v1095, %v1481
          %1483 = vmatprep.mubr.f32.mxu0 0.0
          %1484 = vmatmul.mubr.f32.gmra.mrb[0].mxu0 %v1249
          %v1485 = vpop.f32.mrb[0].mxu0
          %v1486 = vadd.f32 %v1091, %v1485
          %v1487 = vpop.f32.mrb[0].mxu0
          %v1488 = vadd.f32 %v1095, %v1487
          %1489 = vmatprep.mubr.f32.mxu0 0.0
          %1490 = vmatmul.mubr.f32.gmra.mrb[0].mxu0 %v1252
          %v1491 = vpop.f32.mrb[0].mxu0
          %v1492 = vadd.f32 %v1091, %v1491
          %v1493 = vpop.f32.mrb[0].mxu0
          %v1494 = vadd.f32 %v1095, %v1493
          %1495 = vmatprep.mubr.f32.mxu0 0.0
          %1496 = vmatmul.mubr.f32.gmra.mrb[0].mxu0 %v1255
          %v1497 = vpop.f32.mrb[0].mxu0
          %v1498 = vadd.f32 %v1091, %v1497
          %v1499 = vpop.f32.mrb[0].mxu0
          %v1500 = vadd.f32 %v1095, %v1499
          %1501 = vmatprep.mubr.f32.mxu0 0.0
          %1502 = vmatmul.mubr.f32.gmra.mrb[0].mxu0 %v1258
          %v1503 = vpop.f32.mrb[0].mxu0
          %v1504 = vadd.f32 %v1091, %v1503
          %v1505 = vpop.f32.mrb[0].mxu0
          %v1506 = vadd.f32 %v1095, %v1505
          %1507 = vmatprep.mubr.f32.mxu0 0.0
          %1508 = vmatmul.mubr.f32.gmra.mrb[0].mxu0 %v1261
          %v1509 = vpop.f32.mrb[0].mxu0
          %v1510 = vadd.f32 %v1091, %v1509
          %v1511 = vpop.f32.mrb[0].mxu0
          %v1512 = vadd.f32 %v1095, %v1511
          %1513 = vmatprep.mubr.f32.mxu0 0.0
          %1514 = vmatmul.mubr.f32.gmra.mrb[0].mxu0 %v1264
          %v1515 = vpop.f32.mrb[0].mxu0
          %v1516 = vadd.f32 %v1091, %v1515
          %v1517 = vpop.f32.mrb[0].mxu0
          %v1518 = vadd.f32 %v1095, %v1517
          %1519 = vmatprep.mubr.f32.mxu0 0.0
          %1520 = vmatmul.mubr.f32.gmra.mrb[0].mxu0 %v1267
          %v1521 = vpop.f32.mrb[0].mxu0
          %v1522 = vadd.f32 %v1091, %v1521
          %v1523 = vpop.f32.mrb[0].mxu0
          %v1524 = vadd.f32 %v1095, %v1523
          %1525 = vdwg.mxu0
          %1526 = vmatprep.subr.mxu0 %v1085
          %1527 = vmatpush1.msra.mxu0 %v1084
          %1528 = vmatprep.subr.mxu0 0.0
          %1529 = vmatpush1.msra.mxu0 0.0
          %1530 = vmatprep.subr.mxu0 0.0
          %1531 = vmatpush1.msra.mxu0 0.0
          %1532 = vmatprep.subr.mxu0 0.0
          %1533 = vmatpush1.msra.mxu0 0.0
          %1534 = vmatprep.subr.mxu0 0.0
          %1535 = vmatpush1.msra.mxu0 0.0
          %1536 = vmatprep.subr.mxu0 0.0
          %1537 = vmatpush1.msra.mxu0 0.0
          %1538 = vmatprep.subr.mxu0 0.0
          %1539 = vmatpush1.msra.mxu0 0.0
          %1540 = vmatprep.subr.mxu0 0.0
          %1541 = vmatpush1.msra.mxu0 0.0
          %1542 = vmatprep.subr.mxu0 0.0
          %1543 = vmatpush1.msra.mxu0 0.0
          %1544 = vmatprep.subr.mxu0 0.0
          %1545 = vmatpush1.msra.mxu0 0.0
          %1546 = vmatprep.subr.mxu0 0.0
          %1547 = vmatpush1.msra.mxu0 0.0
          %1548 = vmatprep.subr.mxu0 0.0
          %1549 = vmatpush1.msra.mxu0 0.0
          %1550 = vmatprep.subr.mxu0 0.0
          %1551 = vmatpush1.msra.mxu0 0.0
          %1552 = vmatprep.subr.mxu0 0.0
          %1553 = vmatpush1.msra.mxu0 0.0
          %1554 = vmatprep.subr.mxu0 0.0
          %1555 = vmatpush1.msra.mxu0 0.0
          %1556 = vmatprep.subr.mxu0 0.0
          %1557 = vmatpush1.msra.mxu0 0.0
          %1558 = vmatprep.subr.mxu0 0.0
          %1559 = vmatpush1.msra.mxu0 0.0
          %1560 = vmatprep.subr.mxu0 0.0
          %1561 = vmatpush1.msra.mxu0 0.0
          %1562 = vmatprep.subr.mxu0 0.0
          %1563 = vmatpush1.msra.mxu0 0.0
          %1564 = vmatprep.subr.mxu0 0.0
          %1565 = vmatpush1.msra.mxu0 0.0
          %1566 = vmatprep.subr.mxu0 0.0
          %1567 = vmatpush1.msra.mxu0 0.0
          %1568 = vmatprep.subr.mxu0 0.0
          %1569 = vmatpush1.msra.mxu0 0.0
          %1570 = vmatprep.subr.mxu0 0.0
          %1571 = vmatpush1.msra.mxu0 0.0
          %1572 = vmatprep.subr.mxu0 0.0
          %1573 = vmatpush1.msra.mxu0 0.0
          %1574 = vmatprep.subr.mxu0 0.0
          %1575 = vmatpush1.msra.mxu0 0.0
          %1576 = vmatprep.subr.mxu0 0.0
          %1577 = vmatpush1.msra.mxu0 0.0
          %1578 = vmatprep.subr.mxu0 0.0
          %1579 = vmatpush1.msra.mxu0 0.0
          %1580 = vmatprep.subr.mxu0 0.0
          %1581 = vmatpush1.msra.mxu0 0.0
          %1582 = vmatprep.subr.mxu0 0.0
          %1583 = vmatpush1.msra.mxu0 0.0
          %1584 = vmatprep.subr.mxu0 0.0
          %1585 = vmatpush1.msra.mxu0 0.0
          %1586 = vmatprep.subr.mxu0 0.0
          %1587 = vmatpush1.msra.mxu0 0.0
          %1588 = vmatprep.subr.mxu0 0.0
          %1589 = vmatpush1.msra.mxu0 0.0
          %1590 = vmatprep.mubr.f32.mxu0 0.0
          %1591 = vmatmul.mubr.f32.gmra.mrb[0].mxu0 %v1174
          %v1592 = vpop.f32.mrb[0].mxu0
          %v1593 = vadd.f32 %v1099, %v1592
          %v1594 = vpop.f32.mrb[0].mxu0
          %v1595 = vadd.f32 %v1103, %v1594
          %1596 = vmatprep.mubr.f32.mxu0 0.0
          %1597 = vmatmul.mubr.f32.gmra.mrb[0].mxu0 %v1177
          %v1598 = vpop.f32.mrb[0].mxu0
          %v1599 = vadd.f32 %v1099, %v1598
          %v1600 = vpop.f32.mrb[0].mxu0
          %v1601 = vadd.f32 %v1103, %v1600
          %1602 = vmatprep.mubr.f32.mxu0 0.0
          %1603 = vmatmul.mubr.f32.gmra.mrb[0].mxu0 %v1180
          %v1604 = vpop.f32.mrb[0].mxu0
          %v1605 = vadd.f32 %v1099, %v1604
          %v1606 = vpop.f32.mrb[0].mxu0
          %v1607 = vadd.f32 %v1103, %v1606
          %1608 = vmatprep.mubr.f32.mxu0 0.0
          %1609 = vmatmul.mubr.f32.gmra.mrb[0].mxu0 %v1183
          %v1610 = vpop.f32.mrb[0].mxu0
          %v1611 = vadd.f32 %v1099, %v1610
          %v1612 = vpop.f32.mrb[0].mxu0
          %v1613 = vadd.f32 %v1103, %v1612
          %1614 = vmatprep.mubr.f32.mxu0 0.0
          %1615 = vmatmul.mubr.f32.gmra.mrb[0].mxu0 %v1186
          %v1616 = vpop.f32.mrb[0].mxu0
          %v1617 = vadd.f32 %v1099, %v1616
          %v1618 = vpop.f32.mrb[0].mxu0
          %v1619 = vadd.f32 %v1103, %v1618
          %1620 = vmatprep.mubr.f32.mxu0 0.0
          %1621 = vmatmul.mubr.f32.gmra.mrb[0].mxu0 %v1189
          %v1622 = vpop.f32.mrb[0].mxu0
          %v1623 = vadd.f32 %v1099, %v1622
          %v1624 = vpop.f32.mrb[0].mxu0
          %v1625 = vadd.f32 %v1103, %v1624
          %1626 = vmatprep.mubr.f32.mxu0 0.0
          %1627 = vmatmul.mubr.f32.gmra.mrb[0].mxu0 %v1192
          %v1628 = vpop.f32.mrb[0].mxu0
          %v1629 = vadd.f32 %v1099, %v1628
          %v1630 = vpop.f32.mrb[0].mxu0
          %v1631 = vadd.f32 %v1103, %v1630
          %1632 = vmatprep.mubr.f32.mxu0 0.0
          %1633 = vmatmul.mubr.f32.gmra.mrb[0].mxu0 %v1195
          %v1634 = vpop.f32.mrb[0].mxu0
          %v1635 = vadd.f32 %v1099, %v1634
          %v1636 = vpop.f32.mrb[0].mxu0
          %v1637 = vadd.f32 %v1103, %v1636
          %1638 = vmatprep.mubr.f32.mxu0 0.0
          %1639 = vmatmul.mubr.f32.gmra.mrb[0].mxu0 %v1198
          %v1640 = vpop.f32.mrb[0].mxu0
          %v1641 = vadd.f32 %v1099, %v1640
          %v1642 = vpop.f32.mrb[0].mxu0
          %v1643 = vadd.f32 %v1103, %v1642
          %1644 = vmatprep.mubr.f32.mxu0 0.0
          %1645 = vmatmul.mubr.f32.gmra.mrb[0].mxu0 %v1201
          %v1646 = vpop.f32.mrb[0].mxu0
          %v1647 = vadd.f32 %v1099, %v1646
          %v1648 = vpop.f32.mrb[0].mxu0
          %v1649 = vadd.f32 %v1103, %v1648
          %1650 = vmatprep.mubr.f32.mxu0 0.0
          %1651 = vmatmul.mubr.f32.gmra.mrb[0].mxu0 %v1204
          %v1652 = vpop.f32.mrb[0].mxu0
          %v1653 = vadd.f32 %v1099, %v1652
          %v1654 = vpop.f32.mrb[0].mxu0
          %v1655 = vadd.f32 %v1103, %v1654
          %1656 = vmatprep.mubr.f32.mxu0 0.0
          %1657 = vmatmul.mubr.f32.gmra.mrb[0].mxu0 %v1207
          %v1658 = vpop.f32.mrb[0].mxu0
          %v1659 = vadd.f32 %v1099, %v1658
          %v1660 = vpop.f32.mrb[0].mxu0
          %v1661 = vadd.f32 %v1103, %v1660
          %1662 = vmatprep.mubr.f32.mxu0 0.0
          %1663 = vmatmul.mubr.f32.gmra.mrb[0].mxu0 %v1210
          %v1664 = vpop.f32.mrb[0].mxu0
          %v1665 = vadd.f32 %v1099, %v1664
          %v1666 = vpop.f32.mrb[0].mxu0
          %v1667 = vadd.f32 %v1103, %v1666
          %1668 = vmatprep.mubr.f32.mxu0 0.0
          %1669 = vmatmul.mubr.f32.gmra.mrb[0].mxu0 %v1213
          %v1670 = vpop.f32.mrb[0].mxu0
          %v1671 = vadd.f32 %v1099, %v1670
          %v1672 = vpop.f32.mrb[0].mxu0
          %v1673 = vadd.f32 %v1103, %v1672
          %1674 = vmatprep.mubr.f32.mxu0 0.0
          %1675 = vmatmul.mubr.f32.gmra.mrb[0].mxu0 %v1216
          %v1676 = vpop.f32.mrb[0].mxu0
          %v1677 = vadd.f32 %v1099, %v1676
          %v1678 = vpop.f32.mrb[0].mxu0
          %v1679 = vadd.f32 %v1103, %v1678
          %1680 = vmatprep.mubr.f32.mxu0 0.0
          %1681 = vmatmul.mubr.f32.gmra.mrb[0].mxu0 %v1219
          %v1682 = vpop.f32.mrb[0].mxu0
          %v1683 = vadd.f32 %v1099, %v1682
          %v1684 = vpop.f32.mrb[0].mxu0
          %v1685 = vadd.f32 %v1103, %v1684
          %1686 = vmatprep.mubr.f32.mxu0 0.0
          %1687 = vmatmul.mubr.f32.gmra.mrb[0].mxu0 %v1222
          %v1688 = vpop.f32.mrb[0].mxu0
          %v1689 = vadd.f32 %v1099, %v1688
          %v1690 = vpop.f32.mrb[0].mxu0
          %v1691 = vadd.f32 %v1103, %v1690
          %1692 = vmatprep.mubr.f32.mxu0 0.0
          %1693 = vmatmul.mubr.f32.gmra.mrb[0].mxu0 %v1225
          %v1694 = vpop.f32.mrb[0].mxu0
          %v1695 = vadd.f32 %v1099, %v1694
          %v1696 = vpop.f32.mrb[0].mxu0
          %v1697 = vadd.f32 %v1103, %v1696
          %1698 = vmatprep.mubr.f32.mxu0 0.0
          %1699 = vmatmul.mubr.f32.gmra.mrb[0].mxu0 %v1228
          %v1700 = vpop.f32.mrb[0].mxu0
          %v1701 = vadd.f32 %v1099, %v1700
          %v1702 = vpop.f32.mrb[0].mxu0
          %v1703 = vadd.f32 %v1103, %v1702
          %1704 = vmatprep.mubr.f32.mxu0 0.0
          %1705 = vmatmul.mubr.f32.gmra.mrb[0].mxu0 %v1231
          %v1706 = vpop.f32.mrb[0].mxu0
          %v1707 = vadd.f32 %v1099, %v1706
          %v1708 = vpop.f32.mrb[0].mxu0
          %v1709 = vadd.f32 %v1103, %v1708
          %1710 = vmatprep.mubr.f32.mxu0 0.0
          %1711 = vmatmul.mubr.f32.gmra.mrb[0].mxu0 %v1234
          %v1712 = vpop.f32.mrb[0].mxu0
          %v1713 = vadd.f32 %v1099, %v1712
          %v1714 = vpop.f32.mrb[0].mxu0
          %v1715 = vadd.f32 %v1103, %v1714
          %1716 = vmatprep.mubr.f32.mxu0 0.0
          %1717 = vmatmul.mubr.f32.gmra.mrb[0].mxu0 %v1237
          %v1718 = vpop.f32.mrb[0].mxu0
          %v1719 = vadd.f32 %v1099, %v1718
          %v1720 = vpop.f32.mrb[0].mxu0
          %v1721 = vadd.f32 %v1103, %v1720
          %1722 = vmatprep.mubr.f32.mxu0 0.0
          %1723 = vmatmul.mubr.f32.gmra.mrb[0].mxu0 %v1240
          %v1724 = vpop.f32.mrb[0].mxu0
          %v1725 = vadd.f32 %v1099, %v1724
          %v1726 = vpop.f32.mrb[0].mxu0
          %v1727 = vadd.f32 %v1103, %v1726
          %1728 = vmatprep.mubr.f32.mxu0 0.0
          %1729 = vmatmul.mubr.f32.gmra.mrb[0].mxu0 %v1243
          %v1730 = vpop.f32.mrb[0].mxu0
          %v1731 = vadd.f32 %v1099, %v1730
          %v1732 = vpop.f32.mrb[0].mxu0
          %v1733 = vadd.f32 %v1103, %v1732
          %1734 = vmatprep.mubr.f32.mxu0 0.0
          %1735 = vmatmul.mubr.f32.gmra.mrb[0].mxu0 %v1246
          %v1736 = vpop.f32.mrb[0].mxu0
          %v1737 = vadd.f32 %v1099, %v1736
          %v1738 = vpop.f32.mrb[0].mxu0
          %v1739 = vadd.f32 %v1103, %v1738
          %1740 = vmatprep.mubr.f32.mxu0 0.0
          %1741 = vmatmul.mubr.f32.gmra.mrb[0].mxu0 %v1249
          %v1742 = vpop.f32.mrb[0].mxu0
          %v1743 = vadd.f32 %v1099, %v1742
          %v1744 = vpop.f32.mrb[0].mxu0
          %v1745 = vadd.f32 %v1103, %v1744
          %1746 = vmatprep.mubr.f32.mxu0 0.0
          %1747 = vmatmul.mubr.f32.gmra.mrb[0].mxu0 %v1252
          %v1748 = vpop.f32.mrb[0].mxu0
          %v1749 = vadd.f32 %v1099, %v1748
          %v1750 = vpop.f32.mrb[0].mxu0
          %v1751 = vadd.f32 %v1103, %v1750
          %1752 = vmatprep.mubr.f32.mxu0 0.0
          %1753 = vmatmul.mubr.f32.gmra.mrb[0].mxu0 %v1255
          %v1754 = vpop.f32.mrb[0].mxu0
          %v1755 = vadd.f32 %v1099, %v1754
          %v1756 = vpop.f32.mrb[0].mxu0
          %v1757 = vadd.f32 %v1103, %v1756
          %1758 = vmatprep.mubr.f32.mxu0 0.0
          %1759 = vmatmul.mubr.f32.gmra.mrb[0].mxu0 %v1258
          %v1760 = vpop.f32.mrb[0].mxu0
          %v1761 = vadd.f32 %v1099, %v1760
          %v1762 = vpop.f32.mrb[0].mxu0
          %v1763 = vadd.f32 %v1103, %v1762
          %1764 = vmatprep.mubr.f32.mxu0 0.0
          %1765 = vmatmul.mubr.f32.gmra.mrb[0].mxu0 %v1261
          %v1766 = vpop.f32.mrb[0].mxu0
          %v1767 = vadd.f32 %v1099, %v1766
          %v1768 = vpop.f32.mrb[0].mxu0
          %v1769 = vadd.f32 %v1103, %v1768
          %1770 = vmatprep.mubr.f32.mxu0 0.0
          %1771 = vmatmul.mubr.f32.gmra.mrb[0].mxu0 %v1264
          %v1772 = vpop.f32.mrb[0].mxu0
          %v1773 = vadd.f32 %v1099, %v1772
          %v1774 = vpop.f32.mrb[0].mxu0
          %v1775 = vadd.f32 %v1103, %v1774
          %1776 = vmatprep.mubr.f32.mxu0 0.0
          %1777 = vmatmul.mubr.f32.gmra.mrb[0].mxu0 %v1267
          %v1778 = vpop.f32.mrb[0].mxu0
          %v1779 = vadd.f32 %v1099, %v1778
          %v1780 = vpop.f32.mrb[0].mxu0
          %v1781 = vadd.f32 %v1103, %v1780
          %1782 = vdwg.mxu0
          %s1783 = smul.u32 %s31, 128
          %s1784 = smul.addr %s1783, 8
          %s1785 = scalar_lea.vmem [#allocation6], %s1784
          %1786 = vst [vmem:[%s1785] sm:$0xff] %v1336
          %1787 = vst [vmem:[%s1785 + $0x8] sm:$0xff] %v1338
          %1788 = vst [vmem:[%s1785 + $0x10] sm:$0xff] %v1593
          %1789 = vst [vmem:[%s1785 + $0x18] sm:$0xff] %v1595
          %1790 = vst [vmem:[%s1785 + $0x20] sm:$0xff] %v1342
          %1791 = vst [vmem:[%s1785 + $0x28] sm:$0xff] %v1344
          %1792 = vst [vmem:[%s1785 + $0x30] sm:$0xff] %v1599
          %1793 = vst [vmem:[%s1785 + $0x38] sm:$0xff] %v1601
          %1794 = vst [vmem:[%s1785 + $0x40] sm:$0xff] %v1348
          %1795 = vst [vmem:[%s1785 + $0x48] sm:$0xff] %v1350
          %1796 = vst [vmem:[%s1785 + $0x50] sm:$0xff] %v1605
          %1797 = vst [vmem:[%s1785 + $0x58] sm:$0xff] %v1607
          %1798 = vst [vmem:[%s1785 + $0x60] sm:$0xff] %v1354
          %1799 = vst [vmem:[%s1785 + $0x68] sm:$0xff] %v1356
          %1800 = vst [vmem:[%s1785 + $0x70] sm:$0xff] %v1611
          %1801 = vst [vmem:[%s1785 + $0x78] sm:$0xff] %v1613
          %1802 = vst [vmem:[%s1785 + $0x80] sm:$0xff] %v1360
          %1803 = vst [vmem:[%s1785 + $0x88] sm:$0xff] %v1362
          %1804 = vst [vmem:[%s1785 + $0x90] sm:$0xff] %v1617
          %1805 = vst [vmem:[%s1785 + $0x98] sm:$0xff] %v1619
          %1806 = vst [vmem:[%s1785 + $0xa0] sm:$0xff] %v1366
          %1807 = vst [vmem:[%s1785 + $0xa8] sm:$0xff] %v1368
          %1808 = vst [vmem:[%s1785 + $0xb0] sm:$0xff] %v1623
          %1809 = vst [vmem:[%s1785 + $0xb8] sm:$0xff] %v1625
          %1810 = vst [vmem:[%s1785 + $0xc0] sm:$0xff] %v1372
          %1811 = vst [vmem:[%s1785 + $0xc8] sm:$0xff] %v1374
          %1812 = vst [vmem:[%s1785 + $0xd0] sm:$0xff] %v1629
          %1813 = vst [vmem:[%s1785 + $0xd8] sm:$0xff] %v1631
          %1814 = vst [vmem:[%s1785 + $0xe0] sm:$0xff] %v1378
          %1815 = vst [vmem:[%s1785 + $0xe8] sm:$0xff] %v1380
          %1816 = vst [vmem:[%s1785 + $0xf0] sm:$0xff] %v1635
          %1817 = vst [vmem:[%s1785 + $0xf8] sm:$0xff] %v1637
          %1818 = vst [vmem:[%s1785 + $0x100] sm:$0xff] %v1384
          %1819 = vst [vmem:[%s1785 + $0x108] sm:$0xff] %v1386
          %1820 = vst [vmem:[%s1785 + $0x110] sm:$0xff] %v1641
          %1821 = vst [vmem:[%s1785 + $0x118] sm:$0xff] %v1643
          %1822 = vst [vmem:[%s1785 + $0x120] sm:$0xff] %v1390
          %1823 = vst [vmem:[%s1785 + $0x128] sm:$0xff] %v1392
          %1824 = vst [vmem:[%s1785 + $0x130] sm:$0xff] %v1647
          %1825 = vst [vmem:[%s1785 + $0x138] sm:$0xff] %v1649
          %1826 = vst [vmem:[%s1785 + $0x140] sm:$0xff] %v1396
          %1827 = vst [vmem:[%s1785 + $0x148] sm:$0xff] %v1398
          %1828 = vst [vmem:[%s1785 + $0x150] sm:$0xff] %v1653
          %1829 = vst [vmem:[%s1785 + $0x158] sm:$0xff] %v1655
          %1830 = vst [vmem:[%s1785 + $0x160] sm:$0xff] %v1402
          %1831 = vst [vmem:[%s1785 + $0x168] sm:$0xff] %v1404
          %1832 = vst [vmem:[%s1785 + $0x170] sm:$0xff] %v1659
          %1833 = vst [vmem:[%s1785 + $0x178] sm:$0xff] %v1661
          %1834 = vst [vmem:[%s1785 + $0x180] sm:$0xff] %v1408
          %1835 = vst [vmem:[%s1785 + $0x188] sm:$0xff] %v1410
          %1836 = vst [vmem:[%s1785 + $0x190] sm:$0xff] %v1665
          %1837 = vst [vmem:[%s1785 + $0x198] sm:$0xff] %v1667
          %1838 = vst [vmem:[%s1785 + $0x1a0] sm:$0xff] %v1414
          %1839 = vst [vmem:[%s1785 + $0x1a8] sm:$0xff] %v1416
          %1840 = vst [vmem:[%s1785 + $0x1b0] sm:$0xff] %v1671
          %1841 = vst [vmem:[%s1785 + $0x1b8] sm:$0xff] %v1673
          %1842 = vst [vmem:[%s1785 + $0x1c0] sm:$0xff] %v1420
          %1843 = vst [vmem:[%s1785 + $0x1c8] sm:$0xff] %v1422
          %1844 = vst [vmem:[%s1785 + $0x1d0] sm:$0xff] %v1677
          %1845 = vst [vmem:[%s1785 + $0x1d8] sm:$0xff] %v1679
          %1846 = vst [vmem:[%s1785 + $0x1e0] sm:$0xff] %v1426
          %1847 = vst [vmem:[%s1785 + $0x1e8] sm:$0xff] %v1428
          %1848 = vst [vmem:[%s1785 + $0x1f0] sm:$0xff] %v1683
          %1849 = vst [vmem:[%s1785 + $0x1f8] sm:$0xff] %v1685
          %1850 = vst [vmem:[%s1785 + $0x200] sm:$0xff] %v1432
          %1851 = vst [vmem:[%s1785 + $0x208] sm:$0xff] %v1434
          %1852 = vst [vmem:[%s1785 + $0x210] sm:$0xff] %v1689
          %1853 = vst [vmem:[%s1785 + $0x218] sm:$0xff] %v1691
          %1854 = vst [vmem:[%s1785 + $0x220] sm:$0xff] %v1438
          %1855 = vst [vmem:[%s1785 + $0x228] sm:$0xff] %v1440
          %1856 = vst [vmem:[%s1785 + $0x230] sm:$0xff] %v1695
          %1857 = vst [vmem:[%s1785 + $0x238] sm:$0xff] %v1697
          %1858 = vst [vmem:[%s1785 + $0x240] sm:$0xff] %v1444
          %1859 = vst [vmem:[%s1785 + $0x248] sm:$0xff] %v1446
          %1860 = vst [vmem:[%s1785 + $0x250] sm:$0xff] %v1701
          %1861 = vst [vmem:[%s1785 + $0x258] sm:$0xff] %v1703
          %1862 = vst [vmem:[%s1785 + $0x260] sm:$0xff] %v1450
          %1863 = vst [vmem:[%s1785 + $0x268] sm:$0xff] %v1452
          %1864 = vst [vmem:[%s1785 + $0x270] sm:$0xff] %v1707
          %1865 = vst [vmem:[%s1785 + $0x278] sm:$0xff] %v1709
          %1866 = vst [vmem:[%s1785 + $0x280] sm:$0xff] %v1456
          %1867 = vst [vmem:[%s1785 + $0x288] sm:$0xff] %v1458
          %1868 = vst [vmem:[%s1785 + $0x290] sm:$0xff] %v1713
          %1869 = vst [vmem:[%s1785 + $0x298] sm:$0xff] %v1715
          %1870 = vst [vmem:[%s1785 + $0x2a0] sm:$0xff] %v1462
          %1871 = vst [vmem:[%s1785 + $0x2a8] sm:$0xff] %v1464
          %1872 = vst [vmem:[%s1785 + $0x2b0] sm:$0xff] %v1719
          %1873 = vst [vmem:[%s1785 + $0x2b8] sm:$0xff] %v1721
          %1874 = vst [vmem:[%s1785 + $0x2c0] sm:$0xff] %v1468
          %1875 = vst [vmem:[%s1785 + $0x2c8] sm:$0xff] %v1470
          %1876 = vst [vmem:[%s1785 + $0x2d0] sm:$0xff] %v1725
          %1877 = vst [vmem:[%s1785 + $0x2d8] sm:$0xff] %v1727
          %1878 = vst [vmem:[%s1785 + $0x2e0] sm:$0xff] %v1474
          %1879 = vst [vmem:[%s1785 + $0x2e8] sm:$0xff] %v1476
          %1880 = vst [vmem:[%s1785 + $0x2f0] sm:$0xff] %v1731
          %1881 = vst [vmem:[%s1785 + $0x2f8] sm:$0xff] %v1733
          %1882 = vst [vmem:[%s1785 + $0x300] sm:$0xff] %v1480
          %1883 = vst [vmem:[%s1785 + $0x308] sm:$0xff] %v1482
          %1884 = vst [vmem:[%s1785 + $0x310] sm:$0xff] %v1737
          %1885 = vst [vmem:[%s1785 + $0x318] sm:$0xff] %v1739
          %1886 = vst [vmem:[%s1785 + $0x320] sm:$0xff] %v1486
          %1887 = vst [vmem:[%s1785 + $0x328] sm:$0xff] %v1488
          %1888 = vst [vmem:[%s1785 + $0x330] sm:$0xff] %v1743
          %1889 = vst [vmem:[%s1785 + $0x338] sm:$0xff] %v1745
          %1890 = vst [vmem:[%s1785 + $0x340] sm:$0xff] %v1492
          %1891 = vst [vmem:[%s1785 + $0x348] sm:$0xff] %v1494
          %1892 = vst [vmem:[%s1785 + $0x350] sm:$0xff] %v1749
          %1893 = vst [vmem:[%s1785 + $0x358] sm:$0xff] %v1751
          %1894 = vst [vmem:[%s1785 + $0x360] sm:$0xff] %v1498
          %1895 = vst [vmem:[%s1785 + $0x368] sm:$0xff] %v1500
          %1896 = vst [vmem:[%s1785 + $0x370] sm:$0xff] %v1755
          %1897 = vst [vmem:[%s1785 + $0x378] sm:$0xff] %v1757
          %1898 = vst [vmem:[%s1785 + $0x380] sm:$0xff] %v1504
          %1899 = vst [vmem:[%s1785 + $0x388] sm:$0xff] %v1506
          %1900 = vst [vmem:[%s1785 + $0x390] sm:$0xff] %v1761
          %1901 = vst [vmem:[%s1785 + $0x398] sm:$0xff] %v1763
          %1902 = vst [vmem:[%s1785 + $0x3a0] sm:$0xff] %v1510
          %1903 = vst [vmem:[%s1785 + $0x3a8] sm:$0xff] %v1512
          %1904 = vst [vmem:[%s1785 + $0x3b0] sm:$0xff] %v1767
          %1905 = vst [vmem:[%s1785 + $0x3b8] sm:$0xff] %v1769
          %1906 = vst [vmem:[%s1785 + $0x3c0] sm:$0xff] %v1516
          %1907 = vst [vmem:[%s1785 + $0x3c8] sm:$0xff] %v1518
          %1908 = vst [vmem:[%s1785 + $0x3d0] sm:$0xff] %v1773
          %1909 = vst [vmem:[%s1785 + $0x3d8] sm:$0xff] %v1775
          %1910 = vst [vmem:[%s1785 + $0x3e0] sm:$0xff] %v1522
          %1911 = vst [vmem:[%s1785 + $0x3e8] sm:$0xff] %v1524
          %1912 = vst [vmem:[%s1785 + $0x3f0] sm:$0xff] %v1779
          %1913 = vst [vmem:[%s1785 + $0x3f8] sm:$0xff] %v1781
        $region68: #{tpu_custom_call.1} parent=43 // pred_fallthru
          _
        %s1914 = smul.u32 %s31, 128
        %s1915 = smul.addr %s1914, 8
        %s1916 = scalar_lea.vmem [#allocation6], %s1915
        %v1917 = vld [vmem:[%s1916] sm:$0xff]
        %v1918 = vld [vmem:[%s1916 + $0x8] sm:$0xff]
        %v1919 = vld [vmem:[%s1916 + $0x10] sm:$0xff]
        %v1920 = vld [vmem:[%s1916 + $0x18] sm:$0xff]
        %v1921 = vld [vmem:[%s1916 + $0x20] sm:$0xff]
        %v1922 = vld [vmem:[%s1916 + $0x28] sm:$0xff]
        %v1923 = vld [vmem:[%s1916 + $0x30] sm:$0xff]
        %v1924 = vld [vmem:[%s1916 + $0x38] sm:$0xff]
        %v1925 = vld [vmem:[%s1916 + $0x40] sm:$0xff]
        %v1926 = vld [vmem:[%s1916 + $0x48] sm:$0xff]
        %v1927 = vld [vmem:[%s1916 + $0x50] sm:$0xff]
        %v1928 = vld [vmem:[%s1916 + $0x58] sm:$0xff]
        %v1929 = vld [vmem:[%s1916 + $0x60] sm:$0xff]
        %v1930 = vld [vmem:[%s1916 + $0x68] sm:$0xff]
        %v1931 = vld [vmem:[%s1916 + $0x70] sm:$0xff]
        %v1932 = vld [vmem:[%s1916 + $0x78] sm:$0xff]
        %v1933 = vld [vmem:[%s1916 + $0x80] sm:$0xff]
        %v1934 = vld [vmem:[%s1916 + $0x88] sm:$0xff]
        %v1935 = vld [vmem:[%s1916 + $0x90] sm:$0xff]
        %v1936 = vld [vmem:[%s1916 + $0x98] sm:$0xff]
        %v1937 = vld [vmem:[%s1916 + $0xa0] sm:$0xff]
        %v1938 = vld [vmem:[%s1916 + $0xa8] sm:$0xff]
        %v1939 = vld [vmem:[%s1916 + $0xb0] sm:$0xff]
        %v1940 = vld [vmem:[%s1916 + $0xb8] sm:$0xff]
        %v1941 = vld [vmem:[%s1916 + $0xc0] sm:$0xff]
        %v1942 = vld [vmem:[%s1916 + $0xc8] sm:$0xff]
        %v1943 = vld [vmem:[%s1916 + $0xd0] sm:$0xff]
        %v1944 = vld [vmem:[%s1916 + $0xd8] sm:$0xff]
        %v1945 = vld [vmem:[%s1916 + $0xe0] sm:$0xff]
        %v1946 = vld [vmem:[%s1916 + $0xe8] sm:$0xff]
        %v1947 = vld [vmem:[%s1916 + $0xf0] sm:$0xff]
        %v1948 = vld [vmem:[%s1916 + $0xf8] sm:$0xff]
        %v1949 = vld [vmem:[%s1916 + $0x100] sm:$0xff]
        %v1950 = vld [vmem:[%s1916 + $0x108] sm:$0xff]
        %v1951 = vld [vmem:[%s1916 + $0x110] sm:$0xff]
        %v1952 = vld [vmem:[%s1916 + $0x118] sm:$0xff]
        %v1953 = vld [vmem:[%s1916 + $0x120] sm:$0xff]
        %v1954 = vld [vmem:[%s1916 + $0x128] sm:$0xff]
        %v1955 = vld [vmem:[%s1916 + $0x130] sm:$0xff]
        %v1956 = vld [vmem:[%s1916 + $0x138] sm:$0xff]
        %v1957 = vld [vmem:[%s1916 + $0x140] sm:$0xff]
        %v1958 = vld [vmem:[%s1916 + $0x148] sm:$0xff]
        %v1959 = vld [vmem:[%s1916 + $0x150] sm:$0xff]
        %v1960 = vld [vmem:[%s1916 + $0x158] sm:$0xff]
        %v1961 = vld [vmem:[%s1916 + $0x160] sm:$0xff]
        %v1962 = vld [vmem:[%s1916 + $0x168] sm:$0xff]
        %v1963 = vld [vmem:[%s1916 + $0x170] sm:$0xff]
        %v1964 = vld [vmem:[%s1916 + $0x178] sm:$0xff]
        %v1965 = vld [vmem:[%s1916 + $0x180] sm:$0xff]
        %v1966 = vld [vmem:[%s1916 + $0x188] sm:$0xff]
        %v1967 = vld [vmem:[%s1916 + $0x190] sm:$0xff]
        %v1968 = vld [vmem:[%s1916 + $0x198] sm:$0xff]
        %v1969 = vld [vmem:[%s1916 + $0x1a0] sm:$0xff]
        %v1970 = vld [vmem:[%s1916 + $0x1a8] sm:$0xff]
        %v1971 = vld [vmem:[%s1916 + $0x1b0] sm:$0xff]
        %v1972 = vld [vmem:[%s1916 + $0x1b8] sm:$0xff]
        %v1973 = vld [vmem:[%s1916 + $0x1c0] sm:$0xff]
        %v1974 = vld [vmem:[%s1916 + $0x1c8] sm:$0xff]
        %v1975 = vld [vmem:[%s1916 + $0x1d0] sm:$0xff]
        %v1976 = vld [vmem:[%s1916 + $0x1d8] sm:$0xff]
        %v1977 = vld [vmem:[%s1916 + $0x1e0] sm:$0xff]
        %v1978 = vld [vmem:[%s1916 + $0x1e8] sm:$0xff]
        %v1979 = vld [vmem:[%s1916 + $0x1f0] sm:$0xff]
        %v1980 = vld [vmem:[%s1916 + $0x1f8] sm:$0xff]
        %v1981 = vld [vmem:[%s1916 + $0x200] sm:$0xff]
        %v1982 = vld [vmem:[%s1916 + $0x208] sm:$0xff]
        %v1983 = vld [vmem:[%s1916 + $0x210] sm:$0xff]
        %v1984 = vld [vmem:[%s1916 + $0x218] sm:$0xff]
        %v1985 = vld [vmem:[%s1916 + $0x220] sm:$0xff]
        %v1986 = vld [vmem:[%s1916 + $0x228] sm:$0xff]
        %v1987 = vld [vmem:[%s1916 + $0x230] sm:$0xff]
        %v1988 = vld [vmem:[%s1916 + $0x238] sm:$0xff]
        %v1989 = vld [vmem:[%s1916 + $0x240] sm:$0xff]
        %v1990 = vld [vmem:[%s1916 + $0x248] sm:$0xff]
        %v1991 = vld [vmem:[%s1916 + $0x250] sm:$0xff]
        %v1992 = vld [vmem:[%s1916 + $0x258] sm:$0xff]
        %v1993 = vld [vmem:[%s1916 + $0x260] sm:$0xff]
        %v1994 = vld [vmem:[%s1916 + $0x268] sm:$0xff]
        %v1995 = vld [vmem:[%s1916 + $0x270] sm:$0xff]
        %v1996 = vld [vmem:[%s1916 + $0x278] sm:$0xff]
        %v1997 = vld [vmem:[%s1916 + $0x280] sm:$0xff]
        %v1998 = vld [vmem:[%s1916 + $0x288] sm:$0xff]
        %v1999 = vld [vmem:[%s1916 + $0x290] sm:$0xff]
        %v2000 = vld [vmem:[%s1916 + $0x298] sm:$0xff]
        %v2001 = vld [vmem:[%s1916 + $0x2a0] sm:$0xff]
        %v2002 = vld [vmem:[%s1916 + $0x2a8] sm:$0xff]
        %v2003 = vld [vmem:[%s1916 + $0x2b0] sm:$0xff]
        %v2004 = vld [vmem:[%s1916 + $0x2b8] sm:$0xff]
        %v2005 = vld [vmem:[%s1916 + $0x2c0] sm:$0xff]
        %v2006 = vld [vmem:[%s1916 + $0x2c8] sm:$0xff]
        %v2007 = vld [vmem:[%s1916 + $0x2d0] sm:$0xff]
        %v2008 = vld [vmem:[%s1916 + $0x2d8] sm:$0xff]
        %v2009 = vld [vmem:[%s1916 + $0x2e0] sm:$0xff]
        %v2010 = vld [vmem:[%s1916 + $0x2e8] sm:$0xff]
        %v2011 = vld [vmem:[%s1916 + $0x2f0] sm:$0xff]
        %v2012 = vld [vmem:[%s1916 + $0x2f8] sm:$0xff]
        %v2013 = vld [vmem:[%s1916 + $0x300] sm:$0xff]
        %v2014 = vld [vmem:[%s1916 + $0x308] sm:$0xff]
        %v2015 = vld [vmem:[%s1916 + $0x310] sm:$0xff]
        %v2016 = vld [vmem:[%s1916 + $0x318] sm:$0xff]
        %v2017 = vld [vmem:[%s1916 + $0x320] sm:$0xff]
        %v2018 = vld [vmem:[%s1916 + $0x328] sm:$0xff]
        %v2019 = vld [vmem:[%s1916 + $0x330] sm:$0xff]
        %v2020 = vld [vmem:[%s1916 + $0x338] sm:$0xff]
        %v2021 = vld [vmem:[%s1916 + $0x340] sm:$0xff]
        %v2022 = vld [vmem:[%s1916 + $0x348] sm:$0xff]
        %v2023 = vld [vmem:[%s1916 + $0x350] sm:$0xff]
        %v2024 = vld [vmem:[%s1916 + $0x358] sm:$0xff]
        %v2025 = vld [vmem:[%s1916 + $0x360] sm:$0xff]
        %v2026 = vld [vmem:[%s1916 + $0x368] sm:$0xff]
        %v2027 = vld [vmem:[%s1916 + $0x370] sm:$0xff]
        %v2028 = vld [vmem:[%s1916 + $0x378] sm:$0xff]
        %v2029 = vld [vmem:[%s1916 + $0x380] sm:$0xff]
        %v2030 = vld [vmem:[%s1916 + $0x388] sm:$0xff]
        %v2031 = vld [vmem:[%s1916 + $0x390] sm:$0xff]
        %v2032 = vld [vmem:[%s1916 + $0x398] sm:$0xff]
        %v2033 = vld [vmem:[%s1916 + $0x3a0] sm:$0xff]
        %v2034 = vld [vmem:[%s1916 + $0x3a8] sm:$0xff]
        %v2035 = vld [vmem:[%s1916 + $0x3b0] sm:$0xff]
        %v2036 = vld [vmem:[%s1916 + $0x3b8] sm:$0xff]
        %v2037 = vld [vmem:[%s1916 + $0x3c0] sm:$0xff]
        %v2038 = vld [vmem:[%s1916 + $0x3c8] sm:$0xff]
        %v2039 = vld [vmem:[%s1916 + $0x3d0] sm:$0xff]
        %v2040 = vld [vmem:[%s1916 + $0x3d8] sm:$0xff]
        %v2041 = vld [vmem:[%s1916 + $0x3e0] sm:$0xff]
        %v2042 = vld [vmem:[%s1916 + $0x3e8] sm:$0xff]
        %v2043 = vld [vmem:[%s1916 + $0x3f0] sm:$0xff]
        %v2044 = vld [vmem:[%s1916 + $0x3f8] sm:$0xff]
        %v2045 = vld [vmem:[#allocation2] sm:$0xff]
        %v2046 = vld [vmem:[#allocation2 + $0x10] sm:$0xff]
        %v2047 = vld [vmem:[#allocation2 + $0x20] sm:$0xff]
        %v2048 = vld [vmem:[#allocation2 + $0x30] sm:$0xff]
        %v2049 = vld [vmem:[#allocation2 + $0x40] sm:$0xff]
        %v2050 = vld [vmem:[#allocation2 + $0x50] sm:$0xff]
        %v2051 = vld [vmem:[#allocation2 + $0x60] sm:$0xff]
        %v2052 = vld [vmem:[#allocation2 + $0x70] sm:$0xff]
        %v2053 = vld [vmem:[#allocation2 + $0x80] sm:$0xff]
        %v2054 = vld [vmem:[#allocation2 + $0x90] sm:$0xff]
        %v2055 = vld [vmem:[#allocation2 + $0xa0] sm:$0xff]
        %v2056 = vld [vmem:[#allocation2 + $0xb0] sm:$0xff]
        %v2057 = vld [vmem:[#allocation2 + $0xc0] sm:$0xff]
        %v2058 = vld [vmem:[#allocation2 + $0xd0] sm:$0xff]
        %v2059 = vld [vmem:[#allocation2 + $0xe0] sm:$0xff]
        %v2060 = vld [vmem:[#allocation2 + $0xf0] sm:$0xff]
        %v2061 = vld [vmem:[#allocation2 + $0x100] sm:$0xff]
        %v2062 = vld [vmem:[#allocation2 + $0x110] sm:$0xff]
        %v2063 = vld [vmem:[#allocation2 + $0x120] sm:$0xff]
        %v2064 = vld [vmem:[#allocation2 + $0x130] sm:$0xff]
        %v2065 = vld [vmem:[#allocation2 + $0x140] sm:$0xff]
        %v2066 = vld [vmem:[#allocation2 + $0x150] sm:$0xff]
        %v2067 = vld [vmem:[#allocation2 + $0x160] sm:$0xff]
        %v2068 = vld [vmem:[#allocation2 + $0x170] sm:$0xff]
        %v2069 = vld [vmem:[#allocation2 + $0x180] sm:$0xff]
        %v2070 = vld [vmem:[#allocation2 + $0x190] sm:$0xff]
        %v2071 = vld [vmem:[#allocation2 + $0x1a0] sm:$0xff]
        %v2072 = vld [vmem:[#allocation2 + $0x1b0] sm:$0xff]
        %v2073 = vld [vmem:[#allocation2 + $0x1c0] sm:$0xff]
        %v2074 = vld [vmem:[#allocation2 + $0x1d0] sm:$0xff]
        %v2075 = vld [vmem:[#allocation2 + $0x1e0] sm:$0xff]
        %v2076 = vld [vmem:[#allocation2 + $0x1f0] sm:$0xff]
        %2077 = vmatprep.subr.mxu0 0.0
        %2078 = vmatpush1.xpose.msra.mxu0 %v1917
        %2079 = vmatprep.subr.mxu0 0.0
        %2080 = vmatpush1.xpose.msra.mxu0 %v1921
        %2081 = vmatprep.subr.mxu0 0.0
        %2082 = vmatpush1.xpose.msra.mxu0 %v1925
        %2083 = vmatprep.subr.mxu0 0.0
        %2084 = vmatpush1.xpose.msra.mxu0 %v1929
        %2085 = vmatprep.subr.mxu0 0.0
        %2086 = vmatpush1.xpose.msra.mxu0 %v1933
        %2087 = vmatprep.subr.mxu0 0.0
        %2088 = vmatpush1.xpose.msra.mxu0 %v1937
        %2089 = vmatprep.subr.mxu0 0.0
        %2090 = vmatpush1.xpose.msra.mxu0 %v1941
        %2091 = vmatprep.subr.mxu0 0.0
        %2092 = vmatpush1.xpose.msra.mxu0 %v1945
        %2093 = vmatprep.subr.mxu0 0.0
        %2094 = vmatpush1.xpose.msra.mxu0 %v1949
        %2095 = vmatprep.subr.mxu0 0.0
        %2096 = vmatpush1.xpose.msra.mxu0 %v1953
        %2097 = vmatprep.subr.mxu0 0.0
        %2098 = vmatpush1.xpose.msra.mxu0 %v1957
        %2099 = vmatprep.subr.mxu0 0.0
        %2100 = vmatpush1.xpose.msra.mxu0 %v1961
        %2101 = vmatprep.subr.mxu0 0.0
        %2102 = vmatpush1.xpose.msra.mxu0 %v1965
        %2103 = vmatprep.subr.mxu0 0.0
        %2104 = vmatpush1.xpose.msra.mxu0 %v1969
        %2105 = vmatprep.subr.mxu0 0.0
        %2106 = vmatpush1.xpose.msra.mxu0 %v1973
        %2107 = vmatprep.subr.mxu0 0.0
        %2108 = vmatpush1.xpose.msra.mxu0 %v1977
        %2109 = vmatprep.subr.mxu0 0.0
        %2110 = vmatpush1.xpose.msra.mxu0 %v1981
        %2111 = vmatprep.subr.mxu0 0.0
        %2112 = vmatpush1.xpose.msra.mxu0 %v1985
        %2113 = vmatprep.subr.mxu0 0.0
        %2114 = vmatpush1.xpose.msra.mxu0 %v1989
        %2115 = vmatprep.subr.mxu0 0.0
        %2116 = vmatpush1.xpose.msra.mxu0 %v1993
        %2117 = vmatprep.subr.mxu0 0.0
        %2118 = vmatpush1.xpose.msra.mxu0 %v1997
        %2119 = vmatprep.subr.mxu0 0.0
        %2120 = vmatpush1.xpose.msra.mxu0 %v2001
        %2121 = vmatprep.subr.mxu0 0.0
        %2122 = vmatpush1.xpose.msra.mxu0 %v2005
        %2123 = vmatprep.subr.mxu0 0.0
        %2124 = vmatpush1.xpose.msra.mxu0 %v2009
        %2125 = vmatprep.subr.mxu0 0.0
        %2126 = vmatpush1.xpose.msra.mxu0 %v2013
        %2127 = vmatprep.subr.mxu0 0.0
        %2128 = vmatpush1.xpose.msra.mxu0 %v2017
        %2129 = vmatprep.subr.mxu0 0.0
        %2130 = vmatpush1.xpose.msra.mxu0 %v2021
        %2131 = vmatprep.subr.mxu0 0.0
        %2132 = vmatpush1.xpose.msra.mxu0 %v2025
        %2133 = vmatprep.subr.mxu0 0.0
        %2134 = vmatpush1.xpose.msra.mxu0 %v2029
        %2135 = vmatprep.subr.mxu0 0.0
        %2136 = vmatpush1.xpose.msra.mxu0 %v2033
        %2137 = vmatprep.subr.mxu0 0.0
        %2138 = vmatpush1.xpose.msra.mxu0 %v2037
        %2139 = vmatprep.subr.mxu0 0.0
        %2140 = vmatpush1.xpose.msra.mxu0 %v2041
        %2141 = vmatprep.mubr.f32.mxu0 0.0
        %2142 = vmatmul.mubr.f32.gmra.mrb[0].mxu0 %v2045
        %v2143 = vpop.f32.mrb[0].mxu0
        %v2144 = vadd.f32 0.0, %v2143
        %v2145 = vpop.f32.mrb[0].mxu0
        %v2146 = vadd.f32 0.0, %v2145
        %2147 = vmatprep.mubr.f32.mxu0 0.0
        %2148 = vmatmul.mubr.f32.gmra.mrb[0].mxu0 %v2046
        %v2149 = vpop.f32.mrb[0].mxu0
        %v2150 = vadd.f32 0.0, %v2149
        %v2151 = vpop.f32.mrb[0].mxu0
        %v2152 = vadd.f32 0.0, %v2151
        %2153 = vmatprep.mubr.f32.mxu0 0.0
        %2154 = vmatmul.mubr.f32.gmra.mrb[0].mxu0 %v2047
        %v2155 = vpop.f32.mrb[0].mxu0
        %v2156 = vadd.f32 0.0, %v2155
        %v2157 = vpop.f32.mrb[0].mxu0
        %v2158 = vadd.f32 0.0, %v2157
        %2159 = vmatprep.mubr.f32.mxu0 0.0
        %2160 = vmatmul.mubr.f32.gmra.mrb[0].mxu0 %v2048
        %v2161 = vpop.f32.mrb[0].mxu0
        %v2162 = vadd.f32 0.0, %v2161
        %v2163 = vpop.f32.mrb[0].mxu0
        %v2164 = vadd.f32 0.0, %v2163
        %2165 = vmatprep.mubr.f32.mxu0 0.0
        %2166 = vmatmul.mubr.f32.gmra.mrb[0].mxu0 %v2049
        %v2167 = vpop.f32.mrb[0].mxu0
        %v2168 = vadd.f32 0.0, %v2167
        %v2169 = vpop.f32.mrb[0].mxu0
        %v2170 = vadd.f32 0.0, %v2169
        %2171 = vmatprep.mubr.f32.mxu0 0.0
        %2172 = vmatmul.mubr.f32.gmra.mrb[0].mxu0 %v2050
        %v2173 = vpop.f32.mrb[0].mxu0
        %v2174 = vadd.f32 0.0, %v2173
        %v2175 = vpop.f32.mrb[0].mxu0
        %v2176 = vadd.f32 0.0, %v2175
        %2177 = vmatprep.mubr.f32.mxu0 0.0
        %2178 = vmatmul.mubr.f32.gmra.mrb[0].mxu0 %v2051
        %v2179 = vpop.f32.mrb[0].mxu0
        %v2180 = vadd.f32 0.0, %v2179
        %v2181 = vpop.f32.mrb[0].mxu0
        %v2182 = vadd.f32 0.0, %v2181
        %2183 = vmatprep.mubr.f32.mxu0 0.0
        %2184 = vmatmul.mubr.f32.gmra.mrb[0].mxu0 %v2052
        %v2185 = vpop.f32.mrb[0].mxu0
        %v2186 = vadd.f32 0.0, %v2185
        %v2187 = vpop.f32.mrb[0].mxu0
        %v2188 = vadd.f32 0.0, %v2187
        %2189 = vmatprep.mubr.f32.mxu0 0.0
        %2190 = vmatmul.mubr.f32.gmra.mrb[0].mxu0 %v2053
        %v2191 = vpop.f32.mrb[0].mxu0
        %v2192 = vadd.f32 0.0, %v2191
        %v2193 = vpop.f32.mrb[0].mxu0
        %v2194 = vadd.f32 0.0, %v2193
        %2195 = vmatprep.mubr.f32.mxu0 0.0
        %2196 = vmatmul.mubr.f32.gmra.mrb[0].mxu0 %v2054
        %v2197 = vpop.f32.mrb[0].mxu0
        %v2198 = vadd.f32 0.0, %v2197
        %v2199 = vpop.f32.mrb[0].mxu0
        %v2200 = vadd.f32 0.0, %v2199
        %2201 = vmatprep.mubr.f32.mxu0 0.0
        %2202 = vmatmul.mubr.f32.gmra.mrb[0].mxu0 %v2055
        %v2203 = vpop.f32.mrb[0].mxu0
        %v2204 = vadd.f32 0.0, %v2203
        %v2205 = vpop.f32.mrb[0].mxu0
        %v2206 = vadd.f32 0.0, %v2205
        %2207 = vmatprep.mubr.f32.mxu0 0.0
        %2208 = vmatmul.mubr.f32.gmra.mrb[0].mxu0 %v2056
        %v2209 = vpop.f32.mrb[0].mxu0
        %v2210 = vadd.f32 0.0, %v2209
        %v2211 = vpop.f32.mrb[0].mxu0
        %v2212 = vadd.f32 0.0, %v2211
        %2213 = vmatprep.mubr.f32.mxu0 0.0
        %2214 = vmatmul.mubr.f32.gmra.mrb[0].mxu0 %v2057
        %v2215 = vpop.f32.mrb[0].mxu0
        %v2216 = vadd.f32 0.0, %v2215
        %v2217 = vpop.f32.mrb[0].mxu0
        %v2218 = vadd.f32 0.0, %v2217
        %2219 = vmatprep.mubr.f32.mxu0 0.0
        %2220 = vmatmul.mubr.f32.gmra.mrb[0].mxu0 %v2058
        %v2221 = vpop.f32.mrb[0].mxu0
        %v2222 = vadd.f32 0.0, %v2221
        %v2223 = vpop.f32.mrb[0].mxu0
        %v2224 = vadd.f32 0.0, %v2223
        %2225 = vmatprep.mubr.f32.mxu0 0.0
        %2226 = vmatmul.mubr.f32.gmra.mrb[0].mxu0 %v2059
        %v2227 = vpop.f32.mrb[0].mxu0
        %v2228 = vadd.f32 0.0, %v2227
        %v2229 = vpop.f32.mrb[0].mxu0
        %v2230 = vadd.f32 0.0, %v2229
        %2231 = vmatprep.mubr.f32.mxu0 0.0
        %2232 = vmatmul.mubr.f32.gmra.mrb[0].mxu0 %v2060
        %v2233 = vpop.f32.mrb[0].mxu0
        %v2234 = vadd.f32 0.0, %v2233
        %v2235 = vpop.f32.mrb[0].mxu0
        %v2236 = vadd.f32 0.0, %v2235
        %2237 = vmatprep.mubr.f32.mxu0 0.0
        %2238 = vmatmul.mubr.f32.gmra.mrb[0].mxu0 %v2061
        %v2239 = vpop.f32.mrb[0].mxu0
        %v2240 = vadd.f32 0.0, %v2239
        %v2241 = vpop.f32.mrb[0].mxu0
        %v2242 = vadd.f32 0.0, %v2241
        %2243 = vmatprep.mubr.f32.mxu0 0.0
        %2244 = vmatmul.mubr.f32.gmra.mrb[0].mxu0 %v2062
        %v2245 = vpop.f32.mrb[0].mxu0
        %v2246 = vadd.f32 0.0, %v2245
        %v2247 = vpop.f32.mrb[0].mxu0
        %v2248 = vadd.f32 0.0, %v2247
        %2249 = vmatprep.mubr.f32.mxu0 0.0
        %2250 = vmatmul.mubr.f32.gmra.mrb[0].mxu0 %v2063
        %v2251 = vpop.f32.mrb[0].mxu0
        %v2252 = vadd.f32 0.0, %v2251
        %v2253 = vpop.f32.mrb[0].mxu0
        %v2254 = vadd.f32 0.0, %v2253
        %2255 = vmatprep.mubr.f32.mxu0 0.0
        %2256 = vmatmul.mubr.f32.gmra.mrb[0].mxu0 %v2064
        %v2257 = vpop.f32.mrb[0].mxu0
        %v2258 = vadd.f32 0.0, %v2257
        %v2259 = vpop.f32.mrb[0].mxu0
        %v2260 = vadd.f32 0.0, %v2259
        %2261 = vmatprep.mubr.f32.mxu0 0.0
        %2262 = vmatmul.mubr.f32.gmra.mrb[0].mxu0 %v2065
        %v2263 = vpop.f32.mrb[0].mxu0
        %v2264 = vadd.f32 0.0, %v2263
        %v2265 = vpop.f32.mrb[0].mxu0
        %v2266 = vadd.f32 0.0, %v2265
        %2267 = vmatprep.mubr.f32.mxu0 0.0
        %2268 = vmatmul.mubr.f32.gmra.mrb[0].mxu0 %v2066
        %v2269 = vpop.f32.mrb[0].mxu0
        %v2270 = vadd.f32 0.0, %v2269
        %v2271 = vpop.f32.mrb[0].mxu0
        %v2272 = vadd.f32 0.0, %v2271
        %2273 = vmatprep.mubr.f32.mxu0 0.0
        %2274 = vmatmul.mubr.f32.gmra.mrb[0].mxu0 %v2067
        %v2275 = vpop.f32.mrb[0].mxu0
        %v2276 = vadd.f32 0.0, %v2275
        %v2277 = vpop.f32.mrb[0].mxu0
        %v2278 = vadd.f32 0.0, %v2277
        %2279 = vmatprep.mubr.f32.mxu0 0.0
        %2280 = vmatmul.mubr.f32.gmra.mrb[0].mxu0 %v2068
        %v2281 = vpop.f32.mrb[0].mxu0
        %v2282 = vadd.f32 0.0, %v2281
        %v2283 = vpop.f32.mrb[0].mxu0
        %v2284 = vadd.f32 0.0, %v2283
        %2285 = vmatprep.mubr.f32.mxu0 0.0
        %2286 = vmatmul.mubr.f32.gmra.mrb[0].mxu0 %v2069
        %v2287 = vpop.f32.mrb[0].mxu0
        %v2288 = vadd.f32 0.0, %v2287
        %v2289 = vpop.f32.mrb[0].mxu0
        %v2290 = vadd.f32 0.0, %v2289
        %2291 = vmatprep.mubr.f32.mxu0 0.0
        %2292 = vmatmul.mubr.f32.gmra.mrb[0].mxu0 %v2070
        %v2293 = vpop.f32.mrb[0].mxu0
        %v2294 = vadd.f32 0.0, %v2293
        %v2295 = vpop.f32.mrb[0].mxu0
        %v2296 = vadd.f32 0.0, %v2295
        %2297 = vmatprep.mubr.f32.mxu0 0.0
        %2298 = vmatmul.mubr.f32.gmra.mrb[0].mxu0 %v2071
        %v2299 = vpop.f32.mrb[0].mxu0
        %v2300 = vadd.f32 0.0, %v2299
        %v2301 = vpop.f32.mrb[0].mxu0
        %v2302 = vadd.f32 0.0, %v2301
        %2303 = vmatprep.mubr.f32.mxu0 0.0
        %2304 = vmatmul.mubr.f32.gmra.mrb[0].mxu0 %v2072
        %v2305 = vpop.f32.mrb[0].mxu0
        %v2306 = vadd.f32 0.0, %v2305
        %v2307 = vpop.f32.mrb[0].mxu0
        %v2308 = vadd.f32 0.0, %v2307
        %2309 = vmatprep.mubr.f32.mxu0 0.0
        %2310 = vmatmul.mubr.f32.gmra.mrb[0].mxu0 %v2073
        %v2311 = vpop.f32.mrb[0].mxu0
        %v2312 = vadd.f32 0.0, %v2311
        %v2313 = vpop.f32.mrb[0].mxu0
        %v2314 = vadd.f32 0.0, %v2313
        %2315 = vmatprep.mubr.f32.mxu0 0.0
        %2316 = vmatmul.mubr.f32.gmra.mrb[0].mxu0 %v2074
        %v2317 = vpop.f32.mrb[0].mxu0
        %v2318 = vadd.f32 0.0, %v2317
        %v2319 = vpop.f32.mrb[0].mxu0
        %v2320 = vadd.f32 0.0, %v2319
        %2321 = vmatprep.mubr.f32.mxu0 0.0
        %2322 = vmatmul.mubr.f32.gmra.mrb[0].mxu0 %v2075
        %v2323 = vpop.f32.mrb[0].mxu0
        %v2324 = vadd.f32 0.0, %v2323
        %v2325 = vpop.f32.mrb[0].mxu0
        %v2326 = vadd.f32 0.0, %v2325
        %2327 = vmatprep.mubr.f32.mxu0 0.0
        %2328 = vmatmul.mubr.f32.gmra.mrb[0].mxu0 %v2076
        %v2329 = vpop.f32.mrb[0].mxu0
        %v2330 = vadd.f32 0.0, %v2329
        %v2331 = vpop.f32.mrb[0].mxu0
        %v2332 = vadd.f32 0.0, %v2331
        %2333 = vdwg.mxu0
        %v2334 = vld [vmem:[#allocation4] sm:$0xff]
        %v2335 = vld [vmem:[#allocation4 + $0x8] sm:$0xff]
        %v2336 = vld [vmem:[#allocation4 + $0x10] sm:$0xff]
        %v2337 = vld [vmem:[#allocation4 + $0x18] sm:$0xff]
        %v2338 = vld [vmem:[#allocation4 + $0x20] sm:$0xff]
        %v2339 = vld [vmem:[#allocation4 + $0x28] sm:$0xff]
        %v2340 = vld [vmem:[#allocation4 + $0x30] sm:$0xff]
        %v2341 = vld [vmem:[#allocation4 + $0x38] sm:$0xff]
        %v2342 = vld [vmem:[#allocation4 + $0x40] sm:$0xff]
        %v2343 = vld [vmem:[#allocation4 + $0x48] sm:$0xff]
        %v2344 = vld [vmem:[#allocation4 + $0x50] sm:$0xff]
        %v2345 = vld [vmem:[#allocation4 + $0x58] sm:$0xff]
        %v2346 = vld [vmem:[#allocation4 + $0x60] sm:$0xff]
        %v2347 = vld [vmem:[#allocation4 + $0x68] sm:$0xff]
        %v2348 = vld [vmem:[#allocation4 + $0x70] sm:$0xff]
        %v2349 = vld [vmem:[#allocation4 + $0x78] sm:$0xff]
        %v2350 = vld [vmem:[#allocation4 + $0x80] sm:$0xff]
        %v2351 = vld [vmem:[#allocation4 + $0x88] sm:$0xff]
        %v2352 = vld [vmem:[#allocation4 + $0x90] sm:$0xff]
        %v2353 = vld [vmem:[#allocation4 + $0x98] sm:$0xff]
        %v2354 = vld [vmem:[#allocation4 + $0xa0] sm:$0xff]
        %v2355 = vld [vmem:[#allocation4 + $0xa8] sm:$0xff]
        %v2356 = vld [vmem:[#allocation4 + $0xb0] sm:$0xff]
        %v2357 = vld [vmem:[#allocation4 + $0xb8] sm:$0xff]
        %v2358 = vld [vmem:[#allocation4 + $0xc0] sm:$0xff]
        %v2359 = vld [vmem:[#allocation4 + $0xc8] sm:$0xff]
        %v2360 = vld [vmem:[#allocation4 + $0xd0] sm:$0xff]
        %v2361 = vld [vmem:[#allocation4 + $0xd8] sm:$0xff]
        %v2362 = vld [vmem:[#allocation4 + $0xe0] sm:$0xff]
        %v2363 = vld [vmem:[#allocation4 + $0xe8] sm:$0xff]
        %v2364 = vld [vmem:[#allocation4 + $0xf0] sm:$0xff]
        %v2365 = vld [vmem:[#allocation4 + $0xf8] sm:$0xff]
        %v2366 = vmax.f32 %v2144, %v2146
        %2367 = vmax.xlane.f32.xlu0 %v2366
        %v2368 = vpop.xlane.xlu0 %2367
        %v2369 = vmax.f32 %v2150, %v2152
        %2370 = vmax.xlane.f32.xlu0 %v2369
        %v2371 = vpop.xlane.xlu0 %2370
        %v2372 = vmax.f32 %v2156, %v2158
        %2373 = vmax.xlane.f32.xlu0 %v2372
        %v2374 = vpop.xlane.xlu0 %2373
        %v2375 = vmax.f32 %v2162, %v2164
        %2376 = vmax.xlane.f32.xlu0 %v2375
        %v2377 = vpop.xlane.xlu0 %2376
        %v2378 = vmax.f32 %v2168, %v2170
        %2379 = vmax.xlane.f32.xlu0 %v2378
        %v2380 = vpop.xlane.xlu0 %2379
        %v2381 = vmax.f32 %v2174, %v2176
        %2382 = vmax.xlane.f32.xlu0 %v2381
        %v2383 = vpop.xlane.xlu0 %2382
        %v2384 = vmax.f32 %v2180, %v2182
        %2385 = vmax.xlane.f32.xlu0 %v2384
        %v2386 = vpop.xlane.xlu0 %2385
        %v2387 = vmax.f32 %v2186, %v2188
        %2388 = vmax.xlane.f32.xlu0 %v2387
        %v2389 = vpop.xlane.xlu0 %2388
        %v2390 = vmax.f32 %v2192, %v2194
        %2391 = vmax.xlane.f32.xlu0 %v2390
        %v2392 = vpop.xlane.xlu0 %2391
        %v2393 = vmax.f32 %v2198, %v2200
        %2394 = vmax.xlane.f32.xlu0 %v2393
        %v2395 = vpop.xlane.xlu0 %2394
        %v2396 = vmax.f32 %v2204, %v2206
        %2397 = vmax.xlane.f32.xlu0 %v2396
        %v2398 = vpop.xlane.xlu0 %2397
        %v2399 = vmax.f32 %v2210, %v2212
        %2400 = vmax.xlane.f32.xlu0 %v2399
        %v2401 = vpop.xlane.xlu0 %2400
        %v2402 = vmax.f32 %v2216, %v2218
        %2403 = vmax.xlane.f32.xlu0 %v2402
        %v2404 = vpop.xlane.xlu0 %2403
        %v2405 = vmax.f32 %v2222, %v2224
        %2406 = vmax.xlane.f32.xlu0 %v2405
        %v2407 = vpop.xlane.xlu0 %2406
        %v2408 = vmax.f32 %v2228, %v2230
        %2409 = vmax.xlane.f32.xlu0 %v2408
        %v2410 = vpop.xlane.xlu0 %2409
        %v2411 = vmax.f32 %v2234, %v2236
        %2412 = vmax.xlane.f32.xlu0 %v2411
        %v2413 = vpop.xlane.xlu0 %2412
        %v2414 = vmax.f32 %v2240, %v2242
        %2415 = vmax.xlane.f32.xlu0 %v2414
        %v2416 = vpop.xlane.xlu0 %2415
        %v2417 = vmax.f32 %v2246, %v2248
        %2418 = vmax.xlane.f32.xlu0 %v2417
        %v2419 = vpop.xlane.xlu0 %2418
        %v2420 = vmax.f32 %v2252, %v2254
        %2421 = vmax.xlane.f32.xlu0 %v2420
        %v2422 = vpop.xlane.xlu0 %2421
        %v2423 = vmax.f32 %v2258, %v2260
        %2424 = vmax.xlane.f32.xlu0 %v2423
        %v2425 = vpop.xlane.xlu0 %2424
        %v2426 = vmax.f32 %v2264, %v2266
        %2427 = vmax.xlane.f32.xlu0 %v2426
        %v2428 = vpop.xlane.xlu0 %2427
        %v2429 = vmax.f32 %v2270, %v2272
        %2430 = vmax.xlane.f32.xlu0 %v2429
        %v2431 = vpop.xlane.xlu0 %2430
        %v2432 = vmax.f32 %v2276, %v2278
        %2433 = vmax.xlane.f32.xlu0 %v2432
        %v2434 = vpop.xlane.xlu0 %2433
        %v2435 = vmax.f32 %v2282, %v2284
        %2436 = vmax.xlane.f32.xlu0 %v2435
        %v2437 = vpop.xlane.xlu0 %2436
        %v2438 = vmax.f32 %v2288, %v2290
        %2439 = vmax.xlane.f32.xlu0 %v2438
        %v2440 = vpop.xlane.xlu0 %2439
        %v2441 = vmax.f32 %v2294, %v2296
        %2442 = vmax.xlane.f32.xlu0 %v2441
        %v2443 = vpop.xlane.xlu0 %2442
        %v2444 = vmax.f32 %v2300, %v2302
        %2445 = vmax.xlane.f32.xlu0 %v2444
        %v2446 = vpop.xlane.xlu0 %2445
        %v2447 = vmax.f32 %v2306, %v2308
        %2448 = vmax.xlane.f32.xlu0 %v2447
        %v2449 = vpop.xlane.xlu0 %2448
        %v2450 = vmax.f32 %v2312, %v2314
        %2451 = vmax.xlane.f32.xlu0 %v2450
        %v2452 = vpop.xlane.xlu0 %2451
        %v2453 = vmax.f32 %v2318, %v2320
        %2454 = vmax.xlane.f32.xlu0 %v2453
        %v2455 = vpop.xlane.xlu0 %2454
        %v2456 = vmax.f32 %v2324, %v2326
        %2457 = vmax.xlane.f32.xlu0 %v2456
        %v2458 = vpop.xlane.xlu0 %2457
        %v2459 = vmax.f32 %v2330, %v2332
        %2460 = vmax.xlane.f32.xlu0 %v2459
        %v2461 = vpop.xlane.xlu0 %2460
        %v2462 = vmax.f32 %v2334, %v2368
        %v2463 = vmax.f32 %v2335, %v2371
        %v2464 = vmax.f32 %v2336, %v2374
        %v2465 = vmax.f32 %v2337, %v2377
        %v2466 = vmax.f32 %v2338, %v2380
        %v2467 = vmax.f32 %v2339, %v2383
        %v2468 = vmax.f32 %v2340, %v2386
        %v2469 = vmax.f32 %v2341, %v2389
        %v2470 = vmax.f32 %v2342, %v2392
        %v2471 = vmax.f32 %v2343, %v2395
        %v2472 = vmax.f32 %v2344, %v2398
        %v2473 = vmax.f32 %v2345, %v2401
        %v2474 = vmax.f32 %v2346, %v2404
        %v2475 = vmax.f32 %v2347, %v2407
        %v2476 = vmax.f32 %v2348, %v2410
        %v2477 = vmax.f32 %v2349, %v2413
        %v2478 = vmax.f32 %v2350, %v2416
        %v2479 = vmax.f32 %v2351, %v2419
        %v2480 = vmax.f32 %v2352, %v2422
        %v2481 = vmax.f32 %v2353, %v2425
        %v2482 = vmax.f32 %v2354, %v2428
        %v2483 = vmax.f32 %v2355, %v2431
        %v2484 = vmax.f32 %v2356, %v2434
        %v2485 = vmax.f32 %v2357, %v2437
        %v2486 = vmax.f32 %v2358, %v2440
        %v2487 = vmax.f32 %v2359, %v2443
        %v2488 = vmax.f32 %v2360, %v2446
        %v2489 = vmax.f32 %v2361, %v2449
        %v2490 = vmax.f32 %v2362, %v2452
        %v2491 = vmax.f32 %v2363, %v2455
        %v2492 = vmax.f32 %v2364, %v2458
        %v2493 = vmax.f32 %v2365, %v2461
        %v2494 = vsub.f32 %v2334, %v2462
        %v2495 = vsub.f32 %v2335, %v2463
        %v2496 = vsub.f32 %v2336, %v2464
        %v2497 = vsub.f32 %v2337, %v2465
        %v2498 = vsub.f32 %v2338, %v2466
        %v2499 = vsub.f32 %v2339, %v2467
        %v2500 = vsub.f32 %v2340, %v2468
        %v2501 = vsub.f32 %v2341, %v2469
        %v2502 = vsub.f32 %v2342, %v2470
        %v2503 = vsub.f32 %v2343, %v2471
        %v2504 = vsub.f32 %v2344, %v2472
        %v2505 = vsub.f32 %v2345, %v2473
        %v2506 = vsub.f32 %v2346, %v2474
        %v2507 = vsub.f32 %v2347, %v2475
        %v2508 = vsub.f32 %v2348, %v2476
        %v2509 = vsub.f32 %v2349, %v2477
        %v2510 = vsub.f32 %v2350, %v2478
        %v2511 = vsub.f32 %v2351, %v2479
        %v2512 = vsub.f32 %v2352, %v2480
        %v2513 = vsub.f32 %v2353, %v2481
        %v2514 = vsub.f32 %v2354, %v2482
        %v2515 = vsub.f32 %v2355, %v2483
        %v2516 = vsub.f32 %v2356, %v2484
        %v2517 = vsub.f32 %v2357, %v2485
        %v2518 = vsub.f32 %v2358, %v2486
        %v2519 = vsub.f32 %v2359, %v2487
        %v2520 = vsub.f32 %v2360, %v2488
        %v2521 = vsub.f32 %v2361, %v2489
        %v2522 = vsub.f32 %v2362, %v2490
        %v2523 = vsub.f32 %v2363, %v2491
        %v2524 = vsub.f32 %v2364, %v2492
        %v2525 = vsub.f32 %v2365, %v2493
        %v2526 = vmul.f32 %v2494, 1.442695
        %v2527 = vpow.pop %v2526
        %v2528 = vmul.f32 %v2495, 1.442695
        %v2529 = vpow.pop %v2528
        %v2530 = vmul.f32 %v2496, 1.442695
        %v2531 = vpow.pop %v2530
        %v2532 = vmul.f32 %v2497, 1.442695
        %v2533 = vpow.pop %v2532
        %v2534 = vmul.f32 %v2498, 1.442695
        %v2535 = vpow.pop %v2534
        %v2536 = vmul.f32 %v2499, 1.442695
        %v2537 = vpow.pop %v2536
        %v2538 = vmul.f32 %v2500, 1.442695
        %v2539 = vpow.pop %v2538
        %v2540 = vmul.f32 %v2501, 1.442695
        %v2541 = vpow.pop %v2540
        %v2542 = vmul.f32 %v2502, 1.442695
        %v2543 = vpow.pop %v2542
        %v2544 = vmul.f32 %v2503, 1.442695
        %v2545 = vpow.pop %v2544
        %v2546 = vmul.f32 %v2504, 1.442695
        %v2547 = vpow.pop %v2546
        %v2548 = vmul.f32 %v2505, 1.442695
        %v2549 = vpow.pop %v2548
        %v2550 = vmul.f32 %v2506, 1.442695
        %v2551 = vpow.pop %v2550
        %v2552 = vmul.f32 %v2507, 1.442695
        %v2553 = vpow.pop %v2552
        %v2554 = vmul.f32 %v2508, 1.442695
        %v2555 = vpow.pop %v2554
        %v2556 = vmul.f32 %v2509, 1.442695
        %v2557 = vpow.pop %v2556
        %v2558 = vmul.f32 %v2510, 1.442695
        %v2559 = vpow.pop %v2558
        %v2560 = vmul.f32 %v2511, 1.442695
        %v2561 = vpow.pop %v2560
        %v2562 = vmul.f32 %v2512, 1.442695
        %v2563 = vpow.pop %v2562
        %v2564 = vmul.f32 %v2513, 1.442695
        %v2565 = vpow.pop %v2564
        %v2566 = vmul.f32 %v2514, 1.442695
        %v2567 = vpow.pop %v2566
        %v2568 = vmul.f32 %v2515, 1.442695
        %v2569 = vpow.pop %v2568
        %v2570 = vmul.f32 %v2516, 1.442695
        %v2571 = vpow.pop %v2570
        %v2572 = vmul.f32 %v2517, 1.442695
        %v2573 = vpow.pop %v2572
        %v2574 = vmul.f32 %v2518, 1.442695
        %v2575 = vpow.pop %v2574
        %v2576 = vmul.f32 %v2519, 1.442695
        %v2577 = vpow.pop %v2576
        %v2578 = vmul.f32 %v2520, 1.442695
        %v2579 = vpow.pop %v2578
        %v2580 = vmul.f32 %v2521, 1.442695
        %v2581 = vpow.pop %v2580
        %v2582 = vmul.f32 %v2522, 1.442695
        %v2583 = vpow.pop %v2582
        %v2584 = vmul.f32 %v2523, 1.442695
        %v2585 = vpow.pop %v2584
        %v2586 = vmul.f32 %v2524, 1.442695
        %v2587 = vpow.pop %v2586
        %v2588 = vmul.f32 %v2525, 1.442695
        %v2589 = vpow.pop %v2588
        %2591 = vset.pattern.permute.xlu0 0
        %2592 = vperm.xlu0 %2591, %v2462
        %v2593 = vpop.permute.xlu0 %2592
        %2596 = vset.pattern.permute.xlu0 0
        %2597 = vperm.xlu0 %2596, %v2463
        %v2598 = vpop.permute.xlu0 %2597
        %2601 = vset.pattern.permute.xlu0 0
        %2602 = vperm.xlu0 %2601, %v2464
        %v2603 = vpop.permute.xlu0 %2602
        %2606 = vset.pattern.permute.xlu0 0
        %2607 = vperm.xlu0 %2606, %v2465
        %v2608 = vpop.permute.xlu0 %2607
        %2611 = vset.pattern.permute.xlu0 0
        %2612 = vperm.xlu0 %2611, %v2466
        %v2613 = vpop.permute.xlu0 %2612
        %2616 = vset.pattern.permute.xlu0 0
        %2617 = vperm.xlu0 %2616, %v2467
        %v2618 = vpop.permute.xlu0 %2617
        %2621 = vset.pattern.permute.xlu0 0
        %2622 = vperm.xlu0 %2621, %v2468
        %v2623 = vpop.permute.xlu0 %2622
        %2626 = vset.pattern.permute.xlu0 0
        %2627 = vperm.xlu0 %2626, %v2469
        %v2628 = vpop.permute.xlu0 %2627
        %2631 = vset.pattern.permute.xlu0 0
        %2632 = vperm.xlu0 %2631, %v2470
        %v2633 = vpop.permute.xlu0 %2632
        %2636 = vset.pattern.permute.xlu0 0
        %2637 = vperm.xlu0 %2636, %v2471
        %v2638 = vpop.permute.xlu0 %2637
        %2641 = vset.pattern.permute.xlu0 0
        %2642 = vperm.xlu0 %2641, %v2472
        %v2643 = vpop.permute.xlu0 %2642
        %2646 = vset.pattern.permute.xlu0 0
        %2647 = vperm.xlu0 %2646, %v2473
        %v2648 = vpop.permute.xlu0 %2647
        %2651 = vset.pattern.permute.xlu0 0
        %2652 = vperm.xlu0 %2651, %v2474
        %v2653 = vpop.permute.xlu0 %2652
        %2656 = vset.pattern.permute.xlu0 0
        %2657 = vperm.xlu0 %2656, %v2475
        %v2658 = vpop.permute.xlu0 %2657
        %2661 = vset.pattern.permute.xlu0 0
        %2662 = vperm.xlu0 %2661, %v2476
        %v2663 = vpop.permute.xlu0 %2662
        %2666 = vset.pattern.permute.xlu0 0
        %2667 = vperm.xlu0 %2666, %v2477
        %v2668 = vpop.permute.xlu0 %2667
        %2671 = vset.pattern.permute.xlu0 0
        %2672 = vperm.xlu0 %2671, %v2478
        %v2673 = vpop.permute.xlu0 %2672
        %2676 = vset.pattern.permute.xlu0 0
        %2677 = vperm.xlu0 %2676, %v2479
        %v2678 = vpop.permute.xlu0 %2677
        %2681 = vset.pattern.permute.xlu0 0
        %2682 = vperm.xlu0 %2681, %v2480
        %v2683 = vpop.permute.xlu0 %2682
        %2686 = vset.pattern.permute.xlu0 0
        %2687 = vperm.xlu0 %2686, %v2481
        %v2688 = vpop.permute.xlu0 %2687
        %2691 = vset.pattern.permute.xlu0 0
        %2692 = vperm.xlu0 %2691, %v2482
        %v2693 = vpop.permute.xlu0 %2692
        %2696 = vset.pattern.permute.xlu0 0
        %2697 = vperm.xlu0 %2696, %v2483
        %v2698 = vpop.permute.xlu0 %2697
        %2701 = vset.pattern.permute.xlu0 0
        %2702 = vperm.xlu0 %2701, %v2484
        %v2703 = vpop.permute.xlu0 %2702
        %2706 = vset.pattern.permute.xlu0 0
        %2707 = vperm.xlu0 %2706, %v2485
        %v2708 = vpop.permute.xlu0 %2707
        %2711 = vset.pattern.permute.xlu0 0
        %2712 = vperm.xlu0 %2711, %v2486
        %v2713 = vpop.permute.xlu0 %2712
        %2716 = vset.pattern.permute.xlu0 0
        %2717 = vperm.xlu0 %2716, %v2487
        %v2718 = vpop.permute.xlu0 %2717
        %2721 = vset.pattern.permute.xlu0 0
        %2722 = vperm.xlu0 %2721, %v2488
        %v2723 = vpop.permute.xlu0 %2722
        %2726 = vset.pattern.permute.xlu0 0
        %2727 = vperm.xlu0 %2726, %v2489
        %v2728 = vpop.permute.xlu0 %2727
        %2731 = vset.pattern.permute.xlu0 0
        %2732 = vperm.xlu0 %2731, %v2490
        %v2733 = vpop.permute.xlu0 %2732
        %2736 = vset.pattern.permute.xlu0 0
        %2737 = vperm.xlu0 %2736, %v2491
        %v2738 = vpop.permute.xlu0 %2737
        %2741 = vset.pattern.permute.xlu0 0
        %2742 = vperm.xlu0 %2741, %v2492
        %v2743 = vpop.permute.xlu0 %2742
        %2746 = vset.pattern.permute.xlu0 0
        %2747 = vperm.xlu0 %2746, %v2493
        %v2748 = vpop.permute.xlu0 %2747
        %v2750 = vsub.f32 %v2144, %v2593
        %v2751 = vsub.f32 %v2146, %v2593
        %v2752 = vsub.f32 %v2150, %v2598
        %v2753 = vsub.f32 %v2152, %v2598
        %v2754 = vsub.f32 %v2156, %v2603
        %v2755 = vsub.f32 %v2158, %v2603
        %v2756 = vsub.f32 %v2162, %v2608
        %v2757 = vsub.f32 %v2164, %v2608
        %v2758 = vsub.f32 %v2168, %v2613
        %v2759 = vsub.f32 %v2170, %v2613
        %v2760 = vsub.f32 %v2174, %v2618
        %v2761 = vsub.f32 %v2176, %v2618
        %v2762 = vsub.f32 %v2180, %v2623
        %v2763 = vsub.f32 %v2182, %v2623
        %v2764 = vsub.f32 %v2186, %v2628
        %v2765 = vsub.f32 %v2188, %v2628
        %v2766 = vsub.f32 %v2192, %v2633
        %v2767 = vsub.f32 %v2194, %v2633
        %v2768 = vsub.f32 %v2198, %v2638
        %v2769 = vsub.f32 %v2200, %v2638
        %v2770 = vsub.f32 %v2204, %v2643
        %v2771 = vsub.f32 %v2206, %v2643
        %v2772 = vsub.f32 %v2210, %v2648
        %v2773 = vsub.f32 %v2212, %v2648
        %v2774 = vsub.f32 %v2216, %v2653
        %v2775 = vsub.f32 %v2218, %v2653
        %v2776 = vsub.f32 %v2222, %v2658
        %v2777 = vsub.f32 %v2224, %v2658
        %v2778 = vsub.f32 %v2228, %v2663
        %v2779 = vsub.f32 %v2230, %v2663
        %v2780 = vsub.f32 %v2234, %v2668
        %v2781 = vsub.f32 %v2236, %v2668
        %v2782 = vsub.f32 %v2240, %v2673
        %v2783 = vsub.f32 %v2242, %v2673
        %v2784 = vsub.f32 %v2246, %v2678
        %v2785 = vsub.f32 %v2248, %v2678
        %v2786 = vsub.f32 %v2252, %v2683
        %v2787 = vsub.f32 %v2254, %v2683
        %v2788 = vsub.f32 %v2258, %v2688
        %v2789 = vsub.f32 %v2260, %v2688
        %v2790 = vsub.f32 %v2264, %v2693
        %v2791 = vsub.f32 %v2266, %v2693
        %v2792 = vsub.f32 %v2270, %v2698
        %v2793 = vsub.f32 %v2272, %v2698
        %v2794 = vsub.f32 %v2276, %v2703
        %v2795 = vsub.f32 %v2278, %v2703
        %v2796 = vsub.f32 %v2282, %v2708
        %v2797 = vsub.f32 %v2284, %v2708
        %v2798 = vsub.f32 %v2288, %v2713
        %v2799 = vsub.f32 %v2290, %v2713
        %v2800 = vsub.f32 %v2294, %v2718
        %v2801 = vsub.f32 %v2296, %v2718
        %v2802 = vsub.f32 %v2300, %v2723
        %v2803 = vsub.f32 %v2302, %v2723
        %v2804 = vsub.f32 %v2306, %v2728
        %v2805 = vsub.f32 %v2308, %v2728
        %v2806 = vsub.f32 %v2312, %v2733
        %v2807 = vsub.f32 %v2314, %v2733
        %v2808 = vsub.f32 %v2318, %v2738
        %v2809 = vsub.f32 %v2320, %v2738
        %v2810 = vsub.f32 %v2324, %v2743
        %v2811 = vsub.f32 %v2326, %v2743
        %v2812 = vsub.f32 %v2330, %v2748
        %v2813 = vsub.f32 %v2332, %v2748
        %v2814 = vmul.f32 %v2750, 1.442695
        %v2815 = vpow.pop %v2814
        %v2816 = vmul.f32 %v2751, 1.442695
        %v2817 = vpow.pop %v2816
        %v2818 = vmul.f32 %v2752, 1.442695
        %v2819 = vpow.pop %v2818
        %v2820 = vmul.f32 %v2753, 1.442695
        %v2821 = vpow.pop %v2820
        %v2822 = vmul.f32 %v2754, 1.442695
        %v2823 = vpow.pop %v2822
        %v2824 = vmul.f32 %v2755, 1.442695
        %v2825 = vpow.pop %v2824
        %v2826 = vmul.f32 %v2756, 1.442695
        %v2827 = vpow.pop %v2826
        %v2828 = vmul.f32 %v2757, 1.442695
        %v2829 = vpow.pop %v2828
        %v2830 = vmul.f32 %v2758, 1.442695
        %v2831 = vpow.pop %v2830
        %v2832 = vmul.f32 %v2759, 1.442695
        %v2833 = vpow.pop %v2832
        %v2834 = vmul.f32 %v2760, 1.442695
        %v2835 = vpow.pop %v2834
        %v2836 = vmul.f32 %v2761, 1.442695
        %v2837 = vpow.pop %v2836
        %v2838 = vmul.f32 %v2762, 1.442695
        %v2839 = vpow.pop %v2838
        %v2840 = vmul.f32 %v2763, 1.442695
        %v2841 = vpow.pop %v2840
        %v2842 = vmul.f32 %v2764, 1.442695
        %v2843 = vpow.pop %v2842
        %v2844 = vmul.f32 %v2765, 1.442695
        %v2845 = vpow.pop %v2844
        %v2846 = vmul.f32 %v2766, 1.442695
        %v2847 = vpow.pop %v2846
        %v2848 = vmul.f32 %v2767, 1.442695
        %v2849 = vpow.pop %v2848
        %v2850 = vmul.f32 %v2768, 1.442695
        %v2851 = vpow.pop %v2850
        %v2852 = vmul.f32 %v2769, 1.442695
        %v2853 = vpow.pop %v2852
        %v2854 = vmul.f32 %v2770, 1.442695
        %v2855 = vpow.pop %v2854
        %v2856 = vmul.f32 %v2771, 1.442695
        %v2857 = vpow.pop %v2856
        %v2858 = vmul.f32 %v2772, 1.442695
        %v2859 = vpow.pop %v2858
        %v2860 = vmul.f32 %v2773, 1.442695
        %v2861 = vpow.pop %v2860
        %v2862 = vmul.f32 %v2774, 1.442695
        %v2863 = vpow.pop %v2862
        %v2864 = vmul.f32 %v2775, 1.442695
        %v2865 = vpow.pop %v2864
        %v2866 = vmul.f32 %v2776, 1.442695
        %v2867 = vpow.pop %v2866
        %v2868 = vmul.f32 %v2777, 1.442695
        %v2869 = vpow.pop %v2868
        %v2870 = vmul.f32 %v2778, 1.442695
        %v2871 = vpow.pop %v2870
        %v2872 = vmul.f32 %v2779, 1.442695
        %v2873 = vpow.pop %v2872
        %v2874 = vmul.f32 %v2780, 1.442695
        %v2875 = vpow.pop %v2874
        %v2876 = vmul.f32 %v2781, 1.442695
        %v2877 = vpow.pop %v2876
        %v2878 = vmul.f32 %v2782, 1.442695
        %v2879 = vpow.pop %v2878
        %v2880 = vmul.f32 %v2783, 1.442695
        %v2881 = vpow.pop %v2880
        %v2882 = vmul.f32 %v2784, 1.442695
        %v2883 = vpow.pop %v2882
        %v2884 = vmul.f32 %v2785, 1.442695
        %v2885 = vpow.pop %v2884
        %v2886 = vmul.f32 %v2786, 1.442695
        %v2887 = vpow.pop %v2886
        %v2888 = vmul.f32 %v2787, 1.442695
        %v2889 = vpow.pop %v2888
        %v2890 = vmul.f32 %v2788, 1.442695
        %v2891 = vpow.pop %v2890
        %v2892 = vmul.f32 %v2789, 1.442695
        %v2893 = vpow.pop %v2892
        %v2894 = vmul.f32 %v2790, 1.442695
        %v2895 = vpow.pop %v2894
        %v2896 = vmul.f32 %v2791, 1.442695
        %v2897 = vpow.pop %v2896
        %v2898 = vmul.f32 %v2792, 1.442695
        %v2899 = vpow.pop %v2898
        %v2900 = vmul.f32 %v2793, 1.442695
        %v2901 = vpow.pop %v2900
        %v2902 = vmul.f32 %v2794, 1.442695
        %v2903 = vpow.pop %v2902
        %v2904 = vmul.f32 %v2795, 1.442695
        %v2905 = vpow.pop %v2904
        %v2906 = vmul.f32 %v2796, 1.442695
        %v2907 = vpow.pop %v2906
        %v2908 = vmul.f32 %v2797, 1.442695
        %v2909 = vpow.pop %v2908
        %v2910 = vmul.f32 %v2798, 1.442695
        %v2911 = vpow.pop %v2910
        %v2912 = vmul.f32 %v2799, 1.442695
        %v2913 = vpow.pop %v2912
        %v2914 = vmul.f32 %v2800, 1.442695
        %v2915 = vpow.pop %v2914
        %v2916 = vmul.f32 %v2801, 1.442695
        %v2917 = vpow.pop %v2916
        %v2918 = vmul.f32 %v2802, 1.442695
        %v2919 = vpow.pop %v2918
        %v2920 = vmul.f32 %v2803, 1.442695
        %v2921 = vpow.pop %v2920
        %v2922 = vmul.f32 %v2804, 1.442695
        %v2923 = vpow.pop %v2922
        %v2924 = vmul.f32 %v2805, 1.442695
        %v2925 = vpow.pop %v2924
        %v2926 = vmul.f32 %v2806, 1.442695
        %v2927 = vpow.pop %v2926
        %v2928 = vmul.f32 %v2807, 1.442695
        %v2929 = vpow.pop %v2928
        %v2930 = vmul.f32 %v2808, 1.442695
        %v2931 = vpow.pop %v2930
        %v2932 = vmul.f32 %v2809, 1.442695
        %v2933 = vpow.pop %v2932
        %v2934 = vmul.f32 %v2810, 1.442695
        %v2935 = vpow.pop %v2934
        %v2936 = vmul.f32 %v2811, 1.442695
        %v2937 = vpow.pop %v2936
        %v2938 = vmul.f32 %v2812, 1.442695
        %v2939 = vpow.pop %v2938
        %v2940 = vmul.f32 %v2813, 1.442695
        %v2941 = vpow.pop %v2940
        %v2942 = vld [vmem:[#allocation5] sm:$0xff]
        %v2943 = vld [vmem:[#allocation5 + $0x8] sm:$0xff]
        %v2944 = vld [vmem:[#allocation5 + $0x10] sm:$0xff]
        %v2945 = vld [vmem:[#allocation5 + $0x18] sm:$0xff]
        %v2946 = vld [vmem:[#allocation5 + $0x20] sm:$0xff]
        %v2947 = vld [vmem:[#allocation5 + $0x28] sm:$0xff]
        %v2948 = vld [vmem:[#allocation5 + $0x30] sm:$0xff]
        %v2949 = vld [vmem:[#allocation5 + $0x38] sm:$0xff]
        %v2950 = vld [vmem:[#allocation5 + $0x40] sm:$0xff]
        %v2951 = vld [vmem:[#allocation5 + $0x48] sm:$0xff]
        %v2952 = vld [vmem:[#allocation5 + $0x50] sm:$0xff]
        %v2953 = vld [vmem:[#allocation5 + $0x58] sm:$0xff]
        %v2954 = vld [vmem:[#allocation5 + $0x60] sm:$0xff]
        %v2955 = vld [vmem:[#allocation5 + $0x68] sm:$0xff]
        %v2956 = vld [vmem:[#allocation5 + $0x70] sm:$0xff]
        %v2957 = vld [vmem:[#allocation5 + $0x78] sm:$0xff]
        %v2958 = vld [vmem:[#allocation5 + $0x80] sm:$0xff]
        %v2959 = vld [vmem:[#allocation5 + $0x88] sm:$0xff]
        %v2960 = vld [vmem:[#allocation5 + $0x90] sm:$0xff]
        %v2961 = vld [vmem:[#allocation5 + $0x98] sm:$0xff]
        %v2962 = vld [vmem:[#allocation5 + $0xa0] sm:$0xff]
        %v2963 = vld [vmem:[#allocation5 + $0xa8] sm:$0xff]
        %v2964 = vld [vmem:[#allocation5 + $0xb0] sm:$0xff]
        %v2965 = vld [vmem:[#allocation5 + $0xb8] sm:$0xff]
        %v2966 = vld [vmem:[#allocation5 + $0xc0] sm:$0xff]
        %v2967 = vld [vmem:[#allocation5 + $0xc8] sm:$0xff]
        %v2968 = vld [vmem:[#allocation5 + $0xd0] sm:$0xff]
        %v2969 = vld [vmem:[#allocation5 + $0xd8] sm:$0xff]
        %v2970 = vld [vmem:[#allocation5 + $0xe0] sm:$0xff]
        %v2971 = vld [vmem:[#allocation5 + $0xe8] sm:$0xff]
        %v2972 = vld [vmem:[#allocation5 + $0xf0] sm:$0xff]
        %v2973 = vld [vmem:[#allocation5 + $0xf8] sm:$0xff]
        %v2974 = vmul.f32 %v2527, %v2942
        %v2975 = vmul.f32 %v2529, %v2943
        %v2976 = vmul.f32 %v2531, %v2944
        %v2977 = vmul.f32 %v2533, %v2945
        %v2978 = vmul.f32 %v2535, %v2946
        %v2979 = vmul.f32 %v2537, %v2947
        %v2980 = vmul.f32 %v2539, %v2948
        %v2981 = vmul.f32 %v2541, %v2949
        %v2982 = vmul.f32 %v2543, %v2950
        %v2983 = vmul.f32 %v2545, %v2951
        %v2984 = vmul.f32 %v2547, %v2952
        %v2985 = vmul.f32 %v2549, %v2953
        %v2986 = vmul.f32 %v2551, %v2954
        %v2987 = vmul.f32 %v2553, %v2955
        %v2988 = vmul.f32 %v2555, %v2956
        %v2989 = vmul.f32 %v2557, %v2957
        %v2990 = vmul.f32 %v2559, %v2958
        %v2991 = vmul.f32 %v2561, %v2959
        %v2992 = vmul.f32 %v2563, %v2960
        %v2993 = vmul.f32 %v2565, %v2961
        %v2994 = vmul.f32 %v2567, %v2962
        %v2995 = vmul.f32 %v2569, %v2963
        %v2996 = vmul.f32 %v2571, %v2964
        %v2997 = vmul.f32 %v2573, %v2965
        %v2998 = vmul.f32 %v2575, %v2966
        %v2999 = vmul.f32 %v2577, %v2967
        %v3000 = vmul.f32 %v2579, %v2968
        %v3001 = vmul.f32 %v2581, %v2969
        %v3002 = vmul.f32 %v2583, %v2970
        %v3003 = vmul.f32 %v2585, %v2971
        %v3004 = vmul.f32 %v2587, %v2972
        %v3005 = vmul.f32 %v2589, %v2973
        %v3006 = vadd.f32 %v2815, %v2817
        %3007 = vadd.xlane.f32.xlu0 %v3006
        %v3008 = vpop.xlane.xlu0 %3007
        %v3009 = vadd.f32 %v2819, %v2821
        %3010 = vadd.xlane.f32.xlu0 %v3009
        %v3011 = vpop.xlane.xlu0 %3010
        %v3012 = vadd.f32 %v2823, %v2825
        %3013 = vadd.xlane.f32.xlu0 %v3012
        %v3014 = vpop.xlane.xlu0 %3013
        %v3015 = vadd.f32 %v2827, %v2829
        %3016 = vadd.xlane.f32.xlu0 %v3015
        %v3017 = vpop.xlane.xlu0 %3016
        %v3018 = vadd.f32 %v2831, %v2833
        %3019 = vadd.xlane.f32.xlu0 %v3018
        %v3020 = vpop.xlane.xlu0 %3019
        %v3021 = vadd.f32 %v2835, %v2837
        %3022 = vadd.xlane.f32.xlu0 %v3021
        %v3023 = vpop.xlane.xlu0 %3022
        %v3024 = vadd.f32 %v2839, %v2841
        %3025 = vadd.xlane.f32.xlu0 %v3024
        %v3026 = vpop.xlane.xlu0 %3025
        %v3027 = vadd.f32 %v2843, %v2845
        %3028 = vadd.xlane.f32.xlu0 %v3027
        %v3029 = vpop.xlane.xlu0 %3028
        %v3030 = vadd.f32 %v2847, %v2849
        %3031 = vadd.xlane.f32.xlu0 %v3030
        %v3032 = vpop.xlane.xlu0 %3031
        %v3033 = vadd.f32 %v2851, %v2853
        %3034 = vadd.xlane.f32.xlu0 %v3033
        %v3035 = vpop.xlane.xlu0 %3034
        %v3036 = vadd.f32 %v2855, %v2857
        %3037 = vadd.xlane.f32.xlu0 %v3036
        %v3038 = vpop.xlane.xlu0 %3037
        %v3039 = vadd.f32 %v2859, %v2861
        %3040 = vadd.xlane.f32.xlu0 %v3039
        %v3041 = vpop.xlane.xlu0 %3040
        %v3042 = vadd.f32 %v2863, %v2865
        %3043 = vadd.xlane.f32.xlu0 %v3042
        %v3044 = vpop.xlane.xlu0 %3043
        %v3045 = vadd.f32 %v2867, %v2869
        %3046 = vadd.xlane.f32.xlu0 %v3045
        %v3047 = vpop.xlane.xlu0 %3046
        %v3048 = vadd.f32 %v2871, %v2873
        %3049 = vadd.xlane.f32.xlu0 %v3048
        %v3050 = vpop.xlane.xlu0 %3049
        %v3051 = vadd.f32 %v2875, %v2877
        %3052 = vadd.xlane.f32.xlu0 %v3051
        %v3053 = vpop.xlane.xlu0 %3052
        %v3054 = vadd.f32 %v2879, %v2881
        %3055 = vadd.xlane.f32.xlu0 %v3054
        %v3056 = vpop.xlane.xlu0 %3055
        %v3057 = vadd.f32 %v2883, %v2885
        %3058 = vadd.xlane.f32.xlu0 %v3057
        %v3059 = vpop.xlane.xlu0 %3058
        %v3060 = vadd.f32 %v2887, %v2889
        %3061 = vadd.xlane.f32.xlu0 %v3060
        %v3062 = vpop.xlane.xlu0 %3061
        %v3063 = vadd.f32 %v2891, %v2893
        %3064 = vadd.xlane.f32.xlu0 %v3063
        %v3065 = vpop.xlane.xlu0 %3064
        %v3066 = vadd.f32 %v2895, %v2897
        %3067 = vadd.xlane.f32.xlu0 %v3066
        %v3068 = vpop.xlane.xlu0 %3067
        %v3069 = vadd.f32 %v2899, %v2901
        %3070 = vadd.xlane.f32.xlu0 %v3069
        %v3071 = vpop.xlane.xlu0 %3070
        %v3072 = vadd.f32 %v2903, %v2905
        %3073 = vadd.xlane.f32.xlu0 %v3072
        %v3074 = vpop.xlane.xlu0 %3073
        %v3075 = vadd.f32 %v2907, %v2909
        %3076 = vadd.xlane.f32.xlu0 %v3075
        %v3077 = vpop.xlane.xlu0 %3076
        %v3078 = vadd.f32 %v2911, %v2913
        %3079 = vadd.xlane.f32.xlu0 %v3078
        %v3080 = vpop.xlane.xlu0 %3079
        %v3081 = vadd.f32 %v2915, %v2917
        %3082 = vadd.xlane.f32.xlu0 %v3081
        %v3083 = vpop.xlane.xlu0 %3082
        %v3084 = vadd.f32 %v2919, %v2921
        %3085 = vadd.xlane.f32.xlu0 %v3084
        %v3086 = vpop.xlane.xlu0 %3085
        %v3087 = vadd.f32 %v2923, %v2925
        %3088 = vadd.xlane.f32.xlu0 %v3087
        %v3089 = vpop.xlane.xlu0 %3088
        %v3090 = vadd.f32 %v2927, %v2929
        %3091 = vadd.xlane.f32.xlu0 %v3090
        %v3092 = vpop.xlane.xlu0 %3091
        %v3093 = vadd.f32 %v2931, %v2933
        %3094 = vadd.xlane.f32.xlu0 %v3093
        %v3095 = vpop.xlane.xlu0 %3094
        %v3096 = vadd.f32 %v2935, %v2937
        %3097 = vadd.xlane.f32.xlu0 %v3096
        %v3098 = vpop.xlane.xlu0 %3097
        %v3099 = vadd.f32 %v2939, %v2941
        %3100 = vadd.xlane.f32.xlu0 %v3099
        %v3101 = vpop.xlane.xlu0 %3100
        %v3102 = vadd.f32 %v2974, %v3008
        %v3103 = vadd.f32 %v2975, %v3011
        %v3104 = vadd.f32 %v2976, %v3014
        %v3105 = vadd.f32 %v2977, %v3017
        %v3106 = vadd.f32 %v2978, %v3020
        %v3107 = vadd.f32 %v2979, %v3023
        %v3108 = vadd.f32 %v2980, %v3026
        %v3109 = vadd.f32 %v2981, %v3029
        %v3110 = vadd.f32 %v2982, %v3032
        %v3111 = vadd.f32 %v2983, %v3035
        %v3112 = vadd.f32 %v2984, %v3038
        %v3113 = vadd.f32 %v2985, %v3041
        %v3114 = vadd.f32 %v2986, %v3044
        %v3115 = vadd.f32 %v2987, %v3047
        %v3116 = vadd.f32 %v2988, %v3050
        %v3117 = vadd.f32 %v2989, %v3053
        %v3118 = vadd.f32 %v2990, %v3056
        %v3119 = vadd.f32 %v2991, %v3059
        %v3120 = vadd.f32 %v2992, %v3062
        %v3121 = vadd.f32 %v2993, %v3065
        %v3122 = vadd.f32 %v2994, %v3068
        %v3123 = vadd.f32 %v2995, %v3071
        %v3124 = vadd.f32 %v2996, %v3074
        %v3125 = vadd.f32 %v2997, %v3077
        %v3126 = vadd.f32 %v2998, %v3080
        %v3127 = vadd.f32 %v2999, %v3083
        %v3128 = vadd.f32 %v3000, %v3086
        %v3129 = vadd.f32 %v3001, %v3089
        %v3130 = vadd.f32 %v3002, %v3092
        %v3131 = vadd.f32 %v3003, %v3095
        %v3132 = vadd.f32 %v3004, %v3098
        %v3133 = vadd.f32 %v3005, %v3101
        %vm3134 = vcmask 7168
        %3135 = vst.msk [vmem:[#allocation5] sm:$0xff] %vm3134, %v3102
        %3136 = vst.msk [vmem:[#allocation5 + $0x8] sm:$0xff] %vm3134, %v3103
        %3137 = vst.msk [vmem:[#allocation5 + $0x10] sm:$0xff] %vm3134, %v3104
        %3138 = vst.msk [vmem:[#allocation5 + $0x18] sm:$0xff] %vm3134, %v3105
        %3139 = vst.msk [vmem:[#allocation5 + $0x20] sm:$0xff] %vm3134, %v3106
        %3140 = vst.msk [vmem:[#allocation5 + $0x28] sm:$0xff] %vm3134, %v3107
        %3141 = vst.msk [vmem:[#allocation5 + $0x30] sm:$0xff] %vm3134, %v3108
        %3142 = vst.msk [vmem:[#allocation5 + $0x38] sm:$0xff] %vm3134, %v3109
        %3143 = vst.msk [vmem:[#allocation5 + $0x40] sm:$0xff] %vm3134, %v3110
        %3144 = vst.msk [vmem:[#allocation5 + $0x48] sm:$0xff] %vm3134, %v3111
        %3145 = vst.msk [vmem:[#allocation5 + $0x50] sm:$0xff] %vm3134, %v3112
        %3146 = vst.msk [vmem:[#allocation5 + $0x58] sm:$0xff] %vm3134, %v3113
        %3147 = vst.msk [vmem:[#allocation5 + $0x60] sm:$0xff] %vm3134, %v3114
        %3148 = vst.msk [vmem:[#allocation5 + $0x68] sm:$0xff] %vm3134, %v3115
        %3149 = vst.msk [vmem:[#allocation5 + $0x70] sm:$0xff] %vm3134, %v3116
        %3150 = vst.msk [vmem:[#allocation5 + $0x78] sm:$0xff] %vm3134, %v3117
        %3151 = vst.msk [vmem:[#allocation5 + $0x80] sm:$0xff] %vm3134, %v3118
        %3152 = vst.msk [vmem:[#allocation5 + $0x88] sm:$0xff] %vm3134, %v3119
        %3153 = vst.msk [vmem:[#allocation5 + $0x90] sm:$0xff] %vm3134, %v3120
        %3154 = vst.msk [vmem:[#allocation5 + $0x98] sm:$0xff] %vm3134, %v3121
        %3155 = vst.msk [vmem:[#allocation5 + $0xa0] sm:$0xff] %vm3134, %v3122
        %3156 = vst.msk [vmem:[#allocation5 + $0xa8] sm:$0xff] %vm3134, %v3123
        %3157 = vst.msk [vmem:[#allocation5 + $0xb0] sm:$0xff] %vm3134, %v3124
        %3158 = vst.msk [vmem:[#allocation5 + $0xb8] sm:$0xff] %vm3134, %v3125
        %3159 = vst.msk [vmem:[#allocation5 + $0xc0] sm:$0xff] %vm3134, %v3126
        %3160 = vst.msk [vmem:[#allocation5 + $0xc8] sm:$0xff] %vm3134, %v3127
        %3161 = vst.msk [vmem:[#allocation5 + $0xd0] sm:$0xff] %vm3134, %v3128
        %3162 = vst.msk [vmem:[#allocation5 + $0xd8] sm:$0xff] %vm3134, %v3129
        %3163 = vst.msk [vmem:[#allocation5 + $0xe0] sm:$0xff] %vm3134, %v3130
        %3164 = vst.msk [vmem:[#allocation5 + $0xe8] sm:$0xff] %vm3134, %v3131
        %3165 = vst.msk [vmem:[#allocation5 + $0xf0] sm:$0xff] %vm3134, %v3132
        %3166 = vst.msk [vmem:[#allocation5 + $0xf8] sm:$0xff] %vm3134, %v3133
        %v3167 = vld [vmem:[#allocation3] sm:$0xff]
        %v3168 = vld [vmem:[#allocation3 + $0x10] sm:$0xff]
        %v3169 = vld [vmem:[#allocation3 + $0x20] sm:$0xff]
        %v3170 = vld [vmem:[#allocation3 + $0x30] sm:$0xff]
        %v3171 = vld [vmem:[#allocation3 + $0x40] sm:$0xff]
        %v3172 = vld [vmem:[#allocation3 + $0x50] sm:$0xff]
        %v3173 = vld [vmem:[#allocation3 + $0x60] sm:$0xff]
        %v3174 = vld [vmem:[#allocation3 + $0x70] sm:$0xff]
        %v3175 = vld [vmem:[#allocation3 + $0x80] sm:$0xff]
        %v3176 = vld [vmem:[#allocation3 + $0x90] sm:$0xff]
        %v3177 = vld [vmem:[#allocation3 + $0xa0] sm:$0xff]
        %v3178 = vld [vmem:[#allocation3 + $0xb0] sm:$0xff]
        %v3179 = vld [vmem:[#allocation3 + $0xc0] sm:$0xff]
        %v3180 = vld [vmem:[#allocation3 + $0xd0] sm:$0xff]
        %v3181 = vld [vmem:[#allocation3 + $0xe0] sm:$0xff]
        %v3182 = vld [vmem:[#allocation3 + $0xf0] sm:$0xff]
        %v3183 = vld [vmem:[#allocation3 + $0x100] sm:$0xff]
        %v3184 = vld [vmem:[#allocation3 + $0x110] sm:$0xff]
        %v3185 = vld [vmem:[#allocation3 + $0x120] sm:$0xff]
        %v3186 = vld [vmem:[#allocation3 + $0x130] sm:$0xff]
        %v3187 = vld [vmem:[#allocation3 + $0x140] sm:$0xff]
        %v3188 = vld [vmem:[#allocation3 + $0x150] sm:$0xff]
        %v3189 = vld [vmem:[#allocation3 + $0x160] sm:$0xff]
        %v3190 = vld [vmem:[#allocation3 + $0x170] sm:$0xff]
        %v3191 = vld [vmem:[#allocation3 + $0x180] sm:$0xff]
        %v3192 = vld [vmem:[#allocation3 + $0x190] sm:$0xff]
        %v3193 = vld [vmem:[#allocation3 + $0x1a0] sm:$0xff]
        %v3194 = vld [vmem:[#allocation3 + $0x1b0] sm:$0xff]
        %v3195 = vld [vmem:[#allocation3 + $0x1c0] sm:$0xff]
        %v3196 = vld [vmem:[#allocation3 + $0x1d0] sm:$0xff]
        %v3197 = vld [vmem:[#allocation3 + $0x1e0] sm:$0xff]
        %v3198 = vld [vmem:[#allocation3 + $0x1f0] sm:$0xff]
        %3200 = vset.pattern.permute.xlu0 0
        %3201 = vperm.xlu0 %3200, %v2527
        %v3202 = vpop.permute.xlu0 %3201
        %3205 = vset.pattern.permute.xlu0 0
        %3206 = vperm.xlu0 %3205, %v2529
        %v3207 = vpop.permute.xlu0 %3206
        %3210 = vset.pattern.permute.xlu0 0
        %3211 = vperm.xlu0 %3210, %v2531
        %v3212 = vpop.permute.xlu0 %3211
        %3215 = vset.pattern.permute.xlu0 0
        %3216 = vperm.xlu0 %3215, %v2533
        %v3217 = vpop.permute.xlu0 %3216
        %3220 = vset.pattern.permute.xlu0 0
        %3221 = vperm.xlu0 %3220, %v2535
        %v3222 = vpop.permute.xlu0 %3221
        %3225 = vset.pattern.permute.xlu0 0
        %3226 = vperm.xlu0 %3225, %v2537
        %v3227 = vpop.permute.xlu0 %3226
        %3230 = vset.pattern.permute.xlu0 0
        %3231 = vperm.xlu0 %3230, %v2539
        %v3232 = vpop.permute.xlu0 %3231
        %3235 = vset.pattern.permute.xlu0 0
        %3236 = vperm.xlu0 %3235, %v2541
        %v3237 = vpop.permute.xlu0 %3236
        %3240 = vset.pattern.permute.xlu0 0
        %3241 = vperm.xlu0 %3240, %v2543
        %v3242 = vpop.permute.xlu0 %3241
        %3245 = vset.pattern.permute.xlu0 0
        %3246 = vperm.xlu0 %3245, %v2545
        %v3247 = vpop.permute.xlu0 %3246
        %3250 = vset.pattern.permute.xlu0 0
        %3251 = vperm.xlu0 %3250, %v2547
        %v3252 = vpop.permute.xlu0 %3251
        %3255 = vset.pattern.permute.xlu0 0
        %3256 = vperm.xlu0 %3255, %v2549
        %v3257 = vpop.permute.xlu0 %3256
        %3260 = vset.pattern.permute.xlu0 0
        %3261 = vperm.xlu0 %3260, %v2551
        %v3262 = vpop.permute.xlu0 %3261
        %3265 = vset.pattern.permute.xlu0 0
        %3266 = vperm.xlu0 %3265, %v2553
        %v3267 = vpop.permute.xlu0 %3266
        %3270 = vset.pattern.permute.xlu0 0
        %3271 = vperm.xlu0 %3270, %v2555
        %v3272 = vpop.permute.xlu0 %3271
        %3275 = vset.pattern.permute.xlu0 0
        %3276 = vperm.xlu0 %3275, %v2557
        %v3277 = vpop.permute.xlu0 %3276
        %3280 = vset.pattern.permute.xlu0 0
        %3281 = vperm.xlu0 %3280, %v2559
        %v3282 = vpop.permute.xlu0 %3281
        %3285 = vset.pattern.permute.xlu0 0
        %3286 = vperm.xlu0 %3285, %v2561
        %v3287 = vpop.permute.xlu0 %3286
        %3290 = vset.pattern.permute.xlu0 0
        %3291 = vperm.xlu0 %3290, %v2563
        %v3292 = vpop.permute.xlu0 %3291
        %3295 = vset.pattern.permute.xlu0 0
        %3296 = vperm.xlu0 %3295, %v2565
        %v3297 = vpop.permute.xlu0 %3296
        %3300 = vset.pattern.permute.xlu0 0
        %3301 = vperm.xlu0 %3300, %v2567
        %v3302 = vpop.permute.xlu0 %3301
        %3305 = vset.pattern.permute.xlu0 0
        %3306 = vperm.xlu0 %3305, %v2569
        %v3307 = vpop.permute.xlu0 %3306
        %3310 = vset.pattern.permute.xlu0 0
        %3311 = vperm.xlu0 %3310, %v2571
        %v3312 = vpop.permute.xlu0 %3311
        %3315 = vset.pattern.permute.xlu0 0
        %3316 = vperm.xlu0 %3315, %v2573
        %v3317 = vpop.permute.xlu0 %3316
        %3320 = vset.pattern.permute.xlu0 0
        %3321 = vperm.xlu0 %3320, %v2575
        %v3322 = vpop.permute.xlu0 %3321
        %3325 = vset.pattern.permute.xlu0 0
        %3326 = vperm.xlu0 %3325, %v2577
        %v3327 = vpop.permute.xlu0 %3326
        %3330 = vset.pattern.permute.xlu0 0
        %3331 = vperm.xlu0 %3330, %v2579
        %v3332 = vpop.permute.xlu0 %3331
        %3335 = vset.pattern.permute.xlu0 0
        %3336 = vperm.xlu0 %3335, %v2581
        %v3337 = vpop.permute.xlu0 %3336
        %3340 = vset.pattern.permute.xlu0 0
        %3341 = vperm.xlu0 %3340, %v2583
        %v3342 = vpop.permute.xlu0 %3341
        %3345 = vset.pattern.permute.xlu0 0
        %3346 = vperm.xlu0 %3345, %v2585
        %v3347 = vpop.permute.xlu0 %3346
        %3350 = vset.pattern.permute.xlu0 0
        %3351 = vperm.xlu0 %3350, %v2587
        %v3352 = vpop.permute.xlu0 %3351
        %3355 = vset.pattern.permute.xlu0 0
        %3356 = vperm.xlu0 %3355, %v2589
        %v3357 = vpop.permute.xlu0 %3356
        %v3359 = vmul.f32 %v3202, %v3167
        %v3360 = vmul.f32 %v3207, %v3168
        %v3361 = vmul.f32 %v3212, %v3169
        %v3362 = vmul.f32 %v3217, %v3170
        %v3363 = vmul.f32 %v3222, %v3171
        %v3364 = vmul.f32 %v3227, %v3172
        %v3365 = vmul.f32 %v3232, %v3173
        %v3366 = vmul.f32 %v3237, %v3174
        %v3367 = vmul.f32 %v3242, %v3175
        %v3368 = vmul.f32 %v3247, %v3176
        %v3369 = vmul.f32 %v3252, %v3177
        %v3370 = vmul.f32 %v3257, %v3178
        %v3371 = vmul.f32 %v3262, %v3179
        %v3372 = vmul.f32 %v3267, %v3180
        %v3373 = vmul.f32 %v3272, %v3181
        %v3374 = vmul.f32 %v3277, %v3182
        %v3375 = vmul.f32 %v3282, %v3183
        %v3376 = vmul.f32 %v3287, %v3184
        %v3377 = vmul.f32 %v3292, %v3185
        %v3378 = vmul.f32 %v3297, %v3186
        %v3379 = vmul.f32 %v3302, %v3187
        %v3380 = vmul.f32 %v3307, %v3188
        %v3381 = vmul.f32 %v3312, %v3189
        %v3382 = vmul.f32 %v3317, %v3190
        %v3383 = vmul.f32 %v3322, %v3191
        %v3384 = vmul.f32 %v3327, %v3192
        %v3385 = vmul.f32 %v3332, %v3193
        %v3386 = vmul.f32 %v3337, %v3194
        %v3387 = vmul.f32 %v3342, %v3195
        %v3388 = vmul.f32 %v3347, %v3196
        %v3389 = vmul.f32 %v3352, %v3197
        %v3390 = vmul.f32 %v3357, %v3198
        %3391 = vmatprep.subr.mxu0 0.0
        %3392 = vmatpush1.msra.mxu0 %v1919
        %3393 = vmatprep.subr.mxu0 0.0
        %3394 = vmatpush1.msra.mxu0 %v1923
        %3395 = vmatprep.subr.mxu0 0.0
        %3396 = vmatpush1.msra.mxu0 %v1927
        %3397 = vmatprep.subr.mxu0 0.0
        %3398 = vmatpush1.msra.mxu0 %v1931
        %3399 = vmatprep.subr.mxu0 0.0
        %3400 = vmatpush1.msra.mxu0 %v1935
        %3401 = vmatprep.subr.mxu0 0.0
        %3402 = vmatpush1.msra.mxu0 %v1939
        %3403 = vmatprep.subr.mxu0 0.0
        %3404 = vmatpush1.msra.mxu0 %v1943
        %3405 = vmatprep.subr.mxu0 0.0
        %3406 = vmatpush1.msra.mxu0 %v1947
        %3407 = vmatprep.subr.mxu0 0.0
        %3408 = vmatpush1.msra.mxu0 %v1951
        %3409 = vmatprep.subr.mxu0 0.0
        %3410 = vmatpush1.msra.mxu0 %v1955
        %3411 = vmatprep.subr.mxu0 0.0
        %3412 = vmatpush1.msra.mxu0 %v1959
        %3413 = vmatprep.subr.mxu0 0.0
        %3414 = vmatpush1.msra.mxu0 %v1963
        %3415 = vmatprep.subr.mxu0 0.0
        %3416 = vmatpush1.msra.mxu0 %v1967
        %3417 = vmatprep.subr.mxu0 0.0
        %3418 = vmatpush1.msra.mxu0 %v1971
        %3419 = vmatprep.subr.mxu0 0.0
        %3420 = vmatpush1.msra.mxu0 %v1975
        %3421 = vmatprep.subr.mxu0 0.0
        %3422 = vmatpush1.msra.mxu0 %v1979
        %3423 = vmatprep.subr.mxu0 0.0
        %3424 = vmatpush1.msra.mxu0 %v1983
        %3425 = vmatprep.subr.mxu0 0.0
        %3426 = vmatpush1.msra.mxu0 %v1987
        %3427 = vmatprep.subr.mxu0 0.0
        %3428 = vmatpush1.msra.mxu0 %v1991
        %3429 = vmatprep.subr.mxu0 0.0
        %3430 = vmatpush1.msra.mxu0 %v1995
        %3431 = vmatprep.subr.mxu0 0.0
        %3432 = vmatpush1.msra.mxu0 %v1999
        %3433 = vmatprep.subr.mxu0 0.0
        %3434 = vmatpush1.msra.mxu0 %v2003
        %3435 = vmatprep.subr.mxu0 0.0
        %3436 = vmatpush1.msra.mxu0 %v2007
        %3437 = vmatprep.subr.mxu0 0.0
        %3438 = vmatpush1.msra.mxu0 %v2011
        %3439 = vmatprep.subr.mxu0 0.0
        %3440 = vmatpush1.msra.mxu0 %v2015
        %3441 = vmatprep.subr.mxu0 0.0
        %3442 = vmatpush1.msra.mxu0 %v2019
        %3443 = vmatprep.subr.mxu0 0.0
        %3444 = vmatpush1.msra.mxu0 %v2023
        %3445 = vmatprep.subr.mxu0 0.0
        %3446 = vmatpush1.msra.mxu0 %v2027
        %3447 = vmatprep.subr.mxu0 0.0
        %3448 = vmatpush1.msra.mxu0 %v2031
        %3449 = vmatprep.subr.mxu0 0.0
        %3450 = vmatpush1.msra.mxu0 %v2035
        %3451 = vmatprep.subr.mxu0 0.0
        %3452 = vmatpush1.msra.mxu0 %v2039
        %3453 = vmatprep.subr.mxu0 0.0
        %3454 = vmatpush1.msra.mxu0 %v2043
        %3455 = vmatprep.mubr.f32.mxu0 %v2817
        %3456 = vmatmul.mubr.f32.gmra.mrb[0].mxu0 %v2815
        %v3457 = vpop.f32.mrb[0].mxu0
        %v3458 = vadd.f32 0.0, %v3457
        %v3459 = vpop.f32.mrb[0].mxu0
        %3460 = vmatprep.mubr.f32.mxu0 %v2821
        %3461 = vmatmul.mubr.f32.gmra.mrb[0].mxu0 %v2819
        %v3462 = vpop.f32.mrb[0].mxu0
        %v3463 = vadd.f32 0.0, %v3462
        %v3464 = vpop.f32.mrb[0].mxu0
        %3465 = vmatprep.mubr.f32.mxu0 %v2825
        %3466 = vmatmul.mubr.f32.gmra.mrb[0].mxu0 %v2823
        %v3467 = vpop.f32.mrb[0].mxu0
        %v3468 = vadd.f32 0.0, %v3467
        %v3469 = vpop.f32.mrb[0].mxu0
        %3470 = vmatprep.mubr.f32.mxu0 %v2829
        %3471 = vmatmul.mubr.f32.gmra.mrb[0].mxu0 %v2827
        %v3472 = vpop.f32.mrb[0].mxu0
        %v3473 = vadd.f32 0.0, %v3472
        %v3474 = vpop.f32.mrb[0].mxu0
        %3475 = vmatprep.mubr.f32.mxu0 %v2833
        %3476 = vmatmul.mubr.f32.gmra.mrb[0].mxu0 %v2831
        %v3477 = vpop.f32.mrb[0].mxu0
        %v3478 = vadd.f32 0.0, %v3477
        %v3479 = vpop.f32.mrb[0].mxu0
        %3480 = vmatprep.mubr.f32.mxu0 %v2837
        %3481 = vmatmul.mubr.f32.gmra.mrb[0].mxu0 %v2835
        %v3482 = vpop.f32.mrb[0].mxu0
        %v3483 = vadd.f32 0.0, %v3482
        %v3484 = vpop.f32.mrb[0].mxu0
        %3485 = vmatprep.mubr.f32.mxu0 %v2841
        %3486 = vmatmul.mubr.f32.gmra.mrb[0].mxu0 %v2839
        %v3487 = vpop.f32.mrb[0].mxu0
        %v3488 = vadd.f32 0.0, %v3487
        %v3489 = vpop.f32.mrb[0].mxu0
        %3490 = vmatprep.mubr.f32.mxu0 %v2845
        %3491 = vmatmul.mubr.f32.gmra.mrb[0].mxu0 %v2843
        %v3492 = vpop.f32.mrb[0].mxu0
        %v3493 = vadd.f32 0.0, %v3492
        %v3494 = vpop.f32.mrb[0].mxu0
        %3495 = vmatprep.mubr.f32.mxu0 %v2849
        %3496 = vmatmul.mubr.f32.gmra.mrb[0].mxu0 %v2847
        %v3497 = vpop.f32.mrb[0].mxu0
        %v3498 = vadd.f32 0.0, %v3497
        %v3499 = vpop.f32.mrb[0].mxu0
        %3500 = vmatprep.mubr.f32.mxu0 %v2853
        %3501 = vmatmul.mubr.f32.gmra.mrb[0].mxu0 %v2851
        %v3502 = vpop.f32.mrb[0].mxu0
        %v3503 = vadd.f32 0.0, %v3502
        %v3504 = vpop.f32.mrb[0].mxu0
        %3505 = vmatprep.mubr.f32.mxu0 %v2857
        %3506 = vmatmul.mubr.f32.gmra.mrb[0].mxu0 %v2855
        %v3507 = vpop.f32.mrb[0].mxu0
        %v3508 = vadd.f32 0.0, %v3507
        %v3509 = vpop.f32.mrb[0].mxu0
        %3510 = vmatprep.mubr.f32.mxu0 %v2861
        %3511 = vmatmul.mubr.f32.gmra.mrb[0].mxu0 %v2859
        %v3512 = vpop.f32.mrb[0].mxu0
        %v3513 = vadd.f32 0.0, %v3512
        %v3514 = vpop.f32.mrb[0].mxu0
        %3515 = vmatprep.mubr.f32.mxu0 %v2865
        %3516 = vmatmul.mubr.f32.gmra.mrb[0].mxu0 %v2863
        %v3517 = vpop.f32.mrb[0].mxu0
        %v3518 = vadd.f32 0.0, %v3517
        %v3519 = vpop.f32.mrb[0].mxu0
        %3520 = vmatprep.mubr.f32.mxu0 %v2869
        %3521 = vmatmul.mubr.f32.gmra.mrb[0].mxu0 %v2867
        %v3522 = vpop.f32.mrb[0].mxu0
        %v3523 = vadd.f32 0.0, %v3522
        %v3524 = vpop.f32.mrb[0].mxu0
        %3525 = vmatprep.mubr.f32.mxu0 %v2873
        %3526 = vmatmul.mubr.f32.gmra.mrb[0].mxu0 %v2871
        %v3527 = vpop.f32.mrb[0].mxu0
        %v3528 = vadd.f32 0.0, %v3527
        %v3529 = vpop.f32.mrb[0].mxu0
        %3530 = vmatprep.mubr.f32.mxu0 %v2877
        %3531 = vmatmul.mubr.f32.gmra.mrb[0].mxu0 %v2875
        %v3532 = vpop.f32.mrb[0].mxu0
        %v3533 = vadd.f32 0.0, %v3532
        %v3534 = vpop.f32.mrb[0].mxu0
        %3535 = vmatprep.mubr.f32.mxu0 %v2881
        %3536 = vmatmul.mubr.f32.gmra.mrb[0].mxu0 %v2879
        %v3537 = vpop.f32.mrb[0].mxu0
        %v3538 = vadd.f32 0.0, %v3537
        %v3539 = vpop.f32.mrb[0].mxu0
        %3540 = vmatprep.mubr.f32.mxu0 %v2885
        %3541 = vmatmul.mubr.f32.gmra.mrb[0].mxu0 %v2883
        %v3542 = vpop.f32.mrb[0].mxu0
        %v3543 = vadd.f32 0.0, %v3542
        %v3544 = vpop.f32.mrb[0].mxu0
        %3545 = vmatprep.mubr.f32.mxu0 %v2889
        %3546 = vmatmul.mubr.f32.gmra.mrb[0].mxu0 %v2887
        %v3547 = vpop.f32.mrb[0].mxu0
        %v3548 = vadd.f32 0.0, %v3547
        %v3549 = vpop.f32.mrb[0].mxu0
        %3550 = vmatprep.mubr.f32.mxu0 %v2893
        %3551 = vmatmul.mubr.f32.gmra.mrb[0].mxu0 %v2891
        %v3552 = vpop.f32.mrb[0].mxu0
        %v3553 = vadd.f32 0.0, %v3552
        %v3554 = vpop.f32.mrb[0].mxu0
        %3555 = vmatprep.mubr.f32.mxu0 %v2897
        %3556 = vmatmul.mubr.f32.gmra.mrb[0].mxu0 %v2895
        %v3557 = vpop.f32.mrb[0].mxu0
        %v3558 = vadd.f32 0.0, %v3557
        %v3559 = vpop.f32.mrb[0].mxu0
        %3560 = vmatprep.mubr.f32.mxu0 %v2901
        %3561 = vmatmul.mubr.f32.gmra.mrb[0].mxu0 %v2899
        %v3562 = vpop.f32.mrb[0].mxu0
        %v3563 = vadd.f32 0.0, %v3562
        %v3564 = vpop.f32.mrb[0].mxu0
        %3565 = vmatprep.mubr.f32.mxu0 %v2905
        %3566 = vmatmul.mubr.f32.gmra.mrb[0].mxu0 %v2903
        %v3567 = vpop.f32.mrb[0].mxu0
        %v3568 = vadd.f32 0.0, %v3567
        %v3569 = vpop.f32.mrb[0].mxu0
        %3570 = vmatprep.mubr.f32.mxu0 %v2909
        %3571 = vmatmul.mubr.f32.gmra.mrb[0].mxu0 %v2907
        %v3572 = vpop.f32.mrb[0].mxu0
        %v3573 = vadd.f32 0.0, %v3572
        %v3574 = vpop.f32.mrb[0].mxu0
        %3575 = vmatprep.mubr.f32.mxu0 %v2913
        %3576 = vmatmul.mubr.f32.gmra.mrb[0].mxu0 %v2911
        %v3577 = vpop.f32.mrb[0].mxu0
        %v3578 = vadd.f32 0.0, %v3577
        %v3579 = vpop.f32.mrb[0].mxu0
        %3580 = vmatprep.mubr.f32.mxu0 %v2917
        %3581 = vmatmul.mubr.f32.gmra.mrb[0].mxu0 %v2915
        %v3582 = vpop.f32.mrb[0].mxu0
        %v3583 = vadd.f32 0.0, %v3582
        %v3584 = vpop.f32.mrb[0].mxu0
        %3585 = vmatprep.mubr.f32.mxu0 %v2921
        %3586 = vmatmul.mubr.f32.gmra.mrb[0].mxu0 %v2919
        %v3587 = vpop.f32.mrb[0].mxu0
        %v3588 = vadd.f32 0.0, %v3587
        %v3589 = vpop.f32.mrb[0].mxu0
        %3590 = vmatprep.mubr.f32.mxu0 %v2925
        %3591 = vmatmul.mubr.f32.gmra.mrb[0].mxu0 %v2923
        %v3592 = vpop.f32.mrb[0].mxu0
        %v3593 = vadd.f32 0.0, %v3592
        %v3594 = vpop.f32.mrb[0].mxu0
        %3595 = vmatprep.mubr.f32.mxu0 %v2929
        %3596 = vmatmul.mubr.f32.gmra.mrb[0].mxu0 %v2927
        %v3597 = vpop.f32.mrb[0].mxu0
        %v3598 = vadd.f32 0.0, %v3597
        %v3599 = vpop.f32.mrb[0].mxu0
        %3600 = vmatprep.mubr.f32.mxu0 %v2933
        %3601 = vmatmul.mubr.f32.gmra.mrb[0].mxu0 %v2931
        %v3602 = vpop.f32.mrb[0].mxu0
        %v3603 = vadd.f32 0.0, %v3602
        %v3604 = vpop.f32.mrb[0].mxu0
        %3605 = vmatprep.mubr.f32.mxu0 %v2937
        %3606 = vmatmul.mubr.f32.gmra.mrb[0].mxu0 %v2935
        %v3607 = vpop.f32.mrb[0].mxu0
        %v3608 = vadd.f32 0.0, %v3607
        %v3609 = vpop.f32.mrb[0].mxu0
        %3610 = vmatprep.mubr.f32.mxu0 %v2941
        %3611 = vmatmul.mubr.f32.gmra.mrb[0].mxu0 %v2939
        %v3612 = vpop.f32.mrb[0].mxu0
        %v3613 = vadd.f32 0.0, %v3612
        %v3614 = vpop.f32.mrb[0].mxu0
        %3615 = vdwg.mxu0
        %v3616 = vadd.f32 %v3359, %v3458
        %v3617 = vadd.f32 %v3360, %v3463
        %v3618 = vadd.f32 %v3361, %v3468
        %v3619 = vadd.f32 %v3362, %v3473
        %v3620 = vadd.f32 %v3363, %v3478
        %v3621 = vadd.f32 %v3364, %v3483
        %v3622 = vadd.f32 %v3365, %v3488
        %v3623 = vadd.f32 %v3366, %v3493
        %v3624 = vadd.f32 %v3367, %v3498
        %v3625 = vadd.f32 %v3368, %v3503
        %v3626 = vadd.f32 %v3369, %v3508
        %v3627 = vadd.f32 %v3370, %v3513
        %v3628 = vadd.f32 %v3371, %v3518
        %v3629 = vadd.f32 %v3372, %v3523
        %v3630 = vadd.f32 %v3373, %v3528
        %v3631 = vadd.f32 %v3374, %v3533
        %v3632 = vadd.f32 %v3375, %v3538
        %v3633 = vadd.f32 %v3376, %v3543
        %v3634 = vadd.f32 %v3377, %v3548
        %v3635 = vadd.f32 %v3378, %v3553
        %v3636 = vadd.f32 %v3379, %v3558
        %v3637 = vadd.f32 %v3380, %v3563
        %v3638 = vadd.f32 %v3381, %v3568
        %v3639 = vadd.f32 %v3382, %v3573
        %v3640 = vadd.f32 %v3383, %v3578
        %v3641 = vadd.f32 %v3384, %v3583
        %v3642 = vadd.f32 %v3385, %v3588
        %v3643 = vadd.f32 %v3386, %v3593
        %v3644 = vadd.f32 %v3387, %v3598
        %v3645 = vadd.f32 %v3388, %v3603
        %v3646 = vadd.f32 %v3389, %v3608
        %v3647 = vadd.f32 %v3390, %v3613
        %3648 = vst [vmem:[#allocation3] sm:$0xff] %v3616
        %3649 = vst [vmem:[#allocation3 + $0x10] sm:$0xff] %v3617
        %3650 = vst [vmem:[#allocation3 + $0x20] sm:$0xff] %v3618
        %3651 = vst [vmem:[#allocation3 + $0x30] sm:$0xff] %v3619
        %3652 = vst [vmem:[#allocation3 + $0x40] sm:$0xff] %v3620
        %3653 = vst [vmem:[#allocation3 + $0x50] sm:$0xff] %v3621
        %3654 = vst [vmem:[#allocation3 + $0x60] sm:$0xff] %v3622
        %3655 = vst [vmem:[#allocation3 + $0x70] sm:$0xff] %v3623
        %3656 = vst [vmem:[#allocation3 + $0x80] sm:$0xff] %v3624
        %3657 = vst [vmem:[#allocation3 + $0x90] sm:$0xff] %v3625
        %3658 = vst [vmem:[#allocation3 + $0xa0] sm:$0xff] %v3626
        %3659 = vst [vmem:[#allocation3 + $0xb0] sm:$0xff] %v3627
        %3660 = vst [vmem:[#allocation3 + $0xc0] sm:$0xff] %v3628
        %3661 = vst [vmem:[#allocation3 + $0xd0] sm:$0xff] %v3629
        %3662 = vst [vmem:[#allocation3 + $0xe0] sm:$0xff] %v3630
        %3663 = vst [vmem:[#allocation3 + $0xf0] sm:$0xff] %v3631
        %3664 = vst [vmem:[#allocation3 + $0x100] sm:$0xff] %v3632
        %3665 = vst [vmem:[#allocation3 + $0x110] sm:$0xff] %v3633
        %3666 = vst [vmem:[#allocation3 + $0x120] sm:$0xff] %v3634
        %3667 = vst [vmem:[#allocation3 + $0x130] sm:$0xff] %v3635
        %3668 = vst [vmem:[#allocation3 + $0x140] sm:$0xff] %v3636
        %3669 = vst [vmem:[#allocation3 + $0x150] sm:$0xff] %v3637
        %3670 = vst [vmem:[#allocation3 + $0x160] sm:$0xff] %v3638
        %3671 = vst [vmem:[#allocation3 + $0x170] sm:$0xff] %v3639
        %3672 = vst [vmem:[#allocation3 + $0x180] sm:$0xff] %v3640
        %3673 = vst [vmem:[#allocation3 + $0x190] sm:$0xff] %v3641
        %3674 = vst [vmem:[#allocation3 + $0x1a0] sm:$0xff] %v3642
        %3675 = vst [vmem:[#allocation3 + $0x1b0] sm:$0xff] %v3643
        %3676 = vst [vmem:[#allocation3 + $0x1c0] sm:$0xff] %v3644
        %3677 = vst [vmem:[#allocation3 + $0x1d0] sm:$0xff] %v3645
        %3678 = vst [vmem:[#allocation3 + $0x1e0] sm:$0xff] %v3646
        %3679 = vst [vmem:[#allocation3 + $0x1f0] sm:$0xff] %v3647
        %3680 = vst.msk [vmem:[#allocation4] sm:$0xff] %vm3134, %v2462
        %3681 = vst.msk [vmem:[#allocation4 + $0x8] sm:$0xff] %vm3134, %v2463
        %3682 = vst.msk [vmem:[#allocation4 + $0x10] sm:$0xff] %vm3134, %v2464
        %3683 = vst.msk [vmem:[#allocation4 + $0x18] sm:$0xff] %vm3134, %v2465
        %3684 = vst.msk [vmem:[#allocation4 + $0x20] sm:$0xff] %vm3134, %v2466
        %3685 = vst.msk [vmem:[#allocation4 + $0x28] sm:$0xff] %vm3134, %v2467
        %3686 = vst.msk [vmem:[#allocation4 + $0x30] sm:$0xff] %vm3134, %v2468
        %3687 = vst.msk [vmem:[#allocation4 + $0x38] sm:$0xff] %vm3134, %v2469
        %3688 = vst.msk [vmem:[#allocation4 + $0x40] sm:$0xff] %vm3134, %v2470
        %3689 = vst.msk [vmem:[#allocation4 + $0x48] sm:$0xff] %vm3134, %v2471
        %3690 = vst.msk [vmem:[#allocation4 + $0x50] sm:$0xff] %vm3134, %v2472
        %3691 = vst.msk [vmem:[#allocation4 + $0x58] sm:$0xff] %vm3134, %v2473
        %3692 = vst.msk [vmem:[#allocation4 + $0x60] sm:$0xff] %vm3134, %v2474
        %3693 = vst.msk [vmem:[#allocation4 + $0x68] sm:$0xff] %vm3134, %v2475
        %3694 = vst.msk [vmem:[#allocation4 + $0x70] sm:$0xff] %vm3134, %v2476
        %3695 = vst.msk [vmem:[#allocation4 + $0x78] sm:$0xff] %vm3134, %v2477
        %3696 = vst.msk [vmem:[#allocation4 + $0x80] sm:$0xff] %vm3134, %v2478
        %3697 = vst.msk [vmem:[#allocation4 + $0x88] sm:$0xff] %vm3134, %v2479
        %3698 = vst.msk [vmem:[#allocation4 + $0x90] sm:$0xff] %vm3134, %v2480
        %3699 = vst.msk [vmem:[#allocation4 + $0x98] sm:$0xff] %vm3134, %v2481
        %3700 = vst.msk [vmem:[#allocation4 + $0xa0] sm:$0xff] %vm3134, %v2482
        %3701 = vst.msk [vmem:[#allocation4 + $0xa8] sm:$0xff] %vm3134, %v2483
        %3702 = vst.msk [vmem:[#allocation4 + $0xb0] sm:$0xff] %vm3134, %v2484
        %3703 = vst.msk [vmem:[#allocation4 + $0xb8] sm:$0xff] %vm3134, %v2485
        %3704 = vst.msk [vmem:[#allocation4 + $0xc0] sm:$0xff] %vm3134, %v2486
        %3705 = vst.msk [vmem:[#allocation4 + $0xc8] sm:$0xff] %vm3134, %v2487
        %3706 = vst.msk [vmem:[#allocation4 + $0xd0] sm:$0xff] %vm3134, %v2488
        %3707 = vst.msk [vmem:[#allocation4 + $0xd8] sm:$0xff] %vm3134, %v2489
        %3708 = vst.msk [vmem:[#allocation4 + $0xe0] sm:$0xff] %vm3134, %v2490
        %3709 = vst.msk [vmem:[#allocation4 + $0xe8] sm:$0xff] %vm3134, %v2491
        %3710 = vst.msk [vmem:[#allocation4 + $0xf0] sm:$0xff] %vm3134, %v2492
        %3711 = vst.msk [vmem:[#allocation4 + $0xf8] sm:$0xff] %vm3134, %v2493
        %v3712 = vld [vmem:[#allocation2 + $0x8] sm:$0xff]
        %v3713 = vld [vmem:[#allocation2 + $0x18] sm:$0xff]
        %v3714 = vld [vmem:[#allocation2 + $0x28] sm:$0xff]
        %v3715 = vld [vmem:[#allocation2 + $0x38] sm:$0xff]
        %v3716 = vld [vmem:[#allocation2 + $0x48] sm:$0xff]
        %v3717 = vld [vmem:[#allocation2 + $0x58] sm:$0xff]
        %v3718 = vld [vmem:[#allocation2 + $0x68] sm:$0xff]
        %v3719 = vld [vmem:[#allocation2 + $0x78] sm:$0xff]
        %v3720 = vld [vmem:[#allocation2 + $0x88] sm:$0xff]
        %v3721 = vld [vmem:[#allocation2 + $0x98] sm:$0xff]
        %v3722 = vld [vmem:[#allocation2 + $0xa8] sm:$0xff]
        %v3723 = vld [vmem:[#allocation2 + $0xb8] sm:$0xff]
        %v3724 = vld [vmem:[#allocation2 + $0xc8] sm:$0xff]
        %v3725 = vld [vmem:[#allocation2 + $0xd8] sm:$0xff]
        %v3726 = vld [vmem:[#allocation2 + $0xe8] sm:$0xff]
        %v3727 = vld [vmem:[#allocation2 + $0xf8] sm:$0xff]
        %v3728 = vld [vmem:[#allocation2 + $0x108] sm:$0xff]
        %v3729 = vld [vmem:[#allocation2 + $0x118] sm:$0xff]
        %v3730 = vld [vmem:[#allocation2 + $0x128] sm:$0xff]
        %v3731 = vld [vmem:[#allocation2 + $0x138] sm:$0xff]
        %v3732 = vld [vmem:[#allocation2 + $0x148] sm:$0xff]
        %v3733 = vld [vmem:[#allocation2 + $0x158] sm:$0xff]
        %v3734 = vld [vmem:[#allocation2 + $0x168] sm:$0xff]
        %v3735 = vld [vmem:[#allocation2 + $0x178] sm:$0xff]
        %v3736 = vld [vmem:[#allocation2 + $0x188] sm:$0xff]
        %v3737 = vld [vmem:[#allocation2 + $0x198] sm:$0xff]
        %v3738 = vld [vmem:[#allocation2 + $0x1a8] sm:$0xff]
        %v3739 = vld [vmem:[#allocation2 + $0x1b8] sm:$0xff]
        %v3740 = vld [vmem:[#allocation2 + $0x1c8] sm:$0xff]
        %v3741 = vld [vmem:[#allocation2 + $0x1d8] sm:$0xff]
        %v3742 = vld [vmem:[#allocation2 + $0x1e8] sm:$0xff]
        %v3743 = vld [vmem:[#allocation2 + $0x1f8] sm:$0xff]
        %3744 = vmatprep.subr.mxu0 0.0
        %3745 = vmatpush1.xpose.msra.mxu0 %v1918
        %3746 = vmatprep.subr.mxu0 0.0
        %3747 = vmatpush1.xpose.msra.mxu0 %v1922
        %3748 = vmatprep.subr.mxu0 0.0
        %3749 = vmatpush1.xpose.msra.mxu0 %v1926
        %3750 = vmatprep.subr.mxu0 0.0
        %3751 = vmatpush1.xpose.msra.mxu0 %v1930
        %3752 = vmatprep.subr.mxu0 0.0
        %3753 = vmatpush1.xpose.msra.mxu0 %v1934
        %3754 = vmatprep.subr.mxu0 0.0
        %3755 = vmatpush1.xpose.msra.mxu0 %v1938
        %3756 = vmatprep.subr.mxu0 0.0
        %3757 = vmatpush1.xpose.msra.mxu0 %v1942
        %3758 = vmatprep.subr.mxu0 0.0
        %3759 = vmatpush1.xpose.msra.mxu0 %v1946
        %3760 = vmatprep.subr.mxu0 0.0
        %3761 = vmatpush1.xpose.msra.mxu0 %v1950
        %3762 = vmatprep.subr.mxu0 0.0
        %3763 = vmatpush1.xpose.msra.mxu0 %v1954
        %3764 = vmatprep.subr.mxu0 0.0
        %3765 = vmatpush1.xpose.msra.mxu0 %v1958
        %3766 = vmatprep.subr.mxu0 0.0
        %3767 = vmatpush1.xpose.msra.mxu0 %v1962
        %3768 = vmatprep.subr.mxu0 0.0
        %3769 = vmatpush1.xpose.msra.mxu0 %v1966
        %3770 = vmatprep.subr.mxu0 0.0
        %3771 = vmatpush1.xpose.msra.mxu0 %v1970
        %3772 = vmatprep.subr.mxu0 0.0
        %3773 = vmatpush1.xpose.msra.mxu0 %v1974
        %3774 = vmatprep.subr.mxu0 0.0
        %3775 = vmatpush1.xpose.msra.mxu0 %v1978
        %3776 = vmatprep.subr.mxu0 0.0
        %3777 = vmatpush1.xpose.msra.mxu0 %v1982
        %3778 = vmatprep.subr.mxu0 0.0
        %3779 = vmatpush1.xpose.msra.mxu0 %v1986
        %3780 = vmatprep.subr.mxu0 0.0
        %3781 = vmatpush1.xpose.msra.mxu0 %v1990
        %3782 = vmatprep.subr.mxu0 0.0
        %3783 = vmatpush1.xpose.msra.mxu0 %v1994
        %3784 = vmatprep.subr.mxu0 0.0
        %3785 = vmatpush1.xpose.msra.mxu0 %v1998
        %3786 = vmatprep.subr.mxu0 0.0
        %3787 = vmatpush1.xpose.msra.mxu0 %v2002
        %3788 = vmatprep.subr.mxu0 0.0
        %3789 = vmatpush1.xpose.msra.mxu0 %v2006
        %3790 = vmatprep.subr.mxu0 0.0
        %3791 = vmatpush1.xpose.msra.mxu0 %v2010
        %3792 = vmatprep.subr.mxu0 0.0
        %3793 = vmatpush1.xpose.msra.mxu0 %v2014
        %3794 = vmatprep.subr.mxu0 0.0
        %3795 = vmatpush1.xpose.msra.mxu0 %v2018
        %3796 = vmatprep.subr.mxu0 0.0
        %3797 = vmatpush1.xpose.msra.mxu0 %v2022
        %3798 = vmatprep.subr.mxu0 0.0
        %3799 = vmatpush1.xpose.msra.mxu0 %v2026
        %3800 = vmatprep.subr.mxu0 0.0
        %3801 = vmatpush1.xpose.msra.mxu0 %v2030
        %3802 = vmatprep.subr.mxu0 0.0
        %3803 = vmatpush1.xpose.msra.mxu0 %v2034
        %3804 = vmatprep.subr.mxu0 0.0
        %3805 = vmatpush1.xpose.msra.mxu0 %v2038
        %3806 = vmatprep.subr.mxu0 0.0
        %3807 = vmatpush1.xpose.msra.mxu0 %v2042
        %3808 = vmatprep.mubr.f32.mxu0 0.0
        %3809 = vmatmul.mubr.f32.gmra.mrb[0].mxu0 %v3712
        %v3810 = vpop.f32.mrb[0].mxu0
        %v3811 = vadd.f32 0.0, %v3810
        %v3812 = vpop.f32.mrb[0].mxu0
        %v3813 = vadd.f32 0.0, %v3812
        %3814 = vmatprep.mubr.f32.mxu0 0.0
        %3815 = vmatmul.mubr.f32.gmra.mrb[0].mxu0 %v3713
        %v3816 = vpop.f32.mrb[0].mxu0
        %v3817 = vadd.f32 0.0, %v3816
        %v3818 = vpop.f32.mrb[0].mxu0
        %v3819 = vadd.f32 0.0, %v3818
        %3820 = vmatprep.mubr.f32.mxu0 0.0
        %3821 = vmatmul.mubr.f32.gmra.mrb[0].mxu0 %v3714
        %v3822 = vpop.f32.mrb[0].mxu0
        %v3823 = vadd.f32 0.0, %v3822
        %v3824 = vpop.f32.mrb[0].mxu0
        %v3825 = vadd.f32 0.0, %v3824
        %3826 = vmatprep.mubr.f32.mxu0 0.0
        %3827 = vmatmul.mubr.f32.gmra.mrb[0].mxu0 %v3715
        %v3828 = vpop.f32.mrb[0].mxu0
        %v3829 = vadd.f32 0.0, %v3828
        %v3830 = vpop.f32.mrb[0].mxu0
        %v3831 = vadd.f32 0.0, %v3830
        %3832 = vmatprep.mubr.f32.mxu0 0.0
        %3833 = vmatmul.mubr.f32.gmra.mrb[0].mxu0 %v3716
        %v3834 = vpop.f32.mrb[0].mxu0
        %v3835 = vadd.f32 0.0, %v3834
        %v3836 = vpop.f32.mrb[0].mxu0
        %v3837 = vadd.f32 0.0, %v3836
        %3838 = vmatprep.mubr.f32.mxu0 0.0
        %3839 = vmatmul.mubr.f32.gmra.mrb[0].mxu0 %v3717
        %v3840 = vpop.f32.mrb[0].mxu0
        %v3841 = vadd.f32 0.0, %v3840
        %v3842 = vpop.f32.mrb[0].mxu0
        %v3843 = vadd.f32 0.0, %v3842
        %3844 = vmatprep.mubr.f32.mxu0 0.0
        %3845 = vmatmul.mubr.f32.gmra.mrb[0].mxu0 %v3718
        %v3846 = vpop.f32.mrb[0].mxu0
        %v3847 = vadd.f32 0.0, %v3846
        %v3848 = vpop.f32.mrb[0].mxu0
        %v3849 = vadd.f32 0.0, %v3848
        %3850 = vmatprep.mubr.f32.mxu0 0.0
        %3851 = vmatmul.mubr.f32.gmra.mrb[0].mxu0 %v3719
        %v3852 = vpop.f32.mrb[0].mxu0
        %v3853 = vadd.f32 0.0, %v3852
        %v3854 = vpop.f32.mrb[0].mxu0
        %v3855 = vadd.f32 0.0, %v3854
        %3856 = vmatprep.mubr.f32.mxu0 0.0
        %3857 = vmatmul.mubr.f32.gmra.mrb[0].mxu0 %v3720
        %v3858 = vpop.f32.mrb[0].mxu0
        %v3859 = vadd.f32 0.0, %v3858
        %v3860 = vpop.f32.mrb[0].mxu0
        %v3861 = vadd.f32 0.0, %v3860
        %3862 = vmatprep.mubr.f32.mxu0 0.0
        %3863 = vmatmul.mubr.f32.gmra.mrb[0].mxu0 %v3721
        %v3864 = vpop.f32.mrb[0].mxu0
        %v3865 = vadd.f32 0.0, %v3864
        %v3866 = vpop.f32.mrb[0].mxu0
        %v3867 = vadd.f32 0.0, %v3866
        %3868 = vmatprep.mubr.f32.mxu0 0.0
        %3869 = vmatmul.mubr.f32.gmra.mrb[0].mxu0 %v3722
        %v3870 = vpop.f32.mrb[0].mxu0
        %v3871 = vadd.f32 0.0, %v3870
        %v3872 = vpop.f32.mrb[0].mxu0
        %v3873 = vadd.f32 0.0, %v3872
        %3874 = vmatprep.mubr.f32.mxu0 0.0
        %3875 = vmatmul.mubr.f32.gmra.mrb[0].mxu0 %v3723
        %v3876 = vpop.f32.mrb[0].mxu0
        %v3877 = vadd.f32 0.0, %v3876
        %v3878 = vpop.f32.mrb[0].mxu0
        %v3879 = vadd.f32 0.0, %v3878
        %3880 = vmatprep.mubr.f32.mxu0 0.0
        %3881 = vmatmul.mubr.f32.gmra.mrb[0].mxu0 %v3724
        %v3882 = vpop.f32.mrb[0].mxu0
        %v3883 = vadd.f32 0.0, %v3882
        %v3884 = vpop.f32.mrb[0].mxu0
        %v3885 = vadd.f32 0.0, %v3884
        %3886 = vmatprep.mubr.f32.mxu0 0.0
        %3887 = vmatmul.mubr.f32.gmra.mrb[0].mxu0 %v3725
        %v3888 = vpop.f32.mrb[0].mxu0
        %v3889 = vadd.f32 0.0, %v3888
        %v3890 = vpop.f32.mrb[0].mxu0
        %v3891 = vadd.f32 0.0, %v3890
        %3892 = vmatprep.mubr.f32.mxu0 0.0
        %3893 = vmatmul.mubr.f32.gmra.mrb[0].mxu0 %v3726
        %v3894 = vpop.f32.mrb[0].mxu0
        %v3895 = vadd.f32 0.0, %v3894
        %v3896 = vpop.f32.mrb[0].mxu0
        %v3897 = vadd.f32 0.0, %v3896
        %3898 = vmatprep.mubr.f32.mxu0 0.0
        %3899 = vmatmul.mubr.f32.gmra.mrb[0].mxu0 %v3727
        %v3900 = vpop.f32.mrb[0].mxu0
        %v3901 = vadd.f32 0.0, %v3900
        %v3902 = vpop.f32.mrb[0].mxu0
        %v3903 = vadd.f32 0.0, %v3902
        %3904 = vmatprep.mubr.f32.mxu0 0.0
        %3905 = vmatmul.mubr.f32.gmra.mrb[0].mxu0 %v3728
        %v3906 = vpop.f32.mrb[0].mxu0
        %v3907 = vadd.f32 0.0, %v3906
        %v3908 = vpop.f32.mrb[0].mxu0
        %v3909 = vadd.f32 0.0, %v3908
        %3910 = vmatprep.mubr.f32.mxu0 0.0
        %3911 = vmatmul.mubr.f32.gmra.mrb[0].mxu0 %v3729
        %v3912 = vpop.f32.mrb[0].mxu0
        %v3913 = vadd.f32 0.0, %v3912
        %v3914 = vpop.f32.mrb[0].mxu0
        %v3915 = vadd.f32 0.0, %v3914
        %3916 = vmatprep.mubr.f32.mxu0 0.0
        %3917 = vmatmul.mubr.f32.gmra.mrb[0].mxu0 %v3730
        %v3918 = vpop.f32.mrb[0].mxu0
        %v3919 = vadd.f32 0.0, %v3918
        %v3920 = vpop.f32.mrb[0].mxu0
        %v3921 = vadd.f32 0.0, %v3920
        %3922 = vmatprep.mubr.f32.mxu0 0.0
        %3923 = vmatmul.mubr.f32.gmra.mrb[0].mxu0 %v3731
        %v3924 = vpop.f32.mrb[0].mxu0
        %v3925 = vadd.f32 0.0, %v3924
        %v3926 = vpop.f32.mrb[0].mxu0
        %v3927 = vadd.f32 0.0, %v3926
        %3928 = vmatprep.mubr.f32.mxu0 0.0
        %3929 = vmatmul.mubr.f32.gmra.mrb[0].mxu0 %v3732
        %v3930 = vpop.f32.mrb[0].mxu0
        %v3931 = vadd.f32 0.0, %v3930
        %v3932 = vpop.f32.mrb[0].mxu0
        %v3933 = vadd.f32 0.0, %v3932
        %3934 = vmatprep.mubr.f32.mxu0 0.0
        %3935 = vmatmul.mubr.f32.gmra.mrb[0].mxu0 %v3733
        %v3936 = vpop.f32.mrb[0].mxu0
        %v3937 = vadd.f32 0.0, %v3936
        %v3938 = vpop.f32.mrb[0].mxu0
        %v3939 = vadd.f32 0.0, %v3938
        %3940 = vmatprep.mubr.f32.mxu0 0.0
        %3941 = vmatmul.mubr.f32.gmra.mrb[0].mxu0 %v3734
        %v3942 = vpop.f32.mrb[0].mxu0
        %v3943 = vadd.f32 0.0, %v3942
        %v3944 = vpop.f32.mrb[0].mxu0
        %v3945 = vadd.f32 0.0, %v3944
        %3946 = vmatprep.mubr.f32.mxu0 0.0
        %3947 = vmatmul.mubr.f32.gmra.mrb[0].mxu0 %v3735
        %v3948 = vpop.f32.mrb[0].mxu0
        %v3949 = vadd.f32 0.0, %v3948
        %v3950 = vpop.f32.mrb[0].mxu0
        %v3951 = vadd.f32 0.0, %v3950
        %3952 = vmatprep.mubr.f32.mxu0 0.0
        %3953 = vmatmul.mubr.f32.gmra.mrb[0].mxu0 %v3736
        %v3954 = vpop.f32.mrb[0].mxu0
        %v3955 = vadd.f32 0.0, %v3954
        %v3956 = vpop.f32.mrb[0].mxu0
        %v3957 = vadd.f32 0.0, %v3956
        %3958 = vmatprep.mubr.f32.mxu0 0.0
        %3959 = vmatmul.mubr.f32.gmra.mrb[0].mxu0 %v3737
        %v3960 = vpop.f32.mrb[0].mxu0
        %v3961 = vadd.f32 0.0, %v3960
        %v3962 = vpop.f32.mrb[0].mxu0
        %v3963 = vadd.f32 0.0, %v3962
        %3964 = vmatprep.mubr.f32.mxu0 0.0
        %3965 = vmatmul.mubr.f32.gmra.mrb[0].mxu0 %v3738
        %v3966 = vpop.f32.mrb[0].mxu0
        %v3967 = vadd.f32 0.0, %v3966
        %v3968 = vpop.f32.mrb[0].mxu0
        %v3969 = vadd.f32 0.0, %v3968
        %3970 = vmatprep.mubr.f32.mxu0 0.0
        %3971 = vmatmul.mubr.f32.gmra.mrb[0].mxu0 %v3739
        %v3972 = vpop.f32.mrb[0].mxu0
        %v3973 = vadd.f32 0.0, %v3972
        %v3974 = vpop.f32.mrb[0].mxu0
        %v3975 = vadd.f32 0.0, %v3974
        %3976 = vmatprep.mubr.f32.mxu0 0.0
        %3977 = vmatmul.mubr.f32.gmra.mrb[0].mxu0 %v3740
        %v3978 = vpop.f32.mrb[0].mxu0
        %v3979 = vadd.f32 0.0, %v3978
        %v3980 = vpop.f32.mrb[0].mxu0
        %v3981 = vadd.f32 0.0, %v3980
        %3982 = vmatprep.mubr.f32.mxu0 0.0
        %3983 = vmatmul.mubr.f32.gmra.mrb[0].mxu0 %v3741
        %v3984 = vpop.f32.mrb[0].mxu0
        %v3985 = vadd.f32 0.0, %v3984
        %v3986 = vpop.f32.mrb[0].mxu0
        %v3987 = vadd.f32 0.0, %v3986
        %3988 = vmatprep.mubr.f32.mxu0 0.0
        %3989 = vmatmul.mubr.f32.gmra.mrb[0].mxu0 %v3742
        %v3990 = vpop.f32.mrb[0].mxu0
        %v3991 = vadd.f32 0.0, %v3990
        %v3992 = vpop.f32.mrb[0].mxu0
        %v3993 = vadd.f32 0.0, %v3992
        %3994 = vmatprep.mubr.f32.mxu0 0.0
        %3995 = vmatmul.mubr.f32.gmra.mrb[0].mxu0 %v3743
        %v3996 = vpop.f32.mrb[0].mxu0
        %v3997 = vadd.f32 0.0, %v3996
        %v3998 = vpop.f32.mrb[0].mxu0
        %v3999 = vadd.f32 0.0, %v3998
        %4000 = vdwg.mxu0
        %s4001 = scalar_lea.vmem [#allocation4], 256
        %v4002 = vld [vmem:[%s4001] sm:$0xff]
        %v4003 = vld [vmem:[%s4001 + $0x8] sm:$0xff]
        %v4004 = vld [vmem:[%s4001 + $0x10] sm:$0xff]
        %v4005 = vld [vmem:[%s4001 + $0x18] sm:$0xff]
        %v4006 = vld [vmem:[%s4001 + $0x20] sm:$0xff]
        %v4007 = vld [vmem:[%s4001 + $0x28] sm:$0xff]
        %v4008 = vld [vmem:[%s4001 + $0x30] sm:$0xff]
        %v4009 = vld [vmem:[%s4001 + $0x38] sm:$0xff]
        %v4010 = vld [vmem:[%s4001 + $0x40] sm:$0xff]
        %v4011 = vld [vmem:[%s4001 + $0x48] sm:$0xff]
        %v4012 = vld [vmem:[%s4001 + $0x50] sm:$0xff]
        %v4013 = vld [vmem:[%s4001 + $0x58] sm:$0xff]
        %v4014 = vld [vmem:[%s4001 + $0x60] sm:$0xff]
        %v4015 = vld [vmem:[%s4001 + $0x68] sm:$0xff]
        %v4016 = vld [vmem:[%s4001 + $0x70] sm:$0xff]
        %v4017 = vld [vmem:[%s4001 + $0x78] sm:$0xff]
        %v4018 = vld [vmem:[%s4001 + $0x80] sm:$0xff]
        %v4019 = vld [vmem:[%s4001 + $0x88] sm:$0xff]
        %v4020 = vld [vmem:[%s4001 + $0x90] sm:$0xff]
        %v4021 = vld [vmem:[%s4001 + $0x98] sm:$0xff]
        %v4022 = vld [vmem:[%s4001 + $0xa0] sm:$0xff]
        %v4023 = vld [vmem:[%s4001 + $0xa8] sm:$0xff]
        %v4024 = vld [vmem:[%s4001 + $0xb0] sm:$0xff]
        %v4025 = vld [vmem:[%s4001 + $0xb8] sm:$0xff]
        %v4026 = vld [vmem:[%s4001 + $0xc0] sm:$0xff]
        %v4027 = vld [vmem:[%s4001 + $0xc8] sm:$0xff]
        %v4028 = vld [vmem:[%s4001 + $0xd0] sm:$0xff]
        %v4029 = vld [vmem:[%s4001 + $0xd8] sm:$0xff]
        %v4030 = vld [vmem:[%s4001 + $0xe0] sm:$0xff]
        %v4031 = vld [vmem:[%s4001 + $0xe8] sm:$0xff]
        %v4032 = vld [vmem:[%s4001 + $0xf0] sm:$0xff]
        %v4033 = vld [vmem:[%s4001 + $0xf8] sm:$0xff]
        %v4034 = vmax.f32 %v3811, %v3813
        %4035 = vmax.xlane.f32.xlu0 %v4034
        %v4036 = vpop.xlane.xlu0 %4035
        %v4037 = vmax.f32 %v3817, %v3819
        %4038 = vmax.xlane.f32.xlu0 %v4037
        %v4039 = vpop.xlane.xlu0 %4038
        %v4040 = vmax.f32 %v3823, %v3825
        %4041 = vmax.xlane.f32.xlu0 %v4040
        %v4042 = vpop.xlane.xlu0 %4041
        %v4043 = vmax.f32 %v3829, %v3831
        %4044 = vmax.xlane.f32.xlu0 %v4043
        %v4045 = vpop.xlane.xlu0 %4044
        %v4046 = vmax.f32 %v3835, %v3837
        %4047 = vmax.xlane.f32.xlu0 %v4046
        %v4048 = vpop.xlane.xlu0 %4047
        %v4049 = vmax.f32 %v3841, %v3843
        %4050 = vmax.xlane.f32.xlu0 %v4049
        %v4051 = vpop.xlane.xlu0 %4050
        %v4052 = vmax.f32 %v3847, %v3849
        %4053 = vmax.xlane.f32.xlu0 %v4052
        %v4054 = vpop.xlane.xlu0 %4053
        %v4055 = vmax.f32 %v3853, %v3855
        %4056 = vmax.xlane.f32.xlu0 %v4055
        %v4057 = vpop.xlane.xlu0 %4056
        %v4058 = vmax.f32 %v3859, %v3861
        %4059 = vmax.xlane.f32.xlu0 %v4058
        %v4060 = vpop.xlane.xlu0 %4059
        %v4061 = vmax.f32 %v3865, %v3867
        %4062 = vmax.xlane.f32.xlu0 %v4061
        %v4063 = vpop.xlane.xlu0 %4062
        %v4064 = vmax.f32 %v3871, %v3873
        %4065 = vmax.xlane.f32.xlu0 %v4064
        %v4066 = vpop.xlane.xlu0 %4065
        %v4067 = vmax.f32 %v3877, %v3879
        %4068 = vmax.xlane.f32.xlu0 %v4067
        %v4069 = vpop.xlane.xlu0 %4068
        %v4070 = vmax.f32 %v3883, %v3885
        %4071 = vmax.xlane.f32.xlu0 %v4070
        %v4072 = vpop.xlane.xlu0 %4071
        %v4073 = vmax.f32 %v3889, %v3891
        %4074 = vmax.xlane.f32.xlu0 %v4073
        %v4075 = vpop.xlane.xlu0 %4074
        %v4076 = vmax.f32 %v3895, %v3897
        %4077 = vmax.xlane.f32.xlu0 %v4076
        %v4078 = vpop.xlane.xlu0 %4077
        %v4079 = vmax.f32 %v3901, %v3903
        %4080 = vmax.xlane.f32.xlu0 %v4079
        %v4081 = vpop.xlane.xlu0 %4080
        %v4082 = vmax.f32 %v3907, %v3909
        %4083 = vmax.xlane.f32.xlu0 %v4082
        %v4084 = vpop.xlane.xlu0 %4083
        %v4085 = vmax.f32 %v3913, %v3915
        %4086 = vmax.xlane.f32.xlu0 %v4085
        %v4087 = vpop.xlane.xlu0 %4086
        %v4088 = vmax.f32 %v3919, %v3921
        %4089 = vmax.xlane.f32.xlu0 %v4088
        %v4090 = vpop.xlane.xlu0 %4089
        %v4091 = vmax.f32 %v3925, %v3927
        %4092 = vmax.xlane.f32.xlu0 %v4091
        %v4093 = vpop.xlane.xlu0 %4092
        %v4094 = vmax.f32 %v3931, %v3933
        %4095 = vmax.xlane.f32.xlu0 %v4094
        %v4096 = vpop.xlane.xlu0 %4095
        %v4097 = vmax.f32 %v3937, %v3939
        %4098 = vmax.xlane.f32.xlu0 %v4097
        %v4099 = vpop.xlane.xlu0 %4098
        %v4100 = vmax.f32 %v3943, %v3945
        %4101 = vmax.xlane.f32.xlu0 %v4100
        %v4102 = vpop.xlane.xlu0 %4101
        %v4103 = vmax.f32 %v3949, %v3951
        %4104 = vmax.xlane.f32.xlu0 %v4103
        %v4105 = vpop.xlane.xlu0 %4104
        %v4106 = vmax.f32 %v3955, %v3957
        %4107 = vmax.xlane.f32.xlu0 %v4106
        %v4108 = vpop.xlane.xlu0 %4107
        %v4109 = vmax.f32 %v3961, %v3963
        %4110 = vmax.xlane.f32.xlu0 %v4109
        %v4111 = vpop.xlane.xlu0 %4110
        %v4112 = vmax.f32 %v3967, %v3969
        %4113 = vmax.xlane.f32.xlu0 %v4112
        %v4114 = vpop.xlane.xlu0 %4113
        %v4115 = vmax.f32 %v3973, %v3975
        %4116 = vmax.xlane.f32.xlu0 %v4115
        %v4117 = vpop.xlane.xlu0 %4116
        %v4118 = vmax.f32 %v3979, %v3981
        %4119 = vmax.xlane.f32.xlu0 %v4118
        %v4120 = vpop.xlane.xlu0 %4119
        %v4121 = vmax.f32 %v3985, %v3987
        %4122 = vmax.xlane.f32.xlu0 %v4121
        %v4123 = vpop.xlane.xlu0 %4122
        %v4124 = vmax.f32 %v3991, %v3993
        %4125 = vmax.xlane.f32.xlu0 %v4124
        %v4126 = vpop.xlane.xlu0 %4125
        %v4127 = vmax.f32 %v3997, %v3999
        %4128 = vmax.xlane.f32.xlu0 %v4127
        %v4129 = vpop.xlane.xlu0 %4128
        %v4130 = vmax.f32 %v4002, %v4036
        %v4131 = vmax.f32 %v4003, %v4039
        %v4132 = vmax.f32 %v4004, %v4042
        %v4133 = vmax.f32 %v4005, %v4045
        %v4134 = vmax.f32 %v4006, %v4048
        %v4135 = vmax.f32 %v4007, %v4051
        %v4136 = vmax.f32 %v4008, %v4054
        %v4137 = vmax.f32 %v4009, %v4057
        %v4138 = vmax.f32 %v4010, %v4060
        %v4139 = vmax.f32 %v4011, %v4063
        %v4140 = vmax.f32 %v4012, %v4066
        %v4141 = vmax.f32 %v4013, %v4069
        %v4142 = vmax.f32 %v4014, %v4072
        %v4143 = vmax.f32 %v4015, %v4075
        %v4144 = vmax.f32 %v4016, %v4078
        %v4145 = vmax.f32 %v4017, %v4081
        %v4146 = vmax.f32 %v4018, %v4084
        %v4147 = vmax.f32 %v4019, %v4087
        %v4148 = vmax.f32 %v4020, %v4090
        %v4149 = vmax.f32 %v4021, %v4093
        %v4150 = vmax.f32 %v4022, %v4096
        %v4151 = vmax.f32 %v4023, %v4099
        %v4152 = vmax.f32 %v4024, %v4102
        %v4153 = vmax.f32 %v4025, %v4105
        %v4154 = vmax.f32 %v4026, %v4108
        %v4155 = vmax.f32 %v4027, %v4111
        %v4156 = vmax.f32 %v4028, %v4114
        %v4157 = vmax.f32 %v4029, %v4117
        %v4158 = vmax.f32 %v4030, %v4120
        %v4159 = vmax.f32 %v4031, %v4123
        %v4160 = vmax.f32 %v4032, %v4126
        %v4161 = vmax.f32 %v4033, %v4129
        %v4162 = vsub.f32 %v4002, %v4130
        %v4163 = vsub.f32 %v4003, %v4131
        %v4164 = vsub.f32 %v4004, %v4132
        %v4165 = vsub.f32 %v4005, %v4133
        %v4166 = vsub.f32 %v4006, %v4134
        %v4167 = vsub.f32 %v4007, %v4135
        %v4168 = vsub.f32 %v4008, %v4136
        %v4169 = vsub.f32 %v4009, %v4137
        %v4170 = vsub.f32 %v4010, %v4138
        %v4171 = vsub.f32 %v4011, %v4139
        %v4172 = vsub.f32 %v4012, %v4140
        %v4173 = vsub.f32 %v4013, %v4141
        %v4174 = vsub.f32 %v4014, %v4142
        %v4175 = vsub.f32 %v4015, %v4143
        %v4176 = vsub.f32 %v4016, %v4144
        %v4177 = vsub.f32 %v4017, %v4145
        %v4178 = vsub.f32 %v4018, %v4146
        %v4179 = vsub.f32 %v4019, %v4147
        %v4180 = vsub.f32 %v4020, %v4148
        %v4181 = vsub.f32 %v4021, %v4149
        %v4182 = vsub.f32 %v4022, %v4150
        %v4183 = vsub.f32 %v4023, %v4151
        %v4184 = vsub.f32 %v4024, %v4152
        %v4185 = vsub.f32 %v4025, %v4153
        %v4186 = vsub.f32 %v4026, %v4154
        %v4187 = vsub.f32 %v4027, %v4155
        %v4188 = vsub.f32 %v4028, %v4156
        %v4189 = vsub.f32 %v4029, %v4157
        %v4190 = vsub.f32 %v4030, %v4158
        %v4191 = vsub.f32 %v4031, %v4159
        %v4192 = vsub.f32 %v4032, %v4160
        %v4193 = vsub.f32 %v4033, %v4161
        %v4194 = vmul.f32 %v4162, 1.442695
        %v4195 = vpow.pop %v4194
        %v4196 = vmul.f32 %v4163, 1.442695
        %v4197 = vpow.pop %v4196
        %v4198 = vmul.f32 %v4164, 1.442695
        %v4199 = vpow.pop %v4198
        %v4200 = vmul.f32 %v4165, 1.442695
        %v4201 = vpow.pop %v4200
        %v4202 = vmul.f32 %v4166, 1.442695
        %v4203 = vpow.pop %v4202
        %v4204 = vmul.f32 %v4167, 1.442695
        %v4205 = vpow.pop %v4204
        %v4206 = vmul.f32 %v4168, 1.442695
        %v4207 = vpow.pop %v4206
        %v4208 = vmul.f32 %v4169, 1.442695
        %v4209 = vpow.pop %v4208
        %v4210 = vmul.f32 %v4170, 1.442695
        %v4211 = vpow.pop %v4210
        %v4212 = vmul.f32 %v4171, 1.442695
        %v4213 = vpow.pop %v4212
        %v4214 = vmul.f32 %v4172, 1.442695
        %v4215 = vpow.pop %v4214
        %v4216 = vmul.f32 %v4173, 1.442695
        %v4217 = vpow.pop %v4216
        %v4218 = vmul.f32 %v4174, 1.442695
        %v4219 = vpow.pop %v4218
        %v4220 = vmul.f32 %v4175, 1.442695
        %v4221 = vpow.pop %v4220
        %v4222 = vmul.f32 %v4176, 1.442695
        %v4223 = vpow.pop %v4222
        %v4224 = vmul.f32 %v4177, 1.442695
        %v4225 = vpow.pop %v4224
        %v4226 = vmul.f32 %v4178, 1.442695
        %v4227 = vpow.pop %v4226
        %v4228 = vmul.f32 %v4179, 1.442695
        %v4229 = vpow.pop %v4228
        %v4230 = vmul.f32 %v4180, 1.442695
        %v4231 = vpow.pop %v4230
        %v4232 = vmul.f32 %v4181, 1.442695
        %v4233 = vpow.pop %v4232
        %v4234 = vmul.f32 %v4182, 1.442695
        %v4235 = vpow.pop %v4234
        %v4236 = vmul.f32 %v4183, 1.442695
        %v4237 = vpow.pop %v4236
        %v4238 = vmul.f32 %v4184, 1.442695
        %v4239 = vpow.pop %v4238
        %v4240 = vmul.f32 %v4185, 1.442695
        %v4241 = vpow.pop %v4240
        %v4242 = vmul.f32 %v4186, 1.442695
        %v4243 = vpow.pop %v4242
        %v4244 = vmul.f32 %v4187, 1.442695
        %v4245 = vpow.pop %v4244
        %v4246 = vmul.f32 %v4188, 1.442695
        %v4247 = vpow.pop %v4246
        %v4248 = vmul.f32 %v4189, 1.442695
        %v4249 = vpow.pop %v4248
        %v4250 = vmul.f32 %v4190, 1.442695
        %v4251 = vpow.pop %v4250
        %v4252 = vmul.f32 %v4191, 1.442695
        %v4253 = vpow.pop %v4252
        %v4254 = vmul.f32 %v4192, 1.442695
        %v4255 = vpow.pop %v4254
        %v4256 = vmul.f32 %v4193, 1.442695
        %v4257 = vpow.pop %v4256
        %4259 = vset.pattern.permute.xlu0 0
        %4260 = vperm.xlu0 %4259, %v4130
        %v4261 = vpop.permute.xlu0 %4260
        %4264 = vset.pattern.permute.xlu0 0
        %4265 = vperm.xlu0 %4264, %v4131
        %v4266 = vpop.permute.xlu0 %4265
        %4269 = vset.pattern.permute.xlu0 0
        %4270 = vperm.xlu0 %4269, %v4132
        %v4271 = vpop.permute.xlu0 %4270
        %4274 = vset.pattern.permute.xlu0 0
        %4275 = vperm.xlu0 %4274, %v4133
        %v4276 = vpop.permute.xlu0 %4275
        %4279 = vset.pattern.permute.xlu0 0
        %4280 = vperm.xlu0 %4279, %v4134
        %v4281 = vpop.permute.xlu0 %4280
        %4284 = vset.pattern.permute.xlu0 0
        %4285 = vperm.xlu0 %4284, %v4135
        %v4286 = vpop.permute.xlu0 %4285
        %4289 = vset.pattern.permute.xlu0 0
        %4290 = vperm.xlu0 %4289, %v4136
        %v4291 = vpop.permute.xlu0 %4290
        %4294 = vset.pattern.permute.xlu0 0
        %4295 = vperm.xlu0 %4294, %v4137
        %v4296 = vpop.permute.xlu0 %4295
        %4299 = vset.pattern.permute.xlu0 0
        %4300 = vperm.xlu0 %4299, %v4138
        %v4301 = vpop.permute.xlu0 %4300
        %4304 = vset.pattern.permute.xlu0 0
        %4305 = vperm.xlu0 %4304, %v4139
        %v4306 = vpop.permute.xlu0 %4305
        %4309 = vset.pattern.permute.xlu0 0
        %4310 = vperm.xlu0 %4309, %v4140
        %v4311 = vpop.permute.xlu0 %4310
        %4314 = vset.pattern.permute.xlu0 0
        %4315 = vperm.xlu0 %4314, %v4141
        %v4316 = vpop.permute.xlu0 %4315
        %4319 = vset.pattern.permute.xlu0 0
        %4320 = vperm.xlu0 %4319, %v4142
        %v4321 = vpop.permute.xlu0 %4320
        %4324 = vset.pattern.permute.xlu0 0
        %4325 = vperm.xlu0 %4324, %v4143
        %v4326 = vpop.permute.xlu0 %4325
        %4329 = vset.pattern.permute.xlu0 0
        %4330 = vperm.xlu0 %4329, %v4144
        %v4331 = vpop.permute.xlu0 %4330
        %4334 = vset.pattern.permute.xlu0 0
        %4335 = vperm.xlu0 %4334, %v4145
        %v4336 = vpop.permute.xlu0 %4335
        %4339 = vset.pattern.permute.xlu0 0
        %4340 = vperm.xlu0 %4339, %v4146
        %v4341 = vpop.permute.xlu0 %4340
        %4344 = vset.pattern.permute.xlu0 0
        %4345 = vperm.xlu0 %4344, %v4147
        %v4346 = vpop.permute.xlu0 %4345
        %4349 = vset.pattern.permute.xlu0 0
        %4350 = vperm.xlu0 %4349, %v4148
        %v4351 = vpop.permute.xlu0 %4350
        %4354 = vset.pattern.permute.xlu0 0
        %4355 = vperm.xlu0 %4354, %v4149
        %v4356 = vpop.permute.xlu0 %4355
        %4359 = vset.pattern.permute.xlu0 0
        %4360 = vperm.xlu0 %4359, %v4150
        %v4361 = vpop.permute.xlu0 %4360
        %4364 = vset.pattern.permute.xlu0 0
        %4365 = vperm.xlu0 %4364, %v4151
        %v4366 = vpop.permute.xlu0 %4365
        %4369 = vset.pattern.permute.xlu0 0
        %4370 = vperm.xlu0 %4369, %v4152
        %v4371 = vpop.permute.xlu0 %4370
        %4374 = vset.pattern.permute.xlu0 0
        %4375 = vperm.xlu0 %4374, %v4153
        %v4376 = vpop.permute.xlu0 %4375
        %4379 = vset.pattern.permute.xlu0 0
        %4380 = vperm.xlu0 %4379, %v4154
        %v4381 = vpop.permute.xlu0 %4380
        %4384 = vset.pattern.permute.xlu0 0
        %4385 = vperm.xlu0 %4384, %v4155
        %v4386 = vpop.permute.xlu0 %4385
        %4389 = vset.pattern.permute.xlu0 0
        %4390 = vperm.xlu0 %4389, %v4156
        %v4391 = vpop.permute.xlu0 %4390
        %4394 = vset.pattern.permute.xlu0 0
        %4395 = vperm.xlu0 %4394, %v4157
        %v4396 = vpop.permute.xlu0 %4395
        %4399 = vset.pattern.permute.xlu0 0
        %4400 = vperm.xlu0 %4399, %v4158
        %v4401 = vpop.permute.xlu0 %4400
        %4404 = vset.pattern.permute.xlu0 0
        %4405 = vperm.xlu0 %4404, %v4159
        %v4406 = vpop.permute.xlu0 %4405
        %4409 = vset.pattern.permute.xlu0 0
        %4410 = vperm.xlu0 %4409, %v4160
        %v4411 = vpop.permute.xlu0 %4410
        %4414 = vset.pattern.permute.xlu0 0
        %4415 = vperm.xlu0 %4414, %v4161
        %v4416 = vpop.permute.xlu0 %4415
        %v4418 = vsub.f32 %v3811, %v4261
        %v4419 = vsub.f32 %v3813, %v4261
        %v4420 = vsub.f32 %v3817, %v4266
        %v4421 = vsub.f32 %v3819, %v4266
        %v4422 = vsub.f32 %v3823, %v4271
        %v4423 = vsub.f32 %v3825, %v4271
        %v4424 = vsub.f32 %v3829, %v4276
        %v4425 = vsub.f32 %v3831, %v4276
        %v4426 = vsub.f32 %v3835, %v4281
        %v4427 = vsub.f32 %v3837, %v4281
        %v4428 = vsub.f32 %v3841, %v4286
        %v4429 = vsub.f32 %v3843, %v4286
        %v4430 = vsub.f32 %v3847, %v4291
        %v4431 = vsub.f32 %v3849, %v4291
        %v4432 = vsub.f32 %v3853, %v4296
        %v4433 = vsub.f32 %v3855, %v4296
        %v4434 = vsub.f32 %v3859, %v4301
        %v4435 = vsub.f32 %v3861, %v4301
        %v4436 = vsub.f32 %v3865, %v4306
        %v4437 = vsub.f32 %v3867, %v4306
        %v4438 = vsub.f32 %v3871, %v4311
        %v4439 = vsub.f32 %v3873, %v4311
        %v4440 = vsub.f32 %v3877, %v4316
        %v4441 = vsub.f32 %v3879, %v4316
        %v4442 = vsub.f32 %v3883, %v4321
        %v4443 = vsub.f32 %v3885, %v4321
        %v4444 = vsub.f32 %v3889, %v4326
        %v4445 = vsub.f32 %v3891, %v4326
        %v4446 = vsub.f32 %v3895, %v4331
        %v4447 = vsub.f32 %v3897, %v4331
        %v4448 = vsub.f32 %v3901, %v4336
        %v4449 = vsub.f32 %v3903, %v4336
        %v4450 = vsub.f32 %v3907, %v4341
        %v4451 = vsub.f32 %v3909, %v4341
        %v4452 = vsub.f32 %v3913, %v4346
        %v4453 = vsub.f32 %v3915, %v4346
        %v4454 = vsub.f32 %v3919, %v4351
        %v4455 = vsub.f32 %v3921, %v4351
        %v4456 = vsub.f32 %v3925, %v4356
        %v4457 = vsub.f32 %v3927, %v4356
        %v4458 = vsub.f32 %v3931, %v4361
        %v4459 = vsub.f32 %v3933, %v4361
        %v4460 = vsub.f32 %v3937, %v4366
        %v4461 = vsub.f32 %v3939, %v4366
        %v4462 = vsub.f32 %v3943, %v4371
        %v4463 = vsub.f32 %v3945, %v4371
        %v4464 = vsub.f32 %v3949, %v4376
        %v4465 = vsub.f32 %v3951, %v4376
        %v4466 = vsub.f32 %v3955, %v4381
        %v4467 = vsub.f32 %v3957, %v4381
        %v4468 = vsub.f32 %v3961, %v4386
        %v4469 = vsub.f32 %v3963, %v4386
        %v4470 = vsub.f32 %v3967, %v4391
        %v4471 = vsub.f32 %v3969, %v4391
        %v4472 = vsub.f32 %v3973, %v4396
        %v4473 = vsub.f32 %v3975, %v4396
        %v4474 = vsub.f32 %v3979, %v4401
        %v4475 = vsub.f32 %v3981, %v4401
        %v4476 = vsub.f32 %v3985, %v4406
        %v4477 = vsub.f32 %v3987, %v4406
        %v4478 = vsub.f32 %v3991, %v4411
        %v4479 = vsub.f32 %v3993, %v4411
        %v4480 = vsub.f32 %v3997, %v4416
        %v4481 = vsub.f32 %v3999, %v4416
        %v4482 = vmul.f32 %v4418, 1.442695
        %v4483 = vpow.pop %v4482
        %v4484 = vmul.f32 %v4419, 1.442695
        %v4485 = vpow.pop %v4484
        %v4486 = vmul.f32 %v4420, 1.442695
        %v4487 = vpow.pop %v4486
        %v4488 = vmul.f32 %v4421, 1.442695
        %v4489 = vpow.pop %v4488
        %v4490 = vmul.f32 %v4422, 1.442695
        %v4491 = vpow.pop %v4490
        %v4492 = vmul.f32 %v4423, 1.442695
        %v4493 = vpow.pop %v4492
        %v4494 = vmul.f32 %v4424, 1.442695
        %v4495 = vpow.pop %v4494
        %v4496 = vmul.f32 %v4425, 1.442695
        %v4497 = vpow.pop %v4496
        %v4498 = vmul.f32 %v4426, 1.442695
        %v4499 = vpow.pop %v4498
        %v4500 = vmul.f32 %v4427, 1.442695
        %v4501 = vpow.pop %v4500
        %v4502 = vmul.f32 %v4428, 1.442695
        %v4503 = vpow.pop %v4502
        %v4504 = vmul.f32 %v4429, 1.442695
        %v4505 = vpow.pop %v4504
        %v4506 = vmul.f32 %v4430, 1.442695
        %v4507 = vpow.pop %v4506
        %v4508 = vmul.f32 %v4431, 1.442695
        %v4509 = vpow.pop %v4508
        %v4510 = vmul.f32 %v4432, 1.442695
        %v4511 = vpow.pop %v4510
        %v4512 = vmul.f32 %v4433, 1.442695
        %v4513 = vpow.pop %v4512
        %v4514 = vmul.f32 %v4434, 1.442695
        %v4515 = vpow.pop %v4514
        %v4516 = vmul.f32 %v4435, 1.442695
        %v4517 = vpow.pop %v4516
        %v4518 = vmul.f32 %v4436, 1.442695
        %v4519 = vpow.pop %v4518
        %v4520 = vmul.f32 %v4437, 1.442695
        %v4521 = vpow.pop %v4520
        %v4522 = vmul.f32 %v4438, 1.442695
        %v4523 = vpow.pop %v4522
        %v4524 = vmul.f32 %v4439, 1.442695
        %v4525 = vpow.pop %v4524
        %v4526 = vmul.f32 %v4440, 1.442695
        %v4527 = vpow.pop %v4526
        %v4528 = vmul.f32 %v4441, 1.442695
        %v4529 = vpow.pop %v4528
        %v4530 = vmul.f32 %v4442, 1.442695
        %v4531 = vpow.pop %v4530
        %v4532 = vmul.f32 %v4443, 1.442695
        %v4533 = vpow.pop %v4532
        %v4534 = vmul.f32 %v4444, 1.442695
        %v4535 = vpow.pop %v4534
        %v4536 = vmul.f32 %v4445, 1.442695
        %v4537 = vpow.pop %v4536
        %v4538 = vmul.f32 %v4446, 1.442695
        %v4539 = vpow.pop %v4538
        %v4540 = vmul.f32 %v4447, 1.442695
        %v4541 = vpow.pop %v4540
        %v4542 = vmul.f32 %v4448, 1.442695
        %v4543 = vpow.pop %v4542
        %v4544 = vmul.f32 %v4449, 1.442695
        %v4545 = vpow.pop %v4544
        %v4546 = vmul.f32 %v4450, 1.442695
        %v4547 = vpow.pop %v4546
        %v4548 = vmul.f32 %v4451, 1.442695
        %v4549 = vpow.pop %v4548
        %v4550 = vmul.f32 %v4452, 1.442695
        %v4551 = vpow.pop %v4550
        %v4552 = vmul.f32 %v4453, 1.442695
        %v4553 = vpow.pop %v4552
        %v4554 = vmul.f32 %v4454, 1.442695
        %v4555 = vpow.pop %v4554
        %v4556 = vmul.f32 %v4455, 1.442695
        %v4557 = vpow.pop %v4556
        %v4558 = vmul.f32 %v4456, 1.442695
        %v4559 = vpow.pop %v4558
        %v4560 = vmul.f32 %v4457, 1.442695
        %v4561 = vpow.pop %v4560
        %v4562 = vmul.f32 %v4458, 1.442695
        %v4563 = vpow.pop %v4562
        %v4564 = vmul.f32 %v4459, 1.442695
        %v4565 = vpow.pop %v4564
        %v4566 = vmul.f32 %v4460, 1.442695
        %v4567 = vpow.pop %v4566
        %v4568 = vmul.f32 %v4461, 1.442695
        %v4569 = vpow.pop %v4568
        %v4570 = vmul.f32 %v4462, 1.442695
        %v4571 = vpow.pop %v4570
        %v4572 = vmul.f32 %v4463, 1.442695
        %v4573 = vpow.pop %v4572
        %v4574 = vmul.f32 %v4464, 1.442695
        %v4575 = vpow.pop %v4574
        %v4576 = vmul.f32 %v4465, 1.442695
        %v4577 = vpow.pop %v4576
        %v4578 = vmul.f32 %v4466, 1.442695
        %v4579 = vpow.pop %v4578
        %v4580 = vmul.f32 %v4467, 1.442695
        %v4581 = vpow.pop %v4580
        %v4582 = vmul.f32 %v4468, 1.442695
        %v4583 = vpow.pop %v4582
        %v4584 = vmul.f32 %v4469, 1.442695
        %v4585 = vpow.pop %v4584
        %v4586 = vmul.f32 %v4470, 1.442695
        %v4587 = vpow.pop %v4586
        %v4588 = vmul.f32 %v4471, 1.442695
        %v4589 = vpow.pop %v4588
        %v4590 = vmul.f32 %v4472, 1.442695
        %v4591 = vpow.pop %v4590
        %v4592 = vmul.f32 %v4473, 1.442695
        %v4593 = vpow.pop %v4592
        %v4594 = vmul.f32 %v4474, 1.442695
        %v4595 = vpow.pop %v4594
        %v4596 = vmul.f32 %v4475, 1.442695
        %v4597 = vpow.pop %v4596
        %v4598 = vmul.f32 %v4476, 1.442695
        %v4599 = vpow.pop %v4598
        %v4600 = vmul.f32 %v4477, 1.442695
        %v4601 = vpow.pop %v4600
        %v4602 = vmul.f32 %v4478, 1.442695
        %v4603 = vpow.pop %v4602
        %v4604 = vmul.f32 %v4479, 1.442695
        %v4605 = vpow.pop %v4604
        %v4606 = vmul.f32 %v4480, 1.442695
        %v4607 = vpow.pop %v4606
        %v4608 = vmul.f32 %v4481, 1.442695
        %v4609 = vpow.pop %v4608
        %s4610 = scalar_lea.vmem [#allocation5], 256
        %v4611 = vld [vmem:[%s4610] sm:$0xff]
        %v4612 = vld [vmem:[%s4610 + $0x8] sm:$0xff]
        %v4613 = vld [vmem:[%s4610 + $0x10] sm:$0xff]
        %v4614 = vld [vmem:[%s4610 + $0x18] sm:$0xff]
        %v4615 = vld [vmem:[%s4610 + $0x20] sm:$0xff]
        %v4616 = vld [vmem:[%s4610 + $0x28] sm:$0xff]
        %v4617 = vld [vmem:[%s4610 + $0x30] sm:$0xff]
        %v4618 = vld [vmem:[%s4610 + $0x38] sm:$0xff]
        %v4619 = vld [vmem:[%s4610 + $0x40] sm:$0xff]
        %v4620 = vld [vmem:[%s4610 + $0x48] sm:$0xff]
        %v4621 = vld [vmem:[%s4610 + $0x50] sm:$0xff]
        %v4622 = vld [vmem:[%s4610 + $0x58] sm:$0xff]
        %v4623 = vld [vmem:[%s4610 + $0x60] sm:$0xff]
        %v4624 = vld [vmem:[%s4610 + $0x68] sm:$0xff]
        %v4625 = vld [vmem:[%s4610 + $0x70] sm:$0xff]
        %v4626 = vld [vmem:[%s4610 + $0x78] sm:$0xff]
        %v4627 = vld [vmem:[%s4610 + $0x80] sm:$0xff]
        %v4628 = vld [vmem:[%s4610 + $0x88] sm:$0xff]
        %v4629 = vld [vmem:[%s4610 + $0x90] sm:$0xff]
        %v4630 = vld [vmem:[%s4610 + $0x98] sm:$0xff]
        %v4631 = vld [vmem:[%s4610 + $0xa0] sm:$0xff]
        %v4632 = vld [vmem:[%s4610 + $0xa8] sm:$0xff]
        %v4633 = vld [vmem:[%s4610 + $0xb0] sm:$0xff]
        %v4634 = vld [vmem:[%s4610 + $0xb8] sm:$0xff]
        %v4635 = vld [vmem:[%s4610 + $0xc0] sm:$0xff]
        %v4636 = vld [vmem:[%s4610 + $0xc8] sm:$0xff]
        %v4637 = vld [vmem:[%s4610 + $0xd0] sm:$0xff]
        %v4638 = vld [vmem:[%s4610 + $0xd8] sm:$0xff]
        %v4639 = vld [vmem:[%s4610 + $0xe0] sm:$0xff]
        %v4640 = vld [vmem:[%s4610 + $0xe8] sm:$0xff]
        %v4641 = vld [vmem:[%s4610 + $0xf0] sm:$0xff]
        %v4642 = vld [vmem:[%s4610 + $0xf8] sm:$0xff]
        %v4643 = vmul.f32 %v4195, %v4611
        %v4644 = vmul.f32 %v4197, %v4612
        %v4645 = vmul.f32 %v4199, %v4613
        %v4646 = vmul.f32 %v4201, %v4614
        %v4647 = vmul.f32 %v4203, %v4615
        %v4648 = vmul.f32 %v4205, %v4616
        %v4649 = vmul.f32 %v4207, %v4617
        %v4650 = vmul.f32 %v4209, %v4618
        %v4651 = vmul.f32 %v4211, %v4619
        %v4652 = vmul.f32 %v4213, %v4620
        %v4653 = vmul.f32 %v4215, %v4621
        %v4654 = vmul.f32 %v4217, %v4622
        %v4655 = vmul.f32 %v4219, %v4623
        %v4656 = vmul.f32 %v4221, %v4624
        %v4657 = vmul.f32 %v4223, %v4625
        %v4658 = vmul.f32 %v4225, %v4626
        %v4659 = vmul.f32 %v4227, %v4627
        %v4660 = vmul.f32 %v4229, %v4628
        %v4661 = vmul.f32 %v4231, %v4629
        %v4662 = vmul.f32 %v4233, %v4630
        %v4663 = vmul.f32 %v4235, %v4631
        %v4664 = vmul.f32 %v4237, %v4632
        %v4665 = vmul.f32 %v4239, %v4633
        %v4666 = vmul.f32 %v4241, %v4634
        %v4667 = vmul.f32 %v4243, %v4635
        %v4668 = vmul.f32 %v4245, %v4636
        %v4669 = vmul.f32 %v4247, %v4637
        %v4670 = vmul.f32 %v4249, %v4638
        %v4671 = vmul.f32 %v4251, %v4639
        %v4672 = vmul.f32 %v4253, %v4640
        %v4673 = vmul.f32 %v4255, %v4641
        %v4674 = vmul.f32 %v4257, %v4642
        %v4675 = vadd.f32 %v4483, %v4485
        %4676 = vadd.xlane.f32.xlu0 %v4675
        %v4677 = vpop.xlane.xlu0 %4676
        %v4678 = vadd.f32 %v4487, %v4489
        %4679 = vadd.xlane.f32.xlu0 %v4678
        %v4680 = vpop.xlane.xlu0 %4679
        %v4681 = vadd.f32 %v4491, %v4493
        %4682 = vadd.xlane.f32.xlu0 %v4681
        %v4683 = vpop.xlane.xlu0 %4682
        %v4684 = vadd.f32 %v4495, %v4497
        %4685 = vadd.xlane.f32.xlu0 %v4684
        %v4686 = vpop.xlane.xlu0 %4685
        %v4687 = vadd.f32 %v4499, %v4501
        %4688 = vadd.xlane.f32.xlu0 %v4687
        %v4689 = vpop.xlane.xlu0 %4688
        %v4690 = vadd.f32 %v4503, %v4505
        %4691 = vadd.xlane.f32.xlu0 %v4690
        %v4692 = vpop.xlane.xlu0 %4691
        %v4693 = vadd.f32 %v4507, %v4509
        %4694 = vadd.xlane.f32.xlu0 %v4693
        %v4695 = vpop.xlane.xlu0 %4694
        %v4696 = vadd.f32 %v4511, %v4513
        %4697 = vadd.xlane.f32.xlu0 %v4696
        %v4698 = vpop.xlane.xlu0 %4697
        %v4699 = vadd.f32 %v4515, %v4517
        %4700 = vadd.xlane.f32.xlu0 %v4699
        %v4701 = vpop.xlane.xlu0 %4700
        %v4702 = vadd.f32 %v4519, %v4521
        %4703 = vadd.xlane.f32.xlu0 %v4702
        %v4704 = vpop.xlane.xlu0 %4703
        %v4705 = vadd.f32 %v4523, %v4525
        %4706 = vadd.xlane.f32.xlu0 %v4705
        %v4707 = vpop.xlane.xlu0 %4706
        %v4708 = vadd.f32 %v4527, %v4529
        %4709 = vadd.xlane.f32.xlu0 %v4708
        %v4710 = vpop.xlane.xlu0 %4709
        %v4711 = vadd.f32 %v4531, %v4533
        %4712 = vadd.xlane.f32.xlu0 %v4711
        %v4713 = vpop.xlane.xlu0 %4712
        %v4714 = vadd.f32 %v4535, %v4537
        %4715 = vadd.xlane.f32.xlu0 %v4714
        %v4716 = vpop.xlane.xlu0 %4715
        %v4717 = vadd.f32 %v4539, %v4541
        %4718 = vadd.xlane.f32.xlu0 %v4717
        %v4719 = vpop.xlane.xlu0 %4718
        %v4720 = vadd.f32 %v4543, %v4545
        %4721 = vadd.xlane.f32.xlu0 %v4720
        %v4722 = vpop.xlane.xlu0 %4721
        %v4723 = vadd.f32 %v4547, %v4549
        %4724 = vadd.xlane.f32.xlu0 %v4723
        %v4725 = vpop.xlane.xlu0 %4724
        %v4726 = vadd.f32 %v4551, %v4553
        %4727 = vadd.xlane.f32.xlu0 %v4726
        %v4728 = vpop.xlane.xlu0 %4727
        %v4729 = vadd.f32 %v4555, %v4557
        %4730 = vadd.xlane.f32.xlu0 %v4729
        %v4731 = vpop.xlane.xlu0 %4730
        %v4732 = vadd.f32 %v4559, %v4561
        %4733 = vadd.xlane.f32.xlu0 %v4732
        %v4734 = vpop.xlane.xlu0 %4733
        %v4735 = vadd.f32 %v4563, %v4565
        %4736 = vadd.xlane.f32.xlu0 %v4735
        %v4737 = vpop.xlane.xlu0 %4736
        %v4738 = vadd.f32 %v4567, %v4569
        %4739 = vadd.xlane.f32.xlu0 %v4738
        %v4740 = vpop.xlane.xlu0 %4739
        %v4741 = vadd.f32 %v4571, %v4573
        %4742 = vadd.xlane.f32.xlu0 %v4741
        %v4743 = vpop.xlane.xlu0 %4742
        %v4744 = vadd.f32 %v4575, %v4577
        %4745 = vadd.xlane.f32.xlu0 %v4744
        %v4746 = vpop.xlane.xlu0 %4745
        %v4747 = vadd.f32 %v4579, %v4581
        %4748 = vadd.xlane.f32.xlu0 %v4747
        %v4749 = vpop.xlane.xlu0 %4748
        %v4750 = vadd.f32 %v4583, %v4585
        %4751 = vadd.xlane.f32.xlu0 %v4750
        %v4752 = vpop.xlane.xlu0 %4751
        %v4753 = vadd.f32 %v4587, %v4589
        %4754 = vadd.xlane.f32.xlu0 %v4753
        %v4755 = vpop.xlane.xlu0 %4754
        %v4756 = vadd.f32 %v4591, %v4593
        %4757 = vadd.xlane.f32.xlu0 %v4756
        %v4758 = vpop.xlane.xlu0 %4757
        %v4759 = vadd.f32 %v4595, %v4597
        %4760 = vadd.xlane.f32.xlu0 %v4759
        %v4761 = vpop.xlane.xlu0 %4760
        %v4762 = vadd.f32 %v4599, %v4601
        %4763 = vadd.xlane.f32.xlu0 %v4762
        %v4764 = vpop.xlane.xlu0 %4763
        %v4765 = vadd.f32 %v4603, %v4605
        %4766 = vadd.xlane.f32.xlu0 %v4765
        %v4767 = vpop.xlane.xlu0 %4766
        %v4768 = vadd.f32 %v4607, %v4609
        %4769 = vadd.xlane.f32.xlu0 %v4768
        %v4770 = vpop.xlane.xlu0 %4769
        %v4771 = vadd.f32 %v4643, %v4677
        %v4772 = vadd.f32 %v4644, %v4680
        %v4773 = vadd.f32 %v4645, %v4683
        %v4774 = vadd.f32 %v4646, %v4686
        %v4775 = vadd.f32 %v4647, %v4689
        %v4776 = vadd.f32 %v4648, %v4692
        %v4777 = vadd.f32 %v4649, %v4695
        %v4778 = vadd.f32 %v4650, %v4698
        %v4779 = vadd.f32 %v4651, %v4701
        %v4780 = vadd.f32 %v4652, %v4704
        %v4781 = vadd.f32 %v4653, %v4707
        %v4782 = vadd.f32 %v4654, %v4710
        %v4783 = vadd.f32 %v4655, %v4713
        %v4784 = vadd.f32 %v4656, %v4716
        %v4785 = vadd.f32 %v4657, %v4719
        %v4786 = vadd.f32 %v4658, %v4722
        %v4787 = vadd.f32 %v4659, %v4725
        %v4788 = vadd.f32 %v4660, %v4728
        %v4789 = vadd.f32 %v4661, %v4731
        %v4790 = vadd.f32 %v4662, %v4734
        %v4791 = vadd.f32 %v4663, %v4737
        %v4792 = vadd.f32 %v4664, %v4740
        %v4793 = vadd.f32 %v4665, %v4743
        %v4794 = vadd.f32 %v4666, %v4746
        %v4795 = vadd.f32 %v4667, %v4749
        %v4796 = vadd.f32 %v4668, %v4752
        %v4797 = vadd.f32 %v4669, %v4755
        %v4798 = vadd.f32 %v4670, %v4758
        %v4799 = vadd.f32 %v4671, %v4761
        %v4800 = vadd.f32 %v4672, %v4764
        %v4801 = vadd.f32 %v4673, %v4767
        %v4802 = vadd.f32 %v4674, %v4770
        %4803 = vst.msk [vmem:[%s4610] sm:$0xff] %vm3134, %v4771
        %4804 = vst.msk [vmem:[%s4610 + $0x8] sm:$0xff] %vm3134, %v4772
        %4805 = vst.msk [vmem:[%s4610 + $0x10] sm:$0xff] %vm3134, %v4773
        %4806 = vst.msk [vmem:[%s4610 + $0x18] sm:$0xff] %vm3134, %v4774
        %4807 = vst.msk [vmem:[%s4610 + $0x20] sm:$0xff] %vm3134, %v4775
        %4808 = vst.msk [vmem:[%s4610 + $0x28] sm:$0xff] %vm3134, %v4776
        %4809 = vst.msk [vmem:[%s4610 + $0x30] sm:$0xff] %vm3134, %v4777
        %4810 = vst.msk [vmem:[%s4610 + $0x38] sm:$0xff] %vm3134, %v4778
        %4811 = vst.msk [vmem:[%s4610 + $0x40] sm:$0xff] %vm3134, %v4779
        %4812 = vst.msk [vmem:[%s4610 + $0x48] sm:$0xff] %vm3134, %v4780
        %4813 = vst.msk [vmem:[%s4610 + $0x50] sm:$0xff] %vm3134, %v4781
        %4814 = vst.msk [vmem:[%s4610 + $0x58] sm:$0xff] %vm3134, %v4782
        %4815 = vst.msk [vmem:[%s4610 + $0x60] sm:$0xff] %vm3134, %v4783
        %4816 = vst.msk [vmem:[%s4610 + $0x68] sm:$0xff] %vm3134, %v4784
        %4817 = vst.msk [vmem:[%s4610 + $0x70] sm:$0xff] %vm3134, %v4785
        %4818 = vst.msk [vmem:[%s4610 + $0x78] sm:$0xff] %vm3134, %v4786
        %4819 = vst.msk [vmem:[%s4610 + $0x80] sm:$0xff] %vm3134, %v4787
        %4820 = vst.msk [vmem:[%s4610 + $0x88] sm:$0xff] %vm3134, %v4788
        %4821 = vst.msk [vmem:[%s4610 + $0x90] sm:$0xff] %vm3134, %v4789
        %4822 = vst.msk [vmem:[%s4610 + $0x98] sm:$0xff] %vm3134, %v4790
        %4823 = vst.msk [vmem:[%s4610 + $0xa0] sm:$0xff] %vm3134, %v4791
        %4824 = vst.msk [vmem:[%s4610 + $0xa8] sm:$0xff] %vm3134, %v4792
        %4825 = vst.msk [vmem:[%s4610 + $0xb0] sm:$0xff] %vm3134, %v4793
        %4826 = vst.msk [vmem:[%s4610 + $0xb8] sm:$0xff] %vm3134, %v4794
        %4827 = vst.msk [vmem:[%s4610 + $0xc0] sm:$0xff] %vm3134, %v4795
        %4828 = vst.msk [vmem:[%s4610 + $0xc8] sm:$0xff] %vm3134, %v4796
        %4829 = vst.msk [vmem:[%s4610 + $0xd0] sm:$0xff] %vm3134, %v4797
        %4830 = vst.msk [vmem:[%s4610 + $0xd8] sm:$0xff] %vm3134, %v4798
        %4831 = vst.msk [vmem:[%s4610 + $0xe0] sm:$0xff] %vm3134, %v4799
        %4832 = vst.msk [vmem:[%s4610 + $0xe8] sm:$0xff] %vm3134, %v4800
        %4833 = vst.msk [vmem:[%s4610 + $0xf0] sm:$0xff] %vm3134, %v4801
        %4834 = vst.msk [vmem:[%s4610 + $0xf8] sm:$0xff] %vm3134, %v4802
        %v4835 = vld [vmem:[#allocation3 + $0x8] sm:$0xff]
        %v4836 = vld [vmem:[#allocation3 + $0x18] sm:$0xff]
        %v4837 = vld [vmem:[#allocation3 + $0x28] sm:$0xff]
        %v4838 = vld [vmem:[#allocation3 + $0x38] sm:$0xff]
        %v4839 = vld [vmem:[#allocation3 + $0x48] sm:$0xff]
        %v4840 = vld [vmem:[#allocation3 + $0x58] sm:$0xff]
        %v4841 = vld [vmem:[#allocation3 + $0x68] sm:$0xff]
        %v4842 = vld [vmem:[#allocation3 + $0x78] sm:$0xff]
        %v4843 = vld [vmem:[#allocation3 + $0x88] sm:$0xff]
        %v4844 = vld [vmem:[#allocation3 + $0x98] sm:$0xff]
        %v4845 = vld [vmem:[#allocation3 + $0xa8] sm:$0xff]
        %v4846 = vld [vmem:[#allocation3 + $0xb8] sm:$0xff]
        %v4847 = vld [vmem:[#allocation3 + $0xc8] sm:$0xff]
        %v4848 = vld [vmem:[#allocation3 + $0xd8] sm:$0xff]
        %v4849 = vld [vmem:[#allocation3 + $0xe8] sm:$0xff]
        %v4850 = vld [vmem:[#allocation3 + $0xf8] sm:$0xff]
        %v4851 = vld [vmem:[#allocation3 + $0x108] sm:$0xff]
        %v4852 = vld [vmem:[#allocation3 + $0x118] sm:$0xff]
        %v4853 = vld [vmem:[#allocation3 + $0x128] sm:$0xff]
        %v4854 = vld [vmem:[#allocation3 + $0x138] sm:$0xff]
        %v4855 = vld [vmem:[#allocation3 + $0x148] sm:$0xff]
        %v4856 = vld [vmem:[#allocation3 + $0x158] sm:$0xff]
        %v4857 = vld [vmem:[#allocation3 + $0x168] sm:$0xff]
        %v4858 = vld [vmem:[#allocation3 + $0x178] sm:$0xff]
        %v4859 = vld [vmem:[#allocation3 + $0x188] sm:$0xff]
        %v4860 = vld [vmem:[#allocation3 + $0x198] sm:$0xff]
        %v4861 = vld [vmem:[#allocation3 + $0x1a8] sm:$0xff]
        %v4862 = vld [vmem:[#allocation3 + $0x1b8] sm:$0xff]
        %v4863 = vld [vmem:[#allocation3 + $0x1c8] sm:$0xff]
        %v4864 = vld [vmem:[#allocation3 + $0x1d8] sm:$0xff]
        %v4865 = vld [vmem:[#allocation3 + $0x1e8] sm:$0xff]
        %v4866 = vld [vmem:[#allocation3 + $0x1f8] sm:$0xff]
        %4868 = vset.pattern.permute.xlu0 0
        %4869 = vperm.xlu0 %4868, %v4195
        %v4870 = vpop.permute.xlu0 %4869
        %4873 = vset.pattern.permute.xlu0 0
        %4874 = vperm.xlu0 %4873, %v4197
        %v4875 = vpop.permute.xlu0 %4874
        %4878 = vset.pattern.permute.xlu0 0
        %4879 = vperm.xlu0 %4878, %v4199
        %v4880 = vpop.permute.xlu0 %4879
        %4883 = vset.pattern.permute.xlu0 0
        %4884 = vperm.xlu0 %4883, %v4201
        %v4885 = vpop.permute.xlu0 %4884
        %4888 = vset.pattern.permute.xlu0 0
        %4889 = vperm.xlu0 %4888, %v4203
        %v4890 = vpop.permute.xlu0 %4889
        %4893 = vset.pattern.permute.xlu0 0
        %4894 = vperm.xlu0 %4893, %v4205
        %v4895 = vpop.permute.xlu0 %4894
        %4898 = vset.pattern.permute.xlu0 0
        %4899 = vperm.xlu0 %4898, %v4207
        %v4900 = vpop.permute.xlu0 %4899
        %4903 = vset.pattern.permute.xlu0 0
        %4904 = vperm.xlu0 %4903, %v4209
        %v4905 = vpop.permute.xlu0 %4904
        %4908 = vset.pattern.permute.xlu0 0
        %4909 = vperm.xlu0 %4908, %v4211
        %v4910 = vpop.permute.xlu0 %4909
        %4913 = vset.pattern.permute.xlu0 0
        %4914 = vperm.xlu0 %4913, %v4213
        %v4915 = vpop.permute.xlu0 %4914
        %4918 = vset.pattern.permute.xlu0 0
        %4919 = vperm.xlu0 %4918, %v4215
        %v4920 = vpop.permute.xlu0 %4919
        %4923 = vset.pattern.permute.xlu0 0
        %4924 = vperm.xlu0 %4923, %v4217
        %v4925 = vpop.permute.xlu0 %4924
        %4928 = vset.pattern.permute.xlu0 0
        %4929 = vperm.xlu0 %4928, %v4219
        %v4930 = vpop.permute.xlu0 %4929
        %4933 = vset.pattern.permute.xlu0 0
        %4934 = vperm.xlu0 %4933, %v4221
        %v4935 = vpop.permute.xlu0 %4934
        %4938 = vset.pattern.permute.xlu0 0
        %4939 = vperm.xlu0 %4938, %v4223
        %v4940 = vpop.permute.xlu0 %4939
        %4943 = vset.pattern.permute.xlu0 0
        %4944 = vperm.xlu0 %4943, %v4225
        %v4945 = vpop.permute.xlu0 %4944
        %4948 = vset.pattern.permute.xlu0 0
        %4949 = vperm.xlu0 %4948, %v4227
        %v4950 = vpop.permute.xlu0 %4949
        %4953 = vset.pattern.permute.xlu0 0
        %4954 = vperm.xlu0 %4953, %v4229
        %v4955 = vpop.permute.xlu0 %4954
        %4958 = vset.pattern.permute.xlu0 0
        %4959 = vperm.xlu0 %4958, %v4231
        %v4960 = vpop.permute.xlu0 %4959
        %4963 = vset.pattern.permute.xlu0 0
        %4964 = vperm.xlu0 %4963, %v4233
        %v4965 = vpop.permute.xlu0 %4964
        %4968 = vset.pattern.permute.xlu0 0
        %4969 = vperm.xlu0 %4968, %v4235
        %v4970 = vpop.permute.xlu0 %4969
        %4973 = vset.pattern.permute.xlu0 0
        %4974 = vperm.xlu0 %4973, %v4237
        %v4975 = vpop.permute.xlu0 %4974
        %4978 = vset.pattern.permute.xlu0 0
        %4979 = vperm.xlu0 %4978, %v4239
        %v4980 = vpop.permute.xlu0 %4979
        %4983 = vset.pattern.permute.xlu0 0
        %4984 = vperm.xlu0 %4983, %v4241
        %v4985 = vpop.permute.xlu0 %4984
        %4988 = vset.pattern.permute.xlu0 0
        %4989 = vperm.xlu0 %4988, %v4243
        %v4990 = vpop.permute.xlu0 %4989
        %4993 = vset.pattern.permute.xlu0 0
        %4994 = vperm.xlu0 %4993, %v4245
        %v4995 = vpop.permute.xlu0 %4994
        %4998 = vset.pattern.permute.xlu0 0
        %4999 = vperm.xlu0 %4998, %v4247
        %v5000 = vpop.permute.xlu0 %4999
        %5003 = vset.pattern.permute.xlu0 0
        %5004 = vperm.xlu0 %5003, %v4249
        %v5005 = vpop.permute.xlu0 %5004
        %5008 = vset.pattern.permute.xlu0 0
        %5009 = vperm.xlu0 %5008, %v4251
        %v5010 = vpop.permute.xlu0 %5009
        %5013 = vset.pattern.permute.xlu0 0
        %5014 = vperm.xlu0 %5013, %v4253
        %v5015 = vpop.permute.xlu0 %5014
        %5018 = vset.pattern.permute.xlu0 0
        %5019 = vperm.xlu0 %5018, %v4255
        %v5020 = vpop.permute.xlu0 %5019
        %5023 = vset.pattern.permute.xlu0 0
        %5024 = vperm.xlu0 %5023, %v4257
        %v5025 = vpop.permute.xlu0 %5024
        %v5027 = vmul.f32 %v4870, %v4835
        %v5028 = vmul.f32 %v4875, %v4836
        %v5029 = vmul.f32 %v4880, %v4837
        %v5030 = vmul.f32 %v4885, %v4838
        %v5031 = vmul.f32 %v4890, %v4839
        %v5032 = vmul.f32 %v4895, %v4840
        %v5033 = vmul.f32 %v4900, %v4841
        %v5034 = vmul.f32 %v4905, %v4842
        %v5035 = vmul.f32 %v4910, %v4843
        %v5036 = vmul.f32 %v4915, %v4844
        %v5037 = vmul.f32 %v4920, %v4845
        %v5038 = vmul.f32 %v4925, %v4846
        %v5039 = vmul.f32 %v4930, %v4847
        %v5040 = vmul.f32 %v4935, %v4848
        %v5041 = vmul.f32 %v4940, %v4849
        %v5042 = vmul.f32 %v4945, %v4850
        %v5043 = vmul.f32 %v4950, %v4851
        %v5044 = vmul.f32 %v4955, %v4852
        %v5045 = vmul.f32 %v4960, %v4853
        %v5046 = vmul.f32 %v4965, %v4854
        %v5047 = vmul.f32 %v4970, %v4855
        %v5048 = vmul.f32 %v4975, %v4856
        %v5049 = vmul.f32 %v4980, %v4857
        %v5050 = vmul.f32 %v4985, %v4858
        %v5051 = vmul.f32 %v4990, %v4859
        %v5052 = vmul.f32 %v4995, %v4860
        %v5053 = vmul.f32 %v5000, %v4861
        %v5054 = vmul.f32 %v5005, %v4862
        %v5055 = vmul.f32 %v5010, %v4863
        %v5056 = vmul.f32 %v5015, %v4864
        %v5057 = vmul.f32 %v5020, %v4865
        %v5058 = vmul.f32 %v5025, %v4866
        %5059 = vmatprep.subr.mxu0 0.0
        %5060 = vmatpush1.msra.mxu0 %v1920
        %5061 = vmatprep.subr.mxu0 0.0
        %5062 = vmatpush1.msra.mxu0 %v1924
        %5063 = vmatprep.subr.mxu0 0.0
        %5064 = vmatpush1.msra.mxu0 %v1928
        %5065 = vmatprep.subr.mxu0 0.0
        %5066 = vmatpush1.msra.mxu0 %v1932
        %5067 = vmatprep.subr.mxu0 0.0
        %5068 = vmatpush1.msra.mxu0 %v1936
        %5069 = vmatprep.subr.mxu0 0.0
        %5070 = vmatpush1.msra.mxu0 %v1940
        %5071 = vmatprep.subr.mxu0 0.0
        %5072 = vmatpush1.msra.mxu0 %v1944
        %5073 = vmatprep.subr.mxu0 0.0
        %5074 = vmatpush1.msra.mxu0 %v1948
        %5075 = vmatprep.subr.mxu0 0.0
        %5076 = vmatpush1.msra.mxu0 %v1952
        %5077 = vmatprep.subr.mxu0 0.0
        %5078 = vmatpush1.msra.mxu0 %v1956
        %5079 = vmatprep.subr.mxu0 0.0
        %5080 = vmatpush1.msra.mxu0 %v1960
        %5081 = vmatprep.subr.mxu0 0.0
        %5082 = vmatpush1.msra.mxu0 %v1964
        %5083 = vmatprep.subr.mxu0 0.0
        %5084 = vmatpush1.msra.mxu0 %v1968
        %5085 = vmatprep.subr.mxu0 0.0
        %5086 = vmatpush1.msra.mxu0 %v1972
        %5087 = vmatprep.subr.mxu0 0.0
        %5088 = vmatpush1.msra.mxu0 %v1976
        %5089 = vmatprep.subr.mxu0 0.0
        %5090 = vmatpush1.msra.mxu0 %v1980
        %5091 = vmatprep.subr.mxu0 0.0
        %5092 = vmatpush1.msra.mxu0 %v1984
        %5093 = vmatprep.subr.mxu0 0.0
        %5094 = vmatpush1.msra.mxu0 %v1988
        %5095 = vmatprep.subr.mxu0 0.0
        %5096 = vmatpush1.msra.mxu0 %v1992
        %5097 = vmatprep.subr.mxu0 0.0
        %5098 = vmatpush1.msra.mxu0 %v1996
        %5099 = vmatprep.subr.mxu0 0.0
        %5100 = vmatpush1.msra.mxu0 %v2000
        %5101 = vmatprep.subr.mxu0 0.0
        %5102 = vmatpush1.msra.mxu0 %v2004
        %5103 = vmatprep.subr.mxu0 0.0
        %5104 = vmatpush1.msra.mxu0 %v2008
        %5105 = vmatprep.subr.mxu0 0.0
        %5106 = vmatpush1.msra.mxu0 %v2012
        %5107 = vmatprep.subr.mxu0 0.0
        %5108 = vmatpush1.msra.mxu0 %v2016
        %5109 = vmatprep.subr.mxu0 0.0
        %5110 = vmatpush1.msra.mxu0 %v2020
        %5111 = vmatprep.subr.mxu0 0.0
        %5112 = vmatpush1.msra.mxu0 %v2024
        %5113 = vmatprep.subr.mxu0 0.0
        %5114 = vmatpush1.msra.mxu0 %v2028
        %5115 = vmatprep.subr.mxu0 0.0
        %5116 = vmatpush1.msra.mxu0 %v2032
        %5117 = vmatprep.subr.mxu0 0.0
        %5118 = vmatpush1.msra.mxu0 %v2036
        %5119 = vmatprep.subr.mxu0 0.0
        %5120 = vmatpush1.msra.mxu0 %v2040
        %5121 = vmatprep.subr.mxu0 0.0
        %5122 = vmatpush1.msra.mxu0 %v2044
        %5123 = vmatprep.mubr.f32.mxu0 %v4485
        %5124 = vmatmul.mubr.f32.gmra.mrb[0].mxu0 %v4483
        %v5125 = vpop.f32.mrb[0].mxu0
        %v5126 = vadd.f32 0.0, %v5125
        %v5127 = vpop.f32.mrb[0].mxu0
        %5128 = vmatprep.mubr.f32.mxu0 %v4489
        %5129 = vmatmul.mubr.f32.gmra.mrb[0].mxu0 %v4487
        %v5130 = vpop.f32.mrb[0].mxu0
        %v5131 = vadd.f32 0.0, %v5130
        %v5132 = vpop.f32.mrb[0].mxu0
        %5133 = vmatprep.mubr.f32.mxu0 %v4493
        %5134 = vmatmul.mubr.f32.gmra.mrb[0].mxu0 %v4491
        %v5135 = vpop.f32.mrb[0].mxu0
        %v5136 = vadd.f32 0.0, %v5135
        %v5137 = vpop.f32.mrb[0].mxu0
        %5138 = vmatprep.mubr.f32.mxu0 %v4497
        %5139 = vmatmul.mubr.f32.gmra.mrb[0].mxu0 %v4495
        %v5140 = vpop.f32.mrb[0].mxu0
        %v5141 = vadd.f32 0.0, %v5140
        %v5142 = vpop.f32.mrb[0].mxu0
        %5143 = vmatprep.mubr.f32.mxu0 %v4501
        %5144 = vmatmul.mubr.f32.gmra.mrb[0].mxu0 %v4499
        %v5145 = vpop.f32.mrb[0].mxu0
        %v5146 = vadd.f32 0.0, %v5145
        %v5147 = vpop.f32.mrb[0].mxu0
        %5148 = vmatprep.mubr.f32.mxu0 %v4505
        %5149 = vmatmul.mubr.f32.gmra.mrb[0].mxu0 %v4503
        %v5150 = vpop.f32.mrb[0].mxu0
        %v5151 = vadd.f32 0.0, %v5150
        %v5152 = vpop.f32.mrb[0].mxu0
        %5153 = vmatprep.mubr.f32.mxu0 %v4509
        %5154 = vmatmul.mubr.f32.gmra.mrb[0].mxu0 %v4507
        %v5155 = vpop.f32.mrb[0].mxu0
        %v5156 = vadd.f32 0.0, %v5155
        %v5157 = vpop.f32.mrb[0].mxu0
        %5158 = vmatprep.mubr.f32.mxu0 %v4513
        %5159 = vmatmul.mubr.f32.gmra.mrb[0].mxu0 %v4511
        %v5160 = vpop.f32.mrb[0].mxu0
        %v5161 = vadd.f32 0.0, %v5160
        %v5162 = vpop.f32.mrb[0].mxu0
        %5163 = vmatprep.mubr.f32.mxu0 %v4517
        %5164 = vmatmul.mubr.f32.gmra.mrb[0].mxu0 %v4515
        %v5165 = vpop.f32.mrb[0].mxu0
        %v5166 = vadd.f32 0.0, %v5165
        %v5167 = vpop.f32.mrb[0].mxu0
        %5168 = vmatprep.mubr.f32.mxu0 %v4521
        %5169 = vmatmul.mubr.f32.gmra.mrb[0].mxu0 %v4519
        %v5170 = vpop.f32.mrb[0].mxu0
        %v5171 = vadd.f32 0.0, %v5170
        %v5172 = vpop.f32.mrb[0].mxu0
        %5173 = vmatprep.mubr.f32.mxu0 %v4525
        %5174 = vmatmul.mubr.f32.gmra.mrb[0].mxu0 %v4523
        %v5175 = vpop.f32.mrb[0].mxu0
        %v5176 = vadd.f32 0.0, %v5175
        %v5177 = vpop.f32.mrb[0].mxu0
        %5178 = vmatprep.mubr.f32.mxu0 %v4529
        %5179 = vmatmul.mubr.f32.gmra.mrb[0].mxu0 %v4527
        %v5180 = vpop.f32.mrb[0].mxu0
        %v5181 = vadd.f32 0.0, %v5180
        %v5182 = vpop.f32.mrb[0].mxu0
        %5183 = vmatprep.mubr.f32.mxu0 %v4533
        %5184 = vmatmul.mubr.f32.gmra.mrb[0].mxu0 %v4531
        %v5185 = vpop.f32.mrb[0].mxu0
        %v5186 = vadd.f32 0.0, %v5185
        %v5187 = vpop.f32.mrb[0].mxu0
        %5188 = vmatprep.mubr.f32.mxu0 %v4537
        %5189 = vmatmul.mubr.f32.gmra.mrb[0].mxu0 %v4535
        %v5190 = vpop.f32.mrb[0].mxu0
        %v5191 = vadd.f32 0.0, %v5190
        %v5192 = vpop.f32.mrb[0].mxu0
        %5193 = vmatprep.mubr.f32.mxu0 %v4541
        %5194 = vmatmul.mubr.f32.gmra.mrb[0].mxu0 %v4539
        %v5195 = vpop.f32.mrb[0].mxu0
        %v5196 = vadd.f32 0.0, %v5195
        %v5197 = vpop.f32.mrb[0].mxu0
        %5198 = vmatprep.mubr.f32.mxu0 %v4545
        %5199 = vmatmul.mubr.f32.gmra.mrb[0].mxu0 %v4543
        %v5200 = vpop.f32.mrb[0].mxu0
        %v5201 = vadd.f32 0.0, %v5200
        %v5202 = vpop.f32.mrb[0].mxu0
        %5203 = vmatprep.mubr.f32.mxu0 %v4549
        %5204 = vmatmul.mubr.f32.gmra.mrb[0].mxu0 %v4547
        %v5205 = vpop.f32.mrb[0].mxu0
        %v5206 = vadd.f32 0.0, %v5205
        %v5207 = vpop.f32.mrb[0].mxu0
        %5208 = vmatprep.mubr.f32.mxu0 %v4553
        %5209 = vmatmul.mubr.f32.gmra.mrb[0].mxu0 %v4551
        %v5210 = vpop.f32.mrb[0].mxu0
        %v5211 = vadd.f32 0.0, %v5210
        %v5212 = vpop.f32.mrb[0].mxu0
        %5213 = vmatprep.mubr.f32.mxu0 %v4557
        %5214 = vmatmul.mubr.f32.gmra.mrb[0].mxu0 %v4555
        %v5215 = vpop.f32.mrb[0].mxu0
        %v5216 = vadd.f32 0.0, %v5215
        %v5217 = vpop.f32.mrb[0].mxu0
        %5218 = vmatprep.mubr.f32.mxu0 %v4561
        %5219 = vmatmul.mubr.f32.gmra.mrb[0].mxu0 %v4559
        %v5220 = vpop.f32.mrb[0].mxu0
        %v5221 = vadd.f32 0.0, %v5220
        %v5222 = vpop.f32.mrb[0].mxu0
        %5223 = vmatprep.mubr.f32.mxu0 %v4565
        %5224 = vmatmul.mubr.f32.gmra.mrb[0].mxu0 %v4563
        %v5225 = vpop.f32.mrb[0].mxu0
        %v5226 = vadd.f32 0.0, %v5225
        %v5227 = vpop.f32.mrb[0].mxu0
        %5228 = vmatprep.mubr.f32.mxu0 %v4569
        %5229 = vmatmul.mubr.f32.gmra.mrb[0].mxu0 %v4567
        %v5230 = vpop.f32.mrb[0].mxu0
        %v5231 = vadd.f32 0.0, %v5230
        %v5232 = vpop.f32.mrb[0].mxu0
        %5233 = vmatprep.mubr.f32.mxu0 %v4573
        %5234 = vmatmul.mubr.f32.gmra.mrb[0].mxu0 %v4571
        %v5235 = vpop.f32.mrb[0].mxu0
        %v5236 = vadd.f32 0.0, %v5235
        %v5237 = vpop.f32.mrb[0].mxu0
        %5238 = vmatprep.mubr.f32.mxu0 %v4577
        %5239 = vmatmul.mubr.f32.gmra.mrb[0].mxu0 %v4575
        %v5240 = vpop.f32.mrb[0].mxu0
        %v5241 = vadd.f32 0.0, %v5240
        %v5242 = vpop.f32.mrb[0].mxu0
        %5243 = vmatprep.mubr.f32.mxu0 %v4581
        %5244 = vmatmul.mubr.f32.gmra.mrb[0].mxu0 %v4579
        %v5245 = vpop.f32.mrb[0].mxu0
        %v5246 = vadd.f32 0.0, %v5245
        %v5247 = vpop.f32.mrb[0].mxu0
        %5248 = vmatprep.mubr.f32.mxu0 %v4585
        %5249 = vmatmul.mubr.f32.gmra.mrb[0].mxu0 %v4583
        %v5250 = vpop.f32.mrb[0].mxu0
        %v5251 = vadd.f32 0.0, %v5250
        %v5252 = vpop.f32.mrb[0].mxu0
        %5253 = vmatprep.mubr.f32.mxu0 %v4589
        %5254 = vmatmul.mubr.f32.gmra.mrb[0].mxu0 %v4587
        %v5255 = vpop.f32.mrb[0].mxu0
        %v5256 = vadd.f32 0.0, %v5255
        %v5257 = vpop.f32.mrb[0].mxu0
        %5258 = vmatprep.mubr.f32.mxu0 %v4593
        %5259 = vmatmul.mubr.f32.gmra.mrb[0].mxu0 %v4591
        %v5260 = vpop.f32.mrb[0].mxu0
        %v5261 = vadd.f32 0.0, %v5260
        %v5262 = vpop.f32.mrb[0].mxu0
        %5263 = vmatprep.mubr.f32.mxu0 %v4597
        %5264 = vmatmul.mubr.f32.gmra.mrb[0].mxu0 %v4595
        %v5265 = vpop.f32.mrb[0].mxu0
        %v5266 = vadd.f32 0.0, %v5265
        %v5267 = vpop.f32.mrb[0].mxu0
        %5268 = vmatprep.mubr.f32.mxu0 %v4601
        %5269 = vmatmul.mubr.f32.gmra.mrb[0].mxu0 %v4599
        %v5270 = vpop.f32.mrb[0].mxu0
        %v5271 = vadd.f32 0.0, %v5270
        %v5272 = vpop.f32.mrb[0].mxu0
        %5273 = vmatprep.mubr.f32.mxu0 %v4605
        %5274 = vmatmul.mubr.f32.gmra.mrb[0].mxu0 %v4603
        %v5275 = vpop.f32.mrb[0].mxu0
        %v5276 = vadd.f32 0.0, %v5275
        %v5277 = vpop.f32.mrb[0].mxu0
        %5278 = vmatprep.mubr.f32.mxu0 %v4609
        %5279 = vmatmul.mubr.f32.gmra.mrb[0].mxu0 %v4607
        %v5280 = vpop.f32.mrb[0].mxu0
        %v5281 = vadd.f32 0.0, %v5280
        %v5282 = vpop.f32.mrb[0].mxu0
        %5283 = vdwg.mxu0
        %v5284 = vadd.f32 %v5027, %v5126
        %v5285 = vadd.f32 %v5028, %v5131
        %v5286 = vadd.f32 %v5029, %v5136
        %v5287 = vadd.f32 %v5030, %v5141
        %v5288 = vadd.f32 %v5031, %v5146
        %v5289 = vadd.f32 %v5032, %v5151
        %v5290 = vadd.f32 %v5033, %v5156
        %v5291 = vadd.f32 %v5034, %v5161
        %v5292 = vadd.f32 %v5035, %v5166
        %v5293 = vadd.f32 %v5036, %v5171
        %v5294 = vadd.f32 %v5037, %v5176
        %v5295 = vadd.f32 %v5038, %v5181
        %v5296 = vadd.f32 %v5039, %v5186
        %v5297 = vadd.f32 %v5040, %v5191
        %v5298 = vadd.f32 %v5041, %v5196
        %v5299 = vadd.f32 %v5042, %v5201
        %v5300 = vadd.f32 %v5043, %v5206
        %v5301 = vadd.f32 %v5044, %v5211
        %v5302 = vadd.f32 %v5045, %v5216
        %v5303 = vadd.f32 %v5046, %v5221
        %v5304 = vadd.f32 %v5047, %v5226
        %v5305 = vadd.f32 %v5048, %v5231
        %v5306 = vadd.f32 %v5049, %v5236
        %v5307 = vadd.f32 %v5050, %v5241
        %v5308 = vadd.f32 %v5051, %v5246
        %v5309 = vadd.f32 %v5052, %v5251
        %v5310 = vadd.f32 %v5053, %v5256
        %v5311 = vadd.f32 %v5054, %v5261
        %v5312 = vadd.f32 %v5055, %v5266
        %v5313 = vadd.f32 %v5056, %v5271
        %v5314 = vadd.f32 %v5057, %v5276
        %v5315 = vadd.f32 %v5058, %v5281
        %5316 = vst [vmem:[#allocation3 + $0x8] sm:$0xff] %v5284
        %5317 = vst [vmem:[#allocation3 + $0x18] sm:$0xff] %v5285
        %5318 = vst [vmem:[#allocation3 + $0x28] sm:$0xff] %v5286
        %5319 = vst [vmem:[#allocation3 + $0x38] sm:$0xff] %v5287
        %5320 = vst [vmem:[#allocation3 + $0x48] sm:$0xff] %v5288
        %5321 = vst [vmem:[#allocation3 + $0x58] sm:$0xff] %v5289
        %5322 = vst [vmem:[#allocation3 + $0x68] sm:$0xff] %v5290
        %5323 = vst [vmem:[#allocation3 + $0x78] sm:$0xff] %v5291
        %5324 = vst [vmem:[#allocation3 + $0x88] sm:$0xff] %v5292
        %5325 = vst [vmem:[#allocation3 + $0x98] sm:$0xff] %v5293
        %5326 = vst [vmem:[#allocation3 + $0xa8] sm:$0xff] %v5294
        %5327 = vst [vmem:[#allocation3 + $0xb8] sm:$0xff] %v5295
        %5328 = vst [vmem:[#allocation3 + $0xc8] sm:$0xff] %v5296
        %5329 = vst [vmem:[#allocation3 + $0xd8] sm:$0xff] %v5297
        %5330 = vst [vmem:[#allocation3 + $0xe8] sm:$0xff] %v5298
        %5331 = vst [vmem:[#allocation3 + $0xf8] sm:$0xff] %v5299
        %5332 = vst [vmem:[#allocation3 + $0x108] sm:$0xff] %v5300
        %5333 = vst [vmem:[#allocation3 + $0x118] sm:$0xff] %v5301
        %5334 = vst [vmem:[#allocation3 + $0x128] sm:$0xff] %v5302
        %5335 = vst [vmem:[#allocation3 + $0x138] sm:$0xff] %v5303
        %5336 = vst [vmem:[#allocation3 + $0x148] sm:$0xff] %v5304
        %5337 = vst [vmem:[#allocation3 + $0x158] sm:$0xff] %v5305
        %5338 = vst [vmem:[#allocation3 + $0x168] sm:$0xff] %v5306
        %5339 = vst [vmem:[#allocation3 + $0x178] sm:$0xff] %v5307
        %5340 = vst [vmem:[#allocation3 + $0x188] sm:$0xff] %v5308
        %5341 = vst [vmem:[#allocation3 + $0x198] sm:$0xff] %v5309
        %5342 = vst [vmem:[#allocation3 + $0x1a8] sm:$0xff] %v5310
        %5343 = vst [vmem:[#allocation3 + $0x1b8] sm:$0xff] %v5311
        %5344 = vst [vmem:[#allocation3 + $0x1c8] sm:$0xff] %v5312
        %5345 = vst [vmem:[#allocation3 + $0x1d8] sm:$0xff] %v5313
        %5346 = vst [vmem:[#allocation3 + $0x1e8] sm:$0xff] %v5314
        %5347 = vst [vmem:[#allocation3 + $0x1f8] sm:$0xff] %v5315
        %5348 = vst.msk [vmem:[%s4001] sm:$0xff] %vm3134, %v4130
        %5349 = vst.msk [vmem:[%s4001 + $0x8] sm:$0xff] %vm3134, %v4131
        %5350 = vst.msk [vmem:[%s4001 + $0x10] sm:$0xff] %vm3134, %v4132
        %5351 = vst.msk [vmem:[%s4001 + $0x18] sm:$0xff] %vm3134, %v4133
        %5352 = vst.msk [vmem:[%s4001 + $0x20] sm:$0xff] %vm3134, %v4134
        %5353 = vst.msk [vmem:[%s4001 + $0x28] sm:$0xff] %vm3134, %v4135
        %5354 = vst.msk [vmem:[%s4001 + $0x30] sm:$0xff] %vm3134, %v4136
        %5355 = vst.msk [vmem:[%s4001 + $0x38] sm:$0xff] %vm3134, %v4137
        %5356 = vst.msk [vmem:[%s4001 + $0x40] sm:$0xff] %vm3134, %v4138
        %5357 = vst.msk [vmem:[%s4001 + $0x48] sm:$0xff] %vm3134, %v4139
        %5358 = vst.msk [vmem:[%s4001 + $0x50] sm:$0xff] %vm3134, %v4140
        %5359 = vst.msk [vmem:[%s4001 + $0x58] sm:$0xff] %vm3134, %v4141
        %5360 = vst.msk [vmem:[%s4001 + $0x60] sm:$0xff] %vm3134, %v4142
        %5361 = vst.msk [vmem:[%s4001 + $0x68] sm:$0xff] %vm3134, %v4143
        %5362 = vst.msk [vmem:[%s4001 + $0x70] sm:$0xff] %vm3134, %v4144
        %5363 = vst.msk [vmem:[%s4001 + $0x78] sm:$0xff] %vm3134, %v4145
        %5364 = vst.msk [vmem:[%s4001 + $0x80] sm:$0xff] %vm3134, %v4146
        %5365 = vst.msk [vmem:[%s4001 + $0x88] sm:$0xff] %vm3134, %v4147
        %5366 = vst.msk [vmem:[%s4001 + $0x90] sm:$0xff] %vm3134, %v4148
        %5367 = vst.msk [vmem:[%s4001 + $0x98] sm:$0xff] %vm3134, %v4149
        %5368 = vst.msk [vmem:[%s4001 + $0xa0] sm:$0xff] %vm3134, %v4150
        %5369 = vst.msk [vmem:[%s4001 + $0xa8] sm:$0xff] %vm3134, %v4151
        %5370 = vst.msk [vmem:[%s4001 + $0xb0] sm:$0xff] %vm3134, %v4152
        %5371 = vst.msk [vmem:[%s4001 + $0xb8] sm:$0xff] %vm3134, %v4153
        %5372 = vst.msk [vmem:[%s4001 + $0xc0] sm:$0xff] %vm3134, %v4154
        %5373 = vst.msk [vmem:[%s4001 + $0xc8] sm:$0xff] %vm3134, %v4155
        %5374 = vst.msk [vmem:[%s4001 + $0xd0] sm:$0xff] %vm3134, %v4156
        %5375 = vst.msk [vmem:[%s4001 + $0xd8] sm:$0xff] %vm3134, %v4157
        %5376 = vst.msk [vmem:[%s4001 + $0xe0] sm:$0xff] %vm3134, %v4158
        %5377 = vst.msk [vmem:[%s4001 + $0xe8] sm:$0xff] %vm3134, %v4159
        %5378 = vst.msk [vmem:[%s4001 + $0xf0] sm:$0xff] %vm3134, %v4160
        %5379 = vst.msk [vmem:[%s4001 + $0xf8] sm:$0xff] %vm3134, %v4161
        // Predicated region
        $region69: #{tpu_custom_call.1} parent=43 // pred_check
          %p5380 = pneg %p381
        $region70: #{tpu_custom_call.1} parent=43 // pred_check_branch
          %5382 = sbr.rel (%p5380) target = $region72
        $region71: #{tpu_custom_call.1} parent=43 // pred_region
          %v5383 = vld [vmem:[#allocation5] sm:$0xff]
          %v5384 = vld [vmem:[#allocation5 + $0x8] sm:$0xff]
          %v5385 = vld [vmem:[#allocation5 + $0x10] sm:$0xff]
          %v5386 = vld [vmem:[#allocation5 + $0x18] sm:$0xff]
          %v5387 = vld [vmem:[#allocation5 + $0x20] sm:$0xff]
          %v5388 = vld [vmem:[#allocation5 + $0x28] sm:$0xff]
          %v5389 = vld [vmem:[#allocation5 + $0x30] sm:$0xff]
          %v5390 = vld [vmem:[#allocation5 + $0x38] sm:$0xff]
          %v5391 = vld [vmem:[#allocation5 + $0x40] sm:$0xff]
          %v5392 = vld [vmem:[#allocation5 + $0x48] sm:$0xff]
          %v5393 = vld [vmem:[#allocation5 + $0x50] sm:$0xff]
          %v5394 = vld [vmem:[#allocation5 + $0x58] sm:$0xff]
          %v5395 = vld [vmem:[#allocation5 + $0x60] sm:$0xff]
          %v5396 = vld [vmem:[#allocation5 + $0x68] sm:$0xff]
          %v5397 = vld [vmem:[#allocation5 + $0x70] sm:$0xff]
          %v5398 = vld [vmem:[#allocation5 + $0x78] sm:$0xff]
          %v5399 = vld [vmem:[#allocation5 + $0x80] sm:$0xff]
          %v5400 = vld [vmem:[#allocation5 + $0x88] sm:$0xff]
          %v5401 = vld [vmem:[#allocation5 + $0x90] sm:$0xff]
          %v5402 = vld [vmem:[#allocation5 + $0x98] sm:$0xff]
          %v5403 = vld [vmem:[#allocation5 + $0xa0] sm:$0xff]
          %v5404 = vld [vmem:[#allocation5 + $0xa8] sm:$0xff]
          %v5405 = vld [vmem:[#allocation5 + $0xb0] sm:$0xff]
          %v5406 = vld [vmem:[#allocation5 + $0xb8] sm:$0xff]
          %v5407 = vld [vmem:[#allocation5 + $0xc0] sm:$0xff]
          %v5408 = vld [vmem:[#allocation5 + $0xc8] sm:$0xff]
          %v5409 = vld [vmem:[#allocation5 + $0xd0] sm:$0xff]
          %v5410 = vld [vmem:[#allocation5 + $0xd8] sm:$0xff]
          %v5411 = vld [vmem:[#allocation5 + $0xe0] sm:$0xff]
          %v5412 = vld [vmem:[#allocation5 + $0xe8] sm:$0xff]
          %v5413 = vld [vmem:[#allocation5 + $0xf0] sm:$0xff]
          %v5414 = vld [vmem:[#allocation5 + $0xf8] sm:$0xff]
          %v5415 = vrcp.pop %v5383
          %v5416 = vrcp.pop %v5384
          %v5417 = vrcp.pop %v5385
          %v5418 = vrcp.pop %v5386
          %v5419 = vrcp.pop %v5387
          %v5420 = vrcp.pop %v5388
          %v5421 = vrcp.pop %v5389
          %v5422 = vrcp.pop %v5390
          %v5423 = vrcp.pop %v5391
          %v5424 = vrcp.pop %v5392
          %v5425 = vrcp.pop %v5393
          %v5426 = vrcp.pop %v5394
          %v5427 = vrcp.pop %v5395
          %v5428 = vrcp.pop %v5396
          %v5429 = vrcp.pop %v5397
          %v5430 = vrcp.pop %v5398
          %v5431 = vrcp.pop %v5399
          %v5432 = vrcp.pop %v5400
          %v5433 = vrcp.pop %v5401
          %v5434 = vrcp.pop %v5402
          %v5435 = vrcp.pop %v5403
          %v5436 = vrcp.pop %v5404
          %v5437 = vrcp.pop %v5405
          %v5438 = vrcp.pop %v5406
          %v5439 = vrcp.pop %v5407
          %v5440 = vrcp.pop %v5408
          %v5441 = vrcp.pop %v5409
          %v5442 = vrcp.pop %v5410
          %v5443 = vrcp.pop %v5411
          %v5444 = vrcp.pop %v5412
          %v5445 = vrcp.pop %v5413
          %v5446 = vrcp.pop %v5414
          %v5447 = vld [vmem:[#allocation3] sm:$0xff]
          %v5448 = vld [vmem:[#allocation3 + $0x10] sm:$0xff]
          %v5449 = vld [vmem:[#allocation3 + $0x20] sm:$0xff]
          %v5450 = vld [vmem:[#allocation3 + $0x30] sm:$0xff]
          %v5451 = vld [vmem:[#allocation3 + $0x40] sm:$0xff]
          %v5452 = vld [vmem:[#allocation3 + $0x50] sm:$0xff]
          %v5453 = vld [vmem:[#allocation3 + $0x60] sm:$0xff]
          %v5454 = vld [vmem:[#allocation3 + $0x70] sm:$0xff]
          %v5455 = vld [vmem:[#allocation3 + $0x80] sm:$0xff]
          %v5456 = vld [vmem:[#allocation3 + $0x90] sm:$0xff]
          %v5457 = vld [vmem:[#allocation3 + $0xa0] sm:$0xff]
          %v5458 = vld [vmem:[#allocation3 + $0xb0] sm:$0xff]
          %v5459 = vld [vmem:[#allocation3 + $0xc0] sm:$0xff]
          %v5460 = vld [vmem:[#allocation3 + $0xd0] sm:$0xff]
          %v5461 = vld [vmem:[#allocation3 + $0xe0] sm:$0xff]
          %v5462 = vld [vmem:[#allocation3 + $0xf0] sm:$0xff]
          %v5463 = vld [vmem:[#allocation3 + $0x100] sm:$0xff]
          %v5464 = vld [vmem:[#allocation3 + $0x110] sm:$0xff]
          %v5465 = vld [vmem:[#allocation3 + $0x120] sm:$0xff]
          %v5466 = vld [vmem:[#allocation3 + $0x130] sm:$0xff]
          %v5467 = vld [vmem:[#allocation3 + $0x140] sm:$0xff]
          %v5468 = vld [vmem:[#allocation3 + $0x150] sm:$0xff]
          %v5469 = vld [vmem:[#allocation3 + $0x160] sm:$0xff]
          %v5470 = vld [vmem:[#allocation3 + $0x170] sm:$0xff]
          %v5471 = vld [vmem:[#allocation3 + $0x180] sm:$0xff]
          %v5472 = vld [vmem:[#allocation3 + $0x190] sm:$0xff]
          %v5473 = vld [vmem:[#allocation3 + $0x1a0] sm:$0xff]
          %v5474 = vld [vmem:[#allocation3 + $0x1b0] sm:$0xff]
          %v5475 = vld [vmem:[#allocation3 + $0x1c0] sm:$0xff]
          %v5476 = vld [vmem:[#allocation3 + $0x1d0] sm:$0xff]
          %v5477 = vld [vmem:[#allocation3 + $0x1e0] sm:$0xff]
          %v5478 = vld [vmem:[#allocation3 + $0x1f0] sm:$0xff]
          %5480 = vset.pattern.permute.xlu0 0
          %5481 = vperm.xlu0 %5480, %v5415
          %v5482 = vpop.permute.xlu0 %5481
          %5485 = vset.pattern.permute.xlu0 0
          %5486 = vperm.xlu0 %5485, %v5416
          %v5487 = vpop.permute.xlu0 %5486
          %5490 = vset.pattern.permute.xlu0 0
          %5491 = vperm.xlu0 %5490, %v5417
          %v5492 = vpop.permute.xlu0 %5491
          %5495 = vset.pattern.permute.xlu0 0
          %5496 = vperm.xlu0 %5495, %v5418
          %v5497 = vpop.permute.xlu0 %5496
          %5500 = vset.pattern.permute.xlu0 0
          %5501 = vperm.xlu0 %5500, %v5419
          %v5502 = vpop.permute.xlu0 %5501
          %5505 = vset.pattern.permute.xlu0 0
          %5506 = vperm.xlu0 %5505, %v5420
          %v5507 = vpop.permute.xlu0 %5506
          %5510 = vset.pattern.permute.xlu0 0
          %5511 = vperm.xlu0 %5510, %v5421
          %v5512 = vpop.permute.xlu0 %5511
          %5515 = vset.pattern.permute.xlu0 0
          %5516 = vperm.xlu0 %5515, %v5422
          %v5517 = vpop.permute.xlu0 %5516
          %5520 = vset.pattern.permute.xlu0 0
          %5521 = vperm.xlu0 %5520, %v5423
          %v5522 = vpop.permute.xlu0 %5521
          %5525 = vset.pattern.permute.xlu0 0
          %5526 = vperm.xlu0 %5525, %v5424
          %v5527 = vpop.permute.xlu0 %5526
          %5530 = vset.pattern.permute.xlu0 0
          %5531 = vperm.xlu0 %5530, %v5425
          %v5532 = vpop.permute.xlu0 %5531
          %5535 = vset.pattern.permute.xlu0 0
          %5536 = vperm.xlu0 %5535, %v5426
          %v5537 = vpop.permute.xlu0 %5536
          %5540 = vset.pattern.permute.xlu0 0
          %5541 = vperm.xlu0 %5540, %v5427
          %v5542 = vpop.permute.xlu0 %5541
          %5545 = vset.pattern.permute.xlu0 0
          %5546 = vperm.xlu0 %5545, %v5428
          %v5547 = vpop.permute.xlu0 %5546
          %5550 = vset.pattern.permute.xlu0 0
          %5551 = vperm.xlu0 %5550, %v5429
          %v5552 = vpop.permute.xlu0 %5551
          %5555 = vset.pattern.permute.xlu0 0
          %5556 = vperm.xlu0 %5555, %v5430
          %v5557 = vpop.permute.xlu0 %5556
          %5560 = vset.pattern.permute.xlu0 0
          %5561 = vperm.xlu0 %5560, %v5431
          %v5562 = vpop.permute.xlu0 %5561
          %5565 = vset.pattern.permute.xlu0 0
          %5566 = vperm.xlu0 %5565, %v5432
          %v5567 = vpop.permute.xlu0 %5566
          %5570 = vset.pattern.permute.xlu0 0
          %5571 = vperm.xlu0 %5570, %v5433
          %v5572 = vpop.permute.xlu0 %5571
          %5575 = vset.pattern.permute.xlu0 0
          %5576 = vperm.xlu0 %5575, %v5434
          %v5577 = vpop.permute.xlu0 %5576
          %5580 = vset.pattern.permute.xlu0 0
          %5581 = vperm.xlu0 %5580, %v5435
          %v5582 = vpop.permute.xlu0 %5581
          %5585 = vset.pattern.permute.xlu0 0
          %5586 = vperm.xlu0 %5585, %v5436
          %v5587 = vpop.permute.xlu0 %5586
          %5590 = vset.pattern.permute.xlu0 0
          %5591 = vperm.xlu0 %5590, %v5437
          %v5592 = vpop.permute.xlu0 %5591
          %5595 = vset.pattern.permute.xlu0 0
          %5596 = vperm.xlu0 %5595, %v5438
          %v5597 = vpop.permute.xlu0 %5596
          %5600 = vset.pattern.permute.xlu0 0
          %5601 = vperm.xlu0 %5600, %v5439
          %v5602 = vpop.permute.xlu0 %5601
          %5605 = vset.pattern.permute.xlu0 0
          %5606 = vperm.xlu0 %5605, %v5440
          %v5607 = vpop.permute.xlu0 %5606
          %5610 = vset.pattern.permute.xlu0 0
          %5611 = vperm.xlu0 %5610, %v5441
          %v5612 = vpop.permute.xlu0 %5611
          %5615 = vset.pattern.permute.xlu0 0
          %5616 = vperm.xlu0 %5615, %v5442
          %v5617 = vpop.permute.xlu0 %5616
          %5620 = vset.pattern.permute.xlu0 0
          %5621 = vperm.xlu0 %5620, %v5443
          %v5622 = vpop.permute.xlu0 %5621
          %5625 = vset.pattern.permute.xlu0 0
          %5626 = vperm.xlu0 %5625, %v5444
          %v5627 = vpop.permute.xlu0 %5626
          %5630 = vset.pattern.permute.xlu0 0
          %5631 = vperm.xlu0 %5630, %v5445
          %v5632 = vpop.permute.xlu0 %5631
          %5635 = vset.pattern.permute.xlu0 0
          %5636 = vperm.xlu0 %5635, %v5446
          %v5637 = vpop.permute.xlu0 %5636
          %v5639 = vmul.f32 %v5447, %v5482
          %v5640 = vmul.f32 %v5448, %v5487
          %v5641 = vmul.f32 %v5449, %v5492
          %v5642 = vmul.f32 %v5450, %v5497
          %v5643 = vmul.f32 %v5451, %v5502
          %v5644 = vmul.f32 %v5452, %v5507
          %v5645 = vmul.f32 %v5453, %v5512
          %v5646 = vmul.f32 %v5454, %v5517
          %v5647 = vmul.f32 %v5455, %v5522
          %v5648 = vmul.f32 %v5456, %v5527
          %v5649 = vmul.f32 %v5457, %v5532
          %v5650 = vmul.f32 %v5458, %v5537
          %v5651 = vmul.f32 %v5459, %v5542
          %v5652 = vmul.f32 %v5460, %v5547
          %v5653 = vmul.f32 %v5461, %v5552
          %v5654 = vmul.f32 %v5462, %v5557
          %v5655 = vmul.f32 %v5463, %v5562
          %v5656 = vmul.f32 %v5464, %v5567
          %v5657 = vmul.f32 %v5465, %v5572
          %v5658 = vmul.f32 %v5466, %v5577
          %v5659 = vmul.f32 %v5467, %v5582
          %v5660 = vmul.f32 %v5468, %v5587
          %v5661 = vmul.f32 %v5469, %v5592
          %v5662 = vmul.f32 %v5470, %v5597
          %v5663 = vmul.f32 %v5471, %v5602
          %v5664 = vmul.f32 %v5472, %v5607
          %v5665 = vmul.f32 %v5473, %v5612
          %v5666 = vmul.f32 %v5474, %v5617
          %v5667 = vmul.f32 %v5475, %v5622
          %v5668 = vmul.f32 %v5476, %v5627
          %v5669 = vmul.f32 %v5477, %v5632
          %v5670 = vmul.f32 %v5478, %v5637
          %vm5671 = vcmask 64512
          %5672 = vst.msk [vmem:[%s379] sm:$0xff] %vm5671, %v5639
          %5673 = vst.msk [vmem:[%s379 + $0x8] sm:$0xff] %vm5671, %v5640
          %5674 = vst.msk [vmem:[%s379 + $0x10] sm:$0xff] %vm5671, %v5641
          %5675 = vst.msk [vmem:[%s379 + $0x18] sm:$0xff] %vm5671, %v5642
          %5676 = vst.msk [vmem:[%s379 + $0x20] sm:$0xff] %vm5671, %v5643
          %5677 = vst.msk [vmem:[%s379 + $0x28] sm:$0xff] %vm5671, %v5644
          %5678 = vst.msk [vmem:[%s379 + $0x30] sm:$0xff] %vm5671, %v5645
          %5679 = vst.msk [vmem:[%s379 + $0x38] sm:$0xff] %vm5671, %v5646
          %5680 = vst.msk [vmem:[%s379 + $0x40] sm:$0xff] %vm5671, %v5647
          %5681 = vst.msk [vmem:[%s379 + $0x48] sm:$0xff] %vm5671, %v5648
          %5682 = vst.msk [vmem:[%s379 + $0x50] sm:$0xff] %vm5671, %v5649
          %5683 = vst.msk [vmem:[%s379 + $0x58] sm:$0xff] %vm5671, %v5650
          %5684 = vst.msk [vmem:[%s379 + $0x60] sm:$0xff] %vm5671, %v5651
          %5685 = vst.msk [vmem:[%s379 + $0x68] sm:$0xff] %vm5671, %v5652
          %5686 = vst.msk [vmem:[%s379 + $0x70] sm:$0xff] %vm5671, %v5653
          %5687 = vst.msk [vmem:[%s379 + $0x78] sm:$0xff] %vm5671, %v5654
          %5688 = vst.msk [vmem:[%s379 + $0x80] sm:$0xff] %vm5671, %v5655
          %5689 = vst.msk [vmem:[%s379 + $0x88] sm:$0xff] %vm5671, %v5656
          %5690 = vst.msk [vmem:[%s379 + $0x90] sm:$0xff] %vm5671, %v5657
          %5691 = vst.msk [vmem:[%s379 + $0x98] sm:$0xff] %vm5671, %v5658
          %5692 = vst.msk [vmem:[%s379 + $0xa0] sm:$0xff] %vm5671, %v5659
          %5693 = vst.msk [vmem:[%s379 + $0xa8] sm:$0xff] %vm5671, %v5660
          %5694 = vst.msk [vmem:[%s379 + $0xb0] sm:$0xff] %vm5671, %v5661
          %5695 = vst.msk [vmem:[%s379 + $0xb8] sm:$0xff] %vm5671, %v5662
          %5696 = vst.msk [vmem:[%s379 + $0xc0] sm:$0xff] %vm5671, %v5663
          %5697 = vst.msk [vmem:[%s379 + $0xc8] sm:$0xff] %vm5671, %v5664
          %5698 = vst.msk [vmem:[%s379 + $0xd0] sm:$0xff] %vm5671, %v5665
          %5699 = vst.msk [vmem:[%s379 + $0xd8] sm:$0xff] %vm5671, %v5666
          %5700 = vst.msk [vmem:[%s379 + $0xe0] sm:$0xff] %vm5671, %v5667
          %5701 = vst.msk [vmem:[%s379 + $0xe8] sm:$0xff] %vm5671, %v5668
          %5702 = vst.msk [vmem:[%s379 + $0xf0] sm:$0xff] %vm5671, %v5669
          %5703 = vst.msk [vmem:[%s379 + $0xf8] sm:$0xff] %vm5671, %v5670
          %v5704 = vld [vmem:[%s4610] sm:$0xff]
          %v5705 = vld [vmem:[%s4610 + $0x8] sm:$0xff]
          %v5706 = vld [vmem:[%s4610 + $0x10] sm:$0xff]
          %v5707 = vld [vmem:[%s4610 + $0x18] sm:$0xff]
          %v5708 = vld [vmem:[%s4610 + $0x20] sm:$0xff]
          %v5709 = vld [vmem:[%s4610 + $0x28] sm:$0xff]
          %v5710 = vld [vmem:[%s4610 + $0x30] sm:$0xff]
          %v5711 = vld [vmem:[%s4610 + $0x38] sm:$0xff]
          %v5712 = vld [vmem:[%s4610 + $0x40] sm:$0xff]
          %v5713 = vld [vmem:[%s4610 + $0x48] sm:$0xff]
          %v5714 = vld [vmem:[%s4610 + $0x50] sm:$0xff]
          %v5715 = vld [vmem:[%s4610 + $0x58] sm:$0xff]
          %v5716 = vld [vmem:[%s4610 + $0x60] sm:$0xff]
          %v5717 = vld [vmem:[%s4610 + $0x68] sm:$0xff]
          %v5718 = vld [vmem:[%s4610 + $0x70] sm:$0xff]
          %v5719 = vld [vmem:[%s4610 + $0x78] sm:$0xff]
          %v5720 = vld [vmem:[%s4610 + $0x80] sm:$0xff]
          %v5721 = vld [vmem:[%s4610 + $0x88] sm:$0xff]
          %v5722 = vld [vmem:[%s4610 + $0x90] sm:$0xff]
          %v5723 = vld [vmem:[%s4610 + $0x98] sm:$0xff]
          %v5724 = vld [vmem:[%s4610 + $0xa0] sm:$0xff]
          %v5725 = vld [vmem:[%s4610 + $0xa8] sm:$0xff]
          %v5726 = vld [vmem:[%s4610 + $0xb0] sm:$0xff]
          %v5727 = vld [vmem:[%s4610 + $0xb8] sm:$0xff]
          %v5728 = vld [vmem:[%s4610 + $0xc0] sm:$0xff]
          %v5729 = vld [vmem:[%s4610 + $0xc8] sm:$0xff]
          %v5730 = vld [vmem:[%s4610 + $0xd0] sm:$0xff]
          %v5731 = vld [vmem:[%s4610 + $0xd8] sm:$0xff]
          %v5732 = vld [vmem:[%s4610 + $0xe0] sm:$0xff]
          %v5733 = vld [vmem:[%s4610 + $0xe8] sm:$0xff]
          %v5734 = vld [vmem:[%s4610 + $0xf0] sm:$0xff]
          %v5735 = vld [vmem:[%s4610 + $0xf8] sm:$0xff]
          %v5736 = vrcp.pop %v5704
          %v5737 = vrcp.pop %v5705
          %v5738 = vrcp.pop %v5706
          %v5739 = vrcp.pop %v5707
          %v5740 = vrcp.pop %v5708
          %v5741 = vrcp.pop %v5709
          %v5742 = vrcp.pop %v5710
          %v5743 = vrcp.pop %v5711
          %v5744 = vrcp.pop %v5712
          %v5745 = vrcp.pop %v5713
          %v5746 = vrcp.pop %v5714
          %v5747 = vrcp.pop %v5715
          %v5748 = vrcp.pop %v5716
          %v5749 = vrcp.pop %v5717
          %v5750 = vrcp.pop %v5718
          %v5751 = vrcp.pop %v5719
          %v5752 = vrcp.pop %v5720
          %v5753 = vrcp.pop %v5721
          %v5754 = vrcp.pop %v5722
          %v5755 = vrcp.pop %v5723
          %v5756 = vrcp.pop %v5724
          %v5757 = vrcp.pop %v5725
          %v5758 = vrcp.pop %v5726
          %v5759 = vrcp.pop %v5727
          %v5760 = vrcp.pop %v5728
          %v5761 = vrcp.pop %v5729
          %v5762 = vrcp.pop %v5730
          %v5763 = vrcp.pop %v5731
          %v5764 = vrcp.pop %v5732
          %v5765 = vrcp.pop %v5733
          %v5766 = vrcp.pop %v5734
          %v5767 = vrcp.pop %v5735
          %v5768 = vld [vmem:[#allocation3 + $0x8] sm:$0xff]
          %v5769 = vld [vmem:[#allocation3 + $0x18] sm:$0xff]
          %v5770 = vld [vmem:[#allocation3 + $0x28] sm:$0xff]
          %v5771 = vld [vmem:[#allocation3 + $0x38] sm:$0xff]
          %v5772 = vld [vmem:[#allocation3 + $0x48] sm:$0xff]
          %v5773 = vld [vmem:[#allocation3 + $0x58] sm:$0xff]
          %v5774 = vld [vmem:[#allocation3 + $0x68] sm:$0xff]
          %v5775 = vld [vmem:[#allocation3 + $0x78] sm:$0xff]
          %v5776 = vld [vmem:[#allocation3 + $0x88] sm:$0xff]
          %v5777 = vld [vmem:[#allocation3 + $0x98] sm:$0xff]
          %v5778 = vld [vmem:[#allocation3 + $0xa8] sm:$0xff]
          %v5779 = vld [vmem:[#allocation3 + $0xb8] sm:$0xff]
          %v5780 = vld [vmem:[#allocation3 + $0xc8] sm:$0xff]
          %v5781 = vld [vmem:[#allocation3 + $0xd8] sm:$0xff]
          %v5782 = vld [vmem:[#allocation3 + $0xe8] sm:$0xff]
          %v5783 = vld [vmem:[#allocation3 + $0xf8] sm:$0xff]
          %v5784 = vld [vmem:[#allocation3 + $0x108] sm:$0xff]
          %v5785 = vld [vmem:[#allocation3 + $0x118] sm:$0xff]
          %v5786 = vld [vmem:[#allocation3 + $0x128] sm:$0xff]
          %v5787 = vld [vmem:[#allocation3 + $0x138] sm:$0xff]
          %v5788 = vld [vmem:[#allocation3 + $0x148] sm:$0xff]
          %v5789 = vld [vmem:[#allocation3 + $0x158] sm:$0xff]
          %v5790 = vld [vmem:[#allocation3 + $0x168] sm:$0xff]
          %v5791 = vld [vmem:[#allocation3 + $0x178] sm:$0xff]
          %v5792 = vld [vmem:[#allocation3 + $0x188] sm:$0xff]
          %v5793 = vld [vmem:[#allocation3 + $0x198] sm:$0xff]
          %v5794 = vld [vmem:[#allocation3 + $0x1a8] sm:$0xff]
          %v5795 = vld [vmem:[#allocation3 + $0x1b8] sm:$0xff]
          %v5796 = vld [vmem:[#allocation3 + $0x1c8] sm:$0xff]
          %v5797 = vld [vmem:[#allocation3 + $0x1d8] sm:$0xff]
          %v5798 = vld [vmem:[#allocation3 + $0x1e8] sm:$0xff]
          %v5799 = vld [vmem:[#allocation3 + $0x1f8] sm:$0xff]
          %5801 = vset.pattern.permute.xlu0 0
          %5802 = vperm.xlu0 %5801, %v5736
          %v5803 = vpop.permute.xlu0 %5802
          %5806 = vset.pattern.permute.xlu0 0
          %5807 = vperm.xlu0 %5806, %v5737
          %v5808 = vpop.permute.xlu0 %5807
          %5811 = vset.pattern.permute.xlu0 0
          %5812 = vperm.xlu0 %5811, %v5738
          %v5813 = vpop.permute.xlu0 %5812
          %5816 = vset.pattern.permute.xlu0 0
          %5817 = vperm.xlu0 %5816, %v5739
          %v5818 = vpop.permute.xlu0 %5817
          %5821 = vset.pattern.permute.xlu0 0
          %5822 = vperm.xlu0 %5821, %v5740
          %v5823 = vpop.permute.xlu0 %5822
          %5826 = vset.pattern.permute.xlu0 0
          %5827 = vperm.xlu0 %5826, %v5741
          %v5828 = vpop.permute.xlu0 %5827
          %5831 = vset.pattern.permute.xlu0 0
          %5832 = vperm.xlu0 %5831, %v5742
          %v5833 = vpop.permute.xlu0 %5832
          %5836 = vset.pattern.permute.xlu0 0
          %5837 = vperm.xlu0 %5836, %v5743
          %v5838 = vpop.permute.xlu0 %5837
          %5841 = vset.pattern.permute.xlu0 0
          %5842 = vperm.xlu0 %5841, %v5744
          %v5843 = vpop.permute.xlu0 %5842
          %5846 = vset.pattern.permute.xlu0 0
          %5847 = vperm.xlu0 %5846, %v5745
          %v5848 = vpop.permute.xlu0 %5847
          %5851 = vset.pattern.permute.xlu0 0
          %5852 = vperm.xlu0 %5851, %v5746
          %v5853 = vpop.permute.xlu0 %5852
          %5856 = vset.pattern.permute.xlu0 0
          %5857 = vperm.xlu0 %5856, %v5747
          %v5858 = vpop.permute.xlu0 %5857
          %5861 = vset.pattern.permute.xlu0 0
          %5862 = vperm.xlu0 %5861, %v5748
          %v5863 = vpop.permute.xlu0 %5862
          %5866 = vset.pattern.permute.xlu0 0
          %5867 = vperm.xlu0 %5866, %v5749
          %v5868 = vpop.permute.xlu0 %5867
          %5871 = vset.pattern.permute.xlu0 0
          %5872 = vperm.xlu0 %5871, %v5750
          %v5873 = vpop.permute.xlu0 %5872
          %5876 = vset.pattern.permute.xlu0 0
          %5877 = vperm.xlu0 %5876, %v5751
          %v5878 = vpop.permute.xlu0 %5877
          %5881 = vset.pattern.permute.xlu0 0
          %5882 = vperm.xlu0 %5881, %v5752
          %v5883 = vpop.permute.xlu0 %5882
          %5886 = vset.pattern.permute.xlu0 0
          %5887 = vperm.xlu0 %5886, %v5753
          %v5888 = vpop.permute.xlu0 %5887
          %5891 = vset.pattern.permute.xlu0 0
          %5892 = vperm.xlu0 %5891, %v5754
          %v5893 = vpop.permute.xlu0 %5892
          %5896 = vset.pattern.permute.xlu0 0
          %5897 = vperm.xlu0 %5896, %v5755
          %v5898 = vpop.permute.xlu0 %5897
          %5901 = vset.pattern.permute.xlu0 0
          %5902 = vperm.xlu0 %5901, %v5756
          %v5903 = vpop.permute.xlu0 %5902
          %5906 = vset.pattern.permute.xlu0 0
          %5907 = vperm.xlu0 %5906, %v5757
          %v5908 = vpop.permute.xlu0 %5907
          %5911 = vset.pattern.permute.xlu0 0
          %5912 = vperm.xlu0 %5911, %v5758
          %v5913 = vpop.permute.xlu0 %5912
          %5916 = vset.pattern.permute.xlu0 0
          %5917 = vperm.xlu0 %5916, %v5759
          %v5918 = vpop.permute.xlu0 %5917
          %5921 = vset.pattern.permute.xlu0 0
          %5922 = vperm.xlu0 %5921, %v5760
          %v5923 = vpop.permute.xlu0 %5922
          %5926 = vset.pattern.permute.xlu0 0
          %5927 = vperm.xlu0 %5926, %v5761
          %v5928 = vpop.permute.xlu0 %5927
          %5931 = vset.pattern.permute.xlu0 0
          %5932 = vperm.xlu0 %5931, %v5762
          %v5933 = vpop.permute.xlu0 %5932
          %5936 = vset.pattern.permute.xlu0 0
          %5937 = vperm.xlu0 %5936, %v5763
          %v5938 = vpop.permute.xlu0 %5937
          %5941 = vset.pattern.permute.xlu0 0
          %5942 = vperm.xlu0 %5941, %v5764
          %v5943 = vpop.permute.xlu0 %5942
          %5946 = vset.pattern.permute.xlu0 0
          %5947 = vperm.xlu0 %5946, %v5765
          %v5948 = vpop.permute.xlu0 %5947
          %5951 = vset.pattern.permute.xlu0 0
          %5952 = vperm.xlu0 %5951, %v5766
          %v5953 = vpop.permute.xlu0 %5952
          %5956 = vset.pattern.permute.xlu0 0
          %5957 = vperm.xlu0 %5956, %v5767
          %v5958 = vpop.permute.xlu0 %5957
          %v5960 = vmul.f32 %v5768, %v5803
          %v5961 = vmul.f32 %v5769, %v5808
          %v5962 = vmul.f32 %v5770, %v5813
          %v5963 = vmul.f32 %v5771, %v5818
          %v5964 = vmul.f32 %v5772, %v5823
          %v5965 = vmul.f32 %v5773, %v5828
          %v5966 = vmul.f32 %v5774, %v5833
          %v5967 = vmul.f32 %v5775, %v5838
          %v5968 = vmul.f32 %v5776, %v5843
          %v5969 = vmul.f32 %v5777, %v5848
          %v5970 = vmul.f32 %v5778, %v5853
          %v5971 = vmul.f32 %v5779, %v5858
          %v5972 = vmul.f32 %v5780, %v5863
          %v5973 = vmul.f32 %v5781, %v5868
          %v5974 = vmul.f32 %v5782, %v5873
          %v5975 = vmul.f32 %v5783, %v5878
          %v5976 = vmul.f32 %v5784, %v5883
          %v5977 = vmul.f32 %v5785, %v5888
          %v5978 = vmul.f32 %v5786, %v5893
          %v5979 = vmul.f32 %v5787, %v5898
          %v5980 = vmul.f32 %v5788, %v5903
          %v5981 = vmul.f32 %v5789, %v5908
          %v5982 = vmul.f32 %v5790, %v5913
          %v5983 = vmul.f32 %v5791, %v5918
          %v5984 = vmul.f32 %v5792, %v5923
          %v5985 = vmul.f32 %v5793, %v5928
          %v5986 = vmul.f32 %v5794, %v5933
          %v5987 = vmul.f32 %v5795, %v5938
          %v5988 = vmul.f32 %v5796, %v5943
          %v5989 = vmul.f32 %v5797, %v5948
          %v5990 = vmul.f32 %v5798, %v5953
          %v5991 = vmul.f32 %v5799, %v5958
          %6024 = vrot.lane.b32.xlu0 %v5960, 8
          %v6025 = vpop.permute.xlu0 %6024
          %6026 = vrot.lane.b32.xlu0 %v5961, 8
          %v6027 = vpop.permute.xlu0 %6026
          %6028 = vrot.lane.b32.xlu0 %v5962, 8
          %v6029 = vpop.permute.xlu0 %6028
          %6030 = vrot.lane.b32.xlu0 %v5963, 8
          %v6031 = vpop.permute.xlu0 %6030
          %6032 = vrot.lane.b32.xlu0 %v5964, 8
          %v6033 = vpop.permute.xlu0 %6032
          %6034 = vrot.lane.b32.xlu0 %v5965, 8
          %v6035 = vpop.permute.xlu0 %6034
          %6036 = vrot.lane.b32.xlu0 %v5966, 8
          %v6037 = vpop.permute.xlu0 %6036
          %6038 = vrot.lane.b32.xlu0 %v5967, 8
          %v6039 = vpop.permute.xlu0 %6038
          %6040 = vrot.lane.b32.xlu0 %v5968, 8
          %v6041 = vpop.permute.xlu0 %6040
          %6042 = vrot.lane.b32.xlu0 %v5969, 8
          %v6043 = vpop.permute.xlu0 %6042
          %6044 = vrot.lane.b32.xlu0 %v5970, 8
          %v6045 = vpop.permute.xlu0 %6044
          %6046 = vrot.lane.b32.xlu0 %v5971, 8
          %v6047 = vpop.permute.xlu0 %6046
          %6048 = vrot.lane.b32.xlu0 %v5972, 8
          %v6049 = vpop.permute.xlu0 %6048
          %6050 = vrot.lane.b32.xlu0 %v5973, 8
          %v6051 = vpop.permute.xlu0 %6050
          %6052 = vrot.lane.b32.xlu0 %v5974, 8
          %v6053 = vpop.permute.xlu0 %6052
          %6054 = vrot.lane.b32.xlu0 %v5975, 8
          %v6055 = vpop.permute.xlu0 %6054
          %6056 = vrot.lane.b32.xlu0 %v5976, 8
          %v6057 = vpop.permute.xlu0 %6056
          %6058 = vrot.lane.b32.xlu0 %v5977, 8
          %v6059 = vpop.permute.xlu0 %6058
          %6060 = vrot.lane.b32.xlu0 %v5978, 8
          %v6061 = vpop.permute.xlu0 %6060
          %6062 = vrot.lane.b32.xlu0 %v5979, 8
          %v6063 = vpop.permute.xlu0 %6062
          %6064 = vrot.lane.b32.xlu0 %v5980, 8
          %v6065 = vpop.permute.xlu0 %6064
          %6066 = vrot.lane.b32.xlu0 %v5981, 8
          %v6067 = vpop.permute.xlu0 %6066
          %6068 = vrot.lane.b32.xlu0 %v5982, 8
          %v6069 = vpop.permute.xlu0 %6068
          %6070 = vrot.lane.b32.xlu0 %v5983, 8
          %v6071 = vpop.permute.xlu0 %6070
          %6072 = vrot.lane.b32.xlu0 %v5984, 8
          %v6073 = vpop.permute.xlu0 %6072
          %6074 = vrot.lane.b32.xlu0 %v5985, 8
          %v6075 = vpop.permute.xlu0 %6074
          %6076 = vrot.lane.b32.xlu0 %v5986, 8
          %v6077 = vpop.permute.xlu0 %6076
          %6078 = vrot.lane.b32.xlu0 %v5987, 8
          %v6079 = vpop.permute.xlu0 %6078
          %6080 = vrot.lane.b32.xlu0 %v5988, 8
          %v6081 = vpop.permute.xlu0 %6080
          %6082 = vrot.lane.b32.xlu0 %v5989, 8
          %v6083 = vpop.permute.xlu0 %6082
          %6084 = vrot.lane.b32.xlu0 %v5990, 8
          %v6085 = vpop.permute.xlu0 %6084
          %6086 = vrot.lane.b32.xlu0 %v5991, 8
          %v6087 = vpop.permute.xlu0 %6086
          %vm6120 = vcmask 130112
          %6121 = vst.msk [vmem:[%s379] sm:$0xff] %vm6120, %v6025
          %6122 = vst.msk [vmem:[%s379 + $0x8] sm:$0xff] %vm6120, %v6027
          %6123 = vst.msk [vmem:[%s379 + $0x10] sm:$0xff] %vm6120, %v6029
          %6124 = vst.msk [vmem:[%s379 + $0x18] sm:$0xff] %vm6120, %v6031
          %6125 = vst.msk [vmem:[%s379 + $0x20] sm:$0xff] %vm6120, %v6033
          %6126 = vst.msk [vmem:[%s379 + $0x28] sm:$0xff] %vm6120, %v6035
          %6127 = vst.msk [vmem:[%s379 + $0x30] sm:$0xff] %vm6120, %v6037
          %6128 = vst.msk [vmem:[%s379 + $0x38] sm:$0xff] %vm6120, %v6039
          %6129 = vst.msk [vmem:[%s379 + $0x40] sm:$0xff] %vm6120, %v6041
          %6130 = vst.msk [vmem:[%s379 + $0x48] sm:$0xff] %vm6120, %v6043
          %6131 = vst.msk [vmem:[%s379 + $0x50] sm:$0xff] %vm6120, %v6045
          %6132 = vst.msk [vmem:[%s379 + $0x58] sm:$0xff] %vm6120, %v6047
          %6133 = vst.msk [vmem:[%s379 + $0x60] sm:$0xff] %vm6120, %v6049
          %6134 = vst.msk [vmem:[%s379 + $0x68] sm:$0xff] %vm6120, %v6051
          %6135 = vst.msk [vmem:[%s379 + $0x70] sm:$0xff] %vm6120, %v6053
          %6136 = vst.msk [vmem:[%s379 + $0x78] sm:$0xff] %vm6120, %v6055
          %6137 = vst.msk [vmem:[%s379 + $0x80] sm:$0xff] %vm6120, %v6057
          %6138 = vst.msk [vmem:[%s379 + $0x88] sm:$0xff] %vm6120, %v6059
          %6139 = vst.msk [vmem:[%s379 + $0x90] sm:$0xff] %vm6120, %v6061
          %6140 = vst.msk [vmem:[%s379 + $0x98] sm:$0xff] %vm6120, %v6063
          %6141 = vst.msk [vmem:[%s379 + $0xa0] sm:$0xff] %vm6120, %v6065
          %6142 = vst.msk [vmem:[%s379 + $0xa8] sm:$0xff] %vm6120, %v6067
          %6143 = vst.msk [vmem:[%s379 + $0xb0] sm:$0xff] %vm6120, %v6069
          %6144 = vst.msk [vmem:[%s379 + $0xb8] sm:$0xff] %vm6120, %v6071
          %6145 = vst.msk [vmem:[%s379 + $0xc0] sm:$0xff] %vm6120, %v6073
          %6146 = vst.msk [vmem:[%s379 + $0xc8] sm:$0xff] %vm6120, %v6075
          %6147 = vst.msk [vmem:[%s379 + $0xd0] sm:$0xff] %vm6120, %v6077
          %6148 = vst.msk [vmem:[%s379 + $0xd8] sm:$0xff] %vm6120, %v6079
          %6149 = vst.msk [vmem:[%s379 + $0xe0] sm:$0xff] %vm6120, %v6081
          %6150 = vst.msk [vmem:[%s379 + $0xe8] sm:$0xff] %vm6120, %v6083
          %6151 = vst.msk [vmem:[%s379 + $0xf0] sm:$0xff] %vm6120, %v6085
          %6152 = vst.msk [vmem:[%s379 + $0xf8] sm:$0xff] %vm6120, %v6087
        $region72: #{tpu_custom_call.1} parent=43 // pred_fallthru
          _
        %s6153 = smul.u32 32, %s30
        %p6154 = scmp.lt.s32.totalorder %s29, 1
        %s6155 = scalar_select %p6154, %s29, 1
        %p6156 = scmp.lt.s32.totalorder %s6153, 31
        %s6157 = scalar_select %p6156, %s6153, 31
        %s6158 = smul.addr %s6155, 32
        %s6159 = sadd.s32 %s6157, %s6158
        %s6160 = smul.addr %s6159, 8
        %s6161 = scalar_lea.vmem %s6, %s6160
        // Predicated region
        $region73: #{tpu_custom_call.1} parent=43 // pred_check
          %p6162 = pneg %p207
        $region74: #{tpu_custom_call.1} parent=43 // pred_check_branch
          %6164 = sbr.rel (%p6162) target = $region76
        $region75: #{tpu_custom_call.1} parent=43 // pred_region
          %s6165 = smul.u32 32, %s30
        $region76: #{tpu_custom_call.1} parent=43 // pred_fallthru
          _
      $region44: #{tpu_custom_call.1} parent=5 // pred_fallthru
        _
      %p6166 = scmp.le.s32.totalorder 2, %s19
      // Predicated region
      $region77: #{tpu_custom_call.1} parent=5 // pred_check
        %p6167 = pneg %p6166
      $region78: #{tpu_custom_call.1} parent=5 // pred_check_branch
        %6169 = sbr.rel (%p6167) target = $region80
      $region79: #{tpu_custom_call.1} parent=5 // pred_region
        %s6170 = ssub.s32 %s19, 2
        // Predicated region
        $region81: #{tpu_custom_call.1} parent=79 // pred_check
          %p6171 = pneg %p213
        $region82: #{tpu_custom_call.1} parent=79 // pred_check_branch
          %6173 = sbr.rel (%p6171) target = $region84
        $region83: #{tpu_custom_call.1} parent=79 // pred_region
          %s6174 = smul.u32 32, %s33
          %p6175 = scmp.lt.s32.totalorder %s32, 1
          %s6176 = scalar_select %p6175, %s32, 1
          %p6177 = scmp.lt.s32.totalorder %s6174, 31
          %s6178 = scalar_select %p6177, %s6174, 31
          %s6179 = smul.addr %s6176, 32
          %s6180 = sadd.s32 %s6178, %s6179
          %s6181 = smul.addr %s6180, 8
          %s6182 = scalar_lea.vmem %s6, %s6181
        $region84: #{tpu_custom_call.1} parent=79 // pred_fallthru
          _
      $region80: #{tpu_custom_call.1} parent=5 // pred_fallthru
        _
    $region6: #{tpu_custom_call.1} parent=1 // loop_footer
      %s23 = sadd.s32 1, %s19
    $region7: #{tpu_custom_call.1} parent=1 // loop_footer_branch
      %18 = sbr.rel target = $region3
    $region8: #{tpu_custom_call.1} parent=1 // loop_exit
      _
    %6183 = vsyncpa [#allocation8], 1
    %s6184 = scalar_lea.sflag [#allocation8], 1
    %6185 = vsyncpa %s6184, 1
    %6186 = vsyncpa [#allocation10], 1
    %s6187 = scalar_lea.sflag [#allocation10], 1
    %6188 = vsyncpa %s6187, 1
    %6189 = vsyncpa [#allocation13], 1

</llo_original>
